<compile_context>
chip_gen: v5e
topology: v5e:2x2
jax: 0.10.0
libtpu: 0.0.40
codegen_flags: <defaults>
</compile_context>

<pallas_src>
import functools

import numpy as np
import jax
import jax.numpy as jnp
from jax.experimental import pallas as pl
from jax.experimental.pallas import tpu as pltpu

EMB_DIM = 64
NUMERIC_SIZES = [64, 16, 128, 64, 128, 64, 512, 512]
CATEGORY_SIZES = [55824, 5443, 13073, 13170, 3145, 33843, 14304, 11, 13601]
N_FIELDS = len(NUMERIC_SIZES) + len(CATEGORY_SIZES)        # 17
PRESIZE = N_FIELDS * EMB_DIM                               # 1088
LEAKY_SLOPE = 0.01                                         # nn.LeakyReLU() default

# Fused-gather layout: tables concatenated in the exact order MLP.forward
# concatenates features: numeric 0..7, then category 8, 7, ..., 0.
_GATHER_TABLE_SIZES = NUMERIC_SIZES + [CATEGORY_SIZES[8 - i] for i in range(9)]
_GATHER_COLS = np.array(list(range(8)) + [16 - i for i in range(9)], dtype=np.int32)
_GATHER_OFFSETS = np.concatenate(
    [[0], np.cumsum(_GATHER_TABLE_SIZES)[:-1]]).astype(np.int32)      # (17,)
TOTAL_ROWS = int(sum(_GATHER_TABLE_SIZES))


def _round_up(x, m):
    return (x + m - 1) // m * m


def _leaky_relu(h):
    return jnp.where(h > 0, h, LEAKY_SLOPE * h)


# ----------------------------- Pallas kernel -------------------------------
def fused_dfm_kernel(x_ref, w1_ref, b1_ref, w2_ref, b2_ref, w3_ref, b3_ref,
                     w4_ref, b4_ref, o_ref):
    # grid = (tower, batch_tile); every block carries a leading size-1 tower dim.
    x = x_ref[0]                                           # (tb, 1088) bf16
    # Layer 1: (tb,1088) @ (1088,256), bf16 operands, f32 accumulate (MXU)
    h = jnp.dot(x, w1_ref[0], preferred_element_type=jnp.float32)
    h = _leaky_relu(h + b1_ref[0])
    # Layer 2: (tb,256) @ (256,256)
    h = jnp.dot(h.astype(jnp.bfloat16), w2_ref[0],
                preferred_element_type=jnp.float32)
    h = _leaky_relu(h + b2_ref[0])
    # Layer 3: (tb,256) @ (256,128)
    h = jnp.dot(h.astype(jnp.bfloat16), w3_ref[0],
                preferred_element_type=jnp.float32)
    h = _leaky_relu(h + b3_ref[0])
    # Layer 4: N=1 matmul -> VPU multiply + lane (XLU) reduction, skip the MXU
    out = jnp.sum(h * w4_ref[0], axis=-1, keepdims=True) + b4_ref[0]   # (tb, 1)
    o_ref[0] = out.astype(o_ref.dtype)


def dfm_towers_pallas(feat_stack, stacked_params, *, tb):
    """feat_stack: (2, Bp, 1088) bf16 -> (2, Bp, 1) f32, both towers fused."""
    T, B, D = feat_stack.shape
    assert T == 2 and D == PRESIZE and B % tb == 0
    W1, B1, W2, B2, W3, B3, W4, B4 = stacked_params

    def w_spec(shape):
        return pl.BlockSpec(shape, lambda t, i: (t, 0, 0))

    return pl.pallas_call(
        fused_dfm_kernel,
        out_shape=jax.ShapeDtypeStruct((T, B, 1), jnp.float32),
        grid_spec=pltpu.PrefetchScalarGridSpec(
            num_scalar_prefetch=0,
            grid=(T, B // tb),
            in_specs=[
                pl.BlockSpec((1, tb, D), lambda t, i: (t, i, 0)),
                w_spec((1, D, 256)),   w_spec((1, 1, 256)),
                w_spec((1, 256, 256)), w_spec((1, 1, 256)),
                w_spec((1, 256, 128)), w_spec((1, 1, 128)),
                w_spec((1, 1, 128)),   w_spec((1, 1, 1)),
            ],
            out_specs=pl.BlockSpec((1, tb, 1), lambda t, i: (t, i, 0)),
        ),
        compiler_params=pltpu.CompilerParams(
            dimension_semantics=("parallel", "parallel"),
            vmem_limit_bytes=32 << 20),
    )(feat_stack, W1, B1, W2, B2, W3, B3, W4, B4)


# ----------------------------- Parameter init ------------------------------
def init_mlp_tower(key):
    """One MLP('MLP_SIG') tower: embedding tables + 4 Linear layers (f32).

    Synthetic deterministic init (the kernel semantics do not depend on the
    init scheme)."""
    keys = jax.random.split(key, 32)
    ki = iter(range(32))

    def emb(k, n):
        return 0.1 * jax.random.normal(k, (n, EMB_DIM), dtype=jnp.float32)

    numeric_emb = [emb(keys[next(ki)], n) for n in NUMERIC_SIZES]
    category_emb = [emb(keys[next(ki)], n) for n in CATEGORY_SIZES]

    def linear(k, fan_in, fan_out):
        w = 0.05 * jax.random.normal(k, (fan_in, fan_out), dtype=jnp.float32)
        b = jnp.zeros((1, fan_out), dtype=jnp.float32)
        return w, b

    w1, b1 = linear(keys[next(ki)], PRESIZE, 256)
    w2, b2 = linear(keys[next(ki)], 256, 256)
    w3, b3 = linear(keys[next(ki)], 256, 128)
    w4, b4 = linear(keys[next(ki)], 128, 1)

    return {
        "numeric_emb": numeric_emb,
        "category_emb": category_emb,
        "mlp": (w1, b1, w2, b2, w3, b3, w4, b4),
    }


def build_dfm_params(cvr_tower, delay_tower):
    """One-time packing (hoisted out of the forward jit):
       - all 17 embedding tables of each tower fused into one bf16 matrix,
         stacked over towers -> (2, TOTAL_ROWS, 64),
       - MLP weights stacked over towers, transposed/cast to the kernel layout.
    """
    def fused_table(tower):
        tabs = [tower["numeric_emb"][i] for i in range(8)] + \
               [tower["category_emb"][8 - i] for i in range(9)]
        return jnp.concatenate(tabs, axis=0)                # (TOTAL_ROWS, 64)

    emb = jnp.stack([fused_table(cvr_tower), fused_table(delay_tower)],
                    axis=0).astype(jnp.bfloat16)            # (2, TOTAL_ROWS, 64)

    def stack(getter):
        return jnp.stack([getter(cvr_tower["mlp"]), getter(delay_tower["mlp"])],
                         axis=0)

    W1 = stack(lambda p: p[0]).astype(jnp.bfloat16)         # (2, 1088, 256)
    B1 = stack(lambda p: p[1])                              # (2, 1, 256) f32
    W2 = stack(lambda p: p[2]).astype(jnp.bfloat16)         # (2, 256, 256)
    B2 = stack(lambda p: p[3])                              # (2, 1, 256) f32
    W3 = stack(lambda p: p[4]).astype(jnp.bfloat16)         # (2, 256, 128)
    B3 = stack(lambda p: p[5])                              # (2, 1, 128) f32
    W4 = stack(lambda p: p[6].T)                            # (2, 1, 128) f32 (row)
    B4 = stack(lambda p: p[7])                              # (2, 1, 1)   f32

    return {"emb": emb, "mlp": (W1, B1, W2, B2, W3, B3, W4, B4)}


# ----------------------------- Forward glue --------------------------------
def gather_features(x_idx, emb_stacked):
    """Single fused gather reproducing the criteo gather/concat of MLP.forward.

    x_idx: (B, 18) int32; emb_stacked: (2, TOTAL_ROWS, 64) bf16
    returns (2, B, 1088) bf16."""
    B = x_idx.shape[0]
    idx = x_idx[:, _GATHER_COLS] + _GATHER_OFFSETS          # (B, 17) row ids
    flat = idx.reshape(-1)                                  # (B*17,)
    feat = jnp.take(emb_stacked, flat, axis=1)              # (2, B*17, 64)
    return feat.reshape(2, B, PRESIZE)                      # (2, B, 1088) bf16


@functools.partial(jax.jit, static_argnames=("tb",))
def dfm_forward(x_idx, params, *, tb=512):
    B = x_idx.shape[0]
    feat = gather_features(x_idx, params["emb"])            # (2, B, 1088) bf16

    # Pad batch to a tile multiple (no feature padding needed).
    tb_eff = min(tb, _round_up(B, 8))
    Bp = _round_up(B, tb_eff)
    if Bp != B:
        feat = jnp.pad(feat, ((0, 0), (0, Bp - B), (0, 0)))

    out = dfm_towers_pallas(feat, params["mlp"], tb=tb_eff)  # (2, Bp, 1) f32

    return {
        "logits": jnp.reshape(out[0, :B, :], (-1, 1)),
        "log_lamb": jnp.reshape(out[1, :B, :], (-1, 1)),
    }


# ----------------------------- Reference (jnp) ------------------------------
def _tower_reference(feat_bf16, W1, B1, W2, B2, W3, B3, W4, B4):
    """Plain-jnp tower with the same precision path (bf16 operands, f32 acc)."""
    h = jnp.dot(feat_bf16, W1, preferred_element_type=jnp.float32)
    h = _leaky_relu(h + B1)
    h = jnp.dot(h.astype(jnp.bfloat16), W2, preferred_element_type=jnp.float32)
    h = _leaky_relu(h + B2)
    h = jnp.dot(h.astype(jnp.bfloat16), W3, preferred_element_type=jnp.float32)
    h = _leaky_relu(h + B3)
    return jnp.sum(h * W4, axis=-1, keepdims=True) + B4


@jax.jit
def reference_forward(x_idx, params):
    feat = gather_features(x_idx, params["emb"])             # (2, B, 1088) bf16
    W1, B1, W2, B2, W3, B3, W4, B4 = params["mlp"]
    cvr = _tower_reference(feat[0], W1[0], B1[0], W2[0], B2[0],
                           W3[0], B3[0], W4[0], B4[0])
    dly = _tower_reference(feat[1], W1[1], B1[1], W2[1], B2[1],
                           W3[1], B3[1], W4[1], B4[1])
    return {"logits": cvr, "log_lamb": dly}


# --------------------------------- Main -------------------------------------
if __name__ == "__main__":
    key = jax.random.PRNGKey(0)
    k_cvr, k_delay, k_x = jax.random.split(key, 3)

    # Two independent towers (DFM: CVR_MLP and Delay_MLP, both MLP_SIG).
    cvr_tower = init_mlp_tower(k_cvr)
    delay_tower = init_mlp_tower(k_delay)

    # One-time packing (stacked bf16 weights + fused embedding table).
    params = build_dfm_params(cvr_tower, delay_tower)
    params = jax.tree_util.tree_map(jax.block_until_ready, params)

    # Input: (B, 18) int indices. col 17 is the (unused) elapse slot.
    B = 512
    col_sizes = NUMERIC_SIZES + CATEGORY_SIZES + [2]
    xkeys = jax.random.split(k_x, len(col_sizes))
    x_cols = [jax.random.randint(kk, (B, 1), 0, n, dtype=jnp.int32)
              for kk, n in zip(xkeys, col_sizes)]
    x_idx = jnp.concatenate(x_cols, axis=1)                 # (512, 18)

    out = dfm_forward(x_idx, params)
    jax.block_until_ready(out)

    # Correctness check against a plain-jnp reference with the same precision path.
    ref = reference_forward(x_idx, params)
    np.testing.assert_allclose(np.asarray(out["logits"]), np.asarray(ref["logits"]),
                               rtol=2e-2, atol=1e-5)
    np.testing.assert_allclose(np.asarray(out["log_lamb"]), np.asarray(ref["log_lamb"]),
                               rtol=2e-2, atol=1e-5)

    assert out["logits"].shape == (B, 1)
    assert out["log_lamb"].shape == (B, 1)
    print("KERNEL_OK")
</pallas_src>

<mosaic_0001>
module attributes {stable_mosaic.version = 11 : i64} {
  func.func @fused_dfm_kernel(%arg0: i32, %arg1: i32, %arg2: memref<1x512x1088xbf16, #tpu.memory_space<vmem>>, %arg3: memref<1x1088x256xbf16, #tpu.memory_space<vmem>>, %arg4: memref<1x1x256xf32, #tpu.memory_space<vmem>>, %arg5: memref<1x256x256xbf16, #tpu.memory_space<vmem>>, %arg6: memref<1x1x256xf32, #tpu.memory_space<vmem>>, %arg7: memref<1x256x128xbf16, #tpu.memory_space<vmem>>, %arg8: memref<1x1x128xf32, #tpu.memory_space<vmem>>, %arg9: memref<1x1x128xf32, #tpu.memory_space<vmem>>, %arg10: memref<1x1x1xf32, #tpu.memory_space<vmem>>, %arg11: memref<1x512x1xf32, #tpu.memory_space<vmem>>) attributes {dimension_semantics = [#tpu.dimension_semantics<parallel>, #tpu.dimension_semantics<parallel>], iteration_bounds = array<i64: 2, 1>, scalar_prefetch = 0 : i64, scratch_operands = 0 : i64, tpu.core_type = #tpu.core_type<tc>, window_params = [{transform_indices = @transform_0, window_bounds = array<i64: 1, 512, 1088>}, {transform_indices = @transform_1, window_bounds = array<i64: 1, 1088, 256>}, {transform_indices = @transform_2, window_bounds = array<i64: 1, 1, 256>}, {transform_indices = @transform_3, window_bounds = array<i64: 1, 256, 256>}, {transform_indices = @transform_4, window_bounds = array<i64: 1, 1, 256>}, {transform_indices = @transform_5, window_bounds = array<i64: 1, 256, 128>}, {transform_indices = @transform_6, window_bounds = array<i64: 1, 1, 128>}, {transform_indices = @transform_7, window_bounds = array<i64: 1, 1, 128>}, {transform_indices = @transform_8, window_bounds = array<i64: 1, 1, 1>}, {transform_indices = @transform_9, window_bounds = array<i64: 1, 512, 1>}]} {
    %c0 = arith.constant 0 : index
    %c0_0 = arith.constant 0 : index
    %c0_1 = arith.constant 0 : index
    %0 = vector.load %arg2[%c0, %c0_0, %c0_1] : memref<1x512x1088xbf16, #tpu.memory_space<vmem>>, vector<1x512x1088xbf16>
    %1 = vector.shape_cast %0 : vector<1x512x1088xbf16> to vector<512x1088xbf16>
    %c0_2 = arith.constant 0 : index
    %c0_3 = arith.constant 0 : index
    %c0_4 = arith.constant 0 : index
    %2 = vector.load %arg3[%c0_2, %c0_3, %c0_4] : memref<1x1088x256xbf16, #tpu.memory_space<vmem>>, vector<1x1088x256xbf16>
    %3 = vector.shape_cast %2 : vector<1x1088x256xbf16> to vector<1088x256xbf16>
    %cst = arith.constant dense<0.000000e+00> : vector<512x256xf32>
    %4 = tpu.matmul %1, %3, %cst {dimension_numbers = #tpu.dot_dimension_numbers<[1], [0], [0], [1], [0, 0, 1, 1], [], []>} : vector<512x1088xbf16>, vector<1088x256xbf16>, vector<512x256xf32> -> vector<512x256xf32>
    %c0_5 = arith.constant 0 : index
    %c0_6 = arith.constant 0 : index
    %c0_7 = arith.constant 0 : index
    %5 = vector.load %arg4[%c0_5, %c0_6, %c0_7] : memref<1x1x256xf32, #tpu.memory_space<vmem>>, vector<1x1x256xf32>
    %6 = vector.shape_cast %5 : vector<1x1x256xf32> to vector<1x256xf32>
    %7 = vector.broadcast %6 : vector<1x256xf32> to vector<512x256xf32>
    %8 = arith.addf %4, %7 : vector<512x256xf32>
    %cst_8 = arith.constant 0.000000e+00 : f32
    %9 = vector.broadcast %cst_8 : f32 to vector<512x256xf32>
    %10 = arith.cmpf ogt, %8, %9 : vector<512x256xf32>
    %cst_9 = arith.constant 0.00999999977 : f32
    %11 = vector.broadcast %cst_9 : f32 to vector<512x256xf32>
    %12 = arith.mulf %11, %8 : vector<512x256xf32>
    %13 = arith.select %10, %8, %12 : vector<512x256xi1>, vector<512x256xf32>
    %14 = arith.truncf %13 : vector<512x256xf32> to vector<512x256xbf16>
    %c0_10 = arith.constant 0 : index
    %c0_11 = arith.constant 0 : index
    %c0_12 = arith.constant 0 : index
    %15 = vector.load %arg5[%c0_10, %c0_11, %c0_12] : memref<1x256x256xbf16, #tpu.memory_space<vmem>>, vector<1x256x256xbf16>
    %16 = vector.shape_cast %15 : vector<1x256x256xbf16> to vector<256x256xbf16>
    %cst_13 = arith.constant dense<0.000000e+00> : vector<512x256xf32>
    %17 = tpu.matmul %14, %16, %cst_13 {dimension_numbers = #tpu.dot_dimension_numbers<[1], [0], [0], [1], [0, 0, 1, 1], [], []>} : vector<512x256xbf16>, vector<256x256xbf16>, vector<512x256xf32> -> vector<512x256xf32>
    %c0_14 = arith.constant 0 : index
    %c0_15 = arith.constant 0 : index
    %c0_16 = arith.constant 0 : index
    %18 = vector.load %arg6[%c0_14, %c0_15, %c0_16] : memref<1x1x256xf32, #tpu.memory_space<vmem>>, vector<1x1x256xf32>
    %19 = vector.shape_cast %18 : vector<1x1x256xf32> to vector<1x256xf32>
    %20 = vector.broadcast %19 : vector<1x256xf32> to vector<512x256xf32>
    %21 = arith.addf %17, %20 : vector<512x256xf32>
    %cst_17 = arith.constant 0.000000e+00 : f32
    %22 = vector.broadcast %cst_17 : f32 to vector<512x256xf32>
    %23 = arith.cmpf ogt, %21, %22 : vector<512x256xf32>
    %cst_18 = arith.constant 0.00999999977 : f32
    %24 = vector.broadcast %cst_18 : f32 to vector<512x256xf32>
    %25 = arith.mulf %24, %21 : vector<512x256xf32>
    %26 = arith.select %23, %21, %25 : vector<512x256xi1>, vector<512x256xf32>
    %27 = arith.truncf %26 : vector<512x256xf32> to vector<512x256xbf16>
    %c0_19 = arith.constant 0 : index
    %c0_20 = arith.constant 0 : index
    %c0_21 = arith.constant 0 : index
    %28 = vector.load %arg7[%c0_19, %c0_20, %c0_21] : memref<1x256x128xbf16, #tpu.memory_space<vmem>>, vector<1x256x128xbf16>
    %29 = vector.shape_cast %28 : vector<1x256x128xbf16> to vector<256x128xbf16>
    %cst_22 = arith.constant dense<0.000000e+00> : vector<512x128xf32>
    %30 = tpu.matmul %27, %29, %cst_22 {dimension_numbers = #tpu.dot_dimension_numbers<[1], [0], [0], [1], [0, 0, 1, 1], [], []>} : vector<512x256xbf16>, vector<256x128xbf16>, vector<512x128xf32> -> vector<512x128xf32>
    %c0_23 = arith.constant 0 : index
    %c0_24 = arith.constant 0 : index
    %c0_25 = arith.constant 0 : index
    %31 = vector.load %arg8[%c0_23, %c0_24, %c0_25] : memref<1x1x128xf32, #tpu.memory_space<vmem>>, vector<1x1x128xf32>
    %32 = vector.shape_cast %31 : vector<1x1x128xf32> to vector<1x128xf32>
    %33 = vector.broadcast %32 : vector<1x128xf32> to vector<512x128xf32>
    %34 = arith.addf %30, %33 : vector<512x128xf32>
    %cst_26 = arith.constant 0.000000e+00 : f32
    %35 = vector.broadcast %cst_26 : f32 to vector<512x128xf32>
    %36 = arith.cmpf ogt, %34, %35 : vector<512x128xf32>
    %cst_27 = arith.constant 0.00999999977 : f32
    %37 = vector.broadcast %cst_27 : f32 to vector<512x128xf32>
    %38 = arith.mulf %37, %34 : vector<512x128xf32>
    %39 = arith.select %36, %34, %38 : vector<512x128xi1>, vector<512x128xf32>
    %c0_28 = arith.constant 0 : index
    %c0_29 = arith.constant 0 : index
    %c0_30 = arith.constant 0 : index
    %40 = vector.load %arg9[%c0_28, %c0_29, %c0_30] : memref<1x1x128xf32, #tpu.memory_space<vmem>>, vector<1x1x128xf32>
    %41 = vector.shape_cast %40 : vector<1x1x128xf32> to vector<1x128xf32>
    %42 = vector.broadcast %41 : vector<1x128xf32> to vector<512x128xf32>
    %43 = arith.mulf %39, %42 : vector<512x128xf32>
    %cst_31 = arith.constant dense<0.000000e+00> : vector<512xf32>
    %44 = vector.multi_reduction <add>, %43, %cst_31 [1] : vector<512x128xf32> to vector<512xf32>
    %45 = vector.shape_cast %44 : vector<512xf32> to vector<512x1xf32>
    %c0_32 = arith.constant 0 : index
    %c0_33 = arith.constant 0 : index
    %c0_34 = arith.constant 0 : index
    %46 = vector.load %arg10[%c0_32, %c0_33, %c0_34] : memref<1x1x1xf32, #tpu.memory_space<vmem>>, vector<1x1x1xf32>
    %47 = vector.shape_cast %46 : vector<1x1x1xf32> to vector<1x1xf32>
    %48 = vector.broadcast %47 : vector<1x1xf32> to vector<512x1xf32>
    %49 = arith.addf %45, %48 : vector<512x1xf32>
    %c0_35 = arith.constant 0 : index
    %c0_36 = arith.constant 0 : index
    %c0_37 = arith.constant 0 : index
    %50 = vector.load %arg11[%c0_35, %c0_36, %c0_37] : memref<1x512x1xf32, #tpu.memory_space<vmem>>, vector<1x512x1xf32>
    %51 = vector.shape_cast %50 : vector<1x512x1xf32> to vector<512x1xf32>
    %52 = vector.shape_cast %49 : vector<512x1xf32> to vector<1x512x1xf32>
    tpu.vector_store %arg11[%c0_35, %c0_36, %c0_37], %52 {strides = array<i32>} : memref<1x512x1xf32, #tpu.memory_space<vmem>>, vector<1x512x1xf32>,
    return
  }
  func.func @transform_0(%arg0: i32, %arg1: i32) -> (i32, i32, i32) {
    %c0_i32 = arith.constant 0 : i32
    %c0_i32_0 = arith.constant 0 : i32
    return %arg0, %arg1, %c0_i32 : i32, i32, i32
  }
  func.func @transform_1(%arg0: i32, %arg1: i32) -> (i32, i32, i32) {
    %c0_i32 = arith.constant 0 : i32
    %c0_i32_0 = arith.constant 0 : i32
    %c0_i32_1 = arith.constant 0 : i32
    return %arg0, %c0_i32, %c0_i32_0 : i32, i32, i32
  }
  func.func @transform_2(%arg0: i32, %arg1: i32) -> (i32, i32, i32) {
    %c0_i32 = arith.constant 0 : i32
    %c0_i32_0 = arith.constant 0 : i32
    %c0_i32_1 = arith.constant 0 : i32
    return %arg0, %c0_i32, %c0_i32_0 : i32, i32, i32
  }
  func.func @transform_3(%arg0: i32, %arg1: i32) -> (i32, i32, i32) {
    %c0_i32 = arith.constant 0 : i32
    %c0_i32_0 = arith.constant 0 : i32
    %c0_i32_1 = arith.constant 0 : i32
    return %arg0, %c0_i32, %c0_i32_0 : i32, i32, i32
  }
  func.func @transform_4(%arg0: i32, %arg1: i32) -> (i32, i32, i32) {
    %c0_i32 = arith.constant 0 : i32
    %c0_i32_0 = arith.constant 0 : i32
    %c0_i32_1 = arith.constant 0 : i32
    return %arg0, %c0_i32, %c0_i32_0 : i32, i32, i32
  }
  func.func @transform_5(%arg0: i32, %arg1: i32) -> (i32, i32, i32) {
    %c0_i32 = arith.constant 0 : i32
    %c0_i32_0 = arith.constant 0 : i32
    %c0_i32_1 = arith.constant 0 : i32
    return %arg0, %c0_i32, %c0_i32_0 : i32, i32, i32
  }
  func.func @transform_6(%arg0: i32, %arg1: i32) -> (i32, i32, i32) {
    %c0_i32 = arith.constant 0 : i32
    %c0_i32_0 = arith.constant 0 : i32
    %c0_i32_1 = arith.constant 0 : i32
    return %arg0, %c0_i32, %c0_i32_0 : i32, i32, i32
  }
  func.func @transform_7(%arg0: i32, %arg1: i32) -> (i32, i32, i32) {
    %c0_i32 = arith.constant 0 : i32
    %c0_i32_0 = arith.constant 0 : i32
    %c0_i32_1 = arith.constant 0 : i32
    return %arg0, %c0_i32, %c0_i32_0 : i32, i32, i32
  }
  func.func @transform_8(%arg0: i32, %arg1: i32) -> (i32, i32, i32) {
    %c0_i32 = arith.constant 0 : i32
    %c0_i32_0 = arith.constant 0 : i32
    %c0_i32_1 = arith.constant 0 : i32
    return %arg0, %c0_i32, %c0_i32_0 : i32, i32, i32
  }
  func.func @transform_9(%arg0: i32, %arg1: i32) -> (i32, i32, i32) {
    %c0_i32 = arith.constant 0 : i32
    %c0_i32_0 = arith.constant 0 : i32
    return %arg0, %arg1, %c0_i32 : i32, i32, i32
  }
}

</mosaic_0001>

<llo_original>
// kernel: dfm_forward.1
$region0: #{dfm_forward.1}
  #allocation0 [shape = 'u32[]', space=smem, size = 0x4, offset = 0x4, fixed_abs, tag = 'smem constant byte address 0x4 - core index']
  #allocation1 [shape = 'u32[72,128]{1,0:T(1,128)}', space=vmem, size = 0x9000, scoped, tag = 'internal scratch']
  %s0 = inlined_call_operand.vmem [shape: bf16[2,512,1088], index: 0, kind: input, shape index: {}]
  %s1 = inlined_call_operand.vmem [shape: bf16[2,1088,256], index: 1, kind: input, shape index: {}]
  %s2 = inlined_call_operand.vmem [shape: f32[2,1,256], index: 2, kind: input, shape index: {}]
  %s3 = inlined_call_operand.vmem [shape: bf16[2,256,256], index: 3, kind: input, shape index: {}]
  %s4 = inlined_call_operand.vmem [shape: f32[2,1,256], index: 4, kind: input, shape index: {}]
  %s5 = inlined_call_operand.vmem [shape: bf16[2,256,128], index: 5, kind: input, shape index: {}]
  %s6 = inlined_call_operand.vmem [shape: f32[2,1,128], index: 6, kind: input, shape index: {}]
  %s7 = inlined_call_operand.vmem [shape: f32[2,1,128], index: 7, kind: input, shape index: {}]
  %s8 = inlined_call_operand.vmem [shape: f32[2,1,1], index: 8, kind: input, shape index: {}]
  %s9 = inlined_call_operand.vmem [shape: f32[2,512,1], index: 9, kind: output, shape index: {}]
  %s10 = sld [smem:[#allocation0]]
  $region69: #{dfm_forward.1} parent=0
    _
  %s12 = ssub.s32 1, %s10
  %s13 = scalar_select 0, %s12, %s10
  loop: start=0, step=1, limit=4
  $region2: #{dfm_forward.1} parent=0 // loop_pre_header
    _
  $region3: #{dfm_forward.1} parent=0 // loop_header
    %s15 = sphi 0, %s19
    %p16 = scmp.ge.s32.totalorder %s15, 4
    %s22 = sphi 0, %s34
    %s23 = sphi 0, %s30
    %s24 = sphi 0, %s22
    %s25 = sphi 0, %s23
    %s26 = sphi 0, %s24
    %s27 = sphi 0, %s25
    %s39 = sphi 0, %s41
    %s42 = sphi 0, %s39
    %s43 = sphi 0, %s42
    %s59 = sphi 0, %s43
    %s65 = sphi 0, %s67
    %s68 = sphi 0, %s65
    %s69 = sphi 0, %s68
    %s85 = sphi 0, %s69
    %s91 = sphi 0, %s93
    %s94 = sphi 0, %s91
    %s95 = sphi 0, %s94
    %s111 = sphi 0, %s95
    %s117 = sphi 0, %s119
    %s120 = sphi 0, %s117
    %s121 = sphi 0, %s120
    %s137 = sphi 0, %s121
    %s143 = sphi 0, %s145
    %s146 = sphi 0, %s143
    %s147 = sphi 0, %s146
    %s163 = sphi 0, %s147
    %s169 = sphi 0, %s171
    %s172 = sphi 0, %s169
    %s173 = sphi 0, %s172
    %s189 = sphi 0, %s173
    %s195 = sphi 0, %s197
    %s198 = sphi 0, %s195
    %s199 = sphi 0, %s198
    %s215 = sphi 0, %s199
    %s221 = sphi 0, %s223
    %s224 = sphi 0, %s221
    %s225 = sphi 0, %s224
    %s241 = sphi 0, %s225
    %s247 = sphi 0, %s249
    %s250 = sphi 0, %s247
    %s251 = sphi 0, %s250
    %s267 = sphi 0, %s251
    %s275 = sphi 0, %s277
    %s278 = sphi 0, %s275
    %s279 = sphi 0, %s278
    %s295 = sphi 0, %s279
  $region4: #{dfm_forward.1} parent=0 // loop_header_branch
    %18 = sbr.rel (%p16) target = $region8
  $region5: #{dfm_forward.1} parent=0 // loop_body
    %s20 = ssub.s32 %s15, 1
    %s21 = ssub.s32 %s15, 2
    %s28 = sadd.s32 1, %s23
    %p29 = scmp.ge.s32.totalorder %s28, 1
    %s30 = scalar_select %p29, 0, %s28
    %s31 = sadd.s32 1, %s22
    %s32 = scalar_select %p29, %s31, %s22
    %p33 = scmp.ge.s32.totalorder %s32, 2
    %s34 = scalar_select %p33, 0, %s32
    %s35 = ssub.s32 %s22, %s34
    %s36 = ssub.s32 %s23, %s30
    %s37 = sor.u32 %s35, %s36
    %p38 = scmp.eq.s32.totalorder %s37, 0
    %s40 = sadd.s32 %s39, 1
    %s41 = scalar_select %p38, %s39, %s40
    %p44 = pneg %p38
    %p45 = scmp.eq.s32.totalorder %s15, 1
    %p46 = por %p44, %p45
    %p47 = scmp.ne.s32.totalorder %s39, %s42
    %p48 = scmp.eq.s32.totalorder %s15, 0
    %p49 = por %p47, %p48
    %p50 = scmp.ne.s32.totalorder %s39, %s42
    %p51 = scmp.eq.s32.totalorder %s20, 1
    %p52 = por %p50, %p51
    %p53 = scmp.ne.s32.totalorder %s42, %s43
    %p54 = scmp.eq.s32.totalorder %s20, 0
    %p55 = por %p53, %p54
    %p56 = scmp.ne.s32.totalorder %s42, %s43
    %p57 = scmp.eq.s32.totalorder %s21, 1
    %p58 = por %p56, %p57
    %p60 = scmp.ne.s32.totalorder %s43, %s59
    %p61 = scmp.eq.s32.totalorder %s21, 0
    %p62 = por %p60, %p61
    %s63 = ssub.s32 %s22, %s34
    %p64 = scmp.eq.s32.totalorder %s63, 0
    %s66 = sadd.s32 %s65, 1
    %s67 = scalar_select %p64, %s65, %s66
    %p70 = pneg %p64
    %p71 = scmp.eq.s32.totalorder %s15, 1
    %p72 = por %p70, %p71
    %p73 = scmp.ne.s32.totalorder %s65, %s68
    %p74 = scmp.eq.s32.totalorder %s15, 0
    %p75 = por %p73, %p74
    %p76 = scmp.ne.s32.totalorder %s65, %s68
    %p77 = scmp.eq.s32.totalorder %s20, 1
    %p78 = por %p76, %p77
    %p79 = scmp.ne.s32.totalorder %s68, %s69
    %p80 = scmp.eq.s32.totalorder %s20, 0
    %p81 = por %p79, %p80
    %p82 = scmp.ne.s32.totalorder %s68, %s69
    %p83 = scmp.eq.s32.totalorder %s21, 1
    %p84 = por %p82, %p83
    %p86 = scmp.ne.s32.totalorder %s69, %s85
    %p87 = scmp.eq.s32.totalorder %s21, 0
    %p88 = por %p86, %p87
    %s89 = ssub.s32 %s22, %s34
    %p90 = scmp.eq.s32.totalorder %s89, 0
    %s92 = sadd.s32 %s91, 1
    %s93 = scalar_select %p90, %s91, %s92
    %p96 = pneg %p90
    %p97 = scmp.eq.s32.totalorder %s15, 1
    %p98 = por %p96, %p97
    %p99 = scmp.ne.s32.totalorder %s91, %s94
    %p100 = scmp.eq.s32.totalorder %s15, 0
    %p101 = por %p99, %p100
    %p102 = scmp.ne.s32.totalorder %s91, %s94
    %p103 = scmp.eq.s32.totalorder %s20, 1
    %p104 = por %p102, %p103
    %p105 = scmp.ne.s32.totalorder %s94, %s95
    %p106 = scmp.eq.s32.totalorder %s20, 0
    %p107 = por %p105, %p106
    %p108 = scmp.ne.s32.totalorder %s94, %s95
    %p109 = scmp.eq.s32.totalorder %s21, 1
    %p110 = por %p108, %p109
    %p112 = scmp.ne.s32.totalorder %s95, %s111
    %p113 = scmp.eq.s32.totalorder %s21, 0
    %p114 = por %p112, %p113
    %s115 = ssub.s32 %s22, %s34
    %p116 = scmp.eq.s32.totalorder %s115, 0
    %s118 = sadd.s32 %s117, 1
    %s119 = scalar_select %p116, %s117, %s118
    %p122 = pneg %p116
    %p123 = scmp.eq.s32.totalorder %s15, 1
    %p124 = por %p122, %p123
    %p125 = scmp.ne.s32.totalorder %s117, %s120
    %p126 = scmp.eq.s32.totalorder %s15, 0
    %p127 = por %p125, %p126
    %p128 = scmp.ne.s32.totalorder %s117, %s120
    %p129 = scmp.eq.s32.totalorder %s20, 1
    %p130 = por %p128, %p129
    %p131 = scmp.ne.s32.totalorder %s120, %s121
    %p132 = scmp.eq.s32.totalorder %s20, 0
    %p133 = por %p131, %p132
    %p134 = scmp.ne.s32.totalorder %s120, %s121
    %p135 = scmp.eq.s32.totalorder %s21, 1
    %p136 = por %p134, %p135
    %p138 = scmp.ne.s32.totalorder %s121, %s137
    %p139 = scmp.eq.s32.totalorder %s21, 0
    %p140 = por %p138, %p139
    %s141 = ssub.s32 %s22, %s34
    %p142 = scmp.eq.s32.totalorder %s141, 0
    %s144 = sadd.s32 %s143, 1
    %s145 = scalar_select %p142, %s143, %s144
    %p148 = pneg %p142
    %p149 = scmp.eq.s32.totalorder %s15, 1
    %p150 = por %p148, %p149
    %p151 = scmp.ne.s32.totalorder %s143, %s146
    %p152 = scmp.eq.s32.totalorder %s15, 0
    %p153 = por %p151, %p152
    %p154 = scmp.ne.s32.totalorder %s143, %s146
    %p155 = scmp.eq.s32.totalorder %s20, 1
    %p156 = por %p154, %p155
    %p157 = scmp.ne.s32.totalorder %s146, %s147
    %p158 = scmp.eq.s32.totalorder %s20, 0
    %p159 = por %p157, %p158
    %p160 = scmp.ne.s32.totalorder %s146, %s147
    %p161 = scmp.eq.s32.totalorder %s21, 1
    %p162 = por %p160, %p161
    %p164 = scmp.ne.s32.totalorder %s147, %s163
    %p165 = scmp.eq.s32.totalorder %s21, 0
    %p166 = por %p164, %p165
    %s167 = ssub.s32 %s22, %s34
    %p168 = scmp.eq.s32.totalorder %s167, 0
    %s170 = sadd.s32 %s169, 1
    %s171 = scalar_select %p168, %s169, %s170
    %p174 = pneg %p168
    %p175 = scmp.eq.s32.totalorder %s15, 1
    %p176 = por %p174, %p175
    %p177 = scmp.ne.s32.totalorder %s169, %s172
    %p178 = scmp.eq.s32.totalorder %s15, 0
    %p179 = por %p177, %p178
    %p180 = scmp.ne.s32.totalorder %s169, %s172
    %p181 = scmp.eq.s32.totalorder %s20, 1
    %p182 = por %p180, %p181
    %p183 = scmp.ne.s32.totalorder %s172, %s173
    %p184 = scmp.eq.s32.totalorder %s20, 0
    %p185 = por %p183, %p184
    %p186 = scmp.ne.s32.totalorder %s172, %s173
    %p187 = scmp.eq.s32.totalorder %s21, 1
    %p188 = por %p186, %p187
    %p190 = scmp.ne.s32.totalorder %s173, %s189
    %p191 = scmp.eq.s32.totalorder %s21, 0
    %p192 = por %p190, %p191
    %s193 = ssub.s32 %s22, %s34
    %p194 = scmp.eq.s32.totalorder %s193, 0
    %s196 = sadd.s32 %s195, 1
    %s197 = scalar_select %p194, %s195, %s196
    %p200 = pneg %p194
    %p201 = scmp.eq.s32.totalorder %s15, 1
    %p202 = por %p200, %p201
    %p203 = scmp.ne.s32.totalorder %s195, %s198
    %p204 = scmp.eq.s32.totalorder %s15, 0
    %p205 = por %p203, %p204
    %p206 = scmp.ne.s32.totalorder %s195, %s198
    %p207 = scmp.eq.s32.totalorder %s20, 1
    %p208 = por %p206, %p207
    %p209 = scmp.ne.s32.totalorder %s198, %s199
    %p210 = scmp.eq.s32.totalorder %s20, 0
    %p211 = por %p209, %p210
    %p212 = scmp.ne.s32.totalorder %s198, %s199
    %p213 = scmp.eq.s32.totalorder %s21, 1
    %p214 = por %p212, %p213
    %p216 = scmp.ne.s32.totalorder %s199, %s215
    %p217 = scmp.eq.s32.totalorder %s21, 0
    %p218 = por %p216, %p217
    %s219 = ssub.s32 %s22, %s34
    %p220 = scmp.eq.s32.totalorder %s219, 0
    %s222 = sadd.s32 %s221, 1
    %s223 = scalar_select %p220, %s221, %s222
    %p226 = pneg %p220
    %p227 = scmp.eq.s32.totalorder %s15, 1
    %p228 = por %p226, %p227
    %p229 = scmp.ne.s32.totalorder %s221, %s224
    %p230 = scmp.eq.s32.totalorder %s15, 0
    %p231 = por %p229, %p230
    %p232 = scmp.ne.s32.totalorder %s221, %s224
    %p233 = scmp.eq.s32.totalorder %s20, 1
    %p234 = por %p232, %p233
    %p235 = scmp.ne.s32.totalorder %s224, %s225
    %p236 = scmp.eq.s32.totalorder %s20, 0
    %p237 = por %p235, %p236
    %p238 = scmp.ne.s32.totalorder %s224, %s225
    %p239 = scmp.eq.s32.totalorder %s21, 1
    %p240 = por %p238, %p239
    %p242 = scmp.ne.s32.totalorder %s225, %s241
    %p243 = scmp.eq.s32.totalorder %s21, 0
    %p244 = por %p242, %p243
    %s245 = ssub.s32 %s22, %s34
    %p246 = scmp.eq.s32.totalorder %s245, 0
    %s248 = sadd.s32 %s247, 1
    %s249 = scalar_select %p246, %s247, %s248
    %p252 = pneg %p246
    %p253 = scmp.eq.s32.totalorder %s15, 1
    %p254 = por %p252, %p253
    %p255 = scmp.ne.s32.totalorder %s247, %s250
    %p256 = scmp.eq.s32.totalorder %s15, 0
    %p257 = por %p255, %p256
    %p258 = scmp.ne.s32.totalorder %s247, %s250
    %p259 = scmp.eq.s32.totalorder %s20, 1
    %p260 = por %p258, %p259
    %p261 = scmp.ne.s32.totalorder %s250, %s251
    %p262 = scmp.eq.s32.totalorder %s20, 0
    %p263 = por %p261, %p262
    %p264 = scmp.ne.s32.totalorder %s250, %s251
    %p265 = scmp.eq.s32.totalorder %s21, 1
    %p266 = por %p264, %p265
    %p268 = scmp.ne.s32.totalorder %s251, %s267
    %p269 = scmp.eq.s32.totalorder %s21, 0
    %p270 = por %p268, %p269
    %s271 = ssub.s32 %s22, %s34
    %s272 = ssub.s32 %s23, %s30
    %s273 = sor.u32 %s271, %s272
    %p274 = scmp.eq.s32.totalorder %s273, 0
    %s276 = sadd.s32 %s275, 1
    %s277 = scalar_select %p274, %s275, %s276
    %p280 = pneg %p274
    %p281 = scmp.eq.s32.totalorder %s15, 1
    %p282 = por %p280, %p281
    %p283 = scmp.ne.s32.totalorder %s275, %s278
    %p284 = scmp.eq.s32.totalorder %s15, 0
    %p285 = por %p283, %p284
    %p286 = scmp.ne.s32.totalorder %s275, %s278
    %p287 = scmp.eq.s32.totalorder %s20, 1
    %p288 = por %p286, %p287
    %p289 = scmp.ne.s32.totalorder %s278, %s279
    %p290 = scmp.eq.s32.totalorder %s20, 0
    %p291 = por %p289, %p290
    %p292 = scmp.ne.s32.totalorder %s278, %s279
    %p293 = scmp.eq.s32.totalorder %s21, 1
    %p294 = por %p292, %p293
    %p296 = scmp.ne.s32.totalorder %s279, %s295
    %p297 = scmp.eq.s32.totalorder %s21, 0
    %p298 = por %p296, %p297
    %p299 = scmp.le.s32.totalorder 1, %s15
    %p300 = scmp.lt.s32.totalorder %s15, 3
    %p301 = pnand %p299, %p300
    %p302 = pneg %p301
    // Predicated region
    $region9: #{dfm_forward.1} parent=5 // pred_check
      _
    $region10: #{dfm_forward.1} parent=5 // pred_check_branch
      %304 = sbr.rel (%p301) target = $region12
    $region11: #{dfm_forward.1} parent=5 // pred_region
      %s305 = ssub.s32 %s15, 1
    $region12: #{dfm_forward.1} parent=5 // pred_fallthru
      _
    %p306 = scmp.lt.s32.totalorder %s15, 2
    // Predicated region
    $region13: #{dfm_forward.1} parent=5 // pred_check
      %p307 = pneg %p306
    $region14: #{dfm_forward.1} parent=5 // pred_check_branch
      %309 = sbr.rel (%p307) target = $region16
    $region15: #{dfm_forward.1} parent=5 // pred_region
      // Predicated region
      $region17: #{dfm_forward.1} parent=15 // pred_check
        %p310 = pneg %p49
      $region18: #{dfm_forward.1} parent=15 // pred_check_branch
        %312 = sbr.rel (%p310) target = $region20
      $region19: #{dfm_forward.1} parent=15 // pred_region
        %s313 = smul.u32 64, %s23
        %p314 = scmp.lt.s32.totalorder %s22, 1
        %s315 = scalar_select %p314, %s22, 1
        %p316 = scmp.lt.s32.totalorder %s313, 63
        %s317 = scalar_select %p316, %s313, 63
        %s318 = smul.addr %s317, 9
        %s319 = smul.addr %s315, 576
        %s320 = sadd.s32 %s318, %s319
        %s321 = smul.addr %s320, 4
        %s322 = scalar_lea.vmem %s0, %s321
        %s323 = smul.u32 64, %s23
      $region20: #{dfm_forward.1} parent=15 // pred_fallthru
        _
      // Predicated region
      $region21: #{dfm_forward.1} parent=15 // pred_check
        %p324 = pneg %p75
      $region22: #{dfm_forward.1} parent=15 // pred_check_branch
        %326 = sbr.rel (%p324) target = $region24
      $region23: #{dfm_forward.1} parent=15 // pred_region
        %p327 = scmp.lt.s32.totalorder %s22, 1
        %s328 = scalar_select %p327, %s22, 1
        %s329 = smul.addr %s328, 272
        %s330 = smul.addr %s329, 4
        %s331 = scalar_lea.vmem %s1, %s330
      $region24: #{dfm_forward.1} parent=15 // pred_fallthru
        _
      // Predicated region
      $region25: #{dfm_forward.1} parent=15 // pred_check
        %p332 = pneg %p101
      $region26: #{dfm_forward.1} parent=15 // pred_check_branch
        %334 = sbr.rel (%p332) target = $region28
      $region27: #{dfm_forward.1} parent=15 // pred_region
        %p335 = scmp.lt.s32.totalorder %s22, 1
        %s336 = scalar_select %p335, %s22, 1
        %s337 = smul.addr %s336, 2
        %s338 = scalar_lea.vmem %s2, %s337
      $region28: #{dfm_forward.1} parent=15 // pred_fallthru
        _
      // Predicated region
      $region29: #{dfm_forward.1} parent=15 // pred_check
        %p339 = pneg %p127
      $region30: #{dfm_forward.1} parent=15 // pred_check_branch
        %341 = sbr.rel (%p339) target = $region32
      $region31: #{dfm_forward.1} parent=15 // pred_region
        %p342 = scmp.lt.s32.totalorder %s22, 1
        %s343 = scalar_select %p342, %s22, 1
        %s344 = smul.addr %s343, 64
        %s345 = smul.addr %s344, 4
        %s346 = scalar_lea.vmem %s3, %s345
      $region32: #{dfm_forward.1} parent=15 // pred_fallthru
        _
      // Predicated region
      $region33: #{dfm_forward.1} parent=15 // pred_check
        %p347 = pneg %p153
      $region34: #{dfm_forward.1} parent=15 // pred_check_branch
        %349 = sbr.rel (%p347) target = $region36
      $region35: #{dfm_forward.1} parent=15 // pred_region
        %p350 = scmp.lt.s32.totalorder %s22, 1
        %s351 = scalar_select %p350, %s22, 1
        %s352 = smul.addr %s351, 2
        %s353 = scalar_lea.vmem %s4, %s352
      $region36: #{dfm_forward.1} parent=15 // pred_fallthru
        _
      // Predicated region
      $region37: #{dfm_forward.1} parent=15 // pred_check
        %p354 = pneg %p179
      $region38: #{dfm_forward.1} parent=15 // pred_check_branch
        %356 = sbr.rel (%p354) target = $region40
      $region39: #{dfm_forward.1} parent=15 // pred_region
        %p357 = scmp.lt.s32.totalorder %s22, 1
        %s358 = scalar_select %p357, %s22, 1
        %s359 = smul.addr %s358, 32
        %s360 = smul.addr %s359, 4
        %s361 = scalar_lea.vmem %s5, %s360
      $region40: #{dfm_forward.1} parent=15 // pred_fallthru
        _
      // Predicated region
      $region41: #{dfm_forward.1} parent=15 // pred_check
        %p362 = pneg %p205
      $region42: #{dfm_forward.1} parent=15 // pred_check_branch
        %364 = sbr.rel (%p362) target = $region44
      $region43: #{dfm_forward.1} parent=15 // pred_region
        %p365 = scmp.lt.s32.totalorder %s22, 1
        %s366 = scalar_select %p365, %s22, 1
        %s367 = scalar_lea.vmem %s6, %s366
      $region44: #{dfm_forward.1} parent=15 // pred_fallthru
        _
      // Predicated region
      $region45: #{dfm_forward.1} parent=15 // pred_check
        %p368 = pneg %p231
      $region46: #{dfm_forward.1} parent=15 // pred_check_branch
        %370 = sbr.rel (%p368) target = $region48
      $region47: #{dfm_forward.1} parent=15 // pred_region
        %p371 = scmp.lt.s32.totalorder %s22, 1
        %s372 = scalar_select %p371, %s22, 1
        %s373 = scalar_lea.vmem %s7, %s372
      $region48: #{dfm_forward.1} parent=15 // pred_fallthru
        _
      // Predicated region
      $region49: #{dfm_forward.1} parent=15 // pred_check
        %p374 = pneg %p257
      $region50: #{dfm_forward.1} parent=15 // pred_check_branch
        %376 = sbr.rel (%p374) target = $region52
      $region51: #{dfm_forward.1} parent=15 // pred_region
        %p377 = scmp.lt.s32.totalorder %s22, 1
        %s378 = scalar_select %p377, %s22, 1
        %s379 = scalar_lea.vmem %s8, %s378
      $region52: #{dfm_forward.1} parent=15 // pred_fallthru
        _
    $region16: #{dfm_forward.1} parent=5 // pred_fallthru
      _
    %p380 = scmp.le.s32.totalorder 1, %s15
    %p381 = scmp.lt.s32.totalorder %s15, 3
    %p382 = pnand %p380, %p381
    %p383 = pneg %p382
    // Predicated region
    $region53: #{dfm_forward.1} parent=5 // pred_check
      _
    $region54: #{dfm_forward.1} parent=5 // pred_check_branch
      %385 = sbr.rel (%p382) target = $region56
    $region55: #{dfm_forward.1} parent=5 // pred_region
      %s386 = ssub.s32 %s15, 1
      %s387 = smul.u32 64, %s25
      %p388 = scmp.lt.s32.totalorder %s24, 1
      %s389 = scalar_select %p388, %s24, 1
      %p390 = scmp.lt.s32.totalorder %s387, 63
      %s391 = scalar_select %p390, %s387, 63
      %s392 = smul.addr %s391, 9
      %s393 = smul.addr %s389, 576
      %s394 = sadd.s32 %s392, %s393
      %s395 = smul.addr %s394, 4
      %s396 = scalar_lea.vmem %s0, %s395
      %p397 = pneg %p55
      %p398 = pneg %p52
      %p399 = scmp.lt.s32.totalorder %s24, 1
      %s400 = scalar_select %p399, %s24, 1
      %s401 = smul.addr %s400, 272
      %s402 = smul.addr %s401, 4
      %s403 = scalar_lea.vmem %s1, %s402
      %p404 = pneg %p81
      %p405 = pneg %p78
      %p406 = scmp.lt.s32.totalorder %s24, 1
      %s407 = scalar_select %p406, %s24, 1
      %s408 = smul.addr %s407, 2
      %s409 = scalar_lea.vmem %s2, %s408
      %p410 = pneg %p107
      %p411 = pneg %p104
      %p412 = scmp.lt.s32.totalorder %s24, 1
      %s413 = scalar_select %p412, %s24, 1
      %s414 = smul.addr %s413, 64
      %s415 = smul.addr %s414, 4
      %s416 = scalar_lea.vmem %s3, %s415
      %p417 = pneg %p133
      %p418 = pneg %p130
      %p419 = scmp.lt.s32.totalorder %s24, 1
      %s420 = scalar_select %p419, %s24, 1
      %s421 = smul.addr %s420, 2
      %s422 = scalar_lea.vmem %s4, %s421
      %p423 = pneg %p159
      %p424 = pneg %p156
      %p425 = scmp.lt.s32.totalorder %s24, 1
      %s426 = scalar_select %p425, %s24, 1
      %s427 = smul.addr %s426, 32
      %s428 = smul.addr %s427, 4
      %s429 = scalar_lea.vmem %s5, %s428
      %p430 = pneg %p185
      %p431 = pneg %p182
      %p432 = scmp.lt.s32.totalorder %s24, 1
      %s433 = scalar_select %p432, %s24, 1
      %s434 = scalar_lea.vmem %s6, %s433
      %p435 = pneg %p211
      %p436 = pneg %p208
      %p437 = scmp.lt.s32.totalorder %s24, 1
      %s438 = scalar_select %p437, %s24, 1
      %s439 = scalar_lea.vmem %s7, %s438
      %p440 = pneg %p237
      %p441 = pneg %p234
      %p442 = scmp.lt.s32.totalorder %s24, 1
      %s443 = scalar_select %p442, %s24, 1
      %s444 = scalar_lea.vmem %s8, %s443
      %p445 = pneg %p263
      %p446 = pneg %p260
      %p447 = pneg %p291
      %p448 = pneg %p288
      %s449 = smul.u32 64, %s25
      %p450 = scmp.lt.s32.totalorder %s24, 1
      %s451 = scalar_select %p450, %s24, 1
      %p452 = scmp.lt.s32.totalorder %s449, 63
      %s453 = scalar_select %p452, %s449, 63
      %s454 = smul.addr %s451, 64
      %s455 = sadd.s32 %s453, %s454
      %s456 = smul.addr %s455, 8
      %s457 = scalar_lea.vmem %s9, %s456
      %s458 = smul.u32 64, %s25
      %p459 = scmp.lt.s32.totalorder %s24, 1
      %s460 = scalar_select %p459, %s24, 1
      %p461 = scmp.lt.s32.totalorder %s458, 63
      %s462 = scalar_select %p461, %s458, 63
      %s463 = smul.addr %s462, 9
      %s464 = smul.addr %s460, 576
      %s465 = sadd.s32 %s463, %s464
      %s466 = smul.addr %s465, 4
      %s467 = scalar_lea.vmem %s0, %s466
      %s468 = smul.u32 64, %s25
      %p469 = scmp.lt.s32.totalorder %s24, 1
      %s470 = scalar_select %p469, %s24, 1
      %s471 = smul.addr %s470, 272
      %s472 = smul.addr %s471, 4
      %s473 = scalar_lea.vmem %s1, %s472
      %p474 = scmp.lt.s32.totalorder %s24, 1
      %s475 = scalar_select %p474, %s24, 1
      %s476 = smul.addr %s475, 2
      %s477 = scalar_lea.vmem %s2, %s476
      %p478 = scmp.lt.s32.totalorder %s24, 1
      %s479 = scalar_select %p478, %s24, 1
      %s480 = smul.addr %s479, 64
      %s481 = smul.addr %s480, 4
      %s482 = scalar_lea.vmem %s3, %s481
      %p483 = scmp.lt.s32.totalorder %s24, 1
      %s484 = scalar_select %p483, %s24, 1
      %s485 = smul.addr %s484, 2
      %s486 = scalar_lea.vmem %s4, %s485
      %p487 = scmp.lt.s32.totalorder %s24, 1
      %s488 = scalar_select %p487, %s24, 1
      %s489 = smul.addr %s488, 32
      %s490 = smul.addr %s489, 4
      %s491 = scalar_lea.vmem %s5, %s490
      %p492 = scmp.lt.s32.totalorder %s24, 1
      %s493 = scalar_select %p492, %s24, 1
      %s494 = scalar_lea.vmem %s6, %s493
      %p495 = scmp.lt.s32.totalorder %s24, 1
      %s496 = scalar_select %p495, %s24, 1
      %s497 = scalar_lea.vmem %s7, %s496
      %p498 = scmp.lt.s32.totalorder %s24, 1
      %s499 = scalar_select %p498, %s24, 1
      %s500 = scalar_lea.vmem %s8, %s499
      %s501 = smul.u32 64, %s25
      %p502 = scmp.lt.s32.totalorder %s24, 1
      %s503 = scalar_select %p502, %s24, 1
      %p504 = scmp.lt.s32.totalorder %s501, 63
      %s505 = scalar_select %p504, %s501, 63
      %s506 = smul.addr %s503, 64
      %s507 = sadd.s32 %s505, %s506
      %s508 = smul.addr %s507, 8
      %s509 = scalar_lea.vmem %s9, %s508
      %s510 = smul.u32 64, %s25
      %v512 = vld [vmem:[%s467] sm:$0xff]
      %v513 = vld [vmem:[%s467 + $0x8] sm:$0xff]
      %v514 = vld [vmem:[%s467 + $0x10] sm:$0xff]
      %v515 = vld [vmem:[%s467 + $0x18] sm:$0xff]
      %v516 = vld [vmem:[%s467 + $0x20] sm:$0xf]
      %v517 = vld [vmem:[%s467 + $0x24] sm:$0xff]
      %v518 = vld [vmem:[%s467 + $0x2c] sm:$0xff]
      %v519 = vld [vmem:[%s467 + $0x34] sm:$0xff]
      %v520 = vld [vmem:[%s467 + $0x3c] sm:$0xff]
      %v521 = vld [vmem:[%s467 + $0x44] sm:$0xf]
      %v522 = vld [vmem:[%s467 + $0x48] sm:$0xff]
      %v523 = vld [vmem:[%s467 + $0x50] sm:$0xff]
      %v524 = vld [vmem:[%s467 + $0x58] sm:$0xff]
      %v525 = vld [vmem:[%s467 + $0x60] sm:$0xff]
      %v526 = vld [vmem:[%s467 + $0x68] sm:$0xf]
      %v527 = vld [vmem:[%s467 + $0x6c] sm:$0xff]
      %v528 = vld [vmem:[%s467 + $0x74] sm:$0xff]
      %v529 = vld [vmem:[%s467 + $0x7c] sm:$0xff]
      %v530 = vld [vmem:[%s467 + $0x84] sm:$0xff]
      %v531 = vld [vmem:[%s467 + $0x8c] sm:$0xf]
      %v532 = vld [vmem:[%s467 + $0x90] sm:$0xff]
      %v533 = vld [vmem:[%s467 + $0x98] sm:$0xff]
      %v534 = vld [vmem:[%s467 + $0xa0] sm:$0xff]
      %v535 = vld [vmem:[%s467 + $0xa8] sm:$0xff]
      %v536 = vld [vmem:[%s467 + $0xb0] sm:$0xf]
      %v537 = vld [vmem:[%s467 + $0xb4] sm:$0xff]
      %v538 = vld [vmem:[%s467 + $0xbc] sm:$0xff]
      %v539 = vld [vmem:[%s467 + $0xc4] sm:$0xff]
      %v540 = vld [vmem:[%s467 + $0xcc] sm:$0xff]
      %v541 = vld [vmem:[%s467 + $0xd4] sm:$0xf]
      %v542 = vld [vmem:[%s467 + $0xd8] sm:$0xff]
      %v543 = vld [vmem:[%s467 + $0xe0] sm:$0xff]
      %v544 = vld [vmem:[%s467 + $0xe8] sm:$0xff]
      %v545 = vld [vmem:[%s467 + $0xf0] sm:$0xff]
      %v546 = vld [vmem:[%s467 + $0xf8] sm:$0xf]
      %v547 = vld [vmem:[%s467 + $0xfc] sm:$0xff]
      %v548 = vld [vmem:[%s467 + $0x104] sm:$0xff]
      %v549 = vld [vmem:[%s467 + $0x10c] sm:$0xff]
      %v550 = vld [vmem:[%s467 + $0x114] sm:$0xff]
      %v551 = vld [vmem:[%s467 + $0x11c] sm:$0xf]
      %v552 = vld [vmem:[%s467 + $0x120] sm:$0xff]
      %v553 = vld [vmem:[%s467 + $0x128] sm:$0xff]
      %v554 = vld [vmem:[%s467 + $0x130] sm:$0xff]
      %v555 = vld [vmem:[%s467 + $0x138] sm:$0xff]
      %v556 = vld [vmem:[%s467 + $0x140] sm:$0xf]
      %v557 = vld [vmem:[%s467 + $0x144] sm:$0xff]
      %v558 = vld [vmem:[%s467 + $0x14c] sm:$0xff]
      %v559 = vld [vmem:[%s467 + $0x154] sm:$0xff]
      %v560 = vld [vmem:[%s467 + $0x15c] sm:$0xff]
      %v561 = vld [vmem:[%s467 + $0x164] sm:$0xf]
      %v562 = vld [vmem:[%s467 + $0x168] sm:$0xff]
      %v563 = vld [vmem:[%s467 + $0x170] sm:$0xff]
      %v564 = vld [vmem:[%s467 + $0x178] sm:$0xff]
      %v565 = vld [vmem:[%s467 + $0x180] sm:$0xff]
      %v566 = vld [vmem:[%s467 + $0x188] sm:$0xf]
      %v567 = vld [vmem:[%s467 + $0x18c] sm:$0xff]
      %v568 = vld [vmem:[%s467 + $0x194] sm:$0xff]
      %v569 = vld [vmem:[%s467 + $0x19c] sm:$0xff]
      %v570 = vld [vmem:[%s467 + $0x1a4] sm:$0xff]
      %v571 = vld [vmem:[%s467 + $0x1ac] sm:$0xf]
      %v572 = vld [vmem:[%s467 + $0x1b0] sm:$0xff]
      %v573 = vld [vmem:[%s467 + $0x1b8] sm:$0xff]
      %v574 = vld [vmem:[%s467 + $0x1c0] sm:$0xff]
      %v575 = vld [vmem:[%s467 + $0x1c8] sm:$0xff]
      %v576 = vld [vmem:[%s467 + $0x1d0] sm:$0xf]
      %v577 = vld [vmem:[%s467 + $0x1d4] sm:$0xff]
      %v578 = vld [vmem:[%s467 + $0x1dc] sm:$0xff]
      %v579 = vld [vmem:[%s467 + $0x1e4] sm:$0xff]
      %v580 = vld [vmem:[%s467 + $0x1ec] sm:$0xff]
      %v581 = vld [vmem:[%s467 + $0x1f4] sm:$0xf]
      %v582 = vld [vmem:[%s467 + $0x1f8] sm:$0xff]
      %v583 = vld [vmem:[%s467 + $0x200] sm:$0xff]
      %v584 = vld [vmem:[%s467 + $0x208] sm:$0xff]
      %v585 = vld [vmem:[%s467 + $0x210] sm:$0xff]
      %v586 = vld [vmem:[%s467 + $0x218] sm:$0xf]
      %v587 = vld [vmem:[%s467 + $0x21c] sm:$0xff]
      %v588 = vld [vmem:[%s467 + $0x224] sm:$0xff]
      %v589 = vld [vmem:[%s467 + $0x22c] sm:$0xff]
      %v590 = vld [vmem:[%s467 + $0x234] sm:$0xff]
      %v591 = vld [vmem:[%s467 + $0x23c] sm:$0xf]
      %v592 = vld [vmem:[%s467 + $0x240] sm:$0xff]
      %v593 = vld [vmem:[%s467 + $0x248] sm:$0xff]
      %v594 = vld [vmem:[%s467 + $0x250] sm:$0xff]
      %v595 = vld [vmem:[%s467 + $0x258] sm:$0xff]
      %v596 = vld [vmem:[%s467 + $0x260] sm:$0xf]
      %v597 = vld [vmem:[%s467 + $0x264] sm:$0xff]
      %v598 = vld [vmem:[%s467 + $0x26c] sm:$0xff]
      %v599 = vld [vmem:[%s467 + $0x274] sm:$0xff]
      %v600 = vld [vmem:[%s467 + $0x27c] sm:$0xff]
      %v601 = vld [vmem:[%s467 + $0x284] sm:$0xf]
      %v602 = vld [vmem:[%s467 + $0x288] sm:$0xff]
      %v603 = vld [vmem:[%s467 + $0x290] sm:$0xff]
      %v604 = vld [vmem:[%s467 + $0x298] sm:$0xff]
      %v605 = vld [vmem:[%s467 + $0x2a0] sm:$0xff]
      %v606 = vld [vmem:[%s467 + $0x2a8] sm:$0xf]
      %v607 = vld [vmem:[%s467 + $0x2ac] sm:$0xff]
      %v608 = vld [vmem:[%s467 + $0x2b4] sm:$0xff]
      %v609 = vld [vmem:[%s467 + $0x2bc] sm:$0xff]
      %v610 = vld [vmem:[%s467 + $0x2c4] sm:$0xff]
      %v611 = vld [vmem:[%s467 + $0x2cc] sm:$0xf]
      %v612 = vld [vmem:[%s467 + $0x2d0] sm:$0xff]
      %v613 = vld [vmem:[%s467 + $0x2d8] sm:$0xff]
      %v614 = vld [vmem:[%s467 + $0x2e0] sm:$0xff]
      %v615 = vld [vmem:[%s467 + $0x2e8] sm:$0xff]
      %v616 = vld [vmem:[%s467 + $0x2f0] sm:$0xf]
      %v617 = vld [vmem:[%s467 + $0x2f4] sm:$0xff]
      %v618 = vld [vmem:[%s467 + $0x2fc] sm:$0xff]
      %v619 = vld [vmem:[%s467 + $0x304] sm:$0xff]
      %v620 = vld [vmem:[%s467 + $0x30c] sm:$0xff]
      %v621 = vld [vmem:[%s467 + $0x314] sm:$0xf]
      %v622 = vld [vmem:[%s467 + $0x318] sm:$0xff]
      %v623 = vld [vmem:[%s467 + $0x320] sm:$0xff]
      %v624 = vld [vmem:[%s467 + $0x328] sm:$0xff]
      %v625 = vld [vmem:[%s467 + $0x330] sm:$0xff]
      %v626 = vld [vmem:[%s467 + $0x338] sm:$0xf]
      %v627 = vld [vmem:[%s467 + $0x33c] sm:$0xff]
      %v628 = vld [vmem:[%s467 + $0x344] sm:$0xff]
      %v629 = vld [vmem:[%s467 + $0x34c] sm:$0xff]
      %v630 = vld [vmem:[%s467 + $0x354] sm:$0xff]
      %v631 = vld [vmem:[%s467 + $0x35c] sm:$0xf]
      %v632 = vld [vmem:[%s467 + $0x360] sm:$0xff]
      %v633 = vld [vmem:[%s467 + $0x368] sm:$0xff]
      %v634 = vld [vmem:[%s467 + $0x370] sm:$0xff]
      %v635 = vld [vmem:[%s467 + $0x378] sm:$0xff]
      %v636 = vld [vmem:[%s467 + $0x380] sm:$0xf]
      %v637 = vld [vmem:[%s467 + $0x384] sm:$0xff]
      %v638 = vld [vmem:[%s467 + $0x38c] sm:$0xff]
      %v639 = vld [vmem:[%s467 + $0x394] sm:$0xff]
      %v640 = vld [vmem:[%s467 + $0x39c] sm:$0xff]
      %v641 = vld [vmem:[%s467 + $0x3a4] sm:$0xf]
      %v642 = vld [vmem:[%s467 + $0x3a8] sm:$0xff]
      %v643 = vld [vmem:[%s467 + $0x3b0] sm:$0xff]
      %v644 = vld [vmem:[%s467 + $0x3b8] sm:$0xff]
      %v645 = vld [vmem:[%s467 + $0x3c0] sm:$0xff]
      %v646 = vld [vmem:[%s467 + $0x3c8] sm:$0xf]
      %v647 = vld [vmem:[%s467 + $0x3cc] sm:$0xff]
      %v648 = vld [vmem:[%s467 + $0x3d4] sm:$0xff]
      %v649 = vld [vmem:[%s467 + $0x3dc] sm:$0xff]
      %v650 = vld [vmem:[%s467 + $0x3e4] sm:$0xff]
      %v651 = vld [vmem:[%s467 + $0x3ec] sm:$0xf]
      %v652 = vld [vmem:[%s467 + $0x3f0] sm:$0xff]
      %v653 = vld [vmem:[%s467 + $0x3f8] sm:$0xff]
      %v654 = vld [vmem:[%s467 + $0x400] sm:$0xff]
      %v655 = vld [vmem:[%s467 + $0x408] sm:$0xff]
      %v656 = vld [vmem:[%s467 + $0x410] sm:$0xf]
      %v657 = vld [vmem:[%s467 + $0x414] sm:$0xff]
      %v658 = vld [vmem:[%s467 + $0x41c] sm:$0xff]
      %v659 = vld [vmem:[%s467 + $0x424] sm:$0xff]
      %v660 = vld [vmem:[%s467 + $0x42c] sm:$0xff]
      %v661 = vld [vmem:[%s467 + $0x434] sm:$0xf]
      %v662 = vld [vmem:[%s467 + $0x438] sm:$0xff]
      %v663 = vld [vmem:[%s467 + $0x440] sm:$0xff]
      %v664 = vld [vmem:[%s467 + $0x448] sm:$0xff]
      %v665 = vld [vmem:[%s467 + $0x450] sm:$0xff]
      %v666 = vld [vmem:[%s467 + $0x458] sm:$0xf]
      %v667 = vld [vmem:[%s467 + $0x45c] sm:$0xff]
      %v668 = vld [vmem:[%s467 + $0x464] sm:$0xff]
      %v669 = vld [vmem:[%s467 + $0x46c] sm:$0xff]
      %v670 = vld [vmem:[%s467 + $0x474] sm:$0xff]
      %v671 = vld [vmem:[%s467 + $0x47c] sm:$0xf]
      %v672 = vld [vmem:[%s467 + $0x480] sm:$0xff]
      %v673 = vld [vmem:[%s467 + $0x488] sm:$0xff]
      %v674 = vld [vmem:[%s467 + $0x490] sm:$0xff]
      %v675 = vld [vmem:[%s467 + $0x498] sm:$0xff]
      %v676 = vld [vmem:[%s467 + $0x4a0] sm:$0xf]
      %v677 = vld [vmem:[%s467 + $0x4a4] sm:$0xff]
      %v678 = vld [vmem:[%s467 + $0x4ac] sm:$0xff]
      %v679 = vld [vmem:[%s467 + $0x4b4] sm:$0xff]
      %v680 = vld [vmem:[%s467 + $0x4bc] sm:$0xff]
      %v681 = vld [vmem:[%s467 + $0x4c4] sm:$0xf]
      %v682 = vld [vmem:[%s467 + $0x4c8] sm:$0xff]
      %v683 = vld [vmem:[%s467 + $0x4d0] sm:$0xff]
      %v684 = vld [vmem:[%s467 + $0x4d8] sm:$0xff]
      %v685 = vld [vmem:[%s467 + $0x4e0] sm:$0xff]
      %v686 = vld [vmem:[%s467 + $0x4e8] sm:$0xf]
      %v687 = vld [vmem:[%s467 + $0x4ec] sm:$0xff]
      %v688 = vld [vmem:[%s467 + $0x4f4] sm:$0xff]
      %v689 = vld [vmem:[%s467 + $0x4fc] sm:$0xff]
      %v690 = vld [vmem:[%s467 + $0x504] sm:$0xff]
      %v691 = vld [vmem:[%s467 + $0x50c] sm:$0xf]
      %v692 = vld [vmem:[%s467 + $0x510] sm:$0xff]
      %v693 = vld [vmem:[%s467 + $0x518] sm:$0xff]
      %v694 = vld [vmem:[%s467 + $0x520] sm:$0xff]
      %v695 = vld [vmem:[%s467 + $0x528] sm:$0xff]
      %v696 = vld [vmem:[%s467 + $0x530] sm:$0xf]
      %v697 = vld [vmem:[%s467 + $0x534] sm:$0xff]
      %v698 = vld [vmem:[%s467 + $0x53c] sm:$0xff]
      %v699 = vld [vmem:[%s467 + $0x544] sm:$0xff]
      %v700 = vld [vmem:[%s467 + $0x54c] sm:$0xff]
      %v701 = vld [vmem:[%s467 + $0x554] sm:$0xf]
      %v702 = vld [vmem:[%s467 + $0x558] sm:$0xff]
      %v703 = vld [vmem:[%s467 + $0x560] sm:$0xff]
      %v704 = vld [vmem:[%s467 + $0x568] sm:$0xff]
      %v705 = vld [vmem:[%s467 + $0x570] sm:$0xff]
      %v706 = vld [vmem:[%s467 + $0x578] sm:$0xf]
      %v707 = vld [vmem:[%s467 + $0x57c] sm:$0xff]
      %v708 = vld [vmem:[%s467 + $0x584] sm:$0xff]
      %v709 = vld [vmem:[%s467 + $0x58c] sm:$0xff]
      %v710 = vld [vmem:[%s467 + $0x594] sm:$0xff]
      %v711 = vld [vmem:[%s467 + $0x59c] sm:$0xf]
      %v712 = vld [vmem:[%s467 + $0x5a0] sm:$0xff]
      %v713 = vld [vmem:[%s467 + $0x5a8] sm:$0xff]
      %v714 = vld [vmem:[%s467 + $0x5b0] sm:$0xff]
      %v715 = vld [vmem:[%s467 + $0x5b8] sm:$0xff]
      %v716 = vld [vmem:[%s467 + $0x5c0] sm:$0xf]
      %v717 = vld [vmem:[%s467 + $0x5c4] sm:$0xff]
      %v718 = vld [vmem:[%s467 + $0x5cc] sm:$0xff]
      %v719 = vld [vmem:[%s467 + $0x5d4] sm:$0xff]
      %v720 = vld [vmem:[%s467 + $0x5dc] sm:$0xff]
      %v721 = vld [vmem:[%s467 + $0x5e4] sm:$0xf]
      %v722 = vld [vmem:[%s467 + $0x5e8] sm:$0xff]
      %v723 = vld [vmem:[%s467 + $0x5f0] sm:$0xff]
      %v724 = vld [vmem:[%s467 + $0x5f8] sm:$0xff]
      %v725 = vld [vmem:[%s467 + $0x600] sm:$0xff]
      %v726 = vld [vmem:[%s467 + $0x608] sm:$0xf]
      %v727 = vld [vmem:[%s467 + $0x60c] sm:$0xff]
      %v728 = vld [vmem:[%s467 + $0x614] sm:$0xff]
      %v729 = vld [vmem:[%s467 + $0x61c] sm:$0xff]
      %v730 = vld [vmem:[%s467 + $0x624] sm:$0xff]
      %v731 = vld [vmem:[%s467 + $0x62c] sm:$0xf]
      %v732 = vld [vmem:[%s467 + $0x630] sm:$0xff]
      %v733 = vld [vmem:[%s467 + $0x638] sm:$0xff]
      %v734 = vld [vmem:[%s467 + $0x640] sm:$0xff]
      %v735 = vld [vmem:[%s467 + $0x648] sm:$0xff]
      %v736 = vld [vmem:[%s467 + $0x650] sm:$0xf]
      %v737 = vld [vmem:[%s467 + $0x654] sm:$0xff]
      %v738 = vld [vmem:[%s467 + $0x65c] sm:$0xff]
      %v739 = vld [vmem:[%s467 + $0x664] sm:$0xff]
      %v740 = vld [vmem:[%s467 + $0x66c] sm:$0xff]
      %v741 = vld [vmem:[%s467 + $0x674] sm:$0xf]
      %v742 = vld [vmem:[%s467 + $0x678] sm:$0xff]
      %v743 = vld [vmem:[%s467 + $0x680] sm:$0xff]
      %v744 = vld [vmem:[%s467 + $0x688] sm:$0xff]
      %v745 = vld [vmem:[%s467 + $0x690] sm:$0xff]
      %v746 = vld [vmem:[%s467 + $0x698] sm:$0xf]
      %v747 = vld [vmem:[%s467 + $0x69c] sm:$0xff]
      %v748 = vld [vmem:[%s467 + $0x6a4] sm:$0xff]
      %v749 = vld [vmem:[%s467 + $0x6ac] sm:$0xff]
      %v750 = vld [vmem:[%s467 + $0x6b4] sm:$0xff]
      %v751 = vld [vmem:[%s467 + $0x6bc] sm:$0xf]
      %v752 = vld [vmem:[%s467 + $0x6c0] sm:$0xff]
      %v753 = vld [vmem:[%s467 + $0x6c8] sm:$0xff]
      %v754 = vld [vmem:[%s467 + $0x6d0] sm:$0xff]
      %v755 = vld [vmem:[%s467 + $0x6d8] sm:$0xff]
      %v756 = vld [vmem:[%s467 + $0x6e0] sm:$0xf]
      %v757 = vld [vmem:[%s467 + $0x6e4] sm:$0xff]
      %v758 = vld [vmem:[%s467 + $0x6ec] sm:$0xff]
      %v759 = vld [vmem:[%s467 + $0x6f4] sm:$0xff]
      %v760 = vld [vmem:[%s467 + $0x6fc] sm:$0xff]
      %v761 = vld [vmem:[%s467 + $0x704] sm:$0xf]
      %v762 = vld [vmem:[%s467 + $0x708] sm:$0xff]
      %v763 = vld [vmem:[%s467 + $0x710] sm:$0xff]
      %v764 = vld [vmem:[%s467 + $0x718] sm:$0xff]
      %v765 = vld [vmem:[%s467 + $0x720] sm:$0xff]
      %v766 = vld [vmem:[%s467 + $0x728] sm:$0xf]
      %v767 = vld [vmem:[%s467 + $0x72c] sm:$0xff]
      %v768 = vld [vmem:[%s467 + $0x734] sm:$0xff]
      %v769 = vld [vmem:[%s467 + $0x73c] sm:$0xff]
      %v770 = vld [vmem:[%s467 + $0x744] sm:$0xff]
      %v771 = vld [vmem:[%s467 + $0x74c] sm:$0xf]
      %v772 = vld [vmem:[%s467 + $0x750] sm:$0xff]
      %v773 = vld [vmem:[%s467 + $0x758] sm:$0xff]
      %v774 = vld [vmem:[%s467 + $0x760] sm:$0xff]
      %v775 = vld [vmem:[%s467 + $0x768] sm:$0xff]
      %v776 = vld [vmem:[%s467 + $0x770] sm:$0xf]
      %v777 = vld [vmem:[%s467 + $0x774] sm:$0xff]
      %v778 = vld [vmem:[%s467 + $0x77c] sm:$0xff]
      %v779 = vld [vmem:[%s467 + $0x784] sm:$0xff]
      %v780 = vld [vmem:[%s467 + $0x78c] sm:$0xff]
      %v781 = vld [vmem:[%s467 + $0x794] sm:$0xf]
      %v782 = vld [vmem:[%s467 + $0x798] sm:$0xff]
      %v783 = vld [vmem:[%s467 + $0x7a0] sm:$0xff]
      %v784 = vld [vmem:[%s467 + $0x7a8] sm:$0xff]
      %v785 = vld [vmem:[%s467 + $0x7b0] sm:$0xff]
      %v786 = vld [vmem:[%s467 + $0x7b8] sm:$0xf]
      %v787 = vld [vmem:[%s467 + $0x7bc] sm:$0xff]
      %v788 = vld [vmem:[%s467 + $0x7c4] sm:$0xff]
      %v789 = vld [vmem:[%s467 + $0x7cc] sm:$0xff]
      %v790 = vld [vmem:[%s467 + $0x7d4] sm:$0xff]
      %v791 = vld [vmem:[%s467 + $0x7dc] sm:$0xf]
      %v792 = vld [vmem:[%s467 + $0x7e0] sm:$0xff]
      %v793 = vld [vmem:[%s467 + $0x7e8] sm:$0xff]
      %v794 = vld [vmem:[%s467 + $0x7f0] sm:$0xff]
      %v795 = vld [vmem:[%s467 + $0x7f8] sm:$0xff]
      %v796 = vld [vmem:[%s467 + $0x800] sm:$0xf]
      %v797 = vld [vmem:[%s467 + $0x804] sm:$0xff]
      %v798 = vld [vmem:[%s467 + $0x80c] sm:$0xff]
      %v799 = vld [vmem:[%s467 + $0x814] sm:$0xff]
      %v800 = vld [vmem:[%s467 + $0x81c] sm:$0xff]
      %v801 = vld [vmem:[%s467 + $0x824] sm:$0xf]
      %v802 = vld [vmem:[%s467 + $0x828] sm:$0xff]
      %v803 = vld [vmem:[%s467 + $0x830] sm:$0xff]
      %v804 = vld [vmem:[%s467 + $0x838] sm:$0xff]
      %v805 = vld [vmem:[%s467 + $0x840] sm:$0xff]
      %v806 = vld [vmem:[%s467 + $0x848] sm:$0xf]
      %v807 = vld [vmem:[%s467 + $0x84c] sm:$0xff]
      %v808 = vld [vmem:[%s467 + $0x854] sm:$0xff]
      %v809 = vld [vmem:[%s467 + $0x85c] sm:$0xff]
      %v810 = vld [vmem:[%s467 + $0x864] sm:$0xff]
      %v811 = vld [vmem:[%s467 + $0x86c] sm:$0xf]
      %v812 = vld [vmem:[%s467 + $0x870] sm:$0xff]
      %v813 = vld [vmem:[%s467 + $0x878] sm:$0xff]
      %v814 = vld [vmem:[%s467 + $0x880] sm:$0xff]
      %v815 = vld [vmem:[%s467 + $0x888] sm:$0xff]
      %v816 = vld [vmem:[%s467 + $0x890] sm:$0xf]
      %v817 = vld [vmem:[%s467 + $0x894] sm:$0xff]
      %v818 = vld [vmem:[%s467 + $0x89c] sm:$0xff]
      %v819 = vld [vmem:[%s467 + $0x8a4] sm:$0xff]
      %v820 = vld [vmem:[%s467 + $0x8ac] sm:$0xff]
      %v821 = vld [vmem:[%s467 + $0x8b4] sm:$0xf]
      %v822 = vld [vmem:[%s467 + $0x8b8] sm:$0xff]
      %v823 = vld [vmem:[%s467 + $0x8c0] sm:$0xff]
      %v824 = vld [vmem:[%s467 + $0x8c8] sm:$0xff]
      %v825 = vld [vmem:[%s467 + $0x8d0] sm:$0xff]
      %v826 = vld [vmem:[%s467 + $0x8d8] sm:$0xf]
      %v827 = vld [vmem:[%s467 + $0x8dc] sm:$0xff]
      %v828 = vld [vmem:[%s467 + $0x8e4] sm:$0xff]
      %v829 = vld [vmem:[%s467 + $0x8ec] sm:$0xff]
      %v830 = vld [vmem:[%s467 + $0x8f4] sm:$0xff]
      %v831 = vld [vmem:[%s467 + $0x8fc] sm:$0xf]
      %v832 = vld [vmem:[%s473] sm:$0xff]
      %v833 = vld [vmem:[%s473 + $0x8] sm:$0xff]
      %v834 = vld [vmem:[%s473 + $0x10] sm:$0xff]
      %v835 = vld [vmem:[%s473 + $0x18] sm:$0xff]
      %v836 = vld [vmem:[%s473 + $0x20] sm:$0xff]
      %v837 = vld [vmem:[%s473 + $0x28] sm:$0xff]
      %v838 = vld [vmem:[%s473 + $0x30] sm:$0xff]
      %v839 = vld [vmem:[%s473 + $0x38] sm:$0xff]
      %v840 = vld [vmem:[%s473 + $0x40] sm:$0xff]
      %v841 = vld [vmem:[%s473 + $0x48] sm:$0xff]
      %v842 = vld [vmem:[%s473 + $0x50] sm:$0xff]
      %v843 = vld [vmem:[%s473 + $0x58] sm:$0xff]
      %v844 = vld [vmem:[%s473 + $0x60] sm:$0xff]
      %v845 = vld [vmem:[%s473 + $0x68] sm:$0xff]
      %v846 = vld [vmem:[%s473 + $0x70] sm:$0xff]
      %v847 = vld [vmem:[%s473 + $0x78] sm:$0xff]
      %v848 = vld [vmem:[%s473 + $0x80] sm:$0xff]
      %v849 = vld [vmem:[%s473 + $0x88] sm:$0xff]
      %v850 = vld [vmem:[%s473 + $0x90] sm:$0xff]
      %v851 = vld [vmem:[%s473 + $0x98] sm:$0xff]
      %v852 = vld [vmem:[%s473 + $0xa0] sm:$0xff]
      %v853 = vld [vmem:[%s473 + $0xa8] sm:$0xff]
      %v854 = vld [vmem:[%s473 + $0xb0] sm:$0xff]
      %v855 = vld [vmem:[%s473 + $0xb8] sm:$0xff]
      %v856 = vld [vmem:[%s473 + $0xc0] sm:$0xff]
      %v857 = vld [vmem:[%s473 + $0xc8] sm:$0xff]
      %v858 = vld [vmem:[%s473 + $0xd0] sm:$0xff]
      %v859 = vld [vmem:[%s473 + $0xd8] sm:$0xff]
      %v860 = vld [vmem:[%s473 + $0xe0] sm:$0xff]
      %v861 = vld [vmem:[%s473 + $0xe8] sm:$0xff]
      %v862 = vld [vmem:[%s473 + $0xf0] sm:$0xff]
      %v863 = vld [vmem:[%s473 + $0xf8] sm:$0xff]
      %v864 = vld [vmem:[%s473 + $0x100] sm:$0xff]
      %v865 = vld [vmem:[%s473 + $0x108] sm:$0xff]
      %v866 = vld [vmem:[%s473 + $0x110] sm:$0xff]
      %v867 = vld [vmem:[%s473 + $0x118] sm:$0xff]
      %v868 = vld [vmem:[%s473 + $0x120] sm:$0xff]
      %v869 = vld [vmem:[%s473 + $0x128] sm:$0xff]
      %v870 = vld [vmem:[%s473 + $0x130] sm:$0xff]
      %v871 = vld [vmem:[%s473 + $0x138] sm:$0xff]
      %v872 = vld [vmem:[%s473 + $0x140] sm:$0xff]
      %v873 = vld [vmem:[%s473 + $0x148] sm:$0xff]
      %v874 = vld [vmem:[%s473 + $0x150] sm:$0xff]
      %v875 = vld [vmem:[%s473 + $0x158] sm:$0xff]
      %v876 = vld [vmem:[%s473 + $0x160] sm:$0xff]
      %v877 = vld [vmem:[%s473 + $0x168] sm:$0xff]
      %v878 = vld [vmem:[%s473 + $0x170] sm:$0xff]
      %v879 = vld [vmem:[%s473 + $0x178] sm:$0xff]
      %v880 = vld [vmem:[%s473 + $0x180] sm:$0xff]
      %v881 = vld [vmem:[%s473 + $0x188] sm:$0xff]
      %v882 = vld [vmem:[%s473 + $0x190] sm:$0xff]
      %v883 = vld [vmem:[%s473 + $0x198] sm:$0xff]
      %v884 = vld [vmem:[%s473 + $0x1a0] sm:$0xff]
      %v885 = vld [vmem:[%s473 + $0x1a8] sm:$0xff]
      %v886 = vld [vmem:[%s473 + $0x1b0] sm:$0xff]
      %v887 = vld [vmem:[%s473 + $0x1b8] sm:$0xff]
      %v888 = vld [vmem:[%s473 + $0x1c0] sm:$0xff]
      %v889 = vld [vmem:[%s473 + $0x1c8] sm:$0xff]
      %v890 = vld [vmem:[%s473 + $0x1d0] sm:$0xff]
      %v891 = vld [vmem:[%s473 + $0x1d8] sm:$0xff]
      %v892 = vld [vmem:[%s473 + $0x1e0] sm:$0xff]
      %v893 = vld [vmem:[%s473 + $0x1e8] sm:$0xff]
      %v894 = vld [vmem:[%s473 + $0x1f0] sm:$0xff]
      %v895 = vld [vmem:[%s473 + $0x1f8] sm:$0xff]
      %v896 = vld [vmem:[%s473 + $0x200] sm:$0xff]
      %v897 = vld [vmem:[%s473 + $0x208] sm:$0xff]
      %v898 = vld [vmem:[%s473 + $0x210] sm:$0xff]
      %v899 = vld [vmem:[%s473 + $0x218] sm:$0xff]
      %v900 = vld [vmem:[%s473 + $0x220] sm:$0xff]
      %v901 = vld [vmem:[%s473 + $0x228] sm:$0xff]
      %v902 = vld [vmem:[%s473 + $0x230] sm:$0xff]
      %v903 = vld [vmem:[%s473 + $0x238] sm:$0xff]
      %v904 = vld [vmem:[%s473 + $0x240] sm:$0xff]
      %v905 = vld [vmem:[%s473 + $0x248] sm:$0xff]
      %v906 = vld [vmem:[%s473 + $0x250] sm:$0xff]
      %v907 = vld [vmem:[%s473 + $0x258] sm:$0xff]
      %v908 = vld [vmem:[%s473 + $0x260] sm:$0xff]
      %v909 = vld [vmem:[%s473 + $0x268] sm:$0xff]
      %v910 = vld [vmem:[%s473 + $0x270] sm:$0xff]
      %v911 = vld [vmem:[%s473 + $0x278] sm:$0xff]
      %v912 = vld [vmem:[%s473 + $0x280] sm:$0xff]
      %v913 = vld [vmem:[%s473 + $0x288] sm:$0xff]
      %v914 = vld [vmem:[%s473 + $0x290] sm:$0xff]
      %v915 = vld [vmem:[%s473 + $0x298] sm:$0xff]
      %v916 = vld [vmem:[%s473 + $0x2a0] sm:$0xff]
      %v917 = vld [vmem:[%s473 + $0x2a8] sm:$0xff]
      %v918 = vld [vmem:[%s473 + $0x2b0] sm:$0xff]
      %v919 = vld [vmem:[%s473 + $0x2b8] sm:$0xff]
      %v920 = vld [vmem:[%s473 + $0x2c0] sm:$0xff]
      %v921 = vld [vmem:[%s473 + $0x2c8] sm:$0xff]
      %v922 = vld [vmem:[%s473 + $0x2d0] sm:$0xff]
      %v923 = vld [vmem:[%s473 + $0x2d8] sm:$0xff]
      %v924 = vld [vmem:[%s473 + $0x2e0] sm:$0xff]
      %v925 = vld [vmem:[%s473 + $0x2e8] sm:$0xff]
      %v926 = vld [vmem:[%s473 + $0x2f0] sm:$0xff]
      %v927 = vld [vmem:[%s473 + $0x2f8] sm:$0xff]
      %v928 = vld [vmem:[%s473 + $0x300] sm:$0xff]
      %v929 = vld [vmem:[%s473 + $0x308] sm:$0xff]
      %v930 = vld [vmem:[%s473 + $0x310] sm:$0xff]
      %v931 = vld [vmem:[%s473 + $0x318] sm:$0xff]
      %v932 = vld [vmem:[%s473 + $0x320] sm:$0xff]
      %v933 = vld [vmem:[%s473 + $0x328] sm:$0xff]
      %v934 = vld [vmem:[%s473 + $0x330] sm:$0xff]
      %v935 = vld [vmem:[%s473 + $0x338] sm:$0xff]
      %v936 = vld [vmem:[%s473 + $0x340] sm:$0xff]
      %v937 = vld [vmem:[%s473 + $0x348] sm:$0xff]
      %v938 = vld [vmem:[%s473 + $0x350] sm:$0xff]
      %v939 = vld [vmem:[%s473 + $0x358] sm:$0xff]
      %v940 = vld [vmem:[%s473 + $0x360] sm:$0xff]
      %v941 = vld [vmem:[%s473 + $0x368] sm:$0xff]
      %v942 = vld [vmem:[%s473 + $0x370] sm:$0xff]
      %v943 = vld [vmem:[%s473 + $0x378] sm:$0xff]
      %v944 = vld [vmem:[%s473 + $0x380] sm:$0xff]
      %v945 = vld [vmem:[%s473 + $0x388] sm:$0xff]
      %v946 = vld [vmem:[%s473 + $0x390] sm:$0xff]
      %v947 = vld [vmem:[%s473 + $0x398] sm:$0xff]
      %v948 = vld [vmem:[%s473 + $0x3a0] sm:$0xff]
      %v949 = vld [vmem:[%s473 + $0x3a8] sm:$0xff]
      %v950 = vld [vmem:[%s473 + $0x3b0] sm:$0xff]
      %v951 = vld [vmem:[%s473 + $0x3b8] sm:$0xff]
      %v952 = vld [vmem:[%s473 + $0x3c0] sm:$0xff]
      %v953 = vld [vmem:[%s473 + $0x3c8] sm:$0xff]
      %v954 = vld [vmem:[%s473 + $0x3d0] sm:$0xff]
      %v955 = vld [vmem:[%s473 + $0x3d8] sm:$0xff]
      %v956 = vld [vmem:[%s473 + $0x3e0] sm:$0xff]
      %v957 = vld [vmem:[%s473 + $0x3e8] sm:$0xff]
      %v958 = vld [vmem:[%s473 + $0x3f0] sm:$0xff]
      %v959 = vld [vmem:[%s473 + $0x3f8] sm:$0xff]
      %v960 = vld [vmem:[%s473 + $0x400] sm:$0xff]
      %v961 = vld [vmem:[%s473 + $0x408] sm:$0xff]
      %v962 = vld [vmem:[%s473 + $0x410] sm:$0xff]
      %v963 = vld [vmem:[%s473 + $0x418] sm:$0xff]
      %v964 = vld [vmem:[%s473 + $0x420] sm:$0xff]
      %v965 = vld [vmem:[%s473 + $0x428] sm:$0xff]
      %v966 = vld [vmem:[%s473 + $0x430] sm:$0xff]
      %v967 = vld [vmem:[%s473 + $0x438] sm:$0xff]
      %v968 = vld [vmem:[%s477] sm:$0x3]
      %v970 = vperm.slane %v968, 0
      %v971 = vperm.slane %v968, 1
      %v1294 = vunpack.c.l.b16 %v512
      %v1295 = vunpack.c.h.b16 %v512
      %v1296 = vunpack.c.l.b16 %v513
      %v1297 = vunpack.c.h.b16 %v513
      %v1298 = vunpack.c.l.b16 %v514
      %v1299 = vunpack.c.h.b16 %v514
      %v1300 = vunpack.c.l.b16 %v515
      %v1301 = vunpack.c.h.b16 %v515
      %v1302 = vunpack.c.l.b16 %v516
      %v1303 = vunpack.c.l.b16 %v517
      %v1304 = vunpack.c.h.b16 %v517
      %v1305 = vunpack.c.l.b16 %v518
      %v1306 = vunpack.c.h.b16 %v518
      %v1307 = vunpack.c.l.b16 %v519
      %v1308 = vunpack.c.h.b16 %v519
      %v1309 = vunpack.c.l.b16 %v520
      %v1310 = vunpack.c.h.b16 %v520
      %v1311 = vunpack.c.l.b16 %v521
      %v1312 = vunpack.c.l.b16 %v522
      %v1313 = vunpack.c.h.b16 %v522
      %v1314 = vunpack.c.l.b16 %v523
      %v1315 = vunpack.c.h.b16 %v523
      %v1316 = vunpack.c.l.b16 %v524
      %v1317 = vunpack.c.h.b16 %v524
      %v1318 = vunpack.c.l.b16 %v525
      %v1319 = vunpack.c.h.b16 %v525
      %v1320 = vunpack.c.l.b16 %v526
      %v1321 = vunpack.c.l.b16 %v527
      %v1322 = vunpack.c.h.b16 %v527
      %v1323 = vunpack.c.l.b16 %v528
      %v1324 = vunpack.c.h.b16 %v528
      %v1325 = vunpack.c.l.b16 %v529
      %v1326 = vunpack.c.h.b16 %v529
      %v1327 = vunpack.c.l.b16 %v530
      %v1328 = vunpack.c.h.b16 %v530
      %v1329 = vunpack.c.l.b16 %v531
      %v1330 = vunpack.c.l.b16 %v532
      %v1331 = vunpack.c.h.b16 %v532
      %v1332 = vunpack.c.l.b16 %v533
      %v1333 = vunpack.c.h.b16 %v533
      %v1334 = vunpack.c.l.b16 %v534
      %v1335 = vunpack.c.h.b16 %v534
      %v1336 = vunpack.c.l.b16 %v535
      %v1337 = vunpack.c.h.b16 %v535
      %v1338 = vunpack.c.l.b16 %v536
      %v1339 = vunpack.c.l.b16 %v537
      %v1340 = vunpack.c.h.b16 %v537
      %v1341 = vunpack.c.l.b16 %v538
      %v1342 = vunpack.c.h.b16 %v538
      %v1343 = vunpack.c.l.b16 %v539
      %v1344 = vunpack.c.h.b16 %v539
      %v1345 = vunpack.c.l.b16 %v540
      %v1346 = vunpack.c.h.b16 %v540
      %v1347 = vunpack.c.l.b16 %v541
      %v1348 = vunpack.c.l.b16 %v542
      %v1349 = vunpack.c.h.b16 %v542
      %v1350 = vunpack.c.l.b16 %v543
      %v1351 = vunpack.c.h.b16 %v543
      %v1352 = vunpack.c.l.b16 %v544
      %v1353 = vunpack.c.h.b16 %v544
      %v1354 = vunpack.c.l.b16 %v545
      %v1355 = vunpack.c.h.b16 %v545
      %v1356 = vunpack.c.l.b16 %v546
      %v1357 = vunpack.c.l.b16 %v547
      %v1358 = vunpack.c.h.b16 %v547
      %v1359 = vunpack.c.l.b16 %v548
      %v1360 = vunpack.c.h.b16 %v548
      %v1361 = vunpack.c.l.b16 %v549
      %v1362 = vunpack.c.h.b16 %v549
      %v1363 = vunpack.c.l.b16 %v550
      %v1364 = vunpack.c.h.b16 %v550
      %v1365 = vunpack.c.l.b16 %v551
      %v1366 = vunpack.c.l.b16 %v552
      %v1367 = vunpack.c.h.b16 %v552
      %v1368 = vunpack.c.l.b16 %v553
      %v1369 = vunpack.c.h.b16 %v553
      %v1370 = vunpack.c.l.b16 %v554
      %v1371 = vunpack.c.h.b16 %v554
      %v1372 = vunpack.c.l.b16 %v555
      %v1373 = vunpack.c.h.b16 %v555
      %v1374 = vunpack.c.l.b16 %v556
      %v1375 = vunpack.c.l.b16 %v557
      %v1376 = vunpack.c.h.b16 %v557
      %v1377 = vunpack.c.l.b16 %v558
      %v1378 = vunpack.c.h.b16 %v558
      %v1379 = vunpack.c.l.b16 %v559
      %v1380 = vunpack.c.h.b16 %v559
      %v1381 = vunpack.c.l.b16 %v560
      %v1382 = vunpack.c.h.b16 %v560
      %v1383 = vunpack.c.l.b16 %v561
      %v1384 = vunpack.c.l.b16 %v562
      %v1385 = vunpack.c.h.b16 %v562
      %v1386 = vunpack.c.l.b16 %v563
      %v1387 = vunpack.c.h.b16 %v563
      %v1388 = vunpack.c.l.b16 %v564
      %v1389 = vunpack.c.h.b16 %v564
      %v1390 = vunpack.c.l.b16 %v565
      %v1391 = vunpack.c.h.b16 %v565
      %v1392 = vunpack.c.l.b16 %v566
      %v1393 = vunpack.c.l.b16 %v567
      %v1394 = vunpack.c.h.b16 %v567
      %v1395 = vunpack.c.l.b16 %v568
      %v1396 = vunpack.c.h.b16 %v568
      %v1397 = vunpack.c.l.b16 %v569
      %v1398 = vunpack.c.h.b16 %v569
      %v1399 = vunpack.c.l.b16 %v570
      %v1400 = vunpack.c.h.b16 %v570
      %v1401 = vunpack.c.l.b16 %v571
      %v1402 = vunpack.c.l.b16 %v572
      %v1403 = vunpack.c.h.b16 %v572
      %v1404 = vunpack.c.l.b16 %v573
      %v1405 = vunpack.c.h.b16 %v573
      %v1406 = vunpack.c.l.b16 %v574
      %v1407 = vunpack.c.h.b16 %v574
      %v1408 = vunpack.c.l.b16 %v575
      %v1409 = vunpack.c.h.b16 %v575
      %v1410 = vunpack.c.l.b16 %v576
      %v1411 = vunpack.c.l.b16 %v577
      %v1412 = vunpack.c.h.b16 %v577
      %v1413 = vunpack.c.l.b16 %v578
      %v1414 = vunpack.c.h.b16 %v578
      %v1415 = vunpack.c.l.b16 %v579
      %v1416 = vunpack.c.h.b16 %v579
      %v1417 = vunpack.c.l.b16 %v580
      %v1418 = vunpack.c.h.b16 %v580
      %v1419 = vunpack.c.l.b16 %v581
      %v1420 = vunpack.c.l.b16 %v582
      %v1421 = vunpack.c.h.b16 %v582
      %v1422 = vunpack.c.l.b16 %v583
      %v1423 = vunpack.c.h.b16 %v583
      %v1424 = vunpack.c.l.b16 %v584
      %v1425 = vunpack.c.h.b16 %v584
      %v1426 = vunpack.c.l.b16 %v585
      %v1427 = vunpack.c.h.b16 %v585
      %v1428 = vunpack.c.l.b16 %v586
      %v1429 = vunpack.c.l.b16 %v587
      %v1430 = vunpack.c.h.b16 %v587
      %v1431 = vunpack.c.l.b16 %v588
      %v1432 = vunpack.c.h.b16 %v588
      %v1433 = vunpack.c.l.b16 %v589
      %v1434 = vunpack.c.h.b16 %v589
      %v1435 = vunpack.c.l.b16 %v590
      %v1436 = vunpack.c.h.b16 %v590
      %v1437 = vunpack.c.l.b16 %v591
      %v1438 = vunpack.c.l.b16 %v592
      %v1439 = vunpack.c.h.b16 %v592
      %v1440 = vunpack.c.l.b16 %v593
      %v1441 = vunpack.c.h.b16 %v593
      %v1442 = vunpack.c.l.b16 %v594
      %v1443 = vunpack.c.h.b16 %v594
      %v1444 = vunpack.c.l.b16 %v595
      %v1445 = vunpack.c.h.b16 %v595
      %v1446 = vunpack.c.l.b16 %v596
      %v1447 = vunpack.c.l.b16 %v597
      %v1448 = vunpack.c.h.b16 %v597
      %v1449 = vunpack.c.l.b16 %v598
      %v1450 = vunpack.c.h.b16 %v598
      %v1451 = vunpack.c.l.b16 %v599
      %v1452 = vunpack.c.h.b16 %v599
      %v1453 = vunpack.c.l.b16 %v600
      %v1454 = vunpack.c.h.b16 %v600
      %v1455 = vunpack.c.l.b16 %v601
      %v1456 = vunpack.c.l.b16 %v602
      %v1457 = vunpack.c.h.b16 %v602
      %v1458 = vunpack.c.l.b16 %v603
      %v1459 = vunpack.c.h.b16 %v603
      %v1460 = vunpack.c.l.b16 %v604
      %v1461 = vunpack.c.h.b16 %v604
      %v1462 = vunpack.c.l.b16 %v605
      %v1463 = vunpack.c.h.b16 %v605
      %v1464 = vunpack.c.l.b16 %v606
      %v1465 = vunpack.c.l.b16 %v607
      %v1466 = vunpack.c.h.b16 %v607
      %v1467 = vunpack.c.l.b16 %v608
      %v1468 = vunpack.c.h.b16 %v608
      %v1469 = vunpack.c.l.b16 %v609
      %v1470 = vunpack.c.h.b16 %v609
      %v1471 = vunpack.c.l.b16 %v610
      %v1472 = vunpack.c.h.b16 %v610
      %v1473 = vunpack.c.l.b16 %v611
      %v1474 = vunpack.c.l.b16 %v612
      %v1475 = vunpack.c.h.b16 %v612
      %v1476 = vunpack.c.l.b16 %v613
      %v1477 = vunpack.c.h.b16 %v613
      %v1478 = vunpack.c.l.b16 %v614
      %v1479 = vunpack.c.h.b16 %v614
      %v1480 = vunpack.c.l.b16 %v615
      %v1481 = vunpack.c.h.b16 %v615
      %v1482 = vunpack.c.l.b16 %v616
      %v1483 = vunpack.c.l.b16 %v617
      %v1484 = vunpack.c.h.b16 %v617
      %v1485 = vunpack.c.l.b16 %v618
      %v1486 = vunpack.c.h.b16 %v618
      %v1487 = vunpack.c.l.b16 %v619
      %v1488 = vunpack.c.h.b16 %v619
      %v1489 = vunpack.c.l.b16 %v620
      %v1490 = vunpack.c.h.b16 %v620
      %v1491 = vunpack.c.l.b16 %v621
      %v1492 = vunpack.c.l.b16 %v622
      %v1493 = vunpack.c.h.b16 %v622
      %v1494 = vunpack.c.l.b16 %v623
      %v1495 = vunpack.c.h.b16 %v623
      %v1496 = vunpack.c.l.b16 %v624
      %v1497 = vunpack.c.h.b16 %v624
      %v1498 = vunpack.c.l.b16 %v625
      %v1499 = vunpack.c.h.b16 %v625
      %v1500 = vunpack.c.l.b16 %v626
      %v1501 = vunpack.c.l.b16 %v627
      %v1502 = vunpack.c.h.b16 %v627
      %v1503 = vunpack.c.l.b16 %v628
      %v1504 = vunpack.c.h.b16 %v628
      %v1505 = vunpack.c.l.b16 %v629
      %v1506 = vunpack.c.h.b16 %v629
      %v1507 = vunpack.c.l.b16 %v630
      %v1508 = vunpack.c.h.b16 %v630
      %v1509 = vunpack.c.l.b16 %v631
      %v1510 = vunpack.c.l.b16 %v632
      %v1511 = vunpack.c.h.b16 %v632
      %v1512 = vunpack.c.l.b16 %v633
      %v1513 = vunpack.c.h.b16 %v633
      %v1514 = vunpack.c.l.b16 %v634
      %v1515 = vunpack.c.h.b16 %v634
      %v1516 = vunpack.c.l.b16 %v635
      %v1517 = vunpack.c.h.b16 %v635
      %v1518 = vunpack.c.l.b16 %v636
      %v1519 = vunpack.c.l.b16 %v637
      %v1520 = vunpack.c.h.b16 %v637
      %v1521 = vunpack.c.l.b16 %v638
      %v1522 = vunpack.c.h.b16 %v638
      %v1523 = vunpack.c.l.b16 %v639
      %v1524 = vunpack.c.h.b16 %v639
      %v1525 = vunpack.c.l.b16 %v640
      %v1526 = vunpack.c.h.b16 %v640
      %v1527 = vunpack.c.l.b16 %v641
      %v1528 = vunpack.c.l.b16 %v642
      %v1529 = vunpack.c.h.b16 %v642
      %v1530 = vunpack.c.l.b16 %v643
      %v1531 = vunpack.c.h.b16 %v643
      %v1532 = vunpack.c.l.b16 %v644
      %v1533 = vunpack.c.h.b16 %v644
      %v1534 = vunpack.c.l.b16 %v645
      %v1535 = vunpack.c.h.b16 %v645
      %v1536 = vunpack.c.l.b16 %v646
      %v1537 = vunpack.c.l.b16 %v647
      %v1538 = vunpack.c.h.b16 %v647
      %v1539 = vunpack.c.l.b16 %v648
      %v1540 = vunpack.c.h.b16 %v648
      %v1541 = vunpack.c.l.b16 %v649
      %v1542 = vunpack.c.h.b16 %v649
      %v1543 = vunpack.c.l.b16 %v650
      %v1544 = vunpack.c.h.b16 %v650
      %v1545 = vunpack.c.l.b16 %v651
      %v1546 = vunpack.c.l.b16 %v652
      %v1547 = vunpack.c.h.b16 %v652
      %v1548 = vunpack.c.l.b16 %v653
      %v1549 = vunpack.c.h.b16 %v653
      %v1550 = vunpack.c.l.b16 %v654
      %v1551 = vunpack.c.h.b16 %v654
      %v1552 = vunpack.c.l.b16 %v655
      %v1553 = vunpack.c.h.b16 %v655
      %v1554 = vunpack.c.l.b16 %v656
      %v1555 = vunpack.c.l.b16 %v657
      %v1556 = vunpack.c.h.b16 %v657
      %v1557 = vunpack.c.l.b16 %v658
      %v1558 = vunpack.c.h.b16 %v658
      %v1559 = vunpack.c.l.b16 %v659
      %v1560 = vunpack.c.h.b16 %v659
      %v1561 = vunpack.c.l.b16 %v660
      %v1562 = vunpack.c.h.b16 %v660
      %v1563 = vunpack.c.l.b16 %v661
      %v1564 = vunpack.c.l.b16 %v662
      %v1565 = vunpack.c.h.b16 %v662
      %v1566 = vunpack.c.l.b16 %v663
      %v1567 = vunpack.c.h.b16 %v663
      %v1568 = vunpack.c.l.b16 %v664
      %v1569 = vunpack.c.h.b16 %v664
      %v1570 = vunpack.c.l.b16 %v665
      %v1571 = vunpack.c.h.b16 %v665
      %v1572 = vunpack.c.l.b16 %v666
      %v1573 = vunpack.c.l.b16 %v667
      %v1574 = vunpack.c.h.b16 %v667
      %v1575 = vunpack.c.l.b16 %v668
      %v1576 = vunpack.c.h.b16 %v668
      %v1577 = vunpack.c.l.b16 %v669
      %v1578 = vunpack.c.h.b16 %v669
      %v1579 = vunpack.c.l.b16 %v670
      %v1580 = vunpack.c.h.b16 %v670
      %v1581 = vunpack.c.l.b16 %v671
      %v1582 = vunpack.c.l.b16 %v672
      %v1583 = vunpack.c.h.b16 %v672
      %v1584 = vunpack.c.l.b16 %v673
      %v1585 = vunpack.c.h.b16 %v673
      %v1586 = vunpack.c.l.b16 %v674
      %v1587 = vunpack.c.h.b16 %v674
      %v1588 = vunpack.c.l.b16 %v675
      %v1589 = vunpack.c.h.b16 %v675
      %v1590 = vunpack.c.l.b16 %v676
      %v1591 = vunpack.c.l.b16 %v677
      %v1592 = vunpack.c.h.b16 %v677
      %v1593 = vunpack.c.l.b16 %v678
      %v1594 = vunpack.c.h.b16 %v678
      %v1595 = vunpack.c.l.b16 %v679
      %v1596 = vunpack.c.h.b16 %v679
      %v1597 = vunpack.c.l.b16 %v680
      %v1598 = vunpack.c.h.b16 %v680
      %v1599 = vunpack.c.l.b16 %v681
      %v1600 = vunpack.c.l.b16 %v682
      %v1601 = vunpack.c.h.b16 %v682
      %v1602 = vunpack.c.l.b16 %v683
      %v1603 = vunpack.c.h.b16 %v683
      %v1604 = vunpack.c.l.b16 %v684
      %v1605 = vunpack.c.h.b16 %v684
      %v1606 = vunpack.c.l.b16 %v685
      %v1607 = vunpack.c.h.b16 %v685
      %v1608 = vunpack.c.l.b16 %v686
      %v1609 = vunpack.c.l.b16 %v687
      %v1610 = vunpack.c.h.b16 %v687
      %v1611 = vunpack.c.l.b16 %v688
      %v1612 = vunpack.c.h.b16 %v688
      %v1613 = vunpack.c.l.b16 %v689
      %v1614 = vunpack.c.h.b16 %v689
      %v1615 = vunpack.c.l.b16 %v690
      %v1616 = vunpack.c.h.b16 %v690
      %v1617 = vunpack.c.l.b16 %v691
      %v1618 = vunpack.c.l.b16 %v692
      %v1619 = vunpack.c.h.b16 %v692
      %v1620 = vunpack.c.l.b16 %v693
      %v1621 = vunpack.c.h.b16 %v693
      %v1622 = vunpack.c.l.b16 %v694
      %v1623 = vunpack.c.h.b16 %v694
      %v1624 = vunpack.c.l.b16 %v695
      %v1625 = vunpack.c.h.b16 %v695
      %v1626 = vunpack.c.l.b16 %v696
      %v1627 = vunpack.c.l.b16 %v697
      %v1628 = vunpack.c.h.b16 %v697
      %v1629 = vunpack.c.l.b16 %v698
      %v1630 = vunpack.c.h.b16 %v698
      %v1631 = vunpack.c.l.b16 %v699
      %v1632 = vunpack.c.h.b16 %v699
      %v1633 = vunpack.c.l.b16 %v700
      %v1634 = vunpack.c.h.b16 %v700
      %v1635 = vunpack.c.l.b16 %v701
      %v1636 = vunpack.c.l.b16 %v702
      %v1637 = vunpack.c.h.b16 %v702
      %v1638 = vunpack.c.l.b16 %v703
      %v1639 = vunpack.c.h.b16 %v703
      %v1640 = vunpack.c.l.b16 %v704
      %v1641 = vunpack.c.h.b16 %v704
      %v1642 = vunpack.c.l.b16 %v705
      %v1643 = vunpack.c.h.b16 %v705
      %v1644 = vunpack.c.l.b16 %v706
      %v1645 = vunpack.c.l.b16 %v707
      %v1646 = vunpack.c.h.b16 %v707
      %v1647 = vunpack.c.l.b16 %v708
      %v1648 = vunpack.c.h.b16 %v708
      %v1649 = vunpack.c.l.b16 %v709
      %v1650 = vunpack.c.h.b16 %v709
      %v1651 = vunpack.c.l.b16 %v710
      %v1652 = vunpack.c.h.b16 %v710
      %v1653 = vunpack.c.l.b16 %v711
      %v1654 = vunpack.c.l.b16 %v712
      %v1655 = vunpack.c.h.b16 %v712
      %v1656 = vunpack.c.l.b16 %v713
      %v1657 = vunpack.c.h.b16 %v713
      %v1658 = vunpack.c.l.b16 %v714
      %v1659 = vunpack.c.h.b16 %v714
      %v1660 = vunpack.c.l.b16 %v715
      %v1661 = vunpack.c.h.b16 %v715
      %v1662 = vunpack.c.l.b16 %v716
      %v1663 = vunpack.c.l.b16 %v717
      %v1664 = vunpack.c.h.b16 %v717
      %v1665 = vunpack.c.l.b16 %v718
      %v1666 = vunpack.c.h.b16 %v718
      %v1667 = vunpack.c.l.b16 %v719
      %v1668 = vunpack.c.h.b16 %v719
      %v1669 = vunpack.c.l.b16 %v720
      %v1670 = vunpack.c.h.b16 %v720
      %v1671 = vunpack.c.l.b16 %v721
      %v1672 = vunpack.c.l.b16 %v722
      %v1673 = vunpack.c.h.b16 %v722
      %v1674 = vunpack.c.l.b16 %v723
      %v1675 = vunpack.c.h.b16 %v723
      %v1676 = vunpack.c.l.b16 %v724
      %v1677 = vunpack.c.h.b16 %v724
      %v1678 = vunpack.c.l.b16 %v725
      %v1679 = vunpack.c.h.b16 %v725
      %v1680 = vunpack.c.l.b16 %v726
      %v1681 = vunpack.c.l.b16 %v727
      %v1682 = vunpack.c.h.b16 %v727
      %v1683 = vunpack.c.l.b16 %v728
      %v1684 = vunpack.c.h.b16 %v728
      %v1685 = vunpack.c.l.b16 %v729
      %v1686 = vunpack.c.h.b16 %v729
      %v1687 = vunpack.c.l.b16 %v730
      %v1688 = vunpack.c.h.b16 %v730
      %v1689 = vunpack.c.l.b16 %v731
      %v1690 = vunpack.c.l.b16 %v732
      %v1691 = vunpack.c.h.b16 %v732
      %v1692 = vunpack.c.l.b16 %v733
      %v1693 = vunpack.c.h.b16 %v733
      %v1694 = vunpack.c.l.b16 %v734
      %v1695 = vunpack.c.h.b16 %v734
      %v1696 = vunpack.c.l.b16 %v735
      %v1697 = vunpack.c.h.b16 %v735
      %v1698 = vunpack.c.l.b16 %v736
      %v1699 = vunpack.c.l.b16 %v737
      %v1700 = vunpack.c.h.b16 %v737
      %v1701 = vunpack.c.l.b16 %v738
      %v1702 = vunpack.c.h.b16 %v738
      %v1703 = vunpack.c.l.b16 %v739
      %v1704 = vunpack.c.h.b16 %v739
      %v1705 = vunpack.c.l.b16 %v740
      %v1706 = vunpack.c.h.b16 %v740
      %v1707 = vunpack.c.l.b16 %v741
      %v1708 = vunpack.c.l.b16 %v742
      %v1709 = vunpack.c.h.b16 %v742
      %v1710 = vunpack.c.l.b16 %v743
      %v1711 = vunpack.c.h.b16 %v743
      %v1712 = vunpack.c.l.b16 %v744
      %v1713 = vunpack.c.h.b16 %v744
      %v1714 = vunpack.c.l.b16 %v745
      %v1715 = vunpack.c.h.b16 %v745
      %v1716 = vunpack.c.l.b16 %v746
      %v1717 = vunpack.c.l.b16 %v747
      %v1718 = vunpack.c.h.b16 %v747
      %v1719 = vunpack.c.l.b16 %v748
      %v1720 = vunpack.c.h.b16 %v748
      %v1721 = vunpack.c.l.b16 %v749
      %v1722 = vunpack.c.h.b16 %v749
      %v1723 = vunpack.c.l.b16 %v750
      %v1724 = vunpack.c.h.b16 %v750
      %v1725 = vunpack.c.l.b16 %v751
      %v1726 = vunpack.c.l.b16 %v752
      %v1727 = vunpack.c.h.b16 %v752
      %v1728 = vunpack.c.l.b16 %v753
      %v1729 = vunpack.c.h.b16 %v753
      %v1730 = vunpack.c.l.b16 %v754
      %v1731 = vunpack.c.h.b16 %v754
      %v1732 = vunpack.c.l.b16 %v755
      %v1733 = vunpack.c.h.b16 %v755
      %v1734 = vunpack.c.l.b16 %v756
      %v1735 = vunpack.c.l.b16 %v757
      %v1736 = vunpack.c.h.b16 %v757
      %v1737 = vunpack.c.l.b16 %v758
      %v1738 = vunpack.c.h.b16 %v758
      %v1739 = vunpack.c.l.b16 %v759
      %v1740 = vunpack.c.h.b16 %v759
      %v1741 = vunpack.c.l.b16 %v760
      %v1742 = vunpack.c.h.b16 %v760
      %v1743 = vunpack.c.l.b16 %v761
      %v1744 = vunpack.c.l.b16 %v762
      %v1745 = vunpack.c.h.b16 %v762
      %v1746 = vunpack.c.l.b16 %v763
      %v1747 = vunpack.c.h.b16 %v763
      %v1748 = vunpack.c.l.b16 %v764
      %v1749 = vunpack.c.h.b16 %v764
      %v1750 = vunpack.c.l.b16 %v765
      %v1751 = vunpack.c.h.b16 %v765
      %v1752 = vunpack.c.l.b16 %v766
      %v1753 = vunpack.c.l.b16 %v767
      %v1754 = vunpack.c.h.b16 %v767
      %v1755 = vunpack.c.l.b16 %v768
      %v1756 = vunpack.c.h.b16 %v768
      %v1757 = vunpack.c.l.b16 %v769
      %v1758 = vunpack.c.h.b16 %v769
      %v1759 = vunpack.c.l.b16 %v770
      %v1760 = vunpack.c.h.b16 %v770
      %v1761 = vunpack.c.l.b16 %v771
      %v1762 = vunpack.c.l.b16 %v772
      %v1763 = vunpack.c.h.b16 %v772
      %v1764 = vunpack.c.l.b16 %v773
      %v1765 = vunpack.c.h.b16 %v773
      %v1766 = vunpack.c.l.b16 %v774
      %v1767 = vunpack.c.h.b16 %v774
      %v1768 = vunpack.c.l.b16 %v775
      %v1769 = vunpack.c.h.b16 %v775
      %v1770 = vunpack.c.l.b16 %v776
      %v1771 = vunpack.c.l.b16 %v777
      %v1772 = vunpack.c.h.b16 %v777
      %v1773 = vunpack.c.l.b16 %v778
      %v1774 = vunpack.c.h.b16 %v778
      %v1775 = vunpack.c.l.b16 %v779
      %v1776 = vunpack.c.h.b16 %v779
      %v1777 = vunpack.c.l.b16 %v780
      %v1778 = vunpack.c.h.b16 %v780
      %v1779 = vunpack.c.l.b16 %v781
      %v1780 = vunpack.c.l.b16 %v782
      %v1781 = vunpack.c.h.b16 %v782
      %v1782 = vunpack.c.l.b16 %v783
      %v1783 = vunpack.c.h.b16 %v783
      %v1784 = vunpack.c.l.b16 %v784
      %v1785 = vunpack.c.h.b16 %v784
      %v1786 = vunpack.c.l.b16 %v785
      %v1787 = vunpack.c.h.b16 %v785
      %v1788 = vunpack.c.l.b16 %v786
      %v1789 = vunpack.c.l.b16 %v787
      %v1790 = vunpack.c.h.b16 %v787
      %v1791 = vunpack.c.l.b16 %v788
      %v1792 = vunpack.c.h.b16 %v788
      %v1793 = vunpack.c.l.b16 %v789
      %v1794 = vunpack.c.h.b16 %v789
      %v1795 = vunpack.c.l.b16 %v790
      %v1796 = vunpack.c.h.b16 %v790
      %v1797 = vunpack.c.l.b16 %v791
      %v1798 = vunpack.c.l.b16 %v792
      %v1799 = vunpack.c.h.b16 %v792
      %v1800 = vunpack.c.l.b16 %v793
      %v1801 = vunpack.c.h.b16 %v793
      %v1802 = vunpack.c.l.b16 %v794
      %v1803 = vunpack.c.h.b16 %v794
      %v1804 = vunpack.c.l.b16 %v795
      %v1805 = vunpack.c.h.b16 %v795
      %v1806 = vunpack.c.l.b16 %v796
      %v1807 = vunpack.c.l.b16 %v797
      %v1808 = vunpack.c.h.b16 %v797
      %v1809 = vunpack.c.l.b16 %v798
      %v1810 = vunpack.c.h.b16 %v798
      %v1811 = vunpack.c.l.b16 %v799
      %v1812 = vunpack.c.h.b16 %v799
      %v1813 = vunpack.c.l.b16 %v800
      %v1814 = vunpack.c.h.b16 %v800
      %v1815 = vunpack.c.l.b16 %v801
      %v1816 = vunpack.c.l.b16 %v802
      %v1817 = vunpack.c.h.b16 %v802
      %v1818 = vunpack.c.l.b16 %v803
      %v1819 = vunpack.c.h.b16 %v803
      %v1820 = vunpack.c.l.b16 %v804
      %v1821 = vunpack.c.h.b16 %v804
      %v1822 = vunpack.c.l.b16 %v805
      %v1823 = vunpack.c.h.b16 %v805
      %v1824 = vunpack.c.l.b16 %v806
      %v1825 = vunpack.c.l.b16 %v807
      %v1826 = vunpack.c.h.b16 %v807
      %v1827 = vunpack.c.l.b16 %v808
      %v1828 = vunpack.c.h.b16 %v808
      %v1829 = vunpack.c.l.b16 %v809
      %v1830 = vunpack.c.h.b16 %v809
      %v1831 = vunpack.c.l.b16 %v810
      %v1832 = vunpack.c.h.b16 %v810
      %v1833 = vunpack.c.l.b16 %v811
      %v1834 = vunpack.c.l.b16 %v812
      %v1835 = vunpack.c.h.b16 %v812
      %v1836 = vunpack.c.l.b16 %v813
      %v1837 = vunpack.c.h.b16 %v813
      %v1838 = vunpack.c.l.b16 %v814
      %v1839 = vunpack.c.h.b16 %v814
      %v1840 = vunpack.c.l.b16 %v815
      %v1841 = vunpack.c.h.b16 %v815
      %v1842 = vunpack.c.l.b16 %v816
      %v1843 = vunpack.c.l.b16 %v817
      %v1844 = vunpack.c.h.b16 %v817
      %v1845 = vunpack.c.l.b16 %v818
      %v1846 = vunpack.c.h.b16 %v818
      %v1847 = vunpack.c.l.b16 %v819
      %v1848 = vunpack.c.h.b16 %v819
      %v1849 = vunpack.c.l.b16 %v820
      %v1850 = vunpack.c.h.b16 %v820
      %v1851 = vunpack.c.l.b16 %v821
      %v1852 = vunpack.c.l.b16 %v822
      %v1853 = vunpack.c.h.b16 %v822
      %v1854 = vunpack.c.l.b16 %v823
      %v1855 = vunpack.c.h.b16 %v823
      %v1856 = vunpack.c.l.b16 %v824
      %v1857 = vunpack.c.h.b16 %v824
      %v1858 = vunpack.c.l.b16 %v825
      %v1859 = vunpack.c.h.b16 %v825
      %v1860 = vunpack.c.l.b16 %v826
      %v1861 = vunpack.c.l.b16 %v827
      %v1862 = vunpack.c.h.b16 %v827
      %v1863 = vunpack.c.l.b16 %v828
      %v1864 = vunpack.c.h.b16 %v828
      %v1865 = vunpack.c.l.b16 %v829
      %v1866 = vunpack.c.h.b16 %v829
      %v1867 = vunpack.c.l.b16 %v830
      %v1868 = vunpack.c.h.b16 %v830
      %v1869 = vunpack.c.l.b16 %v831
      %v1870 = vpack.c.b16 %v1303, %v1294
      %v1871 = vpack.c.b16 %v1304, %v1295
      %v1872 = vpack.c.b16 %v1305, %v1296
      %v1873 = vpack.c.b16 %v1306, %v1297
      %v1874 = vpack.c.b16 %v1307, %v1298
      %v1875 = vpack.c.b16 %v1308, %v1299
      %v1876 = vpack.c.b16 %v1309, %v1300
      %v1877 = vpack.c.b16 %v1310, %v1301
      %v1878 = vpack.c.b16 %v1311, %v1302
      %v1879 = vpack.c.b16 %v1321, %v1312
      %v1880 = vpack.c.b16 %v1322, %v1313
      %v1881 = vpack.c.b16 %v1323, %v1314
      %v1882 = vpack.c.b16 %v1324, %v1315
      %v1883 = vpack.c.b16 %v1325, %v1316
      %v1884 = vpack.c.b16 %v1326, %v1317
      %v1885 = vpack.c.b16 %v1327, %v1318
      %v1886 = vpack.c.b16 %v1328, %v1319
      %v1887 = vpack.c.b16 %v1329, %v1320
      %v1888 = vpack.c.b16 %v1339, %v1330
      %v1889 = vpack.c.b16 %v1340, %v1331
      %v1890 = vpack.c.b16 %v1341, %v1332
      %v1891 = vpack.c.b16 %v1342, %v1333
      %v1892 = vpack.c.b16 %v1343, %v1334
      %v1893 = vpack.c.b16 %v1344, %v1335
      %v1894 = vpack.c.b16 %v1345, %v1336
      %v1895 = vpack.c.b16 %v1346, %v1337
      %v1896 = vpack.c.b16 %v1347, %v1338
      %v1897 = vpack.c.b16 %v1357, %v1348
      %v1898 = vpack.c.b16 %v1358, %v1349
      %v1899 = vpack.c.b16 %v1359, %v1350
      %v1900 = vpack.c.b16 %v1360, %v1351
      %v1901 = vpack.c.b16 %v1361, %v1352
      %v1902 = vpack.c.b16 %v1362, %v1353
      %v1903 = vpack.c.b16 %v1363, %v1354
      %v1904 = vpack.c.b16 %v1364, %v1355
      %v1905 = vpack.c.b16 %v1365, %v1356
      %v1906 = vpack.c.b16 %v1375, %v1366
      %v1907 = vpack.c.b16 %v1376, %v1367
      %v1908 = vpack.c.b16 %v1377, %v1368
      %v1909 = vpack.c.b16 %v1378, %v1369
      %v1910 = vpack.c.b16 %v1379, %v1370
      %v1911 = vpack.c.b16 %v1380, %v1371
      %v1912 = vpack.c.b16 %v1381, %v1372
      %v1913 = vpack.c.b16 %v1382, %v1373
      %v1914 = vpack.c.b16 %v1383, %v1374
      %v1915 = vpack.c.b16 %v1393, %v1384
      %v1916 = vpack.c.b16 %v1394, %v1385
      %v1917 = vpack.c.b16 %v1395, %v1386
      %v1918 = vpack.c.b16 %v1396, %v1387
      %v1919 = vpack.c.b16 %v1397, %v1388
      %v1920 = vpack.c.b16 %v1398, %v1389
      %v1921 = vpack.c.b16 %v1399, %v1390
      %v1922 = vpack.c.b16 %v1400, %v1391
      %v1923 = vpack.c.b16 %v1401, %v1392
      %v1924 = vpack.c.b16 %v1411, %v1402
      %v1925 = vpack.c.b16 %v1412, %v1403
      %v1926 = vpack.c.b16 %v1413, %v1404
      %v1927 = vpack.c.b16 %v1414, %v1405
      %v1928 = vpack.c.b16 %v1415, %v1406
      %v1929 = vpack.c.b16 %v1416, %v1407
      %v1930 = vpack.c.b16 %v1417, %v1408
      %v1931 = vpack.c.b16 %v1418, %v1409
      %v1932 = vpack.c.b16 %v1419, %v1410
      %v1933 = vpack.c.b16 %v1429, %v1420
      %v1934 = vpack.c.b16 %v1430, %v1421
      %v1935 = vpack.c.b16 %v1431, %v1422
      %v1936 = vpack.c.b16 %v1432, %v1423
      %v1937 = vpack.c.b16 %v1433, %v1424
      %v1938 = vpack.c.b16 %v1434, %v1425
      %v1939 = vpack.c.b16 %v1435, %v1426
      %v1940 = vpack.c.b16 %v1436, %v1427
      %v1941 = vpack.c.b16 %v1437, %v1428
      %v1942 = vpack.c.b16 %v1447, %v1438
      %v1943 = vpack.c.b16 %v1448, %v1439
      %v1944 = vpack.c.b16 %v1449, %v1440
      %v1945 = vpack.c.b16 %v1450, %v1441
      %v1946 = vpack.c.b16 %v1451, %v1442
      %v1947 = vpack.c.b16 %v1452, %v1443
      %v1948 = vpack.c.b16 %v1453, %v1444
      %v1949 = vpack.c.b16 %v1454, %v1445
      %v1950 = vpack.c.b16 %v1455, %v1446
      %v1951 = vpack.c.b16 %v1465, %v1456
      %v1952 = vpack.c.b16 %v1466, %v1457
      %v1953 = vpack.c.b16 %v1467, %v1458
      %v1954 = vpack.c.b16 %v1468, %v1459
      %v1955 = vpack.c.b16 %v1469, %v1460
      %v1956 = vpack.c.b16 %v1470, %v1461
      %v1957 = vpack.c.b16 %v1471, %v1462
      %v1958 = vpack.c.b16 %v1472, %v1463
      %v1959 = vpack.c.b16 %v1473, %v1464
      %v1960 = vpack.c.b16 %v1483, %v1474
      %v1961 = vpack.c.b16 %v1484, %v1475
      %v1962 = vpack.c.b16 %v1485, %v1476
      %v1963 = vpack.c.b16 %v1486, %v1477
      %v1964 = vpack.c.b16 %v1487, %v1478
      %v1965 = vpack.c.b16 %v1488, %v1479
      %v1966 = vpack.c.b16 %v1489, %v1480
      %v1967 = vpack.c.b16 %v1490, %v1481
      %v1968 = vpack.c.b16 %v1491, %v1482
      %v1969 = vpack.c.b16 %v1501, %v1492
      %v1970 = vpack.c.b16 %v1502, %v1493
      %v1971 = vpack.c.b16 %v1503, %v1494
      %v1972 = vpack.c.b16 %v1504, %v1495
      %v1973 = vpack.c.b16 %v1505, %v1496
      %v1974 = vpack.c.b16 %v1506, %v1497
      %v1975 = vpack.c.b16 %v1507, %v1498
      %v1976 = vpack.c.b16 %v1508, %v1499
      %v1977 = vpack.c.b16 %v1509, %v1500
      %v1978 = vpack.c.b16 %v1519, %v1510
      %v1979 = vpack.c.b16 %v1520, %v1511
      %v1980 = vpack.c.b16 %v1521, %v1512
      %v1981 = vpack.c.b16 %v1522, %v1513
      %v1982 = vpack.c.b16 %v1523, %v1514
      %v1983 = vpack.c.b16 %v1524, %v1515
      %v1984 = vpack.c.b16 %v1525, %v1516
      %v1985 = vpack.c.b16 %v1526, %v1517
      %v1986 = vpack.c.b16 %v1527, %v1518
      %v1987 = vpack.c.b16 %v1537, %v1528
      %v1988 = vpack.c.b16 %v1538, %v1529
      %v1989 = vpack.c.b16 %v1539, %v1530
      %v1990 = vpack.c.b16 %v1540, %v1531
      %v1991 = vpack.c.b16 %v1541, %v1532
      %v1992 = vpack.c.b16 %v1542, %v1533
      %v1993 = vpack.c.b16 %v1543, %v1534
      %v1994 = vpack.c.b16 %v1544, %v1535
      %v1995 = vpack.c.b16 %v1545, %v1536
      %v1996 = vpack.c.b16 %v1555, %v1546
      %v1997 = vpack.c.b16 %v1556, %v1547
      %v1998 = vpack.c.b16 %v1557, %v1548
      %v1999 = vpack.c.b16 %v1558, %v1549
      %v2000 = vpack.c.b16 %v1559, %v1550
      %v2001 = vpack.c.b16 %v1560, %v1551
      %v2002 = vpack.c.b16 %v1561, %v1552
      %v2003 = vpack.c.b16 %v1562, %v1553
      %v2004 = vpack.c.b16 %v1563, %v1554
      %v2005 = vpack.c.b16 %v1573, %v1564
      %v2006 = vpack.c.b16 %v1574, %v1565
      %v2007 = vpack.c.b16 %v1575, %v1566
      %v2008 = vpack.c.b16 %v1576, %v1567
      %v2009 = vpack.c.b16 %v1577, %v1568
      %v2010 = vpack.c.b16 %v1578, %v1569
      %v2011 = vpack.c.b16 %v1579, %v1570
      %v2012 = vpack.c.b16 %v1580, %v1571
      %v2013 = vpack.c.b16 %v1581, %v1572
      %v2014 = vpack.c.b16 %v1591, %v1582
      %v2015 = vpack.c.b16 %v1592, %v1583
      %v2016 = vpack.c.b16 %v1593, %v1584
      %v2017 = vpack.c.b16 %v1594, %v1585
      %v2018 = vpack.c.b16 %v1595, %v1586
      %v2019 = vpack.c.b16 %v1596, %v1587
      %v2020 = vpack.c.b16 %v1597, %v1588
      %v2021 = vpack.c.b16 %v1598, %v1589
      %v2022 = vpack.c.b16 %v1599, %v1590
      %v2023 = vpack.c.b16 %v1609, %v1600
      %v2024 = vpack.c.b16 %v1610, %v1601
      %v2025 = vpack.c.b16 %v1611, %v1602
      %v2026 = vpack.c.b16 %v1612, %v1603
      %v2027 = vpack.c.b16 %v1613, %v1604
      %v2028 = vpack.c.b16 %v1614, %v1605
      %v2029 = vpack.c.b16 %v1615, %v1606
      %v2030 = vpack.c.b16 %v1616, %v1607
      %v2031 = vpack.c.b16 %v1617, %v1608
      %v2032 = vpack.c.b16 %v1627, %v1618
      %v2033 = vpack.c.b16 %v1628, %v1619
      %v2034 = vpack.c.b16 %v1629, %v1620
      %v2035 = vpack.c.b16 %v1630, %v1621
      %v2036 = vpack.c.b16 %v1631, %v1622
      %v2037 = vpack.c.b16 %v1632, %v1623
      %v2038 = vpack.c.b16 %v1633, %v1624
      %v2039 = vpack.c.b16 %v1634, %v1625
      %v2040 = vpack.c.b16 %v1635, %v1626
      %v2041 = vpack.c.b16 %v1645, %v1636
      %v2042 = vpack.c.b16 %v1646, %v1637
      %v2043 = vpack.c.b16 %v1647, %v1638
      %v2044 = vpack.c.b16 %v1648, %v1639
      %v2045 = vpack.c.b16 %v1649, %v1640
      %v2046 = vpack.c.b16 %v1650, %v1641
      %v2047 = vpack.c.b16 %v1651, %v1642
      %v2048 = vpack.c.b16 %v1652, %v1643
      %v2049 = vpack.c.b16 %v1653, %v1644
      %v2050 = vpack.c.b16 %v1663, %v1654
      %v2051 = vpack.c.b16 %v1664, %v1655
      %v2052 = vpack.c.b16 %v1665, %v1656
      %v2053 = vpack.c.b16 %v1666, %v1657
      %v2054 = vpack.c.b16 %v1667, %v1658
      %v2055 = vpack.c.b16 %v1668, %v1659
      %v2056 = vpack.c.b16 %v1669, %v1660
      %v2057 = vpack.c.b16 %v1670, %v1661
      %v2058 = vpack.c.b16 %v1671, %v1662
      %v2059 = vpack.c.b16 %v1681, %v1672
      %v2060 = vpack.c.b16 %v1682, %v1673
      %v2061 = vpack.c.b16 %v1683, %v1674
      %v2062 = vpack.c.b16 %v1684, %v1675
      %v2063 = vpack.c.b16 %v1685, %v1676
      %v2064 = vpack.c.b16 %v1686, %v1677
      %v2065 = vpack.c.b16 %v1687, %v1678
      %v2066 = vpack.c.b16 %v1688, %v1679
      %v2067 = vpack.c.b16 %v1689, %v1680
      %v2068 = vpack.c.b16 %v1699, %v1690
      %v2069 = vpack.c.b16 %v1700, %v1691
      %v2070 = vpack.c.b16 %v1701, %v1692
      %v2071 = vpack.c.b16 %v1702, %v1693
      %v2072 = vpack.c.b16 %v1703, %v1694
      %v2073 = vpack.c.b16 %v1704, %v1695
      %v2074 = vpack.c.b16 %v1705, %v1696
      %v2075 = vpack.c.b16 %v1706, %v1697
      %v2076 = vpack.c.b16 %v1707, %v1698
      %v2077 = vpack.c.b16 %v1717, %v1708
      %v2078 = vpack.c.b16 %v1718, %v1709
      %v2079 = vpack.c.b16 %v1719, %v1710
      %v2080 = vpack.c.b16 %v1720, %v1711
      %v2081 = vpack.c.b16 %v1721, %v1712
      %v2082 = vpack.c.b16 %v1722, %v1713
      %v2083 = vpack.c.b16 %v1723, %v1714
      %v2084 = vpack.c.b16 %v1724, %v1715
      %v2085 = vpack.c.b16 %v1725, %v1716
      %v2086 = vpack.c.b16 %v1735, %v1726
      %v2087 = vpack.c.b16 %v1736, %v1727
      %v2088 = vpack.c.b16 %v1737, %v1728
      %v2089 = vpack.c.b16 %v1738, %v1729
      %v2090 = vpack.c.b16 %v1739, %v1730
      %v2091 = vpack.c.b16 %v1740, %v1731
      %v2092 = vpack.c.b16 %v1741, %v1732
      %v2093 = vpack.c.b16 %v1742, %v1733
      %v2094 = vpack.c.b16 %v1743, %v1734
      %v2095 = vpack.c.b16 %v1753, %v1744
      %v2096 = vpack.c.b16 %v1754, %v1745
      %v2097 = vpack.c.b16 %v1755, %v1746
      %v2098 = vpack.c.b16 %v1756, %v1747
      %v2099 = vpack.c.b16 %v1757, %v1748
      %v2100 = vpack.c.b16 %v1758, %v1749
      %v2101 = vpack.c.b16 %v1759, %v1750
      %v2102 = vpack.c.b16 %v1760, %v1751
      %v2103 = vpack.c.b16 %v1761, %v1752
      %v2104 = vpack.c.b16 %v1771, %v1762
      %v2105 = vpack.c.b16 %v1772, %v1763
      %v2106 = vpack.c.b16 %v1773, %v1764
      %v2107 = vpack.c.b16 %v1774, %v1765
      %v2108 = vpack.c.b16 %v1775, %v1766
      %v2109 = vpack.c.b16 %v1776, %v1767
      %v2110 = vpack.c.b16 %v1777, %v1768
      %v2111 = vpack.c.b16 %v1778, %v1769
      %v2112 = vpack.c.b16 %v1779, %v1770
      %v2113 = vpack.c.b16 %v1789, %v1780
      %v2114 = vpack.c.b16 %v1790, %v1781
      %v2115 = vpack.c.b16 %v1791, %v1782
      %v2116 = vpack.c.b16 %v1792, %v1783
      %v2117 = vpack.c.b16 %v1793, %v1784
      %v2118 = vpack.c.b16 %v1794, %v1785
      %v2119 = vpack.c.b16 %v1795, %v1786
      %v2120 = vpack.c.b16 %v1796, %v1787
      %v2121 = vpack.c.b16 %v1797, %v1788
      %v2122 = vpack.c.b16 %v1807, %v1798
      %v2123 = vpack.c.b16 %v1808, %v1799
      %v2124 = vpack.c.b16 %v1809, %v1800
      %v2125 = vpack.c.b16 %v1810, %v1801
      %v2126 = vpack.c.b16 %v1811, %v1802
      %v2127 = vpack.c.b16 %v1812, %v1803
      %v2128 = vpack.c.b16 %v1813, %v1804
      %v2129 = vpack.c.b16 %v1814, %v1805
      %v2130 = vpack.c.b16 %v1815, %v1806
      %v2131 = vpack.c.b16 %v1825, %v1816
      %v2132 = vpack.c.b16 %v1826, %v1817
      %v2133 = vpack.c.b16 %v1827, %v1818
      %v2134 = vpack.c.b16 %v1828, %v1819
      %v2135 = vpack.c.b16 %v1829, %v1820
      %v2136 = vpack.c.b16 %v1830, %v1821
      %v2137 = vpack.c.b16 %v1831, %v1822
      %v2138 = vpack.c.b16 %v1832, %v1823
      %v2139 = vpack.c.b16 %v1833, %v1824
      %v2140 = vpack.c.b16 %v1843, %v1834
      %v2141 = vpack.c.b16 %v1844, %v1835
      %v2142 = vpack.c.b16 %v1845, %v1836
      %v2143 = vpack.c.b16 %v1846, %v1837
      %v2144 = vpack.c.b16 %v1847, %v1838
      %v2145 = vpack.c.b16 %v1848, %v1839
      %v2146 = vpack.c.b16 %v1849, %v1840
      %v2147 = vpack.c.b16 %v1850, %v1841
      %v2148 = vpack.c.b16 %v1851, %v1842
      %v2149 = vpack.c.b16 %v1861, %v1852
      %v2150 = vpack.c.b16 %v1862, %v1853
      %v2151 = vpack.c.b16 %v1863, %v1854
      %v2152 = vpack.c.b16 %v1864, %v1855
      %v2153 = vpack.c.b16 %v1865, %v1856
      %v2154 = vpack.c.b16 %v1866, %v1857
      %v2155 = vpack.c.b16 %v1867, %v1858
      %v2156 = vpack.c.b16 %v1868, %v1859
      %v2157 = vpack.c.b16 %v1869, %v1860
      %v2550 = vunpack.c.l.b16 %v832
      %v2551 = vunpack.c.h.b16 %v832
      %v2552 = vunpack.c.l.b16 %v833
      %v2553 = vunpack.c.h.b16 %v833
      %v2554 = vunpack.c.l.b16 %v834
      %v2555 = vunpack.c.h.b16 %v834
      %v2556 = vunpack.c.l.b16 %v835
      %v2557 = vunpack.c.h.b16 %v835
      %v2558 = vunpack.c.l.b16 %v836
      %v2559 = vunpack.c.h.b16 %v836
      %v2560 = vunpack.c.l.b16 %v837
      %v2561 = vunpack.c.h.b16 %v837
      %v2562 = vunpack.c.l.b16 %v838
      %v2563 = vunpack.c.h.b16 %v838
      %v2564 = vunpack.c.l.b16 %v839
      %v2565 = vunpack.c.h.b16 %v839
      %v2566 = vunpack.c.l.b16 %v840
      %v2567 = vunpack.c.h.b16 %v840
      %v2568 = vunpack.c.l.b16 %v841
      %v2569 = vunpack.c.h.b16 %v841
      %v2570 = vunpack.c.l.b16 %v842
      %v2571 = vunpack.c.h.b16 %v842
      %v2572 = vunpack.c.l.b16 %v843
      %v2573 = vunpack.c.h.b16 %v843
      %v2574 = vunpack.c.l.b16 %v844
      %v2575 = vunpack.c.h.b16 %v844
      %v2576 = vunpack.c.l.b16 %v845
      %v2577 = vunpack.c.h.b16 %v845
      %v2578 = vunpack.c.l.b16 %v846
      %v2579 = vunpack.c.h.b16 %v846
      %v2580 = vunpack.c.l.b16 %v847
      %v2581 = vunpack.c.h.b16 %v847
      %v2582 = vunpack.c.l.b16 %v848
      %v2583 = vunpack.c.h.b16 %v848
      %v2584 = vunpack.c.l.b16 %v849
      %v2585 = vunpack.c.h.b16 %v849
      %v2586 = vunpack.c.l.b16 %v850
      %v2587 = vunpack.c.h.b16 %v850
      %v2588 = vunpack.c.l.b16 %v851
      %v2589 = vunpack.c.h.b16 %v851
      %v2590 = vunpack.c.l.b16 %v852
      %v2591 = vunpack.c.h.b16 %v852
      %v2592 = vunpack.c.l.b16 %v853
      %v2593 = vunpack.c.h.b16 %v853
      %v2594 = vunpack.c.l.b16 %v854
      %v2595 = vunpack.c.h.b16 %v854
      %v2596 = vunpack.c.l.b16 %v855
      %v2597 = vunpack.c.h.b16 %v855
      %v2598 = vunpack.c.l.b16 %v856
      %v2599 = vunpack.c.h.b16 %v856
      %v2600 = vunpack.c.l.b16 %v857
      %v2601 = vunpack.c.h.b16 %v857
      %v2602 = vunpack.c.l.b16 %v858
      %v2603 = vunpack.c.h.b16 %v858
      %v2604 = vunpack.c.l.b16 %v859
      %v2605 = vunpack.c.h.b16 %v859
      %v2606 = vunpack.c.l.b16 %v860
      %v2607 = vunpack.c.h.b16 %v860
      %v2608 = vunpack.c.l.b16 %v861
      %v2609 = vunpack.c.h.b16 %v861
      %v2610 = vunpack.c.l.b16 %v862
      %v2611 = vunpack.c.h.b16 %v862
      %v2612 = vunpack.c.l.b16 %v863
      %v2613 = vunpack.c.h.b16 %v863
      %v2614 = vunpack.c.l.b16 %v864
      %v2615 = vunpack.c.h.b16 %v864
      %v2616 = vunpack.c.l.b16 %v865
      %v2617 = vunpack.c.h.b16 %v865
      %v2618 = vunpack.c.l.b16 %v866
      %v2619 = vunpack.c.h.b16 %v866
      %v2620 = vunpack.c.l.b16 %v867
      %v2621 = vunpack.c.h.b16 %v867
      %v2622 = vunpack.c.l.b16 %v868
      %v2623 = vunpack.c.h.b16 %v868
      %v2624 = vunpack.c.l.b16 %v869
      %v2625 = vunpack.c.h.b16 %v869
      %v2626 = vunpack.c.l.b16 %v870
      %v2627 = vunpack.c.h.b16 %v870
      %v2628 = vunpack.c.l.b16 %v871
      %v2629 = vunpack.c.h.b16 %v871
      %v2630 = vunpack.c.l.b16 %v872
      %v2631 = vunpack.c.h.b16 %v872
      %v2632 = vunpack.c.l.b16 %v873
      %v2633 = vunpack.c.h.b16 %v873
      %v2634 = vunpack.c.l.b16 %v874
      %v2635 = vunpack.c.h.b16 %v874
      %v2636 = vunpack.c.l.b16 %v875
      %v2637 = vunpack.c.h.b16 %v875
      %v2638 = vunpack.c.l.b16 %v876
      %v2639 = vunpack.c.h.b16 %v876
      %v2640 = vunpack.c.l.b16 %v877
      %v2641 = vunpack.c.h.b16 %v877
      %v2642 = vunpack.c.l.b16 %v878
      %v2643 = vunpack.c.h.b16 %v878
      %v2644 = vunpack.c.l.b16 %v879
      %v2645 = vunpack.c.h.b16 %v879
      %v2646 = vunpack.c.l.b16 %v880
      %v2647 = vunpack.c.h.b16 %v880
      %v2648 = vunpack.c.l.b16 %v881
      %v2649 = vunpack.c.h.b16 %v881
      %v2650 = vunpack.c.l.b16 %v882
      %v2651 = vunpack.c.h.b16 %v882
      %v2652 = vunpack.c.l.b16 %v883
      %v2653 = vunpack.c.h.b16 %v883
      %v2654 = vunpack.c.l.b16 %v884
      %v2655 = vunpack.c.h.b16 %v884
      %v2656 = vunpack.c.l.b16 %v885
      %v2657 = vunpack.c.h.b16 %v885
      %v2658 = vunpack.c.l.b16 %v886
      %v2659 = vunpack.c.h.b16 %v886
      %v2660 = vunpack.c.l.b16 %v887
      %v2661 = vunpack.c.h.b16 %v887
      %v2662 = vunpack.c.l.b16 %v888
      %v2663 = vunpack.c.h.b16 %v888
      %v2664 = vunpack.c.l.b16 %v889
      %v2665 = vunpack.c.h.b16 %v889
      %v2666 = vunpack.c.l.b16 %v890
      %v2667 = vunpack.c.h.b16 %v890
      %v2668 = vunpack.c.l.b16 %v891
      %v2669 = vunpack.c.h.b16 %v891
      %v2670 = vunpack.c.l.b16 %v892
      %v2671 = vunpack.c.h.b16 %v892
      %v2672 = vunpack.c.l.b16 %v893
      %v2673 = vunpack.c.h.b16 %v893
      %v2674 = vunpack.c.l.b16 %v894
      %v2675 = vunpack.c.h.b16 %v894
      %v2676 = vunpack.c.l.b16 %v895
      %v2677 = vunpack.c.h.b16 %v895
      %v2678 = vunpack.c.l.b16 %v896
      %v2679 = vunpack.c.h.b16 %v896
      %v2680 = vunpack.c.l.b16 %v897
      %v2681 = vunpack.c.h.b16 %v897
      %v2682 = vunpack.c.l.b16 %v898
      %v2683 = vunpack.c.h.b16 %v898
      %v2684 = vunpack.c.l.b16 %v899
      %v2685 = vunpack.c.h.b16 %v899
      %v2686 = vunpack.c.l.b16 %v900
      %v2687 = vunpack.c.h.b16 %v900
      %v2688 = vunpack.c.l.b16 %v901
      %v2689 = vunpack.c.h.b16 %v901
      %v2690 = vunpack.c.l.b16 %v902
      %v2691 = vunpack.c.h.b16 %v902
      %v2692 = vunpack.c.l.b16 %v903
      %v2693 = vunpack.c.h.b16 %v903
      %v2694 = vunpack.c.l.b16 %v904
      %v2695 = vunpack.c.h.b16 %v904
      %v2696 = vunpack.c.l.b16 %v905
      %v2697 = vunpack.c.h.b16 %v905
      %v2698 = vunpack.c.l.b16 %v906
      %v2699 = vunpack.c.h.b16 %v906
      %v2700 = vunpack.c.l.b16 %v907
      %v2701 = vunpack.c.h.b16 %v907
      %v2702 = vunpack.c.l.b16 %v908
      %v2703 = vunpack.c.h.b16 %v908
      %v2704 = vunpack.c.l.b16 %v909
      %v2705 = vunpack.c.h.b16 %v909
      %v2706 = vunpack.c.l.b16 %v910
      %v2707 = vunpack.c.h.b16 %v910
      %v2708 = vunpack.c.l.b16 %v911
      %v2709 = vunpack.c.h.b16 %v911
      %v2710 = vunpack.c.l.b16 %v912
      %v2711 = vunpack.c.h.b16 %v912
      %v2712 = vunpack.c.l.b16 %v913
      %v2713 = vunpack.c.h.b16 %v913
      %v2714 = vunpack.c.l.b16 %v914
      %v2715 = vunpack.c.h.b16 %v914
      %v2716 = vunpack.c.l.b16 %v915
      %v2717 = vunpack.c.h.b16 %v915
      %v2718 = vunpack.c.l.b16 %v916
      %v2719 = vunpack.c.h.b16 %v916
      %v2720 = vunpack.c.l.b16 %v917
      %v2721 = vunpack.c.h.b16 %v917
      %v2722 = vunpack.c.l.b16 %v918
      %v2723 = vunpack.c.h.b16 %v918
      %v2724 = vunpack.c.l.b16 %v919
      %v2725 = vunpack.c.h.b16 %v919
      %v2726 = vunpack.c.l.b16 %v920
      %v2727 = vunpack.c.h.b16 %v920
      %v2728 = vunpack.c.l.b16 %v921
      %v2729 = vunpack.c.h.b16 %v921
      %v2730 = vunpack.c.l.b16 %v922
      %v2731 = vunpack.c.h.b16 %v922
      %v2732 = vunpack.c.l.b16 %v923
      %v2733 = vunpack.c.h.b16 %v923
      %v2734 = vunpack.c.l.b16 %v924
      %v2735 = vunpack.c.h.b16 %v924
      %v2736 = vunpack.c.l.b16 %v925
      %v2737 = vunpack.c.h.b16 %v925
      %v2738 = vunpack.c.l.b16 %v926
      %v2739 = vunpack.c.h.b16 %v926
      %v2740 = vunpack.c.l.b16 %v927
      %v2741 = vunpack.c.h.b16 %v927
      %v2742 = vunpack.c.l.b16 %v928
      %v2743 = vunpack.c.h.b16 %v928
      %v2744 = vunpack.c.l.b16 %v929
      %v2745 = vunpack.c.h.b16 %v929
      %v2746 = vunpack.c.l.b16 %v930
      %v2747 = vunpack.c.h.b16 %v930
      %v2748 = vunpack.c.l.b16 %v931
      %v2749 = vunpack.c.h.b16 %v931
      %v2750 = vunpack.c.l.b16 %v932
      %v2751 = vunpack.c.h.b16 %v932
      %v2752 = vunpack.c.l.b16 %v933
      %v2753 = vunpack.c.h.b16 %v933
      %v2754 = vunpack.c.l.b16 %v934
      %v2755 = vunpack.c.h.b16 %v934
      %v2756 = vunpack.c.l.b16 %v935
      %v2757 = vunpack.c.h.b16 %v935
      %v2758 = vunpack.c.l.b16 %v936
      %v2759 = vunpack.c.h.b16 %v936
      %v2760 = vunpack.c.l.b16 %v937
      %v2761 = vunpack.c.h.b16 %v937
      %v2762 = vunpack.c.l.b16 %v938
      %v2763 = vunpack.c.h.b16 %v938
      %v2764 = vunpack.c.l.b16 %v939
      %v2765 = vunpack.c.h.b16 %v939
      %v2766 = vunpack.c.l.b16 %v940
      %v2767 = vunpack.c.h.b16 %v940
      %v2768 = vunpack.c.l.b16 %v941
      %v2769 = vunpack.c.h.b16 %v941
      %v2770 = vunpack.c.l.b16 %v942
      %v2771 = vunpack.c.h.b16 %v942
      %v2772 = vunpack.c.l.b16 %v943
      %v2773 = vunpack.c.h.b16 %v943
      %v2774 = vunpack.c.l.b16 %v944
      %v2775 = vunpack.c.h.b16 %v944
      %v2776 = vunpack.c.l.b16 %v945
      %v2777 = vunpack.c.h.b16 %v945
      %v2778 = vunpack.c.l.b16 %v946
      %v2779 = vunpack.c.h.b16 %v946
      %v2780 = vunpack.c.l.b16 %v947
      %v2781 = vunpack.c.h.b16 %v947
      %v2782 = vunpack.c.l.b16 %v948
      %v2783 = vunpack.c.h.b16 %v948
      %v2784 = vunpack.c.l.b16 %v949
      %v2785 = vunpack.c.h.b16 %v949
      %v2786 = vunpack.c.l.b16 %v950
      %v2787 = vunpack.c.h.b16 %v950
      %v2788 = vunpack.c.l.b16 %v951
      %v2789 = vunpack.c.h.b16 %v951
      %v2790 = vunpack.c.l.b16 %v952
      %v2791 = vunpack.c.h.b16 %v952
      %v2792 = vunpack.c.l.b16 %v953
      %v2793 = vunpack.c.h.b16 %v953
      %v2794 = vunpack.c.l.b16 %v954
      %v2795 = vunpack.c.h.b16 %v954
      %v2796 = vunpack.c.l.b16 %v955
      %v2797 = vunpack.c.h.b16 %v955
      %v2798 = vunpack.c.l.b16 %v956
      %v2799 = vunpack.c.h.b16 %v956
      %v2800 = vunpack.c.l.b16 %v957
      %v2801 = vunpack.c.h.b16 %v957
      %v2802 = vunpack.c.l.b16 %v958
      %v2803 = vunpack.c.h.b16 %v958
      %v2804 = vunpack.c.l.b16 %v959
      %v2805 = vunpack.c.h.b16 %v959
      %v2806 = vunpack.c.l.b16 %v960
      %v2807 = vunpack.c.h.b16 %v960
      %v2808 = vunpack.c.l.b16 %v961
      %v2809 = vunpack.c.h.b16 %v961
      %v2810 = vunpack.c.l.b16 %v962
      %v2811 = vunpack.c.h.b16 %v962
      %v2812 = vunpack.c.l.b16 %v963
      %v2813 = vunpack.c.h.b16 %v963
      %v2814 = vunpack.c.l.b16 %v964
      %v2815 = vunpack.c.h.b16 %v964
      %v2816 = vunpack.c.l.b16 %v965
      %v2817 = vunpack.c.h.b16 %v965
      %v2818 = vunpack.c.l.b16 %v966
      %v2819 = vunpack.c.h.b16 %v966
      %v2820 = vunpack.c.l.b16 %v967
      %v2821 = vunpack.c.h.b16 %v967
      %v2822 = vpack.c.b16 %v2552, %v2550
      %v2823 = vpack.c.b16 %v2553, %v2551
      %v2824 = vpack.c.b16 %v2556, %v2554
      %v2825 = vpack.c.b16 %v2557, %v2555
      %v2826 = vpack.c.b16 %v2560, %v2558
      %v2827 = vpack.c.b16 %v2561, %v2559
      %v2828 = vpack.c.b16 %v2564, %v2562
      %v2829 = vpack.c.b16 %v2565, %v2563
      %v2830 = vpack.c.b16 %v2568, %v2566
      %v2831 = vpack.c.b16 %v2569, %v2567
      %v2832 = vpack.c.b16 %v2572, %v2570
      %v2833 = vpack.c.b16 %v2573, %v2571
      %v2834 = vpack.c.b16 %v2576, %v2574
      %v2835 = vpack.c.b16 %v2577, %v2575
      %v2836 = vpack.c.b16 %v2580, %v2578
      %v2837 = vpack.c.b16 %v2581, %v2579
      %v2838 = vpack.c.b16 %v2584, %v2582
      %v2839 = vpack.c.b16 %v2585, %v2583
      %v2840 = vpack.c.b16 %v2588, %v2586
      %v2841 = vpack.c.b16 %v2589, %v2587
      %v2842 = vpack.c.b16 %v2592, %v2590
      %v2843 = vpack.c.b16 %v2593, %v2591
      %v2844 = vpack.c.b16 %v2596, %v2594
      %v2845 = vpack.c.b16 %v2597, %v2595
      %v2846 = vpack.c.b16 %v2600, %v2598
      %v2847 = vpack.c.b16 %v2601, %v2599
      %v2848 = vpack.c.b16 %v2604, %v2602
      %v2849 = vpack.c.b16 %v2605, %v2603
      %v2850 = vpack.c.b16 %v2608, %v2606
      %v2851 = vpack.c.b16 %v2609, %v2607
      %v2852 = vpack.c.b16 %v2612, %v2610
      %v2853 = vpack.c.b16 %v2613, %v2611
      %v2854 = vpack.c.b16 %v2616, %v2614
      %v2855 = vpack.c.b16 %v2617, %v2615
      %v2856 = vpack.c.b16 %v2620, %v2618
      %v2857 = vpack.c.b16 %v2621, %v2619
      %v2858 = vpack.c.b16 %v2624, %v2622
      %v2859 = vpack.c.b16 %v2625, %v2623
      %v2860 = vpack.c.b16 %v2628, %v2626
      %v2861 = vpack.c.b16 %v2629, %v2627
      %v2862 = vpack.c.b16 %v2632, %v2630
      %v2863 = vpack.c.b16 %v2633, %v2631
      %v2864 = vpack.c.b16 %v2636, %v2634
      %v2865 = vpack.c.b16 %v2637, %v2635
      %v2866 = vpack.c.b16 %v2640, %v2638
      %v2867 = vpack.c.b16 %v2641, %v2639
      %v2868 = vpack.c.b16 %v2644, %v2642
      %v2869 = vpack.c.b16 %v2645, %v2643
      %v2870 = vpack.c.b16 %v2648, %v2646
      %v2871 = vpack.c.b16 %v2649, %v2647
      %v2872 = vpack.c.b16 %v2652, %v2650
      %v2873 = vpack.c.b16 %v2653, %v2651
      %v2874 = vpack.c.b16 %v2656, %v2654
      %v2875 = vpack.c.b16 %v2657, %v2655
      %v2876 = vpack.c.b16 %v2660, %v2658
      %v2877 = vpack.c.b16 %v2661, %v2659
      %v2878 = vpack.c.b16 %v2664, %v2662
      %v2879 = vpack.c.b16 %v2665, %v2663
      %v2880 = vpack.c.b16 %v2668, %v2666
      %v2881 = vpack.c.b16 %v2669, %v2667
      %v2882 = vpack.c.b16 %v2672, %v2670
      %v2883 = vpack.c.b16 %v2673, %v2671
      %v2884 = vpack.c.b16 %v2676, %v2674
      %v2885 = vpack.c.b16 %v2677, %v2675
      %v2886 = vpack.c.b16 %v2680, %v2678
      %v2887 = vpack.c.b16 %v2681, %v2679
      %v2888 = vpack.c.b16 %v2684, %v2682
      %v2889 = vpack.c.b16 %v2685, %v2683
      %v2890 = vpack.c.b16 %v2688, %v2686
      %v2891 = vpack.c.b16 %v2689, %v2687
      %v2892 = vpack.c.b16 %v2692, %v2690
      %v2893 = vpack.c.b16 %v2693, %v2691
      %v2894 = vpack.c.b16 %v2696, %v2694
      %v2895 = vpack.c.b16 %v2697, %v2695
      %v2896 = vpack.c.b16 %v2700, %v2698
      %v2897 = vpack.c.b16 %v2701, %v2699
      %v2898 = vpack.c.b16 %v2704, %v2702
      %v2899 = vpack.c.b16 %v2705, %v2703
      %v2900 = vpack.c.b16 %v2708, %v2706
      %v2901 = vpack.c.b16 %v2709, %v2707
      %v2902 = vpack.c.b16 %v2712, %v2710
      %v2903 = vpack.c.b16 %v2713, %v2711
      %v2904 = vpack.c.b16 %v2716, %v2714
      %v2905 = vpack.c.b16 %v2717, %v2715
      %v2906 = vpack.c.b16 %v2720, %v2718
      %v2907 = vpack.c.b16 %v2721, %v2719
      %v2908 = vpack.c.b16 %v2724, %v2722
      %v2909 = vpack.c.b16 %v2725, %v2723
      %v2910 = vpack.c.b16 %v2728, %v2726
      %v2911 = vpack.c.b16 %v2729, %v2727
      %v2912 = vpack.c.b16 %v2732, %v2730
      %v2913 = vpack.c.b16 %v2733, %v2731
      %v2914 = vpack.c.b16 %v2736, %v2734
      %v2915 = vpack.c.b16 %v2737, %v2735
      %v2916 = vpack.c.b16 %v2740, %v2738
      %v2917 = vpack.c.b16 %v2741, %v2739
      %v2918 = vpack.c.b16 %v2744, %v2742
      %v2919 = vpack.c.b16 %v2745, %v2743
      %v2920 = vpack.c.b16 %v2748, %v2746
      %v2921 = vpack.c.b16 %v2749, %v2747
      %v2922 = vpack.c.b16 %v2752, %v2750
      %v2923 = vpack.c.b16 %v2753, %v2751
      %v2924 = vpack.c.b16 %v2756, %v2754
      %v2925 = vpack.c.b16 %v2757, %v2755
      %v2926 = vpack.c.b16 %v2760, %v2758
      %v2927 = vpack.c.b16 %v2761, %v2759
      %v2928 = vpack.c.b16 %v2764, %v2762
      %v2929 = vpack.c.b16 %v2765, %v2763
      %v2930 = vpack.c.b16 %v2768, %v2766
      %v2931 = vpack.c.b16 %v2769, %v2767
      %v2932 = vpack.c.b16 %v2772, %v2770
      %v2933 = vpack.c.b16 %v2773, %v2771
      %v2934 = vpack.c.b16 %v2776, %v2774
      %v2935 = vpack.c.b16 %v2777, %v2775
      %v2936 = vpack.c.b16 %v2780, %v2778
      %v2937 = vpack.c.b16 %v2781, %v2779
      %v2938 = vpack.c.b16 %v2784, %v2782
      %v2939 = vpack.c.b16 %v2785, %v2783
      %v2940 = vpack.c.b16 %v2788, %v2786
      %v2941 = vpack.c.b16 %v2789, %v2787
      %v2942 = vpack.c.b16 %v2792, %v2790
      %v2943 = vpack.c.b16 %v2793, %v2791
      %v2944 = vpack.c.b16 %v2796, %v2794
      %v2945 = vpack.c.b16 %v2797, %v2795
      %v2946 = vpack.c.b16 %v2800, %v2798
      %v2947 = vpack.c.b16 %v2801, %v2799
      %v2948 = vpack.c.b16 %v2804, %v2802
      %v2949 = vpack.c.b16 %v2805, %v2803
      %v2950 = vpack.c.b16 %v2808, %v2806
      %v2951 = vpack.c.b16 %v2809, %v2807
      %v2952 = vpack.c.b16 %v2812, %v2810
      %v2953 = vpack.c.b16 %v2813, %v2811
      %v2954 = vpack.c.b16 %v2816, %v2814
      %v2955 = vpack.c.b16 %v2817, %v2815
      %v2956 = vpack.c.b16 %v2820, %v2818
      %v2957 = vpack.c.b16 %v2821, %v2819
      %vm3094 = vcmask 523264
      %v3096 = vsel %vm3094, %v1878, 0
      %v3099 = vsel %vm3094, %v1887, 0
      %v3102 = vsel %vm3094, %v1896, 0
      %v3105 = vsel %vm3094, %v1905, 0
      %v3108 = vsel %vm3094, %v1914, 0
      %v3111 = vsel %vm3094, %v1923, 0
      %v3114 = vsel %vm3094, %v1932, 0
      %v3117 = vsel %vm3094, %v1941, 0
      %v3120 = vsel %vm3094, %v1950, 0
      %v3123 = vsel %vm3094, %v1959, 0
      %v3126 = vsel %vm3094, %v1968, 0
      %v3129 = vsel %vm3094, %v1977, 0
      %v3132 = vsel %vm3094, %v1986, 0
      %v3135 = vsel %vm3094, %v1995, 0
      %v3138 = vsel %vm3094, %v2004, 0
      %v3141 = vsel %vm3094, %v2013, 0
      %v3144 = vsel %vm3094, %v2022, 0
      %v3147 = vsel %vm3094, %v2031, 0
      %v3150 = vsel %vm3094, %v2040, 0
      %v3153 = vsel %vm3094, %v2049, 0
      %v3156 = vsel %vm3094, %v2058, 0
      %v3159 = vsel %vm3094, %v2067, 0
      %v3162 = vsel %vm3094, %v2076, 0
      %v3165 = vsel %vm3094, %v2085, 0
      %v3168 = vsel %vm3094, %v2094, 0
      %v3171 = vsel %vm3094, %v2103, 0
      %v3174 = vsel %vm3094, %v2112, 0
      %v3177 = vsel %vm3094, %v2121, 0
      %v3180 = vsel %vm3094, %v2130, 0
      %v3183 = vsel %vm3094, %v2139, 0
      %v3186 = vsel %vm3094, %v2148, 0
      %v3189 = vsel %vm3094, %v2157, 0
      %3191 = vmatpush.bf16.msra.mxu0 %v2836
      %3192 = vmatpush.bf16.msra.mxu0 %v2834
      %3193 = vmatpush.bf16.msra.mxu0 %v2832
      %3194 = vmatpush.bf16.msra.mxu0 %v2830
      %3195 = vmatpush.bf16.msra.mxu0 %v2828
      %3196 = vmatpush.bf16.msra.mxu0 %v2826
      %3197 = vmatpush.bf16.msra.mxu0 %v2824
      %3198 = vmatpush.bf16.msra.mxu0 %v2822
      %3199 = vmatmul.bf16.gmra.mxu0 %v1870
      %v3200 = vpop.f32.mrf.mxu0
      %v3201 = vadd.f32 %v970, %v3200
      %v3202 = vpop.f32.mrf.mxu0
      %v3203 = vadd.f32 %v970, %v3202
      %3204 = vmatmul.bf16.gmra.mxu0 %v1879
      %v3205 = vpop.f32.mrf.mxu0
      %v3206 = vadd.f32 %v970, %v3205
      %v3207 = vpop.f32.mrf.mxu0
      %v3208 = vadd.f32 %v970, %v3207
      %3209 = vmatmul.bf16.gmra.mxu0 %v1888
      %v3210 = vpop.f32.mrf.mxu0
      %v3211 = vadd.f32 %v970, %v3210
      %v3212 = vpop.f32.mrf.mxu0
      %v3213 = vadd.f32 %v970, %v3212
      %3214 = vmatmul.bf16.gmra.mxu0 %v1897
      %v3215 = vpop.f32.mrf.mxu0
      %v3216 = vadd.f32 %v970, %v3215
      %v3217 = vpop.f32.mrf.mxu0
      %v3218 = vadd.f32 %v970, %v3217
      %3219 = vmatmul.bf16.gmra.mxu0 %v1906
      %v3220 = vpop.f32.mrf.mxu0
      %v3221 = vadd.f32 %v970, %v3220
      %v3222 = vpop.f32.mrf.mxu0
      %v3223 = vadd.f32 %v970, %v3222
      %3224 = vmatmul.bf16.gmra.mxu0 %v1915
      %v3225 = vpop.f32.mrf.mxu0
      %v3226 = vadd.f32 %v970, %v3225
      %v3227 = vpop.f32.mrf.mxu0
      %v3228 = vadd.f32 %v970, %v3227
      %3229 = vmatmul.bf16.gmra.mxu0 %v1924
      %v3230 = vpop.f32.mrf.mxu0
      %v3231 = vadd.f32 %v970, %v3230
      %v3232 = vpop.f32.mrf.mxu0
      %v3233 = vadd.f32 %v970, %v3232
      %3234 = vmatmul.bf16.gmra.mxu0 %v1933
      %v3235 = vpop.f32.mrf.mxu0
      %v3236 = vadd.f32 %v970, %v3235
      %v3237 = vpop.f32.mrf.mxu0
      %v3238 = vadd.f32 %v970, %v3237
      %3239 = vmatmul.bf16.gmra.mxu0 %v1942
      %v3240 = vpop.f32.mrf.mxu0
      %v3241 = vadd.f32 %v970, %v3240
      %v3242 = vpop.f32.mrf.mxu0
      %v3243 = vadd.f32 %v970, %v3242
      %3244 = vmatmul.bf16.gmra.mxu0 %v1951
      %v3245 = vpop.f32.mrf.mxu0
      %v3246 = vadd.f32 %v970, %v3245
      %v3247 = vpop.f32.mrf.mxu0
      %v3248 = vadd.f32 %v970, %v3247
      %3249 = vmatmul.bf16.gmra.mxu0 %v1960
      %v3250 = vpop.f32.mrf.mxu0
      %v3251 = vadd.f32 %v970, %v3250
      %v3252 = vpop.f32.mrf.mxu0
      %v3253 = vadd.f32 %v970, %v3252
      %3254 = vmatmul.bf16.gmra.mxu0 %v1969
      %v3255 = vpop.f32.mrf.mxu0
      %v3256 = vadd.f32 %v970, %v3255
      %v3257 = vpop.f32.mrf.mxu0
      %v3258 = vadd.f32 %v970, %v3257
      %3259 = vmatmul.bf16.gmra.mxu0 %v1978
      %v3260 = vpop.f32.mrf.mxu0
      %v3261 = vadd.f32 %v970, %v3260
      %v3262 = vpop.f32.mrf.mxu0
      %v3263 = vadd.f32 %v970, %v3262
      %3264 = vmatmul.bf16.gmra.mxu0 %v1987
      %v3265 = vpop.f32.mrf.mxu0
      %v3266 = vadd.f32 %v970, %v3265
      %v3267 = vpop.f32.mrf.mxu0
      %v3268 = vadd.f32 %v970, %v3267
      %3269 = vmatmul.bf16.gmra.mxu0 %v1996
      %v3270 = vpop.f32.mrf.mxu0
      %v3271 = vadd.f32 %v970, %v3270
      %v3272 = vpop.f32.mrf.mxu0
      %v3273 = vadd.f32 %v970, %v3272
      %3274 = vmatmul.bf16.gmra.mxu0 %v2005
      %v3275 = vpop.f32.mrf.mxu0
      %v3276 = vadd.f32 %v970, %v3275
      %v3277 = vpop.f32.mrf.mxu0
      %v3278 = vadd.f32 %v970, %v3277
      %3279 = vmatmul.bf16.gmra.mxu0 %v2014
      %v3280 = vpop.f32.mrf.mxu0
      %v3281 = vadd.f32 %v970, %v3280
      %v3282 = vpop.f32.mrf.mxu0
      %v3283 = vadd.f32 %v970, %v3282
      %3284 = vmatmul.bf16.gmra.mxu0 %v2023
      %v3285 = vpop.f32.mrf.mxu0
      %v3286 = vadd.f32 %v970, %v3285
      %v3287 = vpop.f32.mrf.mxu0
      %v3288 = vadd.f32 %v970, %v3287
      %3289 = vmatmul.bf16.gmra.mxu0 %v2032
      %v3290 = vpop.f32.mrf.mxu0
      %v3291 = vadd.f32 %v970, %v3290
      %v3292 = vpop.f32.mrf.mxu0
      %v3293 = vadd.f32 %v970, %v3292
      %3294 = vmatmul.bf16.gmra.mxu0 %v2041
      %v3295 = vpop.f32.mrf.mxu0
      %v3296 = vadd.f32 %v970, %v3295
      %v3297 = vpop.f32.mrf.mxu0
      %v3298 = vadd.f32 %v970, %v3297
      %3299 = vmatmul.bf16.gmra.mxu0 %v2050
      %v3300 = vpop.f32.mrf.mxu0
      %v3301 = vadd.f32 %v970, %v3300
      %v3302 = vpop.f32.mrf.mxu0
      %v3303 = vadd.f32 %v970, %v3302
      %3304 = vmatmul.bf16.gmra.mxu0 %v2059
      %v3305 = vpop.f32.mrf.mxu0
      %v3306 = vadd.f32 %v970, %v3305
      %v3307 = vpop.f32.mrf.mxu0
      %v3308 = vadd.f32 %v970, %v3307
      %3309 = vmatmul.bf16.gmra.mxu0 %v2068
      %v3310 = vpop.f32.mrf.mxu0
      %v3311 = vadd.f32 %v970, %v3310
      %v3312 = vpop.f32.mrf.mxu0
      %v3313 = vadd.f32 %v970, %v3312
      %3314 = vmatmul.bf16.gmra.mxu0 %v2077
      %v3315 = vpop.f32.mrf.mxu0
      %v3316 = vadd.f32 %v970, %v3315
      %v3317 = vpop.f32.mrf.mxu0
      %v3318 = vadd.f32 %v970, %v3317
      %3319 = vmatmul.bf16.gmra.mxu0 %v2086
      %v3320 = vpop.f32.mrf.mxu0
      %v3321 = vadd.f32 %v970, %v3320
      %v3322 = vpop.f32.mrf.mxu0
      %v3323 = vadd.f32 %v970, %v3322
      %3324 = vmatmul.bf16.gmra.mxu0 %v2095
      %v3325 = vpop.f32.mrf.mxu0
      %v3326 = vadd.f32 %v970, %v3325
      %v3327 = vpop.f32.mrf.mxu0
      %v3328 = vadd.f32 %v970, %v3327
      %3329 = vmatmul.bf16.gmra.mxu0 %v2104
      %v3330 = vpop.f32.mrf.mxu0
      %v3331 = vadd.f32 %v970, %v3330
      %v3332 = vpop.f32.mrf.mxu0
      %v3333 = vadd.f32 %v970, %v3332
      %3334 = vmatmul.bf16.gmra.mxu0 %v2113
      %v3335 = vpop.f32.mrf.mxu0
      %v3336 = vadd.f32 %v970, %v3335
      %v3337 = vpop.f32.mrf.mxu0
      %v3338 = vadd.f32 %v970, %v3337
      %3339 = vmatmul.bf16.gmra.mxu0 %v2122
      %v3340 = vpop.f32.mrf.mxu0
      %v3341 = vadd.f32 %v970, %v3340
      %v3342 = vpop.f32.mrf.mxu0
      %v3343 = vadd.f32 %v970, %v3342
      %3344 = vmatmul.bf16.gmra.mxu0 %v2131
      %v3345 = vpop.f32.mrf.mxu0
      %v3346 = vadd.f32 %v970, %v3345
      %v3347 = vpop.f32.mrf.mxu0
      %v3348 = vadd.f32 %v970, %v3347
      %3349 = vmatmul.bf16.gmra.mxu0 %v2140
      %v3350 = vpop.f32.mrf.mxu0
      %v3351 = vadd.f32 %v970, %v3350
      %v3352 = vpop.f32.mrf.mxu0
      %v3353 = vadd.f32 %v970, %v3352
      %3354 = vmatmul.bf16.gmra.mxu0 %v2149
      %v3355 = vpop.f32.mrf.mxu0
      %v3356 = vadd.f32 %v970, %v3355
      %v3357 = vpop.f32.mrf.mxu0
      %v3358 = vadd.f32 %v970, %v3357
      %3359 = vdwg.mxu0
      %3360 = vmatpush.bf16.msra.mxu0 %v2852
      %3361 = vmatpush.bf16.msra.mxu0 %v2850
      %3362 = vmatpush.bf16.msra.mxu0 %v2848
      %3363 = vmatpush.bf16.msra.mxu0 %v2846
      %3364 = vmatpush.bf16.msra.mxu0 %v2844
      %3365 = vmatpush.bf16.msra.mxu0 %v2842
      %3366 = vmatpush.bf16.msra.mxu0 %v2840
      %3367 = vmatpush.bf16.msra.mxu0 %v2838
      %3368 = vmatmul.bf16.gmra.mxu0 %v1871
      %v3369 = vpop.f32.mrf.mxu0
      %v3370 = vadd.f32 %v3201, %v3369
      %v3371 = vpop.f32.mrf.mxu0
      %v3372 = vadd.f32 %v3203, %v3371
      %3373 = vmatmul.bf16.gmra.mxu0 %v1880
      %v3374 = vpop.f32.mrf.mxu0
      %v3375 = vadd.f32 %v3206, %v3374
      %v3376 = vpop.f32.mrf.mxu0
      %v3377 = vadd.f32 %v3208, %v3376
      %3378 = vmatmul.bf16.gmra.mxu0 %v1889
      %v3379 = vpop.f32.mrf.mxu0
      %v3380 = vadd.f32 %v3211, %v3379
      %v3381 = vpop.f32.mrf.mxu0
      %v3382 = vadd.f32 %v3213, %v3381
      %3383 = vmatmul.bf16.gmra.mxu0 %v1898
      %v3384 = vpop.f32.mrf.mxu0
      %v3385 = vadd.f32 %v3216, %v3384
      %v3386 = vpop.f32.mrf.mxu0
      %v3387 = vadd.f32 %v3218, %v3386
      %3388 = vmatmul.bf16.gmra.mxu0 %v1907
      %v3389 = vpop.f32.mrf.mxu0
      %v3390 = vadd.f32 %v3221, %v3389
      %v3391 = vpop.f32.mrf.mxu0
      %v3392 = vadd.f32 %v3223, %v3391
      %3393 = vmatmul.bf16.gmra.mxu0 %v1916
      %v3394 = vpop.f32.mrf.mxu0
      %v3395 = vadd.f32 %v3226, %v3394
      %v3396 = vpop.f32.mrf.mxu0
      %v3397 = vadd.f32 %v3228, %v3396
      %3398 = vmatmul.bf16.gmra.mxu0 %v1925
      %v3399 = vpop.f32.mrf.mxu0
      %v3400 = vadd.f32 %v3231, %v3399
      %v3401 = vpop.f32.mrf.mxu0
      %v3402 = vadd.f32 %v3233, %v3401
      %3403 = vmatmul.bf16.gmra.mxu0 %v1934
      %v3404 = vpop.f32.mrf.mxu0
      %v3405 = vadd.f32 %v3236, %v3404
      %v3406 = vpop.f32.mrf.mxu0
      %v3407 = vadd.f32 %v3238, %v3406
      %3408 = vmatmul.bf16.gmra.mxu0 %v1943
      %v3409 = vpop.f32.mrf.mxu0
      %v3410 = vadd.f32 %v3241, %v3409
      %v3411 = vpop.f32.mrf.mxu0
      %v3412 = vadd.f32 %v3243, %v3411
      %3413 = vmatmul.bf16.gmra.mxu0 %v1952
      %v3414 = vpop.f32.mrf.mxu0
      %v3415 = vadd.f32 %v3246, %v3414
      %v3416 = vpop.f32.mrf.mxu0
      %v3417 = vadd.f32 %v3248, %v3416
      %3418 = vmatmul.bf16.gmra.mxu0 %v1961
      %v3419 = vpop.f32.mrf.mxu0
      %v3420 = vadd.f32 %v3251, %v3419
      %v3421 = vpop.f32.mrf.mxu0
      %v3422 = vadd.f32 %v3253, %v3421
      %3423 = vmatmul.bf16.gmra.mxu0 %v1970
      %v3424 = vpop.f32.mrf.mxu0
      %v3425 = vadd.f32 %v3256, %v3424
      %v3426 = vpop.f32.mrf.mxu0
      %v3427 = vadd.f32 %v3258, %v3426
      %3428 = vmatmul.bf16.gmra.mxu0 %v1979
      %v3429 = vpop.f32.mrf.mxu0
      %v3430 = vadd.f32 %v3261, %v3429
      %v3431 = vpop.f32.mrf.mxu0
      %v3432 = vadd.f32 %v3263, %v3431
      %3433 = vmatmul.bf16.gmra.mxu0 %v1988
      %v3434 = vpop.f32.mrf.mxu0
      %v3435 = vadd.f32 %v3266, %v3434
      %v3436 = vpop.f32.mrf.mxu0
      %v3437 = vadd.f32 %v3268, %v3436
      %3438 = vmatmul.bf16.gmra.mxu0 %v1997
      %v3439 = vpop.f32.mrf.mxu0
      %v3440 = vadd.f32 %v3271, %v3439
      %v3441 = vpop.f32.mrf.mxu0
      %v3442 = vadd.f32 %v3273, %v3441
      %3443 = vmatmul.bf16.gmra.mxu0 %v2006
      %v3444 = vpop.f32.mrf.mxu0
      %v3445 = vadd.f32 %v3276, %v3444
      %v3446 = vpop.f32.mrf.mxu0
      %v3447 = vadd.f32 %v3278, %v3446
      %3448 = vmatmul.bf16.gmra.mxu0 %v2015
      %v3449 = vpop.f32.mrf.mxu0
      %v3450 = vadd.f32 %v3281, %v3449
      %v3451 = vpop.f32.mrf.mxu0
      %v3452 = vadd.f32 %v3283, %v3451
      %3453 = vmatmul.bf16.gmra.mxu0 %v2024
      %v3454 = vpop.f32.mrf.mxu0
      %v3455 = vadd.f32 %v3286, %v3454
      %v3456 = vpop.f32.mrf.mxu0
      %v3457 = vadd.f32 %v3288, %v3456
      %3458 = vmatmul.bf16.gmra.mxu0 %v2033
      %v3459 = vpop.f32.mrf.mxu0
      %v3460 = vadd.f32 %v3291, %v3459
      %v3461 = vpop.f32.mrf.mxu0
      %v3462 = vadd.f32 %v3293, %v3461
      %3463 = vmatmul.bf16.gmra.mxu0 %v2042
      %v3464 = vpop.f32.mrf.mxu0
      %v3465 = vadd.f32 %v3296, %v3464
      %v3466 = vpop.f32.mrf.mxu0
      %v3467 = vadd.f32 %v3298, %v3466
      %3468 = vmatmul.bf16.gmra.mxu0 %v2051
      %v3469 = vpop.f32.mrf.mxu0
      %v3470 = vadd.f32 %v3301, %v3469
      %v3471 = vpop.f32.mrf.mxu0
      %v3472 = vadd.f32 %v3303, %v3471
      %3473 = vmatmul.bf16.gmra.mxu0 %v2060
      %v3474 = vpop.f32.mrf.mxu0
      %v3475 = vadd.f32 %v3306, %v3474
      %v3476 = vpop.f32.mrf.mxu0
      %v3477 = vadd.f32 %v3308, %v3476
      %3478 = vmatmul.bf16.gmra.mxu0 %v2069
      %v3479 = vpop.f32.mrf.mxu0
      %v3480 = vadd.f32 %v3311, %v3479
      %v3481 = vpop.f32.mrf.mxu0
      %v3482 = vadd.f32 %v3313, %v3481
      %3483 = vmatmul.bf16.gmra.mxu0 %v2078
      %v3484 = vpop.f32.mrf.mxu0
      %v3485 = vadd.f32 %v3316, %v3484
      %v3486 = vpop.f32.mrf.mxu0
      %v3487 = vadd.f32 %v3318, %v3486
      %3488 = vmatmul.bf16.gmra.mxu0 %v2087
      %v3489 = vpop.f32.mrf.mxu0
      %v3490 = vadd.f32 %v3321, %v3489
      %v3491 = vpop.f32.mrf.mxu0
      %v3492 = vadd.f32 %v3323, %v3491
      %3493 = vmatmul.bf16.gmra.mxu0 %v2096
      %v3494 = vpop.f32.mrf.mxu0
      %v3495 = vadd.f32 %v3326, %v3494
      %v3496 = vpop.f32.mrf.mxu0
      %v3497 = vadd.f32 %v3328, %v3496
      %3498 = vmatmul.bf16.gmra.mxu0 %v2105
      %v3499 = vpop.f32.mrf.mxu0
      %v3500 = vadd.f32 %v3331, %v3499
      %v3501 = vpop.f32.mrf.mxu0
      %v3502 = vadd.f32 %v3333, %v3501
      %3503 = vmatmul.bf16.gmra.mxu0 %v2114
      %v3504 = vpop.f32.mrf.mxu0
      %v3505 = vadd.f32 %v3336, %v3504
      %v3506 = vpop.f32.mrf.mxu0
      %v3507 = vadd.f32 %v3338, %v3506
      %3508 = vmatmul.bf16.gmra.mxu0 %v2123
      %v3509 = vpop.f32.mrf.mxu0
      %v3510 = vadd.f32 %v3341, %v3509
      %v3511 = vpop.f32.mrf.mxu0
      %v3512 = vadd.f32 %v3343, %v3511
      %3513 = vmatmul.bf16.gmra.mxu0 %v2132
      %v3514 = vpop.f32.mrf.mxu0
      %v3515 = vadd.f32 %v3346, %v3514
      %v3516 = vpop.f32.mrf.mxu0
      %v3517 = vadd.f32 %v3348, %v3516
      %3518 = vmatmul.bf16.gmra.mxu0 %v2141
      %v3519 = vpop.f32.mrf.mxu0
      %v3520 = vadd.f32 %v3351, %v3519
      %v3521 = vpop.f32.mrf.mxu0
      %v3522 = vadd.f32 %v3353, %v3521
      %3523 = vmatmul.bf16.gmra.mxu0 %v2150
      %v3524 = vpop.f32.mrf.mxu0
      %v3525 = vadd.f32 %v3356, %v3524
      %v3526 = vpop.f32.mrf.mxu0
      %v3527 = vadd.f32 %v3358, %v3526
      %3528 = vdwg.mxu0
      %3529 = vmatpush.bf16.msra.mxu0 %v2868
      %3530 = vmatpush.bf16.msra.mxu0 %v2866
      %3531 = vmatpush.bf16.msra.mxu0 %v2864
      %3532 = vmatpush.bf16.msra.mxu0 %v2862
      %3533 = vmatpush.bf16.msra.mxu0 %v2860
      %3534 = vmatpush.bf16.msra.mxu0 %v2858
      %3535 = vmatpush.bf16.msra.mxu0 %v2856
      %3536 = vmatpush.bf16.msra.mxu0 %v2854
      %3537 = vmatmul.bf16.gmra.mxu0 %v1872
      %v3538 = vpop.f32.mrf.mxu0
      %v3539 = vadd.f32 %v3370, %v3538
      %v3540 = vpop.f32.mrf.mxu0
      %v3541 = vadd.f32 %v3372, %v3540
      %3542 = vmatmul.bf16.gmra.mxu0 %v1881
      %v3543 = vpop.f32.mrf.mxu0
      %v3544 = vadd.f32 %v3375, %v3543
      %v3545 = vpop.f32.mrf.mxu0
      %v3546 = vadd.f32 %v3377, %v3545
      %3547 = vmatmul.bf16.gmra.mxu0 %v1890
      %v3548 = vpop.f32.mrf.mxu0
      %v3549 = vadd.f32 %v3380, %v3548
      %v3550 = vpop.f32.mrf.mxu0
      %v3551 = vadd.f32 %v3382, %v3550
      %3552 = vmatmul.bf16.gmra.mxu0 %v1899
      %v3553 = vpop.f32.mrf.mxu0
      %v3554 = vadd.f32 %v3385, %v3553
      %v3555 = vpop.f32.mrf.mxu0
      %v3556 = vadd.f32 %v3387, %v3555
      %3557 = vmatmul.bf16.gmra.mxu0 %v1908
      %v3558 = vpop.f32.mrf.mxu0
      %v3559 = vadd.f32 %v3390, %v3558
      %v3560 = vpop.f32.mrf.mxu0
      %v3561 = vadd.f32 %v3392, %v3560
      %3562 = vmatmul.bf16.gmra.mxu0 %v1917
      %v3563 = vpop.f32.mrf.mxu0
      %v3564 = vadd.f32 %v3395, %v3563
      %v3565 = vpop.f32.mrf.mxu0
      %v3566 = vadd.f32 %v3397, %v3565
      %3567 = vmatmul.bf16.gmra.mxu0 %v1926
      %v3568 = vpop.f32.mrf.mxu0
      %v3569 = vadd.f32 %v3400, %v3568
      %v3570 = vpop.f32.mrf.mxu0
      %v3571 = vadd.f32 %v3402, %v3570
      %3572 = vmatmul.bf16.gmra.mxu0 %v1935
      %v3573 = vpop.f32.mrf.mxu0
      %v3574 = vadd.f32 %v3405, %v3573
      %v3575 = vpop.f32.mrf.mxu0
      %v3576 = vadd.f32 %v3407, %v3575
      %3577 = vmatmul.bf16.gmra.mxu0 %v1944
      %v3578 = vpop.f32.mrf.mxu0
      %v3579 = vadd.f32 %v3410, %v3578
      %v3580 = vpop.f32.mrf.mxu0
      %v3581 = vadd.f32 %v3412, %v3580
      %3582 = vmatmul.bf16.gmra.mxu0 %v1953
      %v3583 = vpop.f32.mrf.mxu0
      %v3584 = vadd.f32 %v3415, %v3583
      %v3585 = vpop.f32.mrf.mxu0
      %v3586 = vadd.f32 %v3417, %v3585
      %3587 = vmatmul.bf16.gmra.mxu0 %v1962
      %v3588 = vpop.f32.mrf.mxu0
      %v3589 = vadd.f32 %v3420, %v3588
      %v3590 = vpop.f32.mrf.mxu0
      %v3591 = vadd.f32 %v3422, %v3590
      %3592 = vmatmul.bf16.gmra.mxu0 %v1971
      %v3593 = vpop.f32.mrf.mxu0
      %v3594 = vadd.f32 %v3425, %v3593
      %v3595 = vpop.f32.mrf.mxu0
      %v3596 = vadd.f32 %v3427, %v3595
      %3597 = vmatmul.bf16.gmra.mxu0 %v1980
      %v3598 = vpop.f32.mrf.mxu0
      %v3599 = vadd.f32 %v3430, %v3598
      %v3600 = vpop.f32.mrf.mxu0
      %v3601 = vadd.f32 %v3432, %v3600
      %3602 = vmatmul.bf16.gmra.mxu0 %v1989
      %v3603 = vpop.f32.mrf.mxu0
      %v3604 = vadd.f32 %v3435, %v3603
      %v3605 = vpop.f32.mrf.mxu0
      %v3606 = vadd.f32 %v3437, %v3605
      %3607 = vmatmul.bf16.gmra.mxu0 %v1998
      %v3608 = vpop.f32.mrf.mxu0
      %v3609 = vadd.f32 %v3440, %v3608
      %v3610 = vpop.f32.mrf.mxu0
      %v3611 = vadd.f32 %v3442, %v3610
      %3612 = vmatmul.bf16.gmra.mxu0 %v2007
      %v3613 = vpop.f32.mrf.mxu0
      %v3614 = vadd.f32 %v3445, %v3613
      %v3615 = vpop.f32.mrf.mxu0
      %v3616 = vadd.f32 %v3447, %v3615
      %3617 = vmatmul.bf16.gmra.mxu0 %v2016
      %v3618 = vpop.f32.mrf.mxu0
      %v3619 = vadd.f32 %v3450, %v3618
      %v3620 = vpop.f32.mrf.mxu0
      %v3621 = vadd.f32 %v3452, %v3620
      %3622 = vmatmul.bf16.gmra.mxu0 %v2025
      %v3623 = vpop.f32.mrf.mxu0
      %v3624 = vadd.f32 %v3455, %v3623
      %v3625 = vpop.f32.mrf.mxu0
      %v3626 = vadd.f32 %v3457, %v3625
      %3627 = vmatmul.bf16.gmra.mxu0 %v2034
      %v3628 = vpop.f32.mrf.mxu0
      %v3629 = vadd.f32 %v3460, %v3628
      %v3630 = vpop.f32.mrf.mxu0
      %v3631 = vadd.f32 %v3462, %v3630
      %3632 = vmatmul.bf16.gmra.mxu0 %v2043
      %v3633 = vpop.f32.mrf.mxu0
      %v3634 = vadd.f32 %v3465, %v3633
      %v3635 = vpop.f32.mrf.mxu0
      %v3636 = vadd.f32 %v3467, %v3635
      %3637 = vmatmul.bf16.gmra.mxu0 %v2052
      %v3638 = vpop.f32.mrf.mxu0
      %v3639 = vadd.f32 %v3470, %v3638
      %v3640 = vpop.f32.mrf.mxu0
      %v3641 = vadd.f32 %v3472, %v3640
      %3642 = vmatmul.bf16.gmra.mxu0 %v2061
      %v3643 = vpop.f32.mrf.mxu0
      %v3644 = vadd.f32 %v3475, %v3643
      %v3645 = vpop.f32.mrf.mxu0
      %v3646 = vadd.f32 %v3477, %v3645
      %3647 = vmatmul.bf16.gmra.mxu0 %v2070
      %v3648 = vpop.f32.mrf.mxu0
      %v3649 = vadd.f32 %v3480, %v3648
      %v3650 = vpop.f32.mrf.mxu0
      %v3651 = vadd.f32 %v3482, %v3650
      %3652 = vmatmul.bf16.gmra.mxu0 %v2079
      %v3653 = vpop.f32.mrf.mxu0
      %v3654 = vadd.f32 %v3485, %v3653
      %v3655 = vpop.f32.mrf.mxu0
      %v3656 = vadd.f32 %v3487, %v3655
      %3657 = vmatmul.bf16.gmra.mxu0 %v2088
      %v3658 = vpop.f32.mrf.mxu0
      %v3659 = vadd.f32 %v3490, %v3658
      %v3660 = vpop.f32.mrf.mxu0
      %v3661 = vadd.f32 %v3492, %v3660
      %3662 = vmatmul.bf16.gmra.mxu0 %v2097
      %v3663 = vpop.f32.mrf.mxu0
      %v3664 = vadd.f32 %v3495, %v3663
      %v3665 = vpop.f32.mrf.mxu0
      %v3666 = vadd.f32 %v3497, %v3665
      %3667 = vmatmul.bf16.gmra.mxu0 %v2106
      %v3668 = vpop.f32.mrf.mxu0
      %v3669 = vadd.f32 %v3500, %v3668
      %v3670 = vpop.f32.mrf.mxu0
      %v3671 = vadd.f32 %v3502, %v3670
      %3672 = vmatmul.bf16.gmra.mxu0 %v2115
      %v3673 = vpop.f32.mrf.mxu0
      %v3674 = vadd.f32 %v3505, %v3673
      %v3675 = vpop.f32.mrf.mxu0
      %v3676 = vadd.f32 %v3507, %v3675
      %3677 = vmatmul.bf16.gmra.mxu0 %v2124
      %v3678 = vpop.f32.mrf.mxu0
      %v3679 = vadd.f32 %v3510, %v3678
      %v3680 = vpop.f32.mrf.mxu0
      %v3681 = vadd.f32 %v3512, %v3680
      %3682 = vmatmul.bf16.gmra.mxu0 %v2133
      %v3683 = vpop.f32.mrf.mxu0
      %v3684 = vadd.f32 %v3515, %v3683
      %v3685 = vpop.f32.mrf.mxu0
      %v3686 = vadd.f32 %v3517, %v3685
      %3687 = vmatmul.bf16.gmra.mxu0 %v2142
      %v3688 = vpop.f32.mrf.mxu0
      %v3689 = vadd.f32 %v3520, %v3688
      %v3690 = vpop.f32.mrf.mxu0
      %v3691 = vadd.f32 %v3522, %v3690
      %3692 = vmatmul.bf16.gmra.mxu0 %v2151
      %v3693 = vpop.f32.mrf.mxu0
      %v3694 = vadd.f32 %v3525, %v3693
      %v3695 = vpop.f32.mrf.mxu0
      %v3696 = vadd.f32 %v3527, %v3695
      %3697 = vdwg.mxu0
      %3698 = vmatpush.bf16.msra.mxu0 %v2884
      %3699 = vmatpush.bf16.msra.mxu0 %v2882
      %3700 = vmatpush.bf16.msra.mxu0 %v2880
      %3701 = vmatpush.bf16.msra.mxu0 %v2878
      %3702 = vmatpush.bf16.msra.mxu0 %v2876
      %3703 = vmatpush.bf16.msra.mxu0 %v2874
      %3704 = vmatpush.bf16.msra.mxu0 %v2872
      %3705 = vmatpush.bf16.msra.mxu0 %v2870
      %3706 = vmatmul.bf16.gmra.mxu0 %v1873
      %v3707 = vpop.f32.mrf.mxu0
      %v3708 = vadd.f32 %v3539, %v3707
      %v3709 = vpop.f32.mrf.mxu0
      %v3710 = vadd.f32 %v3541, %v3709
      %3711 = vmatmul.bf16.gmra.mxu0 %v1882
      %v3712 = vpop.f32.mrf.mxu0
      %v3713 = vadd.f32 %v3544, %v3712
      %v3714 = vpop.f32.mrf.mxu0
      %v3715 = vadd.f32 %v3546, %v3714
      %3716 = vmatmul.bf16.gmra.mxu0 %v1891
      %v3717 = vpop.f32.mrf.mxu0
      %v3718 = vadd.f32 %v3549, %v3717
      %v3719 = vpop.f32.mrf.mxu0
      %v3720 = vadd.f32 %v3551, %v3719
      %3721 = vmatmul.bf16.gmra.mxu0 %v1900
      %v3722 = vpop.f32.mrf.mxu0
      %v3723 = vadd.f32 %v3554, %v3722
      %v3724 = vpop.f32.mrf.mxu0
      %v3725 = vadd.f32 %v3556, %v3724
      %3726 = vmatmul.bf16.gmra.mxu0 %v1909
      %v3727 = vpop.f32.mrf.mxu0
      %v3728 = vadd.f32 %v3559, %v3727
      %v3729 = vpop.f32.mrf.mxu0
      %v3730 = vadd.f32 %v3561, %v3729
      %3731 = vmatmul.bf16.gmra.mxu0 %v1918
      %v3732 = vpop.f32.mrf.mxu0
      %v3733 = vadd.f32 %v3564, %v3732
      %v3734 = vpop.f32.mrf.mxu0
      %v3735 = vadd.f32 %v3566, %v3734
      %3736 = vmatmul.bf16.gmra.mxu0 %v1927
      %v3737 = vpop.f32.mrf.mxu0
      %v3738 = vadd.f32 %v3569, %v3737
      %v3739 = vpop.f32.mrf.mxu0
      %v3740 = vadd.f32 %v3571, %v3739
      %3741 = vmatmul.bf16.gmra.mxu0 %v1936
      %v3742 = vpop.f32.mrf.mxu0
      %v3743 = vadd.f32 %v3574, %v3742
      %v3744 = vpop.f32.mrf.mxu0
      %v3745 = vadd.f32 %v3576, %v3744
      %3746 = vmatmul.bf16.gmra.mxu0 %v1945
      %v3747 = vpop.f32.mrf.mxu0
      %v3748 = vadd.f32 %v3579, %v3747
      %v3749 = vpop.f32.mrf.mxu0
      %v3750 = vadd.f32 %v3581, %v3749
      %3751 = vmatmul.bf16.gmra.mxu0 %v1954
      %v3752 = vpop.f32.mrf.mxu0
      %v3753 = vadd.f32 %v3584, %v3752
      %v3754 = vpop.f32.mrf.mxu0
      %v3755 = vadd.f32 %v3586, %v3754
      %3756 = vmatmul.bf16.gmra.mxu0 %v1963
      %v3757 = vpop.f32.mrf.mxu0
      %v3758 = vadd.f32 %v3589, %v3757
      %v3759 = vpop.f32.mrf.mxu0
      %v3760 = vadd.f32 %v3591, %v3759
      %3761 = vmatmul.bf16.gmra.mxu0 %v1972
      %v3762 = vpop.f32.mrf.mxu0
      %v3763 = vadd.f32 %v3594, %v3762
      %v3764 = vpop.f32.mrf.mxu0
      %v3765 = vadd.f32 %v3596, %v3764
      %3766 = vmatmul.bf16.gmra.mxu0 %v1981
      %v3767 = vpop.f32.mrf.mxu0
      %v3768 = vadd.f32 %v3599, %v3767
      %v3769 = vpop.f32.mrf.mxu0
      %v3770 = vadd.f32 %v3601, %v3769
      %3771 = vmatmul.bf16.gmra.mxu0 %v1990
      %v3772 = vpop.f32.mrf.mxu0
      %v3773 = vadd.f32 %v3604, %v3772
      %v3774 = vpop.f32.mrf.mxu0
      %v3775 = vadd.f32 %v3606, %v3774
      %3776 = vmatmul.bf16.gmra.mxu0 %v1999
      %v3777 = vpop.f32.mrf.mxu0
      %v3778 = vadd.f32 %v3609, %v3777
      %v3779 = vpop.f32.mrf.mxu0
      %v3780 = vadd.f32 %v3611, %v3779
      %3781 = vmatmul.bf16.gmra.mxu0 %v2008
      %v3782 = vpop.f32.mrf.mxu0
      %v3783 = vadd.f32 %v3614, %v3782
      %v3784 = vpop.f32.mrf.mxu0
      %v3785 = vadd.f32 %v3616, %v3784
      %3786 = vmatmul.bf16.gmra.mxu0 %v2017
      %v3787 = vpop.f32.mrf.mxu0
      %v3788 = vadd.f32 %v3619, %v3787
      %v3789 = vpop.f32.mrf.mxu0
      %v3790 = vadd.f32 %v3621, %v3789
      %3791 = vmatmul.bf16.gmra.mxu0 %v2026
      %v3792 = vpop.f32.mrf.mxu0
      %v3793 = vadd.f32 %v3624, %v3792
      %v3794 = vpop.f32.mrf.mxu0
      %v3795 = vadd.f32 %v3626, %v3794
      %3796 = vmatmul.bf16.gmra.mxu0 %v2035
      %v3797 = vpop.f32.mrf.mxu0
      %v3798 = vadd.f32 %v3629, %v3797
      %v3799 = vpop.f32.mrf.mxu0
      %v3800 = vadd.f32 %v3631, %v3799
      %3801 = vmatmul.bf16.gmra.mxu0 %v2044
      %v3802 = vpop.f32.mrf.mxu0
      %v3803 = vadd.f32 %v3634, %v3802
      %v3804 = vpop.f32.mrf.mxu0
      %v3805 = vadd.f32 %v3636, %v3804
      %3806 = vmatmul.bf16.gmra.mxu0 %v2053
      %v3807 = vpop.f32.mrf.mxu0
      %v3808 = vadd.f32 %v3639, %v3807
      %v3809 = vpop.f32.mrf.mxu0
      %v3810 = vadd.f32 %v3641, %v3809
      %3811 = vmatmul.bf16.gmra.mxu0 %v2062
      %v3812 = vpop.f32.mrf.mxu0
      %v3813 = vadd.f32 %v3644, %v3812
      %v3814 = vpop.f32.mrf.mxu0
      %v3815 = vadd.f32 %v3646, %v3814
      %3816 = vmatmul.bf16.gmra.mxu0 %v2071
      %v3817 = vpop.f32.mrf.mxu0
      %v3818 = vadd.f32 %v3649, %v3817
      %v3819 = vpop.f32.mrf.mxu0
      %v3820 = vadd.f32 %v3651, %v3819
      %3821 = vmatmul.bf16.gmra.mxu0 %v2080
      %v3822 = vpop.f32.mrf.mxu0
      %v3823 = vadd.f32 %v3654, %v3822
      %v3824 = vpop.f32.mrf.mxu0
      %v3825 = vadd.f32 %v3656, %v3824
      %3826 = vmatmul.bf16.gmra.mxu0 %v2089
      %v3827 = vpop.f32.mrf.mxu0
      %v3828 = vadd.f32 %v3659, %v3827
      %v3829 = vpop.f32.mrf.mxu0
      %v3830 = vadd.f32 %v3661, %v3829
      %3831 = vmatmul.bf16.gmra.mxu0 %v2098
      %v3832 = vpop.f32.mrf.mxu0
      %v3833 = vadd.f32 %v3664, %v3832
      %v3834 = vpop.f32.mrf.mxu0
      %v3835 = vadd.f32 %v3666, %v3834
      %3836 = vmatmul.bf16.gmra.mxu0 %v2107
      %v3837 = vpop.f32.mrf.mxu0
      %v3838 = vadd.f32 %v3669, %v3837
      %v3839 = vpop.f32.mrf.mxu0
      %v3840 = vadd.f32 %v3671, %v3839
      %3841 = vmatmul.bf16.gmra.mxu0 %v2116
      %v3842 = vpop.f32.mrf.mxu0
      %v3843 = vadd.f32 %v3674, %v3842
      %v3844 = vpop.f32.mrf.mxu0
      %v3845 = vadd.f32 %v3676, %v3844
      %3846 = vmatmul.bf16.gmra.mxu0 %v2125
      %v3847 = vpop.f32.mrf.mxu0
      %v3848 = vadd.f32 %v3679, %v3847
      %v3849 = vpop.f32.mrf.mxu0
      %v3850 = vadd.f32 %v3681, %v3849
      %3851 = vmatmul.bf16.gmra.mxu0 %v2134
      %v3852 = vpop.f32.mrf.mxu0
      %v3853 = vadd.f32 %v3684, %v3852
      %v3854 = vpop.f32.mrf.mxu0
      %v3855 = vadd.f32 %v3686, %v3854
      %3856 = vmatmul.bf16.gmra.mxu0 %v2143
      %v3857 = vpop.f32.mrf.mxu0
      %v3858 = vadd.f32 %v3689, %v3857
      %v3859 = vpop.f32.mrf.mxu0
      %v3860 = vadd.f32 %v3691, %v3859
      %3861 = vmatmul.bf16.gmra.mxu0 %v2152
      %v3862 = vpop.f32.mrf.mxu0
      %v3863 = vadd.f32 %v3694, %v3862
      %v3864 = vpop.f32.mrf.mxu0
      %v3865 = vadd.f32 %v3696, %v3864
      %3866 = vdwg.mxu0
      %3867 = vmatpush.bf16.msra.mxu0 %v2900
      %3868 = vmatpush.bf16.msra.mxu0 %v2898
      %3869 = vmatpush.bf16.msra.mxu0 %v2896
      %3870 = vmatpush.bf16.msra.mxu0 %v2894
      %3871 = vmatpush.bf16.msra.mxu0 %v2892
      %3872 = vmatpush.bf16.msra.mxu0 %v2890
      %3873 = vmatpush.bf16.msra.mxu0 %v2888
      %3874 = vmatpush.bf16.msra.mxu0 %v2886
      %3875 = vmatmul.bf16.gmra.mxu0 %v1874
      %v3876 = vpop.f32.mrf.mxu0
      %v3877 = vadd.f32 %v3708, %v3876
      %v3878 = vpop.f32.mrf.mxu0
      %v3879 = vadd.f32 %v3710, %v3878
      %3880 = vmatmul.bf16.gmra.mxu0 %v1883
      %v3881 = vpop.f32.mrf.mxu0
      %v3882 = vadd.f32 %v3713, %v3881
      %v3883 = vpop.f32.mrf.mxu0
      %v3884 = vadd.f32 %v3715, %v3883
      %3885 = vmatmul.bf16.gmra.mxu0 %v1892
      %v3886 = vpop.f32.mrf.mxu0
      %v3887 = vadd.f32 %v3718, %v3886
      %v3888 = vpop.f32.mrf.mxu0
      %v3889 = vadd.f32 %v3720, %v3888
      %3890 = vmatmul.bf16.gmra.mxu0 %v1901
      %v3891 = vpop.f32.mrf.mxu0
      %v3892 = vadd.f32 %v3723, %v3891
      %v3893 = vpop.f32.mrf.mxu0
      %v3894 = vadd.f32 %v3725, %v3893
      %3895 = vmatmul.bf16.gmra.mxu0 %v1910
      %v3896 = vpop.f32.mrf.mxu0
      %v3897 = vadd.f32 %v3728, %v3896
      %v3898 = vpop.f32.mrf.mxu0
      %v3899 = vadd.f32 %v3730, %v3898
      %3900 = vmatmul.bf16.gmra.mxu0 %v1919
      %v3901 = vpop.f32.mrf.mxu0
      %v3902 = vadd.f32 %v3733, %v3901
      %v3903 = vpop.f32.mrf.mxu0
      %v3904 = vadd.f32 %v3735, %v3903
      %3905 = vmatmul.bf16.gmra.mxu0 %v1928
      %v3906 = vpop.f32.mrf.mxu0
      %v3907 = vadd.f32 %v3738, %v3906
      %v3908 = vpop.f32.mrf.mxu0
      %v3909 = vadd.f32 %v3740, %v3908
      %3910 = vmatmul.bf16.gmra.mxu0 %v1937
      %v3911 = vpop.f32.mrf.mxu0
      %v3912 = vadd.f32 %v3743, %v3911
      %v3913 = vpop.f32.mrf.mxu0
      %v3914 = vadd.f32 %v3745, %v3913
      %3915 = vmatmul.bf16.gmra.mxu0 %v1946
      %v3916 = vpop.f32.mrf.mxu0
      %v3917 = vadd.f32 %v3748, %v3916
      %v3918 = vpop.f32.mrf.mxu0
      %v3919 = vadd.f32 %v3750, %v3918
      %3920 = vmatmul.bf16.gmra.mxu0 %v1955
      %v3921 = vpop.f32.mrf.mxu0
      %v3922 = vadd.f32 %v3753, %v3921
      %v3923 = vpop.f32.mrf.mxu0
      %v3924 = vadd.f32 %v3755, %v3923
      %3925 = vmatmul.bf16.gmra.mxu0 %v1964
      %v3926 = vpop.f32.mrf.mxu0
      %v3927 = vadd.f32 %v3758, %v3926
      %v3928 = vpop.f32.mrf.mxu0
      %v3929 = vadd.f32 %v3760, %v3928
      %3930 = vmatmul.bf16.gmra.mxu0 %v1973
      %v3931 = vpop.f32.mrf.mxu0
      %v3932 = vadd.f32 %v3763, %v3931
      %v3933 = vpop.f32.mrf.mxu0
      %v3934 = vadd.f32 %v3765, %v3933
      %3935 = vmatmul.bf16.gmra.mxu0 %v1982
      %v3936 = vpop.f32.mrf.mxu0
      %v3937 = vadd.f32 %v3768, %v3936
      %v3938 = vpop.f32.mrf.mxu0
      %v3939 = vadd.f32 %v3770, %v3938
      %3940 = vmatmul.bf16.gmra.mxu0 %v1991
      %v3941 = vpop.f32.mrf.mxu0
      %v3942 = vadd.f32 %v3773, %v3941
      %v3943 = vpop.f32.mrf.mxu0
      %v3944 = vadd.f32 %v3775, %v3943
      %3945 = vmatmul.bf16.gmra.mxu0 %v2000
      %v3946 = vpop.f32.mrf.mxu0
      %v3947 = vadd.f32 %v3778, %v3946
      %v3948 = vpop.f32.mrf.mxu0
      %v3949 = vadd.f32 %v3780, %v3948
      %3950 = vmatmul.bf16.gmra.mxu0 %v2009
      %v3951 = vpop.f32.mrf.mxu0
      %v3952 = vadd.f32 %v3783, %v3951
      %v3953 = vpop.f32.mrf.mxu0
      %v3954 = vadd.f32 %v3785, %v3953
      %3955 = vmatmul.bf16.gmra.mxu0 %v2018
      %v3956 = vpop.f32.mrf.mxu0
      %v3957 = vadd.f32 %v3788, %v3956
      %v3958 = vpop.f32.mrf.mxu0
      %v3959 = vadd.f32 %v3790, %v3958
      %3960 = vmatmul.bf16.gmra.mxu0 %v2027
      %v3961 = vpop.f32.mrf.mxu0
      %v3962 = vadd.f32 %v3793, %v3961
      %v3963 = vpop.f32.mrf.mxu0
      %v3964 = vadd.f32 %v3795, %v3963
      %3965 = vmatmul.bf16.gmra.mxu0 %v2036
      %v3966 = vpop.f32.mrf.mxu0
      %v3967 = vadd.f32 %v3798, %v3966
      %v3968 = vpop.f32.mrf.mxu0
      %v3969 = vadd.f32 %v3800, %v3968
      %3970 = vmatmul.bf16.gmra.mxu0 %v2045
      %v3971 = vpop.f32.mrf.mxu0
      %v3972 = vadd.f32 %v3803, %v3971
      %v3973 = vpop.f32.mrf.mxu0
      %v3974 = vadd.f32 %v3805, %v3973
      %3975 = vmatmul.bf16.gmra.mxu0 %v2054
      %v3976 = vpop.f32.mrf.mxu0
      %v3977 = vadd.f32 %v3808, %v3976
      %v3978 = vpop.f32.mrf.mxu0
      %v3979 = vadd.f32 %v3810, %v3978
      %3980 = vmatmul.bf16.gmra.mxu0 %v2063
      %v3981 = vpop.f32.mrf.mxu0
      %v3982 = vadd.f32 %v3813, %v3981
      %v3983 = vpop.f32.mrf.mxu0
      %v3984 = vadd.f32 %v3815, %v3983
      %3985 = vmatmul.bf16.gmra.mxu0 %v2072
      %v3986 = vpop.f32.mrf.mxu0
      %v3987 = vadd.f32 %v3818, %v3986
      %v3988 = vpop.f32.mrf.mxu0
      %v3989 = vadd.f32 %v3820, %v3988
      %3990 = vmatmul.bf16.gmra.mxu0 %v2081
      %v3991 = vpop.f32.mrf.mxu0
      %v3992 = vadd.f32 %v3823, %v3991
      %v3993 = vpop.f32.mrf.mxu0
      %v3994 = vadd.f32 %v3825, %v3993
      %3995 = vmatmul.bf16.gmra.mxu0 %v2090
      %v3996 = vpop.f32.mrf.mxu0
      %v3997 = vadd.f32 %v3828, %v3996
      %v3998 = vpop.f32.mrf.mxu0
      %v3999 = vadd.f32 %v3830, %v3998
      %4000 = vmatmul.bf16.gmra.mxu0 %v2099
      %v4001 = vpop.f32.mrf.mxu0
      %v4002 = vadd.f32 %v3833, %v4001
      %v4003 = vpop.f32.mrf.mxu0
      %v4004 = vadd.f32 %v3835, %v4003
      %4005 = vmatmul.bf16.gmra.mxu0 %v2108
      %v4006 = vpop.f32.mrf.mxu0
      %v4007 = vadd.f32 %v3838, %v4006
      %v4008 = vpop.f32.mrf.mxu0
      %v4009 = vadd.f32 %v3840, %v4008
      %4010 = vmatmul.bf16.gmra.mxu0 %v2117
      %v4011 = vpop.f32.mrf.mxu0
      %v4012 = vadd.f32 %v3843, %v4011
      %v4013 = vpop.f32.mrf.mxu0
      %v4014 = vadd.f32 %v3845, %v4013
      %4015 = vmatmul.bf16.gmra.mxu0 %v2126
      %v4016 = vpop.f32.mrf.mxu0
      %v4017 = vadd.f32 %v3848, %v4016
      %v4018 = vpop.f32.mrf.mxu0
      %v4019 = vadd.f32 %v3850, %v4018
      %4020 = vmatmul.bf16.gmra.mxu0 %v2135
      %v4021 = vpop.f32.mrf.mxu0
      %v4022 = vadd.f32 %v3853, %v4021
      %v4023 = vpop.f32.mrf.mxu0
      %v4024 = vadd.f32 %v3855, %v4023
      %4025 = vmatmul.bf16.gmra.mxu0 %v2144
      %v4026 = vpop.f32.mrf.mxu0
      %v4027 = vadd.f32 %v3858, %v4026
      %v4028 = vpop.f32.mrf.mxu0
      %v4029 = vadd.f32 %v3860, %v4028
      %4030 = vmatmul.bf16.gmra.mxu0 %v2153
      %v4031 = vpop.f32.mrf.mxu0
      %v4032 = vadd.f32 %v3863, %v4031
      %v4033 = vpop.f32.mrf.mxu0
      %v4034 = vadd.f32 %v3865, %v4033
      %4035 = vdwg.mxu0
      %4036 = vmatpush.bf16.msra.mxu0 %v2916
      %4037 = vmatpush.bf16.msra.mxu0 %v2914
      %4038 = vmatpush.bf16.msra.mxu0 %v2912
      %4039 = vmatpush.bf16.msra.mxu0 %v2910
      %4040 = vmatpush.bf16.msra.mxu0 %v2908
      %4041 = vmatpush.bf16.msra.mxu0 %v2906
      %4042 = vmatpush.bf16.msra.mxu0 %v2904
      %4043 = vmatpush.bf16.msra.mxu0 %v2902
      %4044 = vmatmul.bf16.gmra.mxu0 %v1875
      %v4045 = vpop.f32.mrf.mxu0
      %v4046 = vadd.f32 %v3877, %v4045
      %v4047 = vpop.f32.mrf.mxu0
      %v4048 = vadd.f32 %v3879, %v4047
      %4049 = vmatmul.bf16.gmra.mxu0 %v1884
      %v4050 = vpop.f32.mrf.mxu0
      %v4051 = vadd.f32 %v3882, %v4050
      %v4052 = vpop.f32.mrf.mxu0
      %v4053 = vadd.f32 %v3884, %v4052
      %4054 = vmatmul.bf16.gmra.mxu0 %v1893
      %v4055 = vpop.f32.mrf.mxu0
      %v4056 = vadd.f32 %v3887, %v4055
      %v4057 = vpop.f32.mrf.mxu0
      %v4058 = vadd.f32 %v3889, %v4057
      %4059 = vmatmul.bf16.gmra.mxu0 %v1902
      %v4060 = vpop.f32.mrf.mxu0
      %v4061 = vadd.f32 %v3892, %v4060
      %v4062 = vpop.f32.mrf.mxu0
      %v4063 = vadd.f32 %v3894, %v4062
      %4064 = vmatmul.bf16.gmra.mxu0 %v1911
      %v4065 = vpop.f32.mrf.mxu0
      %v4066 = vadd.f32 %v3897, %v4065
      %v4067 = vpop.f32.mrf.mxu0
      %v4068 = vadd.f32 %v3899, %v4067
      %4069 = vmatmul.bf16.gmra.mxu0 %v1920
      %v4070 = vpop.f32.mrf.mxu0
      %v4071 = vadd.f32 %v3902, %v4070
      %v4072 = vpop.f32.mrf.mxu0
      %v4073 = vadd.f32 %v3904, %v4072
      %4074 = vmatmul.bf16.gmra.mxu0 %v1929
      %v4075 = vpop.f32.mrf.mxu0
      %v4076 = vadd.f32 %v3907, %v4075
      %v4077 = vpop.f32.mrf.mxu0
      %v4078 = vadd.f32 %v3909, %v4077
      %4079 = vmatmul.bf16.gmra.mxu0 %v1938
      %v4080 = vpop.f32.mrf.mxu0
      %v4081 = vadd.f32 %v3912, %v4080
      %v4082 = vpop.f32.mrf.mxu0
      %v4083 = vadd.f32 %v3914, %v4082
      %4084 = vmatmul.bf16.gmra.mxu0 %v1947
      %v4085 = vpop.f32.mrf.mxu0
      %v4086 = vadd.f32 %v3917, %v4085
      %v4087 = vpop.f32.mrf.mxu0
      %v4088 = vadd.f32 %v3919, %v4087
      %4089 = vmatmul.bf16.gmra.mxu0 %v1956
      %v4090 = vpop.f32.mrf.mxu0
      %v4091 = vadd.f32 %v3922, %v4090
      %v4092 = vpop.f32.mrf.mxu0
      %v4093 = vadd.f32 %v3924, %v4092
      %4094 = vmatmul.bf16.gmra.mxu0 %v1965
      %v4095 = vpop.f32.mrf.mxu0
      %v4096 = vadd.f32 %v3927, %v4095
      %v4097 = vpop.f32.mrf.mxu0
      %v4098 = vadd.f32 %v3929, %v4097
      %4099 = vmatmul.bf16.gmra.mxu0 %v1974
      %v4100 = vpop.f32.mrf.mxu0
      %v4101 = vadd.f32 %v3932, %v4100
      %v4102 = vpop.f32.mrf.mxu0
      %v4103 = vadd.f32 %v3934, %v4102
      %4104 = vmatmul.bf16.gmra.mxu0 %v1983
      %v4105 = vpop.f32.mrf.mxu0
      %v4106 = vadd.f32 %v3937, %v4105
      %v4107 = vpop.f32.mrf.mxu0
      %v4108 = vadd.f32 %v3939, %v4107
      %4109 = vmatmul.bf16.gmra.mxu0 %v1992
      %v4110 = vpop.f32.mrf.mxu0
      %v4111 = vadd.f32 %v3942, %v4110
      %v4112 = vpop.f32.mrf.mxu0
      %v4113 = vadd.f32 %v3944, %v4112
      %4114 = vmatmul.bf16.gmra.mxu0 %v2001
      %v4115 = vpop.f32.mrf.mxu0
      %v4116 = vadd.f32 %v3947, %v4115
      %v4117 = vpop.f32.mrf.mxu0
      %v4118 = vadd.f32 %v3949, %v4117
      %4119 = vmatmul.bf16.gmra.mxu0 %v2010
      %v4120 = vpop.f32.mrf.mxu0
      %v4121 = vadd.f32 %v3952, %v4120
      %v4122 = vpop.f32.mrf.mxu0
      %v4123 = vadd.f32 %v3954, %v4122
      %4124 = vmatmul.bf16.gmra.mxu0 %v2019
      %v4125 = vpop.f32.mrf.mxu0
      %v4126 = vadd.f32 %v3957, %v4125
      %v4127 = vpop.f32.mrf.mxu0
      %v4128 = vadd.f32 %v3959, %v4127
      %4129 = vmatmul.bf16.gmra.mxu0 %v2028
      %v4130 = vpop.f32.mrf.mxu0
      %v4131 = vadd.f32 %v3962, %v4130
      %v4132 = vpop.f32.mrf.mxu0
      %v4133 = vadd.f32 %v3964, %v4132
      %4134 = vmatmul.bf16.gmra.mxu0 %v2037
      %v4135 = vpop.f32.mrf.mxu0
      %v4136 = vadd.f32 %v3967, %v4135
      %v4137 = vpop.f32.mrf.mxu0
      %v4138 = vadd.f32 %v3969, %v4137
      %4139 = vmatmul.bf16.gmra.mxu0 %v2046
      %v4140 = vpop.f32.mrf.mxu0
      %v4141 = vadd.f32 %v3972, %v4140
      %v4142 = vpop.f32.mrf.mxu0
      %v4143 = vadd.f32 %v3974, %v4142
      %4144 = vmatmul.bf16.gmra.mxu0 %v2055
      %v4145 = vpop.f32.mrf.mxu0
      %v4146 = vadd.f32 %v3977, %v4145
      %v4147 = vpop.f32.mrf.mxu0
      %v4148 = vadd.f32 %v3979, %v4147
      %4149 = vmatmul.bf16.gmra.mxu0 %v2064
      %v4150 = vpop.f32.mrf.mxu0
      %v4151 = vadd.f32 %v3982, %v4150
      %v4152 = vpop.f32.mrf.mxu0
      %v4153 = vadd.f32 %v3984, %v4152
      %4154 = vmatmul.bf16.gmra.mxu0 %v2073
      %v4155 = vpop.f32.mrf.mxu0
      %v4156 = vadd.f32 %v3987, %v4155
      %v4157 = vpop.f32.mrf.mxu0
      %v4158 = vadd.f32 %v3989, %v4157
      %4159 = vmatmul.bf16.gmra.mxu0 %v2082
      %v4160 = vpop.f32.mrf.mxu0
      %v4161 = vadd.f32 %v3992, %v4160
      %v4162 = vpop.f32.mrf.mxu0
      %v4163 = vadd.f32 %v3994, %v4162
      %4164 = vmatmul.bf16.gmra.mxu0 %v2091
      %v4165 = vpop.f32.mrf.mxu0
      %v4166 = vadd.f32 %v3997, %v4165
      %v4167 = vpop.f32.mrf.mxu0
      %v4168 = vadd.f32 %v3999, %v4167
      %4169 = vmatmul.bf16.gmra.mxu0 %v2100
      %v4170 = vpop.f32.mrf.mxu0
      %v4171 = vadd.f32 %v4002, %v4170
      %v4172 = vpop.f32.mrf.mxu0
      %v4173 = vadd.f32 %v4004, %v4172
      %4174 = vmatmul.bf16.gmra.mxu0 %v2109
      %v4175 = vpop.f32.mrf.mxu0
      %v4176 = vadd.f32 %v4007, %v4175
      %v4177 = vpop.f32.mrf.mxu0
      %v4178 = vadd.f32 %v4009, %v4177
      %4179 = vmatmul.bf16.gmra.mxu0 %v2118
      %v4180 = vpop.f32.mrf.mxu0
      %v4181 = vadd.f32 %v4012, %v4180
      %v4182 = vpop.f32.mrf.mxu0
      %v4183 = vadd.f32 %v4014, %v4182
      %4184 = vmatmul.bf16.gmra.mxu0 %v2127
      %v4185 = vpop.f32.mrf.mxu0
      %v4186 = vadd.f32 %v4017, %v4185
      %v4187 = vpop.f32.mrf.mxu0
      %v4188 = vadd.f32 %v4019, %v4187
      %4189 = vmatmul.bf16.gmra.mxu0 %v2136
      %v4190 = vpop.f32.mrf.mxu0
      %v4191 = vadd.f32 %v4022, %v4190
      %v4192 = vpop.f32.mrf.mxu0
      %v4193 = vadd.f32 %v4024, %v4192
      %4194 = vmatmul.bf16.gmra.mxu0 %v2145
      %v4195 = vpop.f32.mrf.mxu0
      %v4196 = vadd.f32 %v4027, %v4195
      %v4197 = vpop.f32.mrf.mxu0
      %v4198 = vadd.f32 %v4029, %v4197
      %4199 = vmatmul.bf16.gmra.mxu0 %v2154
      %v4200 = vpop.f32.mrf.mxu0
      %v4201 = vadd.f32 %v4032, %v4200
      %v4202 = vpop.f32.mrf.mxu0
      %v4203 = vadd.f32 %v4034, %v4202
      %4204 = vdwg.mxu0
      %4205 = vmatpush.bf16.msra.mxu0 %v2932
      %4206 = vmatpush.bf16.msra.mxu0 %v2930
      %4207 = vmatpush.bf16.msra.mxu0 %v2928
      %4208 = vmatpush.bf16.msra.mxu0 %v2926
      %4209 = vmatpush.bf16.msra.mxu0 %v2924
      %4210 = vmatpush.bf16.msra.mxu0 %v2922
      %4211 = vmatpush.bf16.msra.mxu0 %v2920
      %4212 = vmatpush.bf16.msra.mxu0 %v2918
      %4213 = vmatmul.bf16.gmra.mxu0 %v1876
      %v4214 = vpop.f32.mrf.mxu0
      %v4215 = vadd.f32 %v4046, %v4214
      %v4216 = vpop.f32.mrf.mxu0
      %v4217 = vadd.f32 %v4048, %v4216
      %4218 = vmatmul.bf16.gmra.mxu0 %v1885
      %v4219 = vpop.f32.mrf.mxu0
      %v4220 = vadd.f32 %v4051, %v4219
      %v4221 = vpop.f32.mrf.mxu0
      %v4222 = vadd.f32 %v4053, %v4221
      %4223 = vmatmul.bf16.gmra.mxu0 %v1894
      %v4224 = vpop.f32.mrf.mxu0
      %v4225 = vadd.f32 %v4056, %v4224
      %v4226 = vpop.f32.mrf.mxu0
      %v4227 = vadd.f32 %v4058, %v4226
      %4228 = vmatmul.bf16.gmra.mxu0 %v1903
      %v4229 = vpop.f32.mrf.mxu0
      %v4230 = vadd.f32 %v4061, %v4229
      %v4231 = vpop.f32.mrf.mxu0
      %v4232 = vadd.f32 %v4063, %v4231
      %4233 = vmatmul.bf16.gmra.mxu0 %v1912
      %v4234 = vpop.f32.mrf.mxu0
      %v4235 = vadd.f32 %v4066, %v4234
      %v4236 = vpop.f32.mrf.mxu0
      %v4237 = vadd.f32 %v4068, %v4236
      %4238 = vmatmul.bf16.gmra.mxu0 %v1921
      %v4239 = vpop.f32.mrf.mxu0
      %v4240 = vadd.f32 %v4071, %v4239
      %v4241 = vpop.f32.mrf.mxu0
      %v4242 = vadd.f32 %v4073, %v4241
      %4243 = vmatmul.bf16.gmra.mxu0 %v1930
      %v4244 = vpop.f32.mrf.mxu0
      %v4245 = vadd.f32 %v4076, %v4244
      %v4246 = vpop.f32.mrf.mxu0
      %v4247 = vadd.f32 %v4078, %v4246
      %4248 = vmatmul.bf16.gmra.mxu0 %v1939
      %v4249 = vpop.f32.mrf.mxu0
      %v4250 = vadd.f32 %v4081, %v4249
      %v4251 = vpop.f32.mrf.mxu0
      %v4252 = vadd.f32 %v4083, %v4251
      %4253 = vmatmul.bf16.gmra.mxu0 %v1948
      %v4254 = vpop.f32.mrf.mxu0
      %v4255 = vadd.f32 %v4086, %v4254
      %v4256 = vpop.f32.mrf.mxu0
      %v4257 = vadd.f32 %v4088, %v4256
      %4258 = vmatmul.bf16.gmra.mxu0 %v1957
      %v4259 = vpop.f32.mrf.mxu0
      %v4260 = vadd.f32 %v4091, %v4259
      %v4261 = vpop.f32.mrf.mxu0
      %v4262 = vadd.f32 %v4093, %v4261
      %4263 = vmatmul.bf16.gmra.mxu0 %v1966
      %v4264 = vpop.f32.mrf.mxu0
      %v4265 = vadd.f32 %v4096, %v4264
      %v4266 = vpop.f32.mrf.mxu0
      %v4267 = vadd.f32 %v4098, %v4266
      %4268 = vmatmul.bf16.gmra.mxu0 %v1975
      %v4269 = vpop.f32.mrf.mxu0
      %v4270 = vadd.f32 %v4101, %v4269
      %v4271 = vpop.f32.mrf.mxu0
      %v4272 = vadd.f32 %v4103, %v4271
      %4273 = vmatmul.bf16.gmra.mxu0 %v1984
      %v4274 = vpop.f32.mrf.mxu0
      %v4275 = vadd.f32 %v4106, %v4274
      %v4276 = vpop.f32.mrf.mxu0
      %v4277 = vadd.f32 %v4108, %v4276
      %4278 = vmatmul.bf16.gmra.mxu0 %v1993
      %v4279 = vpop.f32.mrf.mxu0
      %v4280 = vadd.f32 %v4111, %v4279
      %v4281 = vpop.f32.mrf.mxu0
      %v4282 = vadd.f32 %v4113, %v4281
      %4283 = vmatmul.bf16.gmra.mxu0 %v2002
      %v4284 = vpop.f32.mrf.mxu0
      %v4285 = vadd.f32 %v4116, %v4284
      %v4286 = vpop.f32.mrf.mxu0
      %v4287 = vadd.f32 %v4118, %v4286
      %4288 = vmatmul.bf16.gmra.mxu0 %v2011
      %v4289 = vpop.f32.mrf.mxu0
      %v4290 = vadd.f32 %v4121, %v4289
      %v4291 = vpop.f32.mrf.mxu0
      %v4292 = vadd.f32 %v4123, %v4291
      %4293 = vmatmul.bf16.gmra.mxu0 %v2020
      %v4294 = vpop.f32.mrf.mxu0
      %v4295 = vadd.f32 %v4126, %v4294
      %v4296 = vpop.f32.mrf.mxu0
      %v4297 = vadd.f32 %v4128, %v4296
      %4298 = vmatmul.bf16.gmra.mxu0 %v2029
      %v4299 = vpop.f32.mrf.mxu0
      %v4300 = vadd.f32 %v4131, %v4299
      %v4301 = vpop.f32.mrf.mxu0
      %v4302 = vadd.f32 %v4133, %v4301
      %4303 = vmatmul.bf16.gmra.mxu0 %v2038
      %v4304 = vpop.f32.mrf.mxu0
      %v4305 = vadd.f32 %v4136, %v4304
      %v4306 = vpop.f32.mrf.mxu0
      %v4307 = vadd.f32 %v4138, %v4306
      %4308 = vmatmul.bf16.gmra.mxu0 %v2047
      %v4309 = vpop.f32.mrf.mxu0
      %v4310 = vadd.f32 %v4141, %v4309
      %v4311 = vpop.f32.mrf.mxu0
      %v4312 = vadd.f32 %v4143, %v4311
      %4313 = vmatmul.bf16.gmra.mxu0 %v2056
      %v4314 = vpop.f32.mrf.mxu0
      %v4315 = vadd.f32 %v4146, %v4314
      %v4316 = vpop.f32.mrf.mxu0
      %v4317 = vadd.f32 %v4148, %v4316
      %4318 = vmatmul.bf16.gmra.mxu0 %v2065
      %v4319 = vpop.f32.mrf.mxu0
      %v4320 = vadd.f32 %v4151, %v4319
      %v4321 = vpop.f32.mrf.mxu0
      %v4322 = vadd.f32 %v4153, %v4321
      %4323 = vmatmul.bf16.gmra.mxu0 %v2074
      %v4324 = vpop.f32.mrf.mxu0
      %v4325 = vadd.f32 %v4156, %v4324
      %v4326 = vpop.f32.mrf.mxu0
      %v4327 = vadd.f32 %v4158, %v4326
      %4328 = vmatmul.bf16.gmra.mxu0 %v2083
      %v4329 = vpop.f32.mrf.mxu0
      %v4330 = vadd.f32 %v4161, %v4329
      %v4331 = vpop.f32.mrf.mxu0
      %v4332 = vadd.f32 %v4163, %v4331
      %4333 = vmatmul.bf16.gmra.mxu0 %v2092
      %v4334 = vpop.f32.mrf.mxu0
      %v4335 = vadd.f32 %v4166, %v4334
      %v4336 = vpop.f32.mrf.mxu0
      %v4337 = vadd.f32 %v4168, %v4336
      %4338 = vmatmul.bf16.gmra.mxu0 %v2101
      %v4339 = vpop.f32.mrf.mxu0
      %v4340 = vadd.f32 %v4171, %v4339
      %v4341 = vpop.f32.mrf.mxu0
      %v4342 = vadd.f32 %v4173, %v4341
      %4343 = vmatmul.bf16.gmra.mxu0 %v2110
      %v4344 = vpop.f32.mrf.mxu0
      %v4345 = vadd.f32 %v4176, %v4344
      %v4346 = vpop.f32.mrf.mxu0
      %v4347 = vadd.f32 %v4178, %v4346
      %4348 = vmatmul.bf16.gmra.mxu0 %v2119
      %v4349 = vpop.f32.mrf.mxu0
      %v4350 = vadd.f32 %v4181, %v4349
      %v4351 = vpop.f32.mrf.mxu0
      %v4352 = vadd.f32 %v4183, %v4351
      %4353 = vmatmul.bf16.gmra.mxu0 %v2128
      %v4354 = vpop.f32.mrf.mxu0
      %v4355 = vadd.f32 %v4186, %v4354
      %v4356 = vpop.f32.mrf.mxu0
      %v4357 = vadd.f32 %v4188, %v4356
      %4358 = vmatmul.bf16.gmra.mxu0 %v2137
      %v4359 = vpop.f32.mrf.mxu0
      %v4360 = vadd.f32 %v4191, %v4359
      %v4361 = vpop.f32.mrf.mxu0
      %v4362 = vadd.f32 %v4193, %v4361
      %4363 = vmatmul.bf16.gmra.mxu0 %v2146
      %v4364 = vpop.f32.mrf.mxu0
      %v4365 = vadd.f32 %v4196, %v4364
      %v4366 = vpop.f32.mrf.mxu0
      %v4367 = vadd.f32 %v4198, %v4366
      %4368 = vmatmul.bf16.gmra.mxu0 %v2155
      %v4369 = vpop.f32.mrf.mxu0
      %v4370 = vadd.f32 %v4201, %v4369
      %v4371 = vpop.f32.mrf.mxu0
      %v4372 = vadd.f32 %v4203, %v4371
      %4373 = vdwg.mxu0
      %4374 = vmatpush.bf16.msra.mxu0 %v2948
      %4375 = vmatpush.bf16.msra.mxu0 %v2946
      %4376 = vmatpush.bf16.msra.mxu0 %v2944
      %4377 = vmatpush.bf16.msra.mxu0 %v2942
      %4378 = vmatpush.bf16.msra.mxu0 %v2940
      %4379 = vmatpush.bf16.msra.mxu0 %v2938
      %4380 = vmatpush.bf16.msra.mxu0 %v2936
      %4381 = vmatpush.bf16.msra.mxu0 %v2934
      %4382 = vmatmul.bf16.gmra.mxu0 %v1877
      %v4383 = vpop.f32.mrf.mxu0
      %v4384 = vadd.f32 %v4215, %v4383
      %v4385 = vpop.f32.mrf.mxu0
      %v4386 = vadd.f32 %v4217, %v4385
      %4387 = vmatmul.bf16.gmra.mxu0 %v1886
      %v4388 = vpop.f32.mrf.mxu0
      %v4389 = vadd.f32 %v4220, %v4388
      %v4390 = vpop.f32.mrf.mxu0
      %v4391 = vadd.f32 %v4222, %v4390
      %4392 = vmatmul.bf16.gmra.mxu0 %v1895
      %v4393 = vpop.f32.mrf.mxu0
      %v4394 = vadd.f32 %v4225, %v4393
      %v4395 = vpop.f32.mrf.mxu0
      %v4396 = vadd.f32 %v4227, %v4395
      %4397 = vmatmul.bf16.gmra.mxu0 %v1904
      %v4398 = vpop.f32.mrf.mxu0
      %v4399 = vadd.f32 %v4230, %v4398
      %v4400 = vpop.f32.mrf.mxu0
      %v4401 = vadd.f32 %v4232, %v4400
      %4402 = vmatmul.bf16.gmra.mxu0 %v1913
      %v4403 = vpop.f32.mrf.mxu0
      %v4404 = vadd.f32 %v4235, %v4403
      %v4405 = vpop.f32.mrf.mxu0
      %v4406 = vadd.f32 %v4237, %v4405
      %4407 = vmatmul.bf16.gmra.mxu0 %v1922
      %v4408 = vpop.f32.mrf.mxu0
      %v4409 = vadd.f32 %v4240, %v4408
      %v4410 = vpop.f32.mrf.mxu0
      %v4411 = vadd.f32 %v4242, %v4410
      %4412 = vmatmul.bf16.gmra.mxu0 %v1931
      %v4413 = vpop.f32.mrf.mxu0
      %v4414 = vadd.f32 %v4245, %v4413
      %v4415 = vpop.f32.mrf.mxu0
      %v4416 = vadd.f32 %v4247, %v4415
      %4417 = vmatmul.bf16.gmra.mxu0 %v1940
      %v4418 = vpop.f32.mrf.mxu0
      %v4419 = vadd.f32 %v4250, %v4418
      %v4420 = vpop.f32.mrf.mxu0
      %v4421 = vadd.f32 %v4252, %v4420
      %4422 = vmatmul.bf16.gmra.mxu0 %v1949
      %v4423 = vpop.f32.mrf.mxu0
      %v4424 = vadd.f32 %v4255, %v4423
      %v4425 = vpop.f32.mrf.mxu0
      %v4426 = vadd.f32 %v4257, %v4425
      %4427 = vmatmul.bf16.gmra.mxu0 %v1958
      %v4428 = vpop.f32.mrf.mxu0
      %v4429 = vadd.f32 %v4260, %v4428
      %v4430 = vpop.f32.mrf.mxu0
      %v4431 = vadd.f32 %v4262, %v4430
      %4432 = vmatmul.bf16.gmra.mxu0 %v1967
      %v4433 = vpop.f32.mrf.mxu0
      %v4434 = vadd.f32 %v4265, %v4433
      %v4435 = vpop.f32.mrf.mxu0
      %v4436 = vadd.f32 %v4267, %v4435
      %4437 = vmatmul.bf16.gmra.mxu0 %v1976
      %v4438 = vpop.f32.mrf.mxu0
      %v4439 = vadd.f32 %v4270, %v4438
      %v4440 = vpop.f32.mrf.mxu0
      %v4441 = vadd.f32 %v4272, %v4440
      %4442 = vmatmul.bf16.gmra.mxu0 %v1985
      %v4443 = vpop.f32.mrf.mxu0
      %v4444 = vadd.f32 %v4275, %v4443
      %v4445 = vpop.f32.mrf.mxu0
      %v4446 = vadd.f32 %v4277, %v4445
      %4447 = vmatmul.bf16.gmra.mxu0 %v1994
      %v4448 = vpop.f32.mrf.mxu0
      %v4449 = vadd.f32 %v4280, %v4448
      %v4450 = vpop.f32.mrf.mxu0
      %v4451 = vadd.f32 %v4282, %v4450
      %4452 = vmatmul.bf16.gmra.mxu0 %v2003
      %v4453 = vpop.f32.mrf.mxu0
      %v4454 = vadd.f32 %v4285, %v4453
      %v4455 = vpop.f32.mrf.mxu0
      %v4456 = vadd.f32 %v4287, %v4455
      %4457 = vmatmul.bf16.gmra.mxu0 %v2012
      %v4458 = vpop.f32.mrf.mxu0
      %v4459 = vadd.f32 %v4290, %v4458
      %v4460 = vpop.f32.mrf.mxu0
      %v4461 = vadd.f32 %v4292, %v4460
      %4462 = vmatmul.bf16.gmra.mxu0 %v2021
      %v4463 = vpop.f32.mrf.mxu0
      %v4464 = vadd.f32 %v4295, %v4463
      %v4465 = vpop.f32.mrf.mxu0
      %v4466 = vadd.f32 %v4297, %v4465
      %4467 = vmatmul.bf16.gmra.mxu0 %v2030
      %v4468 = vpop.f32.mrf.mxu0
      %v4469 = vadd.f32 %v4300, %v4468
      %v4470 = vpop.f32.mrf.mxu0
      %v4471 = vadd.f32 %v4302, %v4470
      %4472 = vmatmul.bf16.gmra.mxu0 %v2039
      %v4473 = vpop.f32.mrf.mxu0
      %v4474 = vadd.f32 %v4305, %v4473
      %v4475 = vpop.f32.mrf.mxu0
      %v4476 = vadd.f32 %v4307, %v4475
      %4477 = vmatmul.bf16.gmra.mxu0 %v2048
      %v4478 = vpop.f32.mrf.mxu0
      %v4479 = vadd.f32 %v4310, %v4478
      %v4480 = vpop.f32.mrf.mxu0
      %v4481 = vadd.f32 %v4312, %v4480
      %4482 = vmatmul.bf16.gmra.mxu0 %v2057
      %v4483 = vpop.f32.mrf.mxu0
      %v4484 = vadd.f32 %v4315, %v4483
      %v4485 = vpop.f32.mrf.mxu0
      %v4486 = vadd.f32 %v4317, %v4485
      %4487 = vmatmul.bf16.gmra.mxu0 %v2066
      %v4488 = vpop.f32.mrf.mxu0
      %v4489 = vadd.f32 %v4320, %v4488
      %v4490 = vpop.f32.mrf.mxu0
      %v4491 = vadd.f32 %v4322, %v4490
      %4492 = vmatmul.bf16.gmra.mxu0 %v2075
      %v4493 = vpop.f32.mrf.mxu0
      %v4494 = vadd.f32 %v4325, %v4493
      %v4495 = vpop.f32.mrf.mxu0
      %v4496 = vadd.f32 %v4327, %v4495
      %4497 = vmatmul.bf16.gmra.mxu0 %v2084
      %v4498 = vpop.f32.mrf.mxu0
      %v4499 = vadd.f32 %v4330, %v4498
      %v4500 = vpop.f32.mrf.mxu0
      %v4501 = vadd.f32 %v4332, %v4500
      %4502 = vmatmul.bf16.gmra.mxu0 %v2093
      %v4503 = vpop.f32.mrf.mxu0
      %v4504 = vadd.f32 %v4335, %v4503
      %v4505 = vpop.f32.mrf.mxu0
      %v4506 = vadd.f32 %v4337, %v4505
      %4507 = vmatmul.bf16.gmra.mxu0 %v2102
      %v4508 = vpop.f32.mrf.mxu0
      %v4509 = vadd.f32 %v4340, %v4508
      %v4510 = vpop.f32.mrf.mxu0
      %v4511 = vadd.f32 %v4342, %v4510
      %4512 = vmatmul.bf16.gmra.mxu0 %v2111
      %v4513 = vpop.f32.mrf.mxu0
      %v4514 = vadd.f32 %v4345, %v4513
      %v4515 = vpop.f32.mrf.mxu0
      %v4516 = vadd.f32 %v4347, %v4515
      %4517 = vmatmul.bf16.gmra.mxu0 %v2120
      %v4518 = vpop.f32.mrf.mxu0
      %v4519 = vadd.f32 %v4350, %v4518
      %v4520 = vpop.f32.mrf.mxu0
      %v4521 = vadd.f32 %v4352, %v4520
      %4522 = vmatmul.bf16.gmra.mxu0 %v2129
      %v4523 = vpop.f32.mrf.mxu0
      %v4524 = vadd.f32 %v4355, %v4523
      %v4525 = vpop.f32.mrf.mxu0
      %v4526 = vadd.f32 %v4357, %v4525
      %4527 = vmatmul.bf16.gmra.mxu0 %v2138
      %v4528 = vpop.f32.mrf.mxu0
      %v4529 = vadd.f32 %v4360, %v4528
      %v4530 = vpop.f32.mrf.mxu0
      %v4531 = vadd.f32 %v4362, %v4530
      %4532 = vmatmul.bf16.gmra.mxu0 %v2147
      %v4533 = vpop.f32.mrf.mxu0
      %v4534 = vadd.f32 %v4365, %v4533
      %v4535 = vpop.f32.mrf.mxu0
      %v4536 = vadd.f32 %v4367, %v4535
      %4537 = vmatmul.bf16.gmra.mxu0 %v2156
      %v4538 = vpop.f32.mrf.mxu0
      %v4539 = vadd.f32 %v4370, %v4538
      %v4540 = vpop.f32.mrf.mxu0
      %v4541 = vadd.f32 %v4372, %v4540
      %4542 = vdwg.mxu0
      %4543 = vmatpush.bf16.msra.mxu0 0
      %4544 = vmatpush.bf16.msra.mxu0 0
      %4545 = vmatpush.bf16.msra.mxu0 0
      %4546 = vmatpush.bf16.msra.mxu0 0
      %4547 = vmatpush.bf16.msra.mxu0 %v2956
      %4548 = vmatpush.bf16.msra.mxu0 %v2954
      %4549 = vmatpush.bf16.msra.mxu0 %v2952
      %4550 = vmatpush.bf16.msra.mxu0 %v2950
      %4551 = vmatmul.bf16.gmra.mxu0 %v3096
      %v4552 = vpop.f32.mrf.mxu0
      %v4553 = vadd.f32 %v4384, %v4552
      %v4554 = vpop.f32.mrf.mxu0
      %v4555 = vadd.f32 %v4386, %v4554
      %4556 = vmatmul.bf16.gmra.mxu0 %v3099
      %v4557 = vpop.f32.mrf.mxu0
      %v4558 = vadd.f32 %v4389, %v4557
      %v4559 = vpop.f32.mrf.mxu0
      %v4560 = vadd.f32 %v4391, %v4559
      %4561 = vmatmul.bf16.gmra.mxu0 %v3102
      %v4562 = vpop.f32.mrf.mxu0
      %v4563 = vadd.f32 %v4394, %v4562
      %v4564 = vpop.f32.mrf.mxu0
      %v4565 = vadd.f32 %v4396, %v4564
      %4566 = vmatmul.bf16.gmra.mxu0 %v3105
      %v4567 = vpop.f32.mrf.mxu0
      %v4568 = vadd.f32 %v4399, %v4567
      %v4569 = vpop.f32.mrf.mxu0
      %v4570 = vadd.f32 %v4401, %v4569
      %4571 = vmatmul.bf16.gmra.mxu0 %v3108
      %v4572 = vpop.f32.mrf.mxu0
      %v4573 = vadd.f32 %v4404, %v4572
      %v4574 = vpop.f32.mrf.mxu0
      %v4575 = vadd.f32 %v4406, %v4574
      %4576 = vmatmul.bf16.gmra.mxu0 %v3111
      %v4577 = vpop.f32.mrf.mxu0
      %v4578 = vadd.f32 %v4409, %v4577
      %v4579 = vpop.f32.mrf.mxu0
      %v4580 = vadd.f32 %v4411, %v4579
      %4581 = vmatmul.bf16.gmra.mxu0 %v3114
      %v4582 = vpop.f32.mrf.mxu0
      %v4583 = vadd.f32 %v4414, %v4582
      %v4584 = vpop.f32.mrf.mxu0
      %v4585 = vadd.f32 %v4416, %v4584
      %4586 = vmatmul.bf16.gmra.mxu0 %v3117
      %v4587 = vpop.f32.mrf.mxu0
      %v4588 = vadd.f32 %v4419, %v4587
      %v4589 = vpop.f32.mrf.mxu0
      %v4590 = vadd.f32 %v4421, %v4589
      %4591 = vmatmul.bf16.gmra.mxu0 %v3120
      %v4592 = vpop.f32.mrf.mxu0
      %v4593 = vadd.f32 %v4424, %v4592
      %v4594 = vpop.f32.mrf.mxu0
      %v4595 = vadd.f32 %v4426, %v4594
      %4596 = vmatmul.bf16.gmra.mxu0 %v3123
      %v4597 = vpop.f32.mrf.mxu0
      %v4598 = vadd.f32 %v4429, %v4597
      %v4599 = vpop.f32.mrf.mxu0
      %v4600 = vadd.f32 %v4431, %v4599
      %4601 = vmatmul.bf16.gmra.mxu0 %v3126
      %v4602 = vpop.f32.mrf.mxu0
      %v4603 = vadd.f32 %v4434, %v4602
      %v4604 = vpop.f32.mrf.mxu0
      %v4605 = vadd.f32 %v4436, %v4604
      %4606 = vmatmul.bf16.gmra.mxu0 %v3129
      %v4607 = vpop.f32.mrf.mxu0
      %v4608 = vadd.f32 %v4439, %v4607
      %v4609 = vpop.f32.mrf.mxu0
      %v4610 = vadd.f32 %v4441, %v4609
      %4611 = vmatmul.bf16.gmra.mxu0 %v3132
      %v4612 = vpop.f32.mrf.mxu0
      %v4613 = vadd.f32 %v4444, %v4612
      %v4614 = vpop.f32.mrf.mxu0
      %v4615 = vadd.f32 %v4446, %v4614
      %4616 = vmatmul.bf16.gmra.mxu0 %v3135
      %v4617 = vpop.f32.mrf.mxu0
      %v4618 = vadd.f32 %v4449, %v4617
      %v4619 = vpop.f32.mrf.mxu0
      %v4620 = vadd.f32 %v4451, %v4619
      %4621 = vmatmul.bf16.gmra.mxu0 %v3138
      %v4622 = vpop.f32.mrf.mxu0
      %v4623 = vadd.f32 %v4454, %v4622
      %v4624 = vpop.f32.mrf.mxu0
      %v4625 = vadd.f32 %v4456, %v4624
      %4626 = vmatmul.bf16.gmra.mxu0 %v3141
      %v4627 = vpop.f32.mrf.mxu0
      %v4628 = vadd.f32 %v4459, %v4627
      %v4629 = vpop.f32.mrf.mxu0
      %v4630 = vadd.f32 %v4461, %v4629
      %4631 = vmatmul.bf16.gmra.mxu0 %v3144
      %v4632 = vpop.f32.mrf.mxu0
      %v4633 = vadd.f32 %v4464, %v4632
      %v4634 = vpop.f32.mrf.mxu0
      %v4635 = vadd.f32 %v4466, %v4634
      %4636 = vmatmul.bf16.gmra.mxu0 %v3147
      %v4637 = vpop.f32.mrf.mxu0
      %v4638 = vadd.f32 %v4469, %v4637
      %v4639 = vpop.f32.mrf.mxu0
      %v4640 = vadd.f32 %v4471, %v4639
      %4641 = vmatmul.bf16.gmra.mxu0 %v3150
      %v4642 = vpop.f32.mrf.mxu0
      %v4643 = vadd.f32 %v4474, %v4642
      %v4644 = vpop.f32.mrf.mxu0
      %v4645 = vadd.f32 %v4476, %v4644
      %4646 = vmatmul.bf16.gmra.mxu0 %v3153
      %v4647 = vpop.f32.mrf.mxu0
      %v4648 = vadd.f32 %v4479, %v4647
      %v4649 = vpop.f32.mrf.mxu0
      %v4650 = vadd.f32 %v4481, %v4649
      %4651 = vmatmul.bf16.gmra.mxu0 %v3156
      %v4652 = vpop.f32.mrf.mxu0
      %v4653 = vadd.f32 %v4484, %v4652
      %v4654 = vpop.f32.mrf.mxu0
      %v4655 = vadd.f32 %v4486, %v4654
      %4656 = vmatmul.bf16.gmra.mxu0 %v3159
      %v4657 = vpop.f32.mrf.mxu0
      %v4658 = vadd.f32 %v4489, %v4657
      %v4659 = vpop.f32.mrf.mxu0
      %v4660 = vadd.f32 %v4491, %v4659
      %4661 = vmatmul.bf16.gmra.mxu0 %v3162
      %v4662 = vpop.f32.mrf.mxu0
      %v4663 = vadd.f32 %v4494, %v4662
      %v4664 = vpop.f32.mrf.mxu0
      %v4665 = vadd.f32 %v4496, %v4664
      %4666 = vmatmul.bf16.gmra.mxu0 %v3165
      %v4667 = vpop.f32.mrf.mxu0
      %v4668 = vadd.f32 %v4499, %v4667
      %v4669 = vpop.f32.mrf.mxu0
      %v4670 = vadd.f32 %v4501, %v4669
      %4671 = vmatmul.bf16.gmra.mxu0 %v3168
      %v4672 = vpop.f32.mrf.mxu0
      %v4673 = vadd.f32 %v4504, %v4672
      %v4674 = vpop.f32.mrf.mxu0
      %v4675 = vadd.f32 %v4506, %v4674
      %4676 = vmatmul.bf16.gmra.mxu0 %v3171
      %v4677 = vpop.f32.mrf.mxu0
      %v4678 = vadd.f32 %v4509, %v4677
      %v4679 = vpop.f32.mrf.mxu0
      %v4680 = vadd.f32 %v4511, %v4679
      %4681 = vmatmul.bf16.gmra.mxu0 %v3174
      %v4682 = vpop.f32.mrf.mxu0
      %v4683 = vadd.f32 %v4514, %v4682
      %v4684 = vpop.f32.mrf.mxu0
      %v4685 = vadd.f32 %v4516, %v4684
      %4686 = vmatmul.bf16.gmra.mxu0 %v3177
      %v4687 = vpop.f32.mrf.mxu0
      %v4688 = vadd.f32 %v4519, %v4687
      %v4689 = vpop.f32.mrf.mxu0
      %v4690 = vadd.f32 %v4521, %v4689
      %4691 = vmatmul.bf16.gmra.mxu0 %v3180
      %v4692 = vpop.f32.mrf.mxu0
      %v4693 = vadd.f32 %v4524, %v4692
      %v4694 = vpop.f32.mrf.mxu0
      %v4695 = vadd.f32 %v4526, %v4694
      %4696 = vmatmul.bf16.gmra.mxu0 %v3183
      %v4697 = vpop.f32.mrf.mxu0
      %v4698 = vadd.f32 %v4529, %v4697
      %v4699 = vpop.f32.mrf.mxu0
      %v4700 = vadd.f32 %v4531, %v4699
      %4701 = vmatmul.bf16.gmra.mxu0 %v3186
      %v4702 = vpop.f32.mrf.mxu0
      %v4703 = vadd.f32 %v4534, %v4702
      %v4704 = vpop.f32.mrf.mxu0
      %v4705 = vadd.f32 %v4536, %v4704
      %4706 = vmatmul.bf16.gmra.mxu0 %v3189
      %v4707 = vpop.f32.mrf.mxu0
      %v4708 = vadd.f32 %v4539, %v4707
      %v4709 = vpop.f32.mrf.mxu0
      %v4710 = vadd.f32 %v4541, %v4709
      %4711 = vdwg.mxu0
      %4712 = vmatpush.bf16.msra.mxu0 %v2837
      %4713 = vmatpush.bf16.msra.mxu0 %v2835
      %4714 = vmatpush.bf16.msra.mxu0 %v2833
      %4715 = vmatpush.bf16.msra.mxu0 %v2831
      %4716 = vmatpush.bf16.msra.mxu0 %v2829
      %4717 = vmatpush.bf16.msra.mxu0 %v2827
      %4718 = vmatpush.bf16.msra.mxu0 %v2825
      %4719 = vmatpush.bf16.msra.mxu0 %v2823
      %4720 = vmatmul.bf16.gmra.mxu0 %v1870
      %v4721 = vpop.f32.mrf.mxu0
      %v4722 = vadd.f32 %v971, %v4721
      %v4723 = vpop.f32.mrf.mxu0
      %v4724 = vadd.f32 %v971, %v4723
      %4725 = vmatmul.bf16.gmra.mxu0 %v1879
      %v4726 = vpop.f32.mrf.mxu0
      %v4727 = vadd.f32 %v971, %v4726
      %v4728 = vpop.f32.mrf.mxu0
      %v4729 = vadd.f32 %v971, %v4728
      %4730 = vmatmul.bf16.gmra.mxu0 %v1888
      %v4731 = vpop.f32.mrf.mxu0
      %v4732 = vadd.f32 %v971, %v4731
      %v4733 = vpop.f32.mrf.mxu0
      %v4734 = vadd.f32 %v971, %v4733
      %4735 = vmatmul.bf16.gmra.mxu0 %v1897
      %v4736 = vpop.f32.mrf.mxu0
      %v4737 = vadd.f32 %v971, %v4736
      %v4738 = vpop.f32.mrf.mxu0
      %v4739 = vadd.f32 %v971, %v4738
      %4740 = vmatmul.bf16.gmra.mxu0 %v1906
      %v4741 = vpop.f32.mrf.mxu0
      %v4742 = vadd.f32 %v971, %v4741
      %v4743 = vpop.f32.mrf.mxu0
      %v4744 = vadd.f32 %v971, %v4743
      %4745 = vmatmul.bf16.gmra.mxu0 %v1915
      %v4746 = vpop.f32.mrf.mxu0
      %v4747 = vadd.f32 %v971, %v4746
      %v4748 = vpop.f32.mrf.mxu0
      %v4749 = vadd.f32 %v971, %v4748
      %4750 = vmatmul.bf16.gmra.mxu0 %v1924
      %v4751 = vpop.f32.mrf.mxu0
      %v4752 = vadd.f32 %v971, %v4751
      %v4753 = vpop.f32.mrf.mxu0
      %v4754 = vadd.f32 %v971, %v4753
      %4755 = vmatmul.bf16.gmra.mxu0 %v1933
      %v4756 = vpop.f32.mrf.mxu0
      %v4757 = vadd.f32 %v971, %v4756
      %v4758 = vpop.f32.mrf.mxu0
      %v4759 = vadd.f32 %v971, %v4758
      %4760 = vmatmul.bf16.gmra.mxu0 %v1942
      %v4761 = vpop.f32.mrf.mxu0
      %v4762 = vadd.f32 %v971, %v4761
      %v4763 = vpop.f32.mrf.mxu0
      %v4764 = vadd.f32 %v971, %v4763
      %4765 = vmatmul.bf16.gmra.mxu0 %v1951
      %v4766 = vpop.f32.mrf.mxu0
      %v4767 = vadd.f32 %v971, %v4766
      %v4768 = vpop.f32.mrf.mxu0
      %v4769 = vadd.f32 %v971, %v4768
      %4770 = vmatmul.bf16.gmra.mxu0 %v1960
      %v4771 = vpop.f32.mrf.mxu0
      %v4772 = vadd.f32 %v971, %v4771
      %v4773 = vpop.f32.mrf.mxu0
      %v4774 = vadd.f32 %v971, %v4773
      %4775 = vmatmul.bf16.gmra.mxu0 %v1969
      %v4776 = vpop.f32.mrf.mxu0
      %v4777 = vadd.f32 %v971, %v4776
      %v4778 = vpop.f32.mrf.mxu0
      %v4779 = vadd.f32 %v971, %v4778
      %4780 = vmatmul.bf16.gmra.mxu0 %v1978
      %v4781 = vpop.f32.mrf.mxu0
      %v4782 = vadd.f32 %v971, %v4781
      %v4783 = vpop.f32.mrf.mxu0
      %v4784 = vadd.f32 %v971, %v4783
      %4785 = vmatmul.bf16.gmra.mxu0 %v1987
      %v4786 = vpop.f32.mrf.mxu0
      %v4787 = vadd.f32 %v971, %v4786
      %v4788 = vpop.f32.mrf.mxu0
      %v4789 = vadd.f32 %v971, %v4788
      %4790 = vmatmul.bf16.gmra.mxu0 %v1996
      %v4791 = vpop.f32.mrf.mxu0
      %v4792 = vadd.f32 %v971, %v4791
      %v4793 = vpop.f32.mrf.mxu0
      %v4794 = vadd.f32 %v971, %v4793
      %4795 = vmatmul.bf16.gmra.mxu0 %v2005
      %v4796 = vpop.f32.mrf.mxu0
      %v4797 = vadd.f32 %v971, %v4796
      %v4798 = vpop.f32.mrf.mxu0
      %v4799 = vadd.f32 %v971, %v4798
      %4800 = vmatmul.bf16.gmra.mxu0 %v2014
      %v4801 = vpop.f32.mrf.mxu0
      %v4802 = vadd.f32 %v971, %v4801
      %v4803 = vpop.f32.mrf.mxu0
      %v4804 = vadd.f32 %v971, %v4803
      %4805 = vmatmul.bf16.gmra.mxu0 %v2023
      %v4806 = vpop.f32.mrf.mxu0
      %v4807 = vadd.f32 %v971, %v4806
      %v4808 = vpop.f32.mrf.mxu0
      %v4809 = vadd.f32 %v971, %v4808
      %4810 = vmatmul.bf16.gmra.mxu0 %v2032
      %v4811 = vpop.f32.mrf.mxu0
      %v4812 = vadd.f32 %v971, %v4811
      %v4813 = vpop.f32.mrf.mxu0
      %v4814 = vadd.f32 %v971, %v4813
      %4815 = vmatmul.bf16.gmra.mxu0 %v2041
      %v4816 = vpop.f32.mrf.mxu0
      %v4817 = vadd.f32 %v971, %v4816
      %v4818 = vpop.f32.mrf.mxu0
      %v4819 = vadd.f32 %v971, %v4818
      %4820 = vmatmul.bf16.gmra.mxu0 %v2050
      %v4821 = vpop.f32.mrf.mxu0
      %v4822 = vadd.f32 %v971, %v4821
      %v4823 = vpop.f32.mrf.mxu0
      %v4824 = vadd.f32 %v971, %v4823
      %4825 = vmatmul.bf16.gmra.mxu0 %v2059
      %v4826 = vpop.f32.mrf.mxu0
      %v4827 = vadd.f32 %v971, %v4826
      %v4828 = vpop.f32.mrf.mxu0
      %v4829 = vadd.f32 %v971, %v4828
      %4830 = vmatmul.bf16.gmra.mxu0 %v2068
      %v4831 = vpop.f32.mrf.mxu0
      %v4832 = vadd.f32 %v971, %v4831
      %v4833 = vpop.f32.mrf.mxu0
      %v4834 = vadd.f32 %v971, %v4833
      %4835 = vmatmul.bf16.gmra.mxu0 %v2077
      %v4836 = vpop.f32.mrf.mxu0
      %v4837 = vadd.f32 %v971, %v4836
      %v4838 = vpop.f32.mrf.mxu0
      %v4839 = vadd.f32 %v971, %v4838
      %4840 = vmatmul.bf16.gmra.mxu0 %v2086
      %v4841 = vpop.f32.mrf.mxu0
      %v4842 = vadd.f32 %v971, %v4841
      %v4843 = vpop.f32.mrf.mxu0
      %v4844 = vadd.f32 %v971, %v4843
      %4845 = vmatmul.bf16.gmra.mxu0 %v2095
      %v4846 = vpop.f32.mrf.mxu0
      %v4847 = vadd.f32 %v971, %v4846
      %v4848 = vpop.f32.mrf.mxu0
      %v4849 = vadd.f32 %v971, %v4848
      %4850 = vmatmul.bf16.gmra.mxu0 %v2104
      %v4851 = vpop.f32.mrf.mxu0
      %v4852 = vadd.f32 %v971, %v4851
      %v4853 = vpop.f32.mrf.mxu0
      %v4854 = vadd.f32 %v971, %v4853
      %4855 = vmatmul.bf16.gmra.mxu0 %v2113
      %v4856 = vpop.f32.mrf.mxu0
      %v4857 = vadd.f32 %v971, %v4856
      %v4858 = vpop.f32.mrf.mxu0
      %v4859 = vadd.f32 %v971, %v4858
      %4860 = vmatmul.bf16.gmra.mxu0 %v2122
      %v4861 = vpop.f32.mrf.mxu0
      %v4862 = vadd.f32 %v971, %v4861
      %v4863 = vpop.f32.mrf.mxu0
      %v4864 = vadd.f32 %v971, %v4863
      %4865 = vmatmul.bf16.gmra.mxu0 %v2131
      %v4866 = vpop.f32.mrf.mxu0
      %v4867 = vadd.f32 %v971, %v4866
      %v4868 = vpop.f32.mrf.mxu0
      %v4869 = vadd.f32 %v971, %v4868
      %4870 = vmatmul.bf16.gmra.mxu0 %v2140
      %v4871 = vpop.f32.mrf.mxu0
      %v4872 = vadd.f32 %v971, %v4871
      %v4873 = vpop.f32.mrf.mxu0
      %v4874 = vadd.f32 %v971, %v4873
      %4875 = vmatmul.bf16.gmra.mxu0 %v2149
      %v4876 = vpop.f32.mrf.mxu0
      %v4877 = vadd.f32 %v971, %v4876
      %v4878 = vpop.f32.mrf.mxu0
      %v4879 = vadd.f32 %v971, %v4878
      %4880 = vdwg.mxu0
      %4881 = vmatpush.bf16.msra.mxu0 %v2853
      %4882 = vmatpush.bf16.msra.mxu0 %v2851
      %4883 = vmatpush.bf16.msra.mxu0 %v2849
      %4884 = vmatpush.bf16.msra.mxu0 %v2847
      %4885 = vmatpush.bf16.msra.mxu0 %v2845
      %4886 = vmatpush.bf16.msra.mxu0 %v2843
      %4887 = vmatpush.bf16.msra.mxu0 %v2841
      %4888 = vmatpush.bf16.msra.mxu0 %v2839
      %4889 = vmatmul.bf16.gmra.mxu0 %v1871
      %v4890 = vpop.f32.mrf.mxu0
      %v4891 = vadd.f32 %v4722, %v4890
      %v4892 = vpop.f32.mrf.mxu0
      %v4893 = vadd.f32 %v4724, %v4892
      %4894 = vmatmul.bf16.gmra.mxu0 %v1880
      %v4895 = vpop.f32.mrf.mxu0
      %v4896 = vadd.f32 %v4727, %v4895
      %v4897 = vpop.f32.mrf.mxu0
      %v4898 = vadd.f32 %v4729, %v4897
      %4899 = vmatmul.bf16.gmra.mxu0 %v1889
      %v4900 = vpop.f32.mrf.mxu0
      %v4901 = vadd.f32 %v4732, %v4900
      %v4902 = vpop.f32.mrf.mxu0
      %v4903 = vadd.f32 %v4734, %v4902
      %4904 = vmatmul.bf16.gmra.mxu0 %v1898
      %v4905 = vpop.f32.mrf.mxu0
      %v4906 = vadd.f32 %v4737, %v4905
      %v4907 = vpop.f32.mrf.mxu0
      %v4908 = vadd.f32 %v4739, %v4907
      %4909 = vmatmul.bf16.gmra.mxu0 %v1907
      %v4910 = vpop.f32.mrf.mxu0
      %v4911 = vadd.f32 %v4742, %v4910
      %v4912 = vpop.f32.mrf.mxu0
      %v4913 = vadd.f32 %v4744, %v4912
      %4914 = vmatmul.bf16.gmra.mxu0 %v1916
      %v4915 = vpop.f32.mrf.mxu0
      %v4916 = vadd.f32 %v4747, %v4915
      %v4917 = vpop.f32.mrf.mxu0
      %v4918 = vadd.f32 %v4749, %v4917
      %4919 = vmatmul.bf16.gmra.mxu0 %v1925
      %v4920 = vpop.f32.mrf.mxu0
      %v4921 = vadd.f32 %v4752, %v4920
      %v4922 = vpop.f32.mrf.mxu0
      %v4923 = vadd.f32 %v4754, %v4922
      %4924 = vmatmul.bf16.gmra.mxu0 %v1934
      %v4925 = vpop.f32.mrf.mxu0
      %v4926 = vadd.f32 %v4757, %v4925
      %v4927 = vpop.f32.mrf.mxu0
      %v4928 = vadd.f32 %v4759, %v4927
      %4929 = vmatmul.bf16.gmra.mxu0 %v1943
      %v4930 = vpop.f32.mrf.mxu0
      %v4931 = vadd.f32 %v4762, %v4930
      %v4932 = vpop.f32.mrf.mxu0
      %v4933 = vadd.f32 %v4764, %v4932
      %4934 = vmatmul.bf16.gmra.mxu0 %v1952
      %v4935 = vpop.f32.mrf.mxu0
      %v4936 = vadd.f32 %v4767, %v4935
      %v4937 = vpop.f32.mrf.mxu0
      %v4938 = vadd.f32 %v4769, %v4937
      %4939 = vmatmul.bf16.gmra.mxu0 %v1961
      %v4940 = vpop.f32.mrf.mxu0
      %v4941 = vadd.f32 %v4772, %v4940
      %v4942 = vpop.f32.mrf.mxu0
      %v4943 = vadd.f32 %v4774, %v4942
      %4944 = vmatmul.bf16.gmra.mxu0 %v1970
      %v4945 = vpop.f32.mrf.mxu0
      %v4946 = vadd.f32 %v4777, %v4945
      %v4947 = vpop.f32.mrf.mxu0
      %v4948 = vadd.f32 %v4779, %v4947
      %4949 = vmatmul.bf16.gmra.mxu0 %v1979
      %v4950 = vpop.f32.mrf.mxu0
      %v4951 = vadd.f32 %v4782, %v4950
      %v4952 = vpop.f32.mrf.mxu0
      %v4953 = vadd.f32 %v4784, %v4952
      %4954 = vmatmul.bf16.gmra.mxu0 %v1988
      %v4955 = vpop.f32.mrf.mxu0
      %v4956 = vadd.f32 %v4787, %v4955
      %v4957 = vpop.f32.mrf.mxu0
      %v4958 = vadd.f32 %v4789, %v4957
      %4959 = vmatmul.bf16.gmra.mxu0 %v1997
      %v4960 = vpop.f32.mrf.mxu0
      %v4961 = vadd.f32 %v4792, %v4960
      %v4962 = vpop.f32.mrf.mxu0
      %v4963 = vadd.f32 %v4794, %v4962
      %4964 = vmatmul.bf16.gmra.mxu0 %v2006
      %v4965 = vpop.f32.mrf.mxu0
      %v4966 = vadd.f32 %v4797, %v4965
      %v4967 = vpop.f32.mrf.mxu0
      %v4968 = vadd.f32 %v4799, %v4967
      %4969 = vmatmul.bf16.gmra.mxu0 %v2015
      %v4970 = vpop.f32.mrf.mxu0
      %v4971 = vadd.f32 %v4802, %v4970
      %v4972 = vpop.f32.mrf.mxu0
      %v4973 = vadd.f32 %v4804, %v4972
      %4974 = vmatmul.bf16.gmra.mxu0 %v2024
      %v4975 = vpop.f32.mrf.mxu0
      %v4976 = vadd.f32 %v4807, %v4975
      %v4977 = vpop.f32.mrf.mxu0
      %v4978 = vadd.f32 %v4809, %v4977
      %4979 = vmatmul.bf16.gmra.mxu0 %v2033
      %v4980 = vpop.f32.mrf.mxu0
      %v4981 = vadd.f32 %v4812, %v4980
      %v4982 = vpop.f32.mrf.mxu0
      %v4983 = vadd.f32 %v4814, %v4982
      %4984 = vmatmul.bf16.gmra.mxu0 %v2042
      %v4985 = vpop.f32.mrf.mxu0
      %v4986 = vadd.f32 %v4817, %v4985
      %v4987 = vpop.f32.mrf.mxu0
      %v4988 = vadd.f32 %v4819, %v4987
      %4989 = vmatmul.bf16.gmra.mxu0 %v2051
      %v4990 = vpop.f32.mrf.mxu0
      %v4991 = vadd.f32 %v4822, %v4990
      %v4992 = vpop.f32.mrf.mxu0
      %v4993 = vadd.f32 %v4824, %v4992
      %4994 = vmatmul.bf16.gmra.mxu0 %v2060
      %v4995 = vpop.f32.mrf.mxu0
      %v4996 = vadd.f32 %v4827, %v4995
      %v4997 = vpop.f32.mrf.mxu0
      %v4998 = vadd.f32 %v4829, %v4997
      %4999 = vmatmul.bf16.gmra.mxu0 %v2069
      %v5000 = vpop.f32.mrf.mxu0
      %v5001 = vadd.f32 %v4832, %v5000
      %v5002 = vpop.f32.mrf.mxu0
      %v5003 = vadd.f32 %v4834, %v5002
      %5004 = vmatmul.bf16.gmra.mxu0 %v2078
      %v5005 = vpop.f32.mrf.mxu0
      %v5006 = vadd.f32 %v4837, %v5005
      %v5007 = vpop.f32.mrf.mxu0
      %v5008 = vadd.f32 %v4839, %v5007
      %5009 = vmatmul.bf16.gmra.mxu0 %v2087
      %v5010 = vpop.f32.mrf.mxu0
      %v5011 = vadd.f32 %v4842, %v5010
      %v5012 = vpop.f32.mrf.mxu0
      %v5013 = vadd.f32 %v4844, %v5012
      %5014 = vmatmul.bf16.gmra.mxu0 %v2096
      %v5015 = vpop.f32.mrf.mxu0
      %v5016 = vadd.f32 %v4847, %v5015
      %v5017 = vpop.f32.mrf.mxu0
      %v5018 = vadd.f32 %v4849, %v5017
      %5019 = vmatmul.bf16.gmra.mxu0 %v2105
      %v5020 = vpop.f32.mrf.mxu0
      %v5021 = vadd.f32 %v4852, %v5020
      %v5022 = vpop.f32.mrf.mxu0
      %v5023 = vadd.f32 %v4854, %v5022
      %5024 = vmatmul.bf16.gmra.mxu0 %v2114
      %v5025 = vpop.f32.mrf.mxu0
      %v5026 = vadd.f32 %v4857, %v5025
      %v5027 = vpop.f32.mrf.mxu0
      %v5028 = vadd.f32 %v4859, %v5027
      %5029 = vmatmul.bf16.gmra.mxu0 %v2123
      %v5030 = vpop.f32.mrf.mxu0
      %v5031 = vadd.f32 %v4862, %v5030
      %v5032 = vpop.f32.mrf.mxu0
      %v5033 = vadd.f32 %v4864, %v5032
      %5034 = vmatmul.bf16.gmra.mxu0 %v2132
      %v5035 = vpop.f32.mrf.mxu0
      %v5036 = vadd.f32 %v4867, %v5035
      %v5037 = vpop.f32.mrf.mxu0
      %v5038 = vadd.f32 %v4869, %v5037
      %5039 = vmatmul.bf16.gmra.mxu0 %v2141
      %v5040 = vpop.f32.mrf.mxu0
      %v5041 = vadd.f32 %v4872, %v5040
      %v5042 = vpop.f32.mrf.mxu0
      %v5043 = vadd.f32 %v4874, %v5042
      %5044 = vmatmul.bf16.gmra.mxu0 %v2150
      %v5045 = vpop.f32.mrf.mxu0
      %v5046 = vadd.f32 %v4877, %v5045
      %v5047 = vpop.f32.mrf.mxu0
      %v5048 = vadd.f32 %v4879, %v5047
      %5049 = vdwg.mxu0
      %5050 = vmatpush.bf16.msra.mxu0 %v2869
      %5051 = vmatpush.bf16.msra.mxu0 %v2867
      %5052 = vmatpush.bf16.msra.mxu0 %v2865
      %5053 = vmatpush.bf16.msra.mxu0 %v2863
      %5054 = vmatpush.bf16.msra.mxu0 %v2861
      %5055 = vmatpush.bf16.msra.mxu0 %v2859
      %5056 = vmatpush.bf16.msra.mxu0 %v2857
      %5057 = vmatpush.bf16.msra.mxu0 %v2855
      %5058 = vmatmul.bf16.gmra.mxu0 %v1872
      %v5059 = vpop.f32.mrf.mxu0
      %v5060 = vadd.f32 %v4891, %v5059
      %v5061 = vpop.f32.mrf.mxu0
      %v5062 = vadd.f32 %v4893, %v5061
      %5063 = vmatmul.bf16.gmra.mxu0 %v1881
      %v5064 = vpop.f32.mrf.mxu0
      %v5065 = vadd.f32 %v4896, %v5064
      %v5066 = vpop.f32.mrf.mxu0
      %v5067 = vadd.f32 %v4898, %v5066
      %5068 = vmatmul.bf16.gmra.mxu0 %v1890
      %v5069 = vpop.f32.mrf.mxu0
      %v5070 = vadd.f32 %v4901, %v5069
      %v5071 = vpop.f32.mrf.mxu0
      %v5072 = vadd.f32 %v4903, %v5071
      %5073 = vmatmul.bf16.gmra.mxu0 %v1899
      %v5074 = vpop.f32.mrf.mxu0
      %v5075 = vadd.f32 %v4906, %v5074
      %v5076 = vpop.f32.mrf.mxu0
      %v5077 = vadd.f32 %v4908, %v5076
      %5078 = vmatmul.bf16.gmra.mxu0 %v1908
      %v5079 = vpop.f32.mrf.mxu0
      %v5080 = vadd.f32 %v4911, %v5079
      %v5081 = vpop.f32.mrf.mxu0
      %v5082 = vadd.f32 %v4913, %v5081
      %5083 = vmatmul.bf16.gmra.mxu0 %v1917
      %v5084 = vpop.f32.mrf.mxu0
      %v5085 = vadd.f32 %v4916, %v5084
      %v5086 = vpop.f32.mrf.mxu0
      %v5087 = vadd.f32 %v4918, %v5086
      %5088 = vmatmul.bf16.gmra.mxu0 %v1926
      %v5089 = vpop.f32.mrf.mxu0
      %v5090 = vadd.f32 %v4921, %v5089
      %v5091 = vpop.f32.mrf.mxu0
      %v5092 = vadd.f32 %v4923, %v5091
      %5093 = vmatmul.bf16.gmra.mxu0 %v1935
      %v5094 = vpop.f32.mrf.mxu0
      %v5095 = vadd.f32 %v4926, %v5094
      %v5096 = vpop.f32.mrf.mxu0
      %v5097 = vadd.f32 %v4928, %v5096
      %5098 = vmatmul.bf16.gmra.mxu0 %v1944
      %v5099 = vpop.f32.mrf.mxu0
      %v5100 = vadd.f32 %v4931, %v5099
      %v5101 = vpop.f32.mrf.mxu0
      %v5102 = vadd.f32 %v4933, %v5101
      %5103 = vmatmul.bf16.gmra.mxu0 %v1953
      %v5104 = vpop.f32.mrf.mxu0
      %v5105 = vadd.f32 %v4936, %v5104
      %v5106 = vpop.f32.mrf.mxu0
      %v5107 = vadd.f32 %v4938, %v5106
      %5108 = vmatmul.bf16.gmra.mxu0 %v1962
      %v5109 = vpop.f32.mrf.mxu0
      %v5110 = vadd.f32 %v4941, %v5109
      %v5111 = vpop.f32.mrf.mxu0
      %v5112 = vadd.f32 %v4943, %v5111
      %5113 = vmatmul.bf16.gmra.mxu0 %v1971
      %v5114 = vpop.f32.mrf.mxu0
      %v5115 = vadd.f32 %v4946, %v5114
      %v5116 = vpop.f32.mrf.mxu0
      %v5117 = vadd.f32 %v4948, %v5116
      %5118 = vmatmul.bf16.gmra.mxu0 %v1980
      %v5119 = vpop.f32.mrf.mxu0
      %v5120 = vadd.f32 %v4951, %v5119
      %v5121 = vpop.f32.mrf.mxu0
      %v5122 = vadd.f32 %v4953, %v5121
      %5123 = vmatmul.bf16.gmra.mxu0 %v1989
      %v5124 = vpop.f32.mrf.mxu0
      %v5125 = vadd.f32 %v4956, %v5124
      %v5126 = vpop.f32.mrf.mxu0
      %v5127 = vadd.f32 %v4958, %v5126
      %5128 = vmatmul.bf16.gmra.mxu0 %v1998
      %v5129 = vpop.f32.mrf.mxu0
      %v5130 = vadd.f32 %v4961, %v5129
      %v5131 = vpop.f32.mrf.mxu0
      %v5132 = vadd.f32 %v4963, %v5131
      %5133 = vmatmul.bf16.gmra.mxu0 %v2007
      %v5134 = vpop.f32.mrf.mxu0
      %v5135 = vadd.f32 %v4966, %v5134
      %v5136 = vpop.f32.mrf.mxu0
      %v5137 = vadd.f32 %v4968, %v5136
      %5138 = vmatmul.bf16.gmra.mxu0 %v2016
      %v5139 = vpop.f32.mrf.mxu0
      %v5140 = vadd.f32 %v4971, %v5139
      %v5141 = vpop.f32.mrf.mxu0
      %v5142 = vadd.f32 %v4973, %v5141
      %5143 = vmatmul.bf16.gmra.mxu0 %v2025
      %v5144 = vpop.f32.mrf.mxu0
      %v5145 = vadd.f32 %v4976, %v5144
      %v5146 = vpop.f32.mrf.mxu0
      %v5147 = vadd.f32 %v4978, %v5146
      %5148 = vmatmul.bf16.gmra.mxu0 %v2034
      %v5149 = vpop.f32.mrf.mxu0
      %v5150 = vadd.f32 %v4981, %v5149
      %v5151 = vpop.f32.mrf.mxu0
      %v5152 = vadd.f32 %v4983, %v5151
      %5153 = vmatmul.bf16.gmra.mxu0 %v2043
      %v5154 = vpop.f32.mrf.mxu0
      %v5155 = vadd.f32 %v4986, %v5154
      %v5156 = vpop.f32.mrf.mxu0
      %v5157 = vadd.f32 %v4988, %v5156
      %5158 = vmatmul.bf16.gmra.mxu0 %v2052
      %v5159 = vpop.f32.mrf.mxu0
      %v5160 = vadd.f32 %v4991, %v5159
      %v5161 = vpop.f32.mrf.mxu0
      %v5162 = vadd.f32 %v4993, %v5161
      %5163 = vmatmul.bf16.gmra.mxu0 %v2061
      %v5164 = vpop.f32.mrf.mxu0
      %v5165 = vadd.f32 %v4996, %v5164
      %v5166 = vpop.f32.mrf.mxu0
      %v5167 = vadd.f32 %v4998, %v5166
      %5168 = vmatmul.bf16.gmra.mxu0 %v2070
      %v5169 = vpop.f32.mrf.mxu0
      %v5170 = vadd.f32 %v5001, %v5169
      %v5171 = vpop.f32.mrf.mxu0
      %v5172 = vadd.f32 %v5003, %v5171
      %5173 = vmatmul.bf16.gmra.mxu0 %v2079
      %v5174 = vpop.f32.mrf.mxu0
      %v5175 = vadd.f32 %v5006, %v5174
      %v5176 = vpop.f32.mrf.mxu0
      %v5177 = vadd.f32 %v5008, %v5176
      %5178 = vmatmul.bf16.gmra.mxu0 %v2088
      %v5179 = vpop.f32.mrf.mxu0
      %v5180 = vadd.f32 %v5011, %v5179
      %v5181 = vpop.f32.mrf.mxu0
      %v5182 = vadd.f32 %v5013, %v5181
      %5183 = vmatmul.bf16.gmra.mxu0 %v2097
      %v5184 = vpop.f32.mrf.mxu0
      %v5185 = vadd.f32 %v5016, %v5184
      %v5186 = vpop.f32.mrf.mxu0
      %v5187 = vadd.f32 %v5018, %v5186
      %5188 = vmatmul.bf16.gmra.mxu0 %v2106
      %v5189 = vpop.f32.mrf.mxu0
      %v5190 = vadd.f32 %v5021, %v5189
      %v5191 = vpop.f32.mrf.mxu0
      %v5192 = vadd.f32 %v5023, %v5191
      %5193 = vmatmul.bf16.gmra.mxu0 %v2115
      %v5194 = vpop.f32.mrf.mxu0
      %v5195 = vadd.f32 %v5026, %v5194
      %v5196 = vpop.f32.mrf.mxu0
      %v5197 = vadd.f32 %v5028, %v5196
      %5198 = vmatmul.bf16.gmra.mxu0 %v2124
      %v5199 = vpop.f32.mrf.mxu0
      %v5200 = vadd.f32 %v5031, %v5199
      %v5201 = vpop.f32.mrf.mxu0
      %v5202 = vadd.f32 %v5033, %v5201
      %5203 = vmatmul.bf16.gmra.mxu0 %v2133
      %v5204 = vpop.f32.mrf.mxu0
      %v5205 = vadd.f32 %v5036, %v5204
      %v5206 = vpop.f32.mrf.mxu0
      %v5207 = vadd.f32 %v5038, %v5206
      %5208 = vmatmul.bf16.gmra.mxu0 %v2142
      %v5209 = vpop.f32.mrf.mxu0
      %v5210 = vadd.f32 %v5041, %v5209
      %v5211 = vpop.f32.mrf.mxu0
      %v5212 = vadd.f32 %v5043, %v5211
      %5213 = vmatmul.bf16.gmra.mxu0 %v2151
      %v5214 = vpop.f32.mrf.mxu0
      %v5215 = vadd.f32 %v5046, %v5214
      %v5216 = vpop.f32.mrf.mxu0
      %v5217 = vadd.f32 %v5048, %v5216
      %5218 = vdwg.mxu0
      %5219 = vmatpush.bf16.msra.mxu0 %v2885
      %5220 = vmatpush.bf16.msra.mxu0 %v2883
      %5221 = vmatpush.bf16.msra.mxu0 %v2881
      %5222 = vmatpush.bf16.msra.mxu0 %v2879
      %5223 = vmatpush.bf16.msra.mxu0 %v2877
      %5224 = vmatpush.bf16.msra.mxu0 %v2875
      %5225 = vmatpush.bf16.msra.mxu0 %v2873
      %5226 = vmatpush.bf16.msra.mxu0 %v2871
      %5227 = vmatmul.bf16.gmra.mxu0 %v1873
      %v5228 = vpop.f32.mrf.mxu0
      %v5229 = vadd.f32 %v5060, %v5228
      %v5230 = vpop.f32.mrf.mxu0
      %v5231 = vadd.f32 %v5062, %v5230
      %5232 = vmatmul.bf16.gmra.mxu0 %v1882
      %v5233 = vpop.f32.mrf.mxu0
      %v5234 = vadd.f32 %v5065, %v5233
      %v5235 = vpop.f32.mrf.mxu0
      %v5236 = vadd.f32 %v5067, %v5235
      %5237 = vmatmul.bf16.gmra.mxu0 %v1891
      %v5238 = vpop.f32.mrf.mxu0
      %v5239 = vadd.f32 %v5070, %v5238
      %v5240 = vpop.f32.mrf.mxu0
      %v5241 = vadd.f32 %v5072, %v5240
      %5242 = vmatmul.bf16.gmra.mxu0 %v1900
      %v5243 = vpop.f32.mrf.mxu0
      %v5244 = vadd.f32 %v5075, %v5243
      %v5245 = vpop.f32.mrf.mxu0
      %v5246 = vadd.f32 %v5077, %v5245
      %5247 = vmatmul.bf16.gmra.mxu0 %v1909
      %v5248 = vpop.f32.mrf.mxu0
      %v5249 = vadd.f32 %v5080, %v5248
      %v5250 = vpop.f32.mrf.mxu0
      %v5251 = vadd.f32 %v5082, %v5250
      %5252 = vmatmul.bf16.gmra.mxu0 %v1918
      %v5253 = vpop.f32.mrf.mxu0
      %v5254 = vadd.f32 %v5085, %v5253
      %v5255 = vpop.f32.mrf.mxu0
      %v5256 = vadd.f32 %v5087, %v5255
      %5257 = vmatmul.bf16.gmra.mxu0 %v1927
      %v5258 = vpop.f32.mrf.mxu0
      %v5259 = vadd.f32 %v5090, %v5258
      %v5260 = vpop.f32.mrf.mxu0
      %v5261 = vadd.f32 %v5092, %v5260
      %5262 = vmatmul.bf16.gmra.mxu0 %v1936
      %v5263 = vpop.f32.mrf.mxu0
      %v5264 = vadd.f32 %v5095, %v5263
      %v5265 = vpop.f32.mrf.mxu0
      %v5266 = vadd.f32 %v5097, %v5265
      %5267 = vmatmul.bf16.gmra.mxu0 %v1945
      %v5268 = vpop.f32.mrf.mxu0
      %v5269 = vadd.f32 %v5100, %v5268
      %v5270 = vpop.f32.mrf.mxu0
      %v5271 = vadd.f32 %v5102, %v5270
      %5272 = vmatmul.bf16.gmra.mxu0 %v1954
      %v5273 = vpop.f32.mrf.mxu0
      %v5274 = vadd.f32 %v5105, %v5273
      %v5275 = vpop.f32.mrf.mxu0
      %v5276 = vadd.f32 %v5107, %v5275
      %5277 = vmatmul.bf16.gmra.mxu0 %v1963
      %v5278 = vpop.f32.mrf.mxu0
      %v5279 = vadd.f32 %v5110, %v5278
      %v5280 = vpop.f32.mrf.mxu0
      %v5281 = vadd.f32 %v5112, %v5280
      %5282 = vmatmul.bf16.gmra.mxu0 %v1972
      %v5283 = vpop.f32.mrf.mxu0
      %v5284 = vadd.f32 %v5115, %v5283
      %v5285 = vpop.f32.mrf.mxu0
      %v5286 = vadd.f32 %v5117, %v5285
      %5287 = vmatmul.bf16.gmra.mxu0 %v1981
      %v5288 = vpop.f32.mrf.mxu0
      %v5289 = vadd.f32 %v5120, %v5288
      %v5290 = vpop.f32.mrf.mxu0
      %v5291 = vadd.f32 %v5122, %v5290
      %5292 = vmatmul.bf16.gmra.mxu0 %v1990
      %v5293 = vpop.f32.mrf.mxu0
      %v5294 = vadd.f32 %v5125, %v5293
      %v5295 = vpop.f32.mrf.mxu0
      %v5296 = vadd.f32 %v5127, %v5295
      %5297 = vmatmul.bf16.gmra.mxu0 %v1999
      %v5298 = vpop.f32.mrf.mxu0
      %v5299 = vadd.f32 %v5130, %v5298
      %v5300 = vpop.f32.mrf.mxu0
      %v5301 = vadd.f32 %v5132, %v5300
      %5302 = vmatmul.bf16.gmra.mxu0 %v2008
      %v5303 = vpop.f32.mrf.mxu0
      %v5304 = vadd.f32 %v5135, %v5303
      %v5305 = vpop.f32.mrf.mxu0
      %v5306 = vadd.f32 %v5137, %v5305
      %5307 = vmatmul.bf16.gmra.mxu0 %v2017
      %v5308 = vpop.f32.mrf.mxu0
      %v5309 = vadd.f32 %v5140, %v5308
      %v5310 = vpop.f32.mrf.mxu0
      %v5311 = vadd.f32 %v5142, %v5310
      %5312 = vmatmul.bf16.gmra.mxu0 %v2026
      %v5313 = vpop.f32.mrf.mxu0
      %v5314 = vadd.f32 %v5145, %v5313
      %v5315 = vpop.f32.mrf.mxu0
      %v5316 = vadd.f32 %v5147, %v5315
      %5317 = vmatmul.bf16.gmra.mxu0 %v2035
      %v5318 = vpop.f32.mrf.mxu0
      %v5319 = vadd.f32 %v5150, %v5318
      %v5320 = vpop.f32.mrf.mxu0
      %v5321 = vadd.f32 %v5152, %v5320
      %5322 = vmatmul.bf16.gmra.mxu0 %v2044
      %v5323 = vpop.f32.mrf.mxu0
      %v5324 = vadd.f32 %v5155, %v5323
      %v5325 = vpop.f32.mrf.mxu0
      %v5326 = vadd.f32 %v5157, %v5325
      %5327 = vmatmul.bf16.gmra.mxu0 %v2053
      %v5328 = vpop.f32.mrf.mxu0
      %v5329 = vadd.f32 %v5160, %v5328
      %v5330 = vpop.f32.mrf.mxu0
      %v5331 = vadd.f32 %v5162, %v5330
      %5332 = vmatmul.bf16.gmra.mxu0 %v2062
      %v5333 = vpop.f32.mrf.mxu0
      %v5334 = vadd.f32 %v5165, %v5333
      %v5335 = vpop.f32.mrf.mxu0
      %v5336 = vadd.f32 %v5167, %v5335
      %5337 = vmatmul.bf16.gmra.mxu0 %v2071
      %v5338 = vpop.f32.mrf.mxu0
      %v5339 = vadd.f32 %v5170, %v5338
      %v5340 = vpop.f32.mrf.mxu0
      %v5341 = vadd.f32 %v5172, %v5340
      %5342 = vmatmul.bf16.gmra.mxu0 %v2080
      %v5343 = vpop.f32.mrf.mxu0
      %v5344 = vadd.f32 %v5175, %v5343
      %v5345 = vpop.f32.mrf.mxu0
      %v5346 = vadd.f32 %v5177, %v5345
      %5347 = vmatmul.bf16.gmra.mxu0 %v2089
      %v5348 = vpop.f32.mrf.mxu0
      %v5349 = vadd.f32 %v5180, %v5348
      %v5350 = vpop.f32.mrf.mxu0
      %v5351 = vadd.f32 %v5182, %v5350
      %5352 = vmatmul.bf16.gmra.mxu0 %v2098
      %v5353 = vpop.f32.mrf.mxu0
      %v5354 = vadd.f32 %v5185, %v5353
      %v5355 = vpop.f32.mrf.mxu0
      %v5356 = vadd.f32 %v5187, %v5355
      %5357 = vmatmul.bf16.gmra.mxu0 %v2107
      %v5358 = vpop.f32.mrf.mxu0
      %v5359 = vadd.f32 %v5190, %v5358
      %v5360 = vpop.f32.mrf.mxu0
      %v5361 = vadd.f32 %v5192, %v5360
      %5362 = vmatmul.bf16.gmra.mxu0 %v2116
      %v5363 = vpop.f32.mrf.mxu0
      %v5364 = vadd.f32 %v5195, %v5363
      %v5365 = vpop.f32.mrf.mxu0
      %v5366 = vadd.f32 %v5197, %v5365
      %5367 = vmatmul.bf16.gmra.mxu0 %v2125
      %v5368 = vpop.f32.mrf.mxu0
      %v5369 = vadd.f32 %v5200, %v5368
      %v5370 = vpop.f32.mrf.mxu0
      %v5371 = vadd.f32 %v5202, %v5370
      %5372 = vmatmul.bf16.gmra.mxu0 %v2134
      %v5373 = vpop.f32.mrf.mxu0
      %v5374 = vadd.f32 %v5205, %v5373
      %v5375 = vpop.f32.mrf.mxu0
      %v5376 = vadd.f32 %v5207, %v5375
      %5377 = vmatmul.bf16.gmra.mxu0 %v2143
      %v5378 = vpop.f32.mrf.mxu0
      %v5379 = vadd.f32 %v5210, %v5378
      %v5380 = vpop.f32.mrf.mxu0
      %v5381 = vadd.f32 %v5212, %v5380
      %5382 = vmatmul.bf16.gmra.mxu0 %v2152
      %v5383 = vpop.f32.mrf.mxu0
      %v5384 = vadd.f32 %v5215, %v5383
      %v5385 = vpop.f32.mrf.mxu0
      %v5386 = vadd.f32 %v5217, %v5385
      %5387 = vdwg.mxu0
      %5388 = vmatpush.bf16.msra.mxu0 %v2901
      %5389 = vmatpush.bf16.msra.mxu0 %v2899
      %5390 = vmatpush.bf16.msra.mxu0 %v2897
      %5391 = vmatpush.bf16.msra.mxu0 %v2895
      %5392 = vmatpush.bf16.msra.mxu0 %v2893
      %5393 = vmatpush.bf16.msra.mxu0 %v2891
      %5394 = vmatpush.bf16.msra.mxu0 %v2889
      %5395 = vmatpush.bf16.msra.mxu0 %v2887
      %5396 = vmatmul.bf16.gmra.mxu0 %v1874
      %v5397 = vpop.f32.mrf.mxu0
      %v5398 = vadd.f32 %v5229, %v5397
      %v5399 = vpop.f32.mrf.mxu0
      %v5400 = vadd.f32 %v5231, %v5399
      %5401 = vmatmul.bf16.gmra.mxu0 %v1883
      %v5402 = vpop.f32.mrf.mxu0
      %v5403 = vadd.f32 %v5234, %v5402
      %v5404 = vpop.f32.mrf.mxu0
      %v5405 = vadd.f32 %v5236, %v5404
      %5406 = vmatmul.bf16.gmra.mxu0 %v1892
      %v5407 = vpop.f32.mrf.mxu0
      %v5408 = vadd.f32 %v5239, %v5407
      %v5409 = vpop.f32.mrf.mxu0
      %v5410 = vadd.f32 %v5241, %v5409
      %5411 = vmatmul.bf16.gmra.mxu0 %v1901
      %v5412 = vpop.f32.mrf.mxu0
      %v5413 = vadd.f32 %v5244, %v5412
      %v5414 = vpop.f32.mrf.mxu0
      %v5415 = vadd.f32 %v5246, %v5414
      %5416 = vmatmul.bf16.gmra.mxu0 %v1910
      %v5417 = vpop.f32.mrf.mxu0
      %v5418 = vadd.f32 %v5249, %v5417
      %v5419 = vpop.f32.mrf.mxu0
      %v5420 = vadd.f32 %v5251, %v5419
      %5421 = vmatmul.bf16.gmra.mxu0 %v1919
      %v5422 = vpop.f32.mrf.mxu0
      %v5423 = vadd.f32 %v5254, %v5422
      %v5424 = vpop.f32.mrf.mxu0
      %v5425 = vadd.f32 %v5256, %v5424
      %5426 = vmatmul.bf16.gmra.mxu0 %v1928
      %v5427 = vpop.f32.mrf.mxu0
      %v5428 = vadd.f32 %v5259, %v5427
      %v5429 = vpop.f32.mrf.mxu0
      %v5430 = vadd.f32 %v5261, %v5429
      %5431 = vmatmul.bf16.gmra.mxu0 %v1937
      %v5432 = vpop.f32.mrf.mxu0
      %v5433 = vadd.f32 %v5264, %v5432
      %v5434 = vpop.f32.mrf.mxu0
      %v5435 = vadd.f32 %v5266, %v5434
      %5436 = vmatmul.bf16.gmra.mxu0 %v1946
      %v5437 = vpop.f32.mrf.mxu0
      %v5438 = vadd.f32 %v5269, %v5437
      %v5439 = vpop.f32.mrf.mxu0
      %v5440 = vadd.f32 %v5271, %v5439
      %5441 = vmatmul.bf16.gmra.mxu0 %v1955
      %v5442 = vpop.f32.mrf.mxu0
      %v5443 = vadd.f32 %v5274, %v5442
      %v5444 = vpop.f32.mrf.mxu0
      %v5445 = vadd.f32 %v5276, %v5444
      %5446 = vmatmul.bf16.gmra.mxu0 %v1964
      %v5447 = vpop.f32.mrf.mxu0
      %v5448 = vadd.f32 %v5279, %v5447
      %v5449 = vpop.f32.mrf.mxu0
      %v5450 = vadd.f32 %v5281, %v5449
      %5451 = vmatmul.bf16.gmra.mxu0 %v1973
      %v5452 = vpop.f32.mrf.mxu0
      %v5453 = vadd.f32 %v5284, %v5452
      %v5454 = vpop.f32.mrf.mxu0
      %v5455 = vadd.f32 %v5286, %v5454
      %5456 = vmatmul.bf16.gmra.mxu0 %v1982
      %v5457 = vpop.f32.mrf.mxu0
      %v5458 = vadd.f32 %v5289, %v5457
      %v5459 = vpop.f32.mrf.mxu0
      %v5460 = vadd.f32 %v5291, %v5459
      %5461 = vmatmul.bf16.gmra.mxu0 %v1991
      %v5462 = vpop.f32.mrf.mxu0
      %v5463 = vadd.f32 %v5294, %v5462
      %v5464 = vpop.f32.mrf.mxu0
      %v5465 = vadd.f32 %v5296, %v5464
      %5466 = vmatmul.bf16.gmra.mxu0 %v2000
      %v5467 = vpop.f32.mrf.mxu0
      %v5468 = vadd.f32 %v5299, %v5467
      %v5469 = vpop.f32.mrf.mxu0
      %v5470 = vadd.f32 %v5301, %v5469
      %5471 = vmatmul.bf16.gmra.mxu0 %v2009
      %v5472 = vpop.f32.mrf.mxu0
      %v5473 = vadd.f32 %v5304, %v5472
      %v5474 = vpop.f32.mrf.mxu0
      %v5475 = vadd.f32 %v5306, %v5474
      %5476 = vmatmul.bf16.gmra.mxu0 %v2018
      %v5477 = vpop.f32.mrf.mxu0
      %v5478 = vadd.f32 %v5309, %v5477
      %v5479 = vpop.f32.mrf.mxu0
      %v5480 = vadd.f32 %v5311, %v5479
      %5481 = vmatmul.bf16.gmra.mxu0 %v2027
      %v5482 = vpop.f32.mrf.mxu0
      %v5483 = vadd.f32 %v5314, %v5482
      %v5484 = vpop.f32.mrf.mxu0
      %v5485 = vadd.f32 %v5316, %v5484
      %5486 = vmatmul.bf16.gmra.mxu0 %v2036
      %v5487 = vpop.f32.mrf.mxu0
      %v5488 = vadd.f32 %v5319, %v5487
      %v5489 = vpop.f32.mrf.mxu0
      %v5490 = vadd.f32 %v5321, %v5489
      %5491 = vmatmul.bf16.gmra.mxu0 %v2045
      %v5492 = vpop.f32.mrf.mxu0
      %v5493 = vadd.f32 %v5324, %v5492
      %v5494 = vpop.f32.mrf.mxu0
      %v5495 = vadd.f32 %v5326, %v5494
      %5496 = vmatmul.bf16.gmra.mxu0 %v2054
      %v5497 = vpop.f32.mrf.mxu0
      %v5498 = vadd.f32 %v5329, %v5497
      %v5499 = vpop.f32.mrf.mxu0
      %v5500 = vadd.f32 %v5331, %v5499
      %5501 = vmatmul.bf16.gmra.mxu0 %v2063
      %v5502 = vpop.f32.mrf.mxu0
      %v5503 = vadd.f32 %v5334, %v5502
      %v5504 = vpop.f32.mrf.mxu0
      %v5505 = vadd.f32 %v5336, %v5504
      %5506 = vmatmul.bf16.gmra.mxu0 %v2072
      %v5507 = vpop.f32.mrf.mxu0
      %v5508 = vadd.f32 %v5339, %v5507
      %v5509 = vpop.f32.mrf.mxu0
      %v5510 = vadd.f32 %v5341, %v5509
      %5511 = vmatmul.bf16.gmra.mxu0 %v2081
      %v5512 = vpop.f32.mrf.mxu0
      %v5513 = vadd.f32 %v5344, %v5512
      %v5514 = vpop.f32.mrf.mxu0
      %v5515 = vadd.f32 %v5346, %v5514
      %5516 = vmatmul.bf16.gmra.mxu0 %v2090
      %v5517 = vpop.f32.mrf.mxu0
      %v5518 = vadd.f32 %v5349, %v5517
      %v5519 = vpop.f32.mrf.mxu0
      %v5520 = vadd.f32 %v5351, %v5519
      %5521 = vmatmul.bf16.gmra.mxu0 %v2099
      %v5522 = vpop.f32.mrf.mxu0
      %v5523 = vadd.f32 %v5354, %v5522
      %v5524 = vpop.f32.mrf.mxu0
      %v5525 = vadd.f32 %v5356, %v5524
      %5526 = vmatmul.bf16.gmra.mxu0 %v2108
      %v5527 = vpop.f32.mrf.mxu0
      %v5528 = vadd.f32 %v5359, %v5527
      %v5529 = vpop.f32.mrf.mxu0
      %v5530 = vadd.f32 %v5361, %v5529
      %5531 = vmatmul.bf16.gmra.mxu0 %v2117
      %v5532 = vpop.f32.mrf.mxu0
      %v5533 = vadd.f32 %v5364, %v5532
      %v5534 = vpop.f32.mrf.mxu0
      %v5535 = vadd.f32 %v5366, %v5534
      %5536 = vmatmul.bf16.gmra.mxu0 %v2126
      %v5537 = vpop.f32.mrf.mxu0
      %v5538 = vadd.f32 %v5369, %v5537
      %v5539 = vpop.f32.mrf.mxu0
      %v5540 = vadd.f32 %v5371, %v5539
      %5541 = vmatmul.bf16.gmra.mxu0 %v2135
      %v5542 = vpop.f32.mrf.mxu0
      %v5543 = vadd.f32 %v5374, %v5542
      %v5544 = vpop.f32.mrf.mxu0
      %v5545 = vadd.f32 %v5376, %v5544
      %5546 = vmatmul.bf16.gmra.mxu0 %v2144
      %v5547 = vpop.f32.mrf.mxu0
      %v5548 = vadd.f32 %v5379, %v5547
      %v5549 = vpop.f32.mrf.mxu0
      %v5550 = vadd.f32 %v5381, %v5549
      %5551 = vmatmul.bf16.gmra.mxu0 %v2153
      %v5552 = vpop.f32.mrf.mxu0
      %v5553 = vadd.f32 %v5384, %v5552
      %v5554 = vpop.f32.mrf.mxu0
      %v5555 = vadd.f32 %v5386, %v5554
      %5556 = vdwg.mxu0
      %5557 = vmatpush.bf16.msra.mxu0 %v2917
      %5558 = vmatpush.bf16.msra.mxu0 %v2915
      %5559 = vmatpush.bf16.msra.mxu0 %v2913
      %5560 = vmatpush.bf16.msra.mxu0 %v2911
      %5561 = vmatpush.bf16.msra.mxu0 %v2909
      %5562 = vmatpush.bf16.msra.mxu0 %v2907
      %5563 = vmatpush.bf16.msra.mxu0 %v2905
      %5564 = vmatpush.bf16.msra.mxu0 %v2903
      %5565 = vmatmul.bf16.gmra.mxu0 %v1875
      %v5566 = vpop.f32.mrf.mxu0
      %v5567 = vadd.f32 %v5398, %v5566
      %v5568 = vpop.f32.mrf.mxu0
      %v5569 = vadd.f32 %v5400, %v5568
      %5570 = vmatmul.bf16.gmra.mxu0 %v1884
      %v5571 = vpop.f32.mrf.mxu0
      %v5572 = vadd.f32 %v5403, %v5571
      %v5573 = vpop.f32.mrf.mxu0
      %v5574 = vadd.f32 %v5405, %v5573
      %5575 = vmatmul.bf16.gmra.mxu0 %v1893
      %v5576 = vpop.f32.mrf.mxu0
      %v5577 = vadd.f32 %v5408, %v5576
      %v5578 = vpop.f32.mrf.mxu0
      %v5579 = vadd.f32 %v5410, %v5578
      %5580 = vmatmul.bf16.gmra.mxu0 %v1902
      %v5581 = vpop.f32.mrf.mxu0
      %v5582 = vadd.f32 %v5413, %v5581
      %v5583 = vpop.f32.mrf.mxu0
      %v5584 = vadd.f32 %v5415, %v5583
      %5585 = vmatmul.bf16.gmra.mxu0 %v1911
      %v5586 = vpop.f32.mrf.mxu0
      %v5587 = vadd.f32 %v5418, %v5586
      %v5588 = vpop.f32.mrf.mxu0
      %v5589 = vadd.f32 %v5420, %v5588
      %5590 = vmatmul.bf16.gmra.mxu0 %v1920
      %v5591 = vpop.f32.mrf.mxu0
      %v5592 = vadd.f32 %v5423, %v5591
      %v5593 = vpop.f32.mrf.mxu0
      %v5594 = vadd.f32 %v5425, %v5593
      %5595 = vmatmul.bf16.gmra.mxu0 %v1929
      %v5596 = vpop.f32.mrf.mxu0
      %v5597 = vadd.f32 %v5428, %v5596
      %v5598 = vpop.f32.mrf.mxu0
      %v5599 = vadd.f32 %v5430, %v5598
      %5600 = vmatmul.bf16.gmra.mxu0 %v1938
      %v5601 = vpop.f32.mrf.mxu0
      %v5602 = vadd.f32 %v5433, %v5601
      %v5603 = vpop.f32.mrf.mxu0
      %v5604 = vadd.f32 %v5435, %v5603
      %5605 = vmatmul.bf16.gmra.mxu0 %v1947
      %v5606 = vpop.f32.mrf.mxu0
      %v5607 = vadd.f32 %v5438, %v5606
      %v5608 = vpop.f32.mrf.mxu0
      %v5609 = vadd.f32 %v5440, %v5608
      %5610 = vmatmul.bf16.gmra.mxu0 %v1956
      %v5611 = vpop.f32.mrf.mxu0
      %v5612 = vadd.f32 %v5443, %v5611
      %v5613 = vpop.f32.mrf.mxu0
      %v5614 = vadd.f32 %v5445, %v5613
      %5615 = vmatmul.bf16.gmra.mxu0 %v1965
      %v5616 = vpop.f32.mrf.mxu0
      %v5617 = vadd.f32 %v5448, %v5616
      %v5618 = vpop.f32.mrf.mxu0
      %v5619 = vadd.f32 %v5450, %v5618
      %5620 = vmatmul.bf16.gmra.mxu0 %v1974
      %v5621 = vpop.f32.mrf.mxu0
      %v5622 = vadd.f32 %v5453, %v5621
      %v5623 = vpop.f32.mrf.mxu0
      %v5624 = vadd.f32 %v5455, %v5623
      %5625 = vmatmul.bf16.gmra.mxu0 %v1983
      %v5626 = vpop.f32.mrf.mxu0
      %v5627 = vadd.f32 %v5458, %v5626
      %v5628 = vpop.f32.mrf.mxu0
      %v5629 = vadd.f32 %v5460, %v5628
      %5630 = vmatmul.bf16.gmra.mxu0 %v1992
      %v5631 = vpop.f32.mrf.mxu0
      %v5632 = vadd.f32 %v5463, %v5631
      %v5633 = vpop.f32.mrf.mxu0
      %v5634 = vadd.f32 %v5465, %v5633
      %5635 = vmatmul.bf16.gmra.mxu0 %v2001
      %v5636 = vpop.f32.mrf.mxu0
      %v5637 = vadd.f32 %v5468, %v5636
      %v5638 = vpop.f32.mrf.mxu0
      %v5639 = vadd.f32 %v5470, %v5638
      %5640 = vmatmul.bf16.gmra.mxu0 %v2010
      %v5641 = vpop.f32.mrf.mxu0
      %v5642 = vadd.f32 %v5473, %v5641
      %v5643 = vpop.f32.mrf.mxu0
      %v5644 = vadd.f32 %v5475, %v5643
      %5645 = vmatmul.bf16.gmra.mxu0 %v2019
      %v5646 = vpop.f32.mrf.mxu0
      %v5647 = vadd.f32 %v5478, %v5646
      %v5648 = vpop.f32.mrf.mxu0
      %v5649 = vadd.f32 %v5480, %v5648
      %5650 = vmatmul.bf16.gmra.mxu0 %v2028
      %v5651 = vpop.f32.mrf.mxu0
      %v5652 = vadd.f32 %v5483, %v5651
      %v5653 = vpop.f32.mrf.mxu0
      %v5654 = vadd.f32 %v5485, %v5653
      %5655 = vmatmul.bf16.gmra.mxu0 %v2037
      %v5656 = vpop.f32.mrf.mxu0
      %v5657 = vadd.f32 %v5488, %v5656
      %v5658 = vpop.f32.mrf.mxu0
      %v5659 = vadd.f32 %v5490, %v5658
      %5660 = vmatmul.bf16.gmra.mxu0 %v2046
      %v5661 = vpop.f32.mrf.mxu0
      %v5662 = vadd.f32 %v5493, %v5661
      %v5663 = vpop.f32.mrf.mxu0
      %v5664 = vadd.f32 %v5495, %v5663
      %5665 = vmatmul.bf16.gmra.mxu0 %v2055
      %v5666 = vpop.f32.mrf.mxu0
      %v5667 = vadd.f32 %v5498, %v5666
      %v5668 = vpop.f32.mrf.mxu0
      %v5669 = vadd.f32 %v5500, %v5668
      %5670 = vmatmul.bf16.gmra.mxu0 %v2064
      %v5671 = vpop.f32.mrf.mxu0
      %v5672 = vadd.f32 %v5503, %v5671
      %v5673 = vpop.f32.mrf.mxu0
      %v5674 = vadd.f32 %v5505, %v5673
      %5675 = vmatmul.bf16.gmra.mxu0 %v2073
      %v5676 = vpop.f32.mrf.mxu0
      %v5677 = vadd.f32 %v5508, %v5676
      %v5678 = vpop.f32.mrf.mxu0
      %v5679 = vadd.f32 %v5510, %v5678
      %5680 = vmatmul.bf16.gmra.mxu0 %v2082
      %v5681 = vpop.f32.mrf.mxu0
      %v5682 = vadd.f32 %v5513, %v5681
      %v5683 = vpop.f32.mrf.mxu0
      %v5684 = vadd.f32 %v5515, %v5683
      %5685 = vmatmul.bf16.gmra.mxu0 %v2091
      %v5686 = vpop.f32.mrf.mxu0
      %v5687 = vadd.f32 %v5518, %v5686
      %v5688 = vpop.f32.mrf.mxu0
      %v5689 = vadd.f32 %v5520, %v5688
      %5690 = vmatmul.bf16.gmra.mxu0 %v2100
      %v5691 = vpop.f32.mrf.mxu0
      %v5692 = vadd.f32 %v5523, %v5691
      %v5693 = vpop.f32.mrf.mxu0
      %v5694 = vadd.f32 %v5525, %v5693
      %5695 = vmatmul.bf16.gmra.mxu0 %v2109
      %v5696 = vpop.f32.mrf.mxu0
      %v5697 = vadd.f32 %v5528, %v5696
      %v5698 = vpop.f32.mrf.mxu0
      %v5699 = vadd.f32 %v5530, %v5698
      %5700 = vmatmul.bf16.gmra.mxu0 %v2118
      %v5701 = vpop.f32.mrf.mxu0
      %v5702 = vadd.f32 %v5533, %v5701
      %v5703 = vpop.f32.mrf.mxu0
      %v5704 = vadd.f32 %v5535, %v5703
      %5705 = vmatmul.bf16.gmra.mxu0 %v2127
      %v5706 = vpop.f32.mrf.mxu0
      %v5707 = vadd.f32 %v5538, %v5706
      %v5708 = vpop.f32.mrf.mxu0
      %v5709 = vadd.f32 %v5540, %v5708
      %5710 = vmatmul.bf16.gmra.mxu0 %v2136
      %v5711 = vpop.f32.mrf.mxu0
      %v5712 = vadd.f32 %v5543, %v5711
      %v5713 = vpop.f32.mrf.mxu0
      %v5714 = vadd.f32 %v5545, %v5713
      %5715 = vmatmul.bf16.gmra.mxu0 %v2145
      %v5716 = vpop.f32.mrf.mxu0
      %v5717 = vadd.f32 %v5548, %v5716
      %v5718 = vpop.f32.mrf.mxu0
      %v5719 = vadd.f32 %v5550, %v5718
      %5720 = vmatmul.bf16.gmra.mxu0 %v2154
      %v5721 = vpop.f32.mrf.mxu0
      %v5722 = vadd.f32 %v5553, %v5721
      %v5723 = vpop.f32.mrf.mxu0
      %v5724 = vadd.f32 %v5555, %v5723
      %5725 = vdwg.mxu0
      %5726 = vmatpush.bf16.msra.mxu0 %v2933
      %5727 = vmatpush.bf16.msra.mxu0 %v2931
      %5728 = vmatpush.bf16.msra.mxu0 %v2929
      %5729 = vmatpush.bf16.msra.mxu0 %v2927
      %5730 = vmatpush.bf16.msra.mxu0 %v2925
      %5731 = vmatpush.bf16.msra.mxu0 %v2923
      %5732 = vmatpush.bf16.msra.mxu0 %v2921
      %5733 = vmatpush.bf16.msra.mxu0 %v2919
      %5734 = vmatmul.bf16.gmra.mxu0 %v1876
      %v5735 = vpop.f32.mrf.mxu0
      %v5736 = vadd.f32 %v5567, %v5735
      %v5737 = vpop.f32.mrf.mxu0
      %v5738 = vadd.f32 %v5569, %v5737
      %5739 = vmatmul.bf16.gmra.mxu0 %v1885
      %v5740 = vpop.f32.mrf.mxu0
      %v5741 = vadd.f32 %v5572, %v5740
      %v5742 = vpop.f32.mrf.mxu0
      %v5743 = vadd.f32 %v5574, %v5742
      %5744 = vmatmul.bf16.gmra.mxu0 %v1894
      %v5745 = vpop.f32.mrf.mxu0
      %v5746 = vadd.f32 %v5577, %v5745
      %v5747 = vpop.f32.mrf.mxu0
      %v5748 = vadd.f32 %v5579, %v5747
      %5749 = vmatmul.bf16.gmra.mxu0 %v1903
      %v5750 = vpop.f32.mrf.mxu0
      %v5751 = vadd.f32 %v5582, %v5750
      %v5752 = vpop.f32.mrf.mxu0
      %v5753 = vadd.f32 %v5584, %v5752
      %5754 = vmatmul.bf16.gmra.mxu0 %v1912
      %v5755 = vpop.f32.mrf.mxu0
      %v5756 = vadd.f32 %v5587, %v5755
      %v5757 = vpop.f32.mrf.mxu0
      %v5758 = vadd.f32 %v5589, %v5757
      %5759 = vmatmul.bf16.gmra.mxu0 %v1921
      %v5760 = vpop.f32.mrf.mxu0
      %v5761 = vadd.f32 %v5592, %v5760
      %v5762 = vpop.f32.mrf.mxu0
      %v5763 = vadd.f32 %v5594, %v5762
      %5764 = vmatmul.bf16.gmra.mxu0 %v1930
      %v5765 = vpop.f32.mrf.mxu0
      %v5766 = vadd.f32 %v5597, %v5765
      %v5767 = vpop.f32.mrf.mxu0
      %v5768 = vadd.f32 %v5599, %v5767
      %5769 = vmatmul.bf16.gmra.mxu0 %v1939
      %v5770 = vpop.f32.mrf.mxu0
      %v5771 = vadd.f32 %v5602, %v5770
      %v5772 = vpop.f32.mrf.mxu0
      %v5773 = vadd.f32 %v5604, %v5772
      %5774 = vmatmul.bf16.gmra.mxu0 %v1948
      %v5775 = vpop.f32.mrf.mxu0
      %v5776 = vadd.f32 %v5607, %v5775
      %v5777 = vpop.f32.mrf.mxu0
      %v5778 = vadd.f32 %v5609, %v5777
      %5779 = vmatmul.bf16.gmra.mxu0 %v1957
      %v5780 = vpop.f32.mrf.mxu0
      %v5781 = vadd.f32 %v5612, %v5780
      %v5782 = vpop.f32.mrf.mxu0
      %v5783 = vadd.f32 %v5614, %v5782
      %5784 = vmatmul.bf16.gmra.mxu0 %v1966
      %v5785 = vpop.f32.mrf.mxu0
      %v5786 = vadd.f32 %v5617, %v5785
      %v5787 = vpop.f32.mrf.mxu0
      %v5788 = vadd.f32 %v5619, %v5787
      %5789 = vmatmul.bf16.gmra.mxu0 %v1975
      %v5790 = vpop.f32.mrf.mxu0
      %v5791 = vadd.f32 %v5622, %v5790
      %v5792 = vpop.f32.mrf.mxu0
      %v5793 = vadd.f32 %v5624, %v5792
      %5794 = vmatmul.bf16.gmra.mxu0 %v1984
      %v5795 = vpop.f32.mrf.mxu0
      %v5796 = vadd.f32 %v5627, %v5795
      %v5797 = vpop.f32.mrf.mxu0
      %v5798 = vadd.f32 %v5629, %v5797
      %5799 = vmatmul.bf16.gmra.mxu0 %v1993
      %v5800 = vpop.f32.mrf.mxu0
      %v5801 = vadd.f32 %v5632, %v5800
      %v5802 = vpop.f32.mrf.mxu0
      %v5803 = vadd.f32 %v5634, %v5802
      %5804 = vmatmul.bf16.gmra.mxu0 %v2002
      %v5805 = vpop.f32.mrf.mxu0
      %v5806 = vadd.f32 %v5637, %v5805
      %v5807 = vpop.f32.mrf.mxu0
      %v5808 = vadd.f32 %v5639, %v5807
      %5809 = vmatmul.bf16.gmra.mxu0 %v2011
      %v5810 = vpop.f32.mrf.mxu0
      %v5811 = vadd.f32 %v5642, %v5810
      %v5812 = vpop.f32.mrf.mxu0
      %v5813 = vadd.f32 %v5644, %v5812
      %5814 = vmatmul.bf16.gmra.mxu0 %v2020
      %v5815 = vpop.f32.mrf.mxu0
      %v5816 = vadd.f32 %v5647, %v5815
      %v5817 = vpop.f32.mrf.mxu0
      %v5818 = vadd.f32 %v5649, %v5817
      %5819 = vmatmul.bf16.gmra.mxu0 %v2029
      %v5820 = vpop.f32.mrf.mxu0
      %v5821 = vadd.f32 %v5652, %v5820
      %v5822 = vpop.f32.mrf.mxu0
      %v5823 = vadd.f32 %v5654, %v5822
      %5824 = vmatmul.bf16.gmra.mxu0 %v2038
      %v5825 = vpop.f32.mrf.mxu0
      %v5826 = vadd.f32 %v5657, %v5825
      %v5827 = vpop.f32.mrf.mxu0
      %v5828 = vadd.f32 %v5659, %v5827
      %5829 = vmatmul.bf16.gmra.mxu0 %v2047
      %v5830 = vpop.f32.mrf.mxu0
      %v5831 = vadd.f32 %v5662, %v5830
      %v5832 = vpop.f32.mrf.mxu0
      %v5833 = vadd.f32 %v5664, %v5832
      %5834 = vmatmul.bf16.gmra.mxu0 %v2056
      %v5835 = vpop.f32.mrf.mxu0
      %v5836 = vadd.f32 %v5667, %v5835
      %v5837 = vpop.f32.mrf.mxu0
      %v5838 = vadd.f32 %v5669, %v5837
      %5839 = vmatmul.bf16.gmra.mxu0 %v2065
      %v5840 = vpop.f32.mrf.mxu0
      %v5841 = vadd.f32 %v5672, %v5840
      %v5842 = vpop.f32.mrf.mxu0
      %v5843 = vadd.f32 %v5674, %v5842
      %5844 = vmatmul.bf16.gmra.mxu0 %v2074
      %v5845 = vpop.f32.mrf.mxu0
      %v5846 = vadd.f32 %v5677, %v5845
      %v5847 = vpop.f32.mrf.mxu0
      %v5848 = vadd.f32 %v5679, %v5847
      %5849 = vmatmul.bf16.gmra.mxu0 %v2083
      %v5850 = vpop.f32.mrf.mxu0
      %v5851 = vadd.f32 %v5682, %v5850
      %v5852 = vpop.f32.mrf.mxu0
      %v5853 = vadd.f32 %v5684, %v5852
      %5854 = vmatmul.bf16.gmra.mxu0 %v2092
      %v5855 = vpop.f32.mrf.mxu0
      %v5856 = vadd.f32 %v5687, %v5855
      %v5857 = vpop.f32.mrf.mxu0
      %v5858 = vadd.f32 %v5689, %v5857
      %5859 = vmatmul.bf16.gmra.mxu0 %v2101
      %v5860 = vpop.f32.mrf.mxu0
      %v5861 = vadd.f32 %v5692, %v5860
      %v5862 = vpop.f32.mrf.mxu0
      %v5863 = vadd.f32 %v5694, %v5862
      %5864 = vmatmul.bf16.gmra.mxu0 %v2110
      %v5865 = vpop.f32.mrf.mxu0
      %v5866 = vadd.f32 %v5697, %v5865
      %v5867 = vpop.f32.mrf.mxu0
      %v5868 = vadd.f32 %v5699, %v5867
      %5869 = vmatmul.bf16.gmra.mxu0 %v2119
      %v5870 = vpop.f32.mrf.mxu0
      %v5871 = vadd.f32 %v5702, %v5870
      %v5872 = vpop.f32.mrf.mxu0
      %v5873 = vadd.f32 %v5704, %v5872
      %5874 = vmatmul.bf16.gmra.mxu0 %v2128
      %v5875 = vpop.f32.mrf.mxu0
      %v5876 = vadd.f32 %v5707, %v5875
      %v5877 = vpop.f32.mrf.mxu0
      %v5878 = vadd.f32 %v5709, %v5877
      %5879 = vmatmul.bf16.gmra.mxu0 %v2137
      %v5880 = vpop.f32.mrf.mxu0
      %v5881 = vadd.f32 %v5712, %v5880
      %v5882 = vpop.f32.mrf.mxu0
      %v5883 = vadd.f32 %v5714, %v5882
      %5884 = vmatmul.bf16.gmra.mxu0 %v2146
      %v5885 = vpop.f32.mrf.mxu0
      %v5886 = vadd.f32 %v5717, %v5885
      %v5887 = vpop.f32.mrf.mxu0
      %v5888 = vadd.f32 %v5719, %v5887
      %5889 = vmatmul.bf16.gmra.mxu0 %v2155
      %v5890 = vpop.f32.mrf.mxu0
      %v5891 = vadd.f32 %v5722, %v5890
      %v5892 = vpop.f32.mrf.mxu0
      %v5893 = vadd.f32 %v5724, %v5892
      %5894 = vdwg.mxu0
      %5895 = vmatpush.bf16.msra.mxu0 %v2949
      %5896 = vmatpush.bf16.msra.mxu0 %v2947
      %5897 = vmatpush.bf16.msra.mxu0 %v2945
      %5898 = vmatpush.bf16.msra.mxu0 %v2943
      %5899 = vmatpush.bf16.msra.mxu0 %v2941
      %5900 = vmatpush.bf16.msra.mxu0 %v2939
      %5901 = vmatpush.bf16.msra.mxu0 %v2937
      %5902 = vmatpush.bf16.msra.mxu0 %v2935
      %5903 = vmatmul.bf16.gmra.mxu0 %v1877
      %v5904 = vpop.f32.mrf.mxu0
      %v5905 = vadd.f32 %v5736, %v5904
      %v5906 = vpop.f32.mrf.mxu0
      %v5907 = vadd.f32 %v5738, %v5906
      %5908 = vmatmul.bf16.gmra.mxu0 %v1886
      %v5909 = vpop.f32.mrf.mxu0
      %v5910 = vadd.f32 %v5741, %v5909
      %v5911 = vpop.f32.mrf.mxu0
      %v5912 = vadd.f32 %v5743, %v5911
      %5913 = vmatmul.bf16.gmra.mxu0 %v1895
      %v5914 = vpop.f32.mrf.mxu0
      %v5915 = vadd.f32 %v5746, %v5914
      %v5916 = vpop.f32.mrf.mxu0
      %v5917 = vadd.f32 %v5748, %v5916
      %5918 = vmatmul.bf16.gmra.mxu0 %v1904
      %v5919 = vpop.f32.mrf.mxu0
      %v5920 = vadd.f32 %v5751, %v5919
      %v5921 = vpop.f32.mrf.mxu0
      %v5922 = vadd.f32 %v5753, %v5921
      %5923 = vmatmul.bf16.gmra.mxu0 %v1913
      %v5924 = vpop.f32.mrf.mxu0
      %v5925 = vadd.f32 %v5756, %v5924
      %v5926 = vpop.f32.mrf.mxu0
      %v5927 = vadd.f32 %v5758, %v5926
      %5928 = vmatmul.bf16.gmra.mxu0 %v1922
      %v5929 = vpop.f32.mrf.mxu0
      %v5930 = vadd.f32 %v5761, %v5929
      %v5931 = vpop.f32.mrf.mxu0
      %v5932 = vadd.f32 %v5763, %v5931
      %5933 = vmatmul.bf16.gmra.mxu0 %v1931
      %v5934 = vpop.f32.mrf.mxu0
      %v5935 = vadd.f32 %v5766, %v5934
      %v5936 = vpop.f32.mrf.mxu0
      %v5937 = vadd.f32 %v5768, %v5936
      %5938 = vmatmul.bf16.gmra.mxu0 %v1940
      %v5939 = vpop.f32.mrf.mxu0
      %v5940 = vadd.f32 %v5771, %v5939
      %v5941 = vpop.f32.mrf.mxu0
      %v5942 = vadd.f32 %v5773, %v5941
      %5943 = vmatmul.bf16.gmra.mxu0 %v1949
      %v5944 = vpop.f32.mrf.mxu0
      %v5945 = vadd.f32 %v5776, %v5944
      %v5946 = vpop.f32.mrf.mxu0
      %v5947 = vadd.f32 %v5778, %v5946
      %5948 = vmatmul.bf16.gmra.mxu0 %v1958
      %v5949 = vpop.f32.mrf.mxu0
      %v5950 = vadd.f32 %v5781, %v5949
      %v5951 = vpop.f32.mrf.mxu0
      %v5952 = vadd.f32 %v5783, %v5951
      %5953 = vmatmul.bf16.gmra.mxu0 %v1967
      %v5954 = vpop.f32.mrf.mxu0
      %v5955 = vadd.f32 %v5786, %v5954
      %v5956 = vpop.f32.mrf.mxu0
      %v5957 = vadd.f32 %v5788, %v5956
      %5958 = vmatmul.bf16.gmra.mxu0 %v1976
      %v5959 = vpop.f32.mrf.mxu0
      %v5960 = vadd.f32 %v5791, %v5959
      %v5961 = vpop.f32.mrf.mxu0
      %v5962 = vadd.f32 %v5793, %v5961
      %5963 = vmatmul.bf16.gmra.mxu0 %v1985
      %v5964 = vpop.f32.mrf.mxu0
      %v5965 = vadd.f32 %v5796, %v5964
      %v5966 = vpop.f32.mrf.mxu0
      %v5967 = vadd.f32 %v5798, %v5966
      %5968 = vmatmul.bf16.gmra.mxu0 %v1994
      %v5969 = vpop.f32.mrf.mxu0
      %v5970 = vadd.f32 %v5801, %v5969
      %v5971 = vpop.f32.mrf.mxu0
      %v5972 = vadd.f32 %v5803, %v5971
      %5973 = vmatmul.bf16.gmra.mxu0 %v2003
      %v5974 = vpop.f32.mrf.mxu0
      %v5975 = vadd.f32 %v5806, %v5974
      %v5976 = vpop.f32.mrf.mxu0
      %v5977 = vadd.f32 %v5808, %v5976
      %5978 = vmatmul.bf16.gmra.mxu0 %v2012
      %v5979 = vpop.f32.mrf.mxu0
      %v5980 = vadd.f32 %v5811, %v5979
      %v5981 = vpop.f32.mrf.mxu0
      %v5982 = vadd.f32 %v5813, %v5981
      %5983 = vmatmul.bf16.gmra.mxu0 %v2021
      %v5984 = vpop.f32.mrf.mxu0
      %v5985 = vadd.f32 %v5816, %v5984
      %v5986 = vpop.f32.mrf.mxu0
      %v5987 = vadd.f32 %v5818, %v5986
      %5988 = vmatmul.bf16.gmra.mxu0 %v2030
      %v5989 = vpop.f32.mrf.mxu0
      %v5990 = vadd.f32 %v5821, %v5989
      %v5991 = vpop.f32.mrf.mxu0
      %v5992 = vadd.f32 %v5823, %v5991
      %5993 = vmatmul.bf16.gmra.mxu0 %v2039
      %v5994 = vpop.f32.mrf.mxu0
      %v5995 = vadd.f32 %v5826, %v5994
      %v5996 = vpop.f32.mrf.mxu0
      %v5997 = vadd.f32 %v5828, %v5996
      %5998 = vmatmul.bf16.gmra.mxu0 %v2048
      %v5999 = vpop.f32.mrf.mxu0
      %v6000 = vadd.f32 %v5831, %v5999
      %v6001 = vpop.f32.mrf.mxu0
      %v6002 = vadd.f32 %v5833, %v6001
      %6003 = vmatmul.bf16.gmra.mxu0 %v2057
      %v6004 = vpop.f32.mrf.mxu0
      %v6005 = vadd.f32 %v5836, %v6004
      %v6006 = vpop.f32.mrf.mxu0
      %v6007 = vadd.f32 %v5838, %v6006
      %6008 = vmatmul.bf16.gmra.mxu0 %v2066
      %v6009 = vpop.f32.mrf.mxu0
      %v6010 = vadd.f32 %v5841, %v6009
      %v6011 = vpop.f32.mrf.mxu0
      %v6012 = vadd.f32 %v5843, %v6011
      %6013 = vmatmul.bf16.gmra.mxu0 %v2075
      %v6014 = vpop.f32.mrf.mxu0
      %v6015 = vadd.f32 %v5846, %v6014
      %v6016 = vpop.f32.mrf.mxu0
      %v6017 = vadd.f32 %v5848, %v6016
      %6018 = vmatmul.bf16.gmra.mxu0 %v2084
      %v6019 = vpop.f32.mrf.mxu0
      %v6020 = vadd.f32 %v5851, %v6019
      %v6021 = vpop.f32.mrf.mxu0
      %v6022 = vadd.f32 %v5853, %v6021
      %6023 = vmatmul.bf16.gmra.mxu0 %v2093
      %v6024 = vpop.f32.mrf.mxu0
      %v6025 = vadd.f32 %v5856, %v6024
      %v6026 = vpop.f32.mrf.mxu0
      %v6027 = vadd.f32 %v5858, %v6026
      %6028 = vmatmul.bf16.gmra.mxu0 %v2102
      %v6029 = vpop.f32.mrf.mxu0
      %v6030 = vadd.f32 %v5861, %v6029
      %v6031 = vpop.f32.mrf.mxu0
      %v6032 = vadd.f32 %v5863, %v6031
      %6033 = vmatmul.bf16.gmra.mxu0 %v2111
      %v6034 = vpop.f32.mrf.mxu0
      %v6035 = vadd.f32 %v5866, %v6034
      %v6036 = vpop.f32.mrf.mxu0
      %v6037 = vadd.f32 %v5868, %v6036
      %6038 = vmatmul.bf16.gmra.mxu0 %v2120
      %v6039 = vpop.f32.mrf.mxu0
      %v6040 = vadd.f32 %v5871, %v6039
      %v6041 = vpop.f32.mrf.mxu0
      %v6042 = vadd.f32 %v5873, %v6041
      %6043 = vmatmul.bf16.gmra.mxu0 %v2129
      %v6044 = vpop.f32.mrf.mxu0
      %v6045 = vadd.f32 %v5876, %v6044
      %v6046 = vpop.f32.mrf.mxu0
      %v6047 = vadd.f32 %v5878, %v6046
      %6048 = vmatmul.bf16.gmra.mxu0 %v2138
      %v6049 = vpop.f32.mrf.mxu0
      %v6050 = vadd.f32 %v5881, %v6049
      %v6051 = vpop.f32.mrf.mxu0
      %v6052 = vadd.f32 %v5883, %v6051
      %6053 = vmatmul.bf16.gmra.mxu0 %v2147
      %v6054 = vpop.f32.mrf.mxu0
      %v6055 = vadd.f32 %v5886, %v6054
      %v6056 = vpop.f32.mrf.mxu0
      %v6057 = vadd.f32 %v5888, %v6056
      %6058 = vmatmul.bf16.gmra.mxu0 %v2156
      %v6059 = vpop.f32.mrf.mxu0
      %v6060 = vadd.f32 %v5891, %v6059
      %v6061 = vpop.f32.mrf.mxu0
      %v6062 = vadd.f32 %v5893, %v6061
      %6063 = vdwg.mxu0
      %6064 = vmatpush.bf16.msra.mxu0 0
      %6065 = vmatpush.bf16.msra.mxu0 0
      %6066 = vmatpush.bf16.msra.mxu0 0
      %6067 = vmatpush.bf16.msra.mxu0 0
      %6068 = vmatpush.bf16.msra.mxu0 %v2957
      %6069 = vmatpush.bf16.msra.mxu0 %v2955
      %6070 = vmatpush.bf16.msra.mxu0 %v2953
      %6071 = vmatpush.bf16.msra.mxu0 %v2951
      %6072 = vmatmul.bf16.gmra.mxu0 %v3096
      %v6073 = vpop.f32.mrf.mxu0
      %v6074 = vadd.f32 %v5905, %v6073
      %v6075 = vpop.f32.mrf.mxu0
      %v6076 = vadd.f32 %v5907, %v6075
      %6077 = vmatmul.bf16.gmra.mxu0 %v3099
      %v6078 = vpop.f32.mrf.mxu0
      %v6079 = vadd.f32 %v5910, %v6078
      %v6080 = vpop.f32.mrf.mxu0
      %v6081 = vadd.f32 %v5912, %v6080
      %6082 = vmatmul.bf16.gmra.mxu0 %v3102
      %v6083 = vpop.f32.mrf.mxu0
      %v6084 = vadd.f32 %v5915, %v6083
      %v6085 = vpop.f32.mrf.mxu0
      %v6086 = vadd.f32 %v5917, %v6085
      %6087 = vmatmul.bf16.gmra.mxu0 %v3105
      %v6088 = vpop.f32.mrf.mxu0
      %v6089 = vadd.f32 %v5920, %v6088
      %v6090 = vpop.f32.mrf.mxu0
      %v6091 = vadd.f32 %v5922, %v6090
      %6092 = vmatmul.bf16.gmra.mxu0 %v3108
      %v6093 = vpop.f32.mrf.mxu0
      %v6094 = vadd.f32 %v5925, %v6093
      %v6095 = vpop.f32.mrf.mxu0
      %v6096 = vadd.f32 %v5927, %v6095
      %6097 = vmatmul.bf16.gmra.mxu0 %v3111
      %v6098 = vpop.f32.mrf.mxu0
      %v6099 = vadd.f32 %v5930, %v6098
      %v6100 = vpop.f32.mrf.mxu0
      %v6101 = vadd.f32 %v5932, %v6100
      %6102 = vmatmul.bf16.gmra.mxu0 %v3114
      %v6103 = vpop.f32.mrf.mxu0
      %v6104 = vadd.f32 %v5935, %v6103
      %v6105 = vpop.f32.mrf.mxu0
      %v6106 = vadd.f32 %v5937, %v6105
      %6107 = vmatmul.bf16.gmra.mxu0 %v3117
      %v6108 = vpop.f32.mrf.mxu0
      %v6109 = vadd.f32 %v5940, %v6108
      %v6110 = vpop.f32.mrf.mxu0
      %v6111 = vadd.f32 %v5942, %v6110
      %6112 = vmatmul.bf16.gmra.mxu0 %v3120
      %v6113 = vpop.f32.mrf.mxu0
      %v6114 = vadd.f32 %v5945, %v6113
      %v6115 = vpop.f32.mrf.mxu0
      %v6116 = vadd.f32 %v5947, %v6115
      %6117 = vmatmul.bf16.gmra.mxu0 %v3123
      %v6118 = vpop.f32.mrf.mxu0
      %v6119 = vadd.f32 %v5950, %v6118
      %v6120 = vpop.f32.mrf.mxu0
      %v6121 = vadd.f32 %v5952, %v6120
      %6122 = vmatmul.bf16.gmra.mxu0 %v3126
      %v6123 = vpop.f32.mrf.mxu0
      %v6124 = vadd.f32 %v5955, %v6123
      %v6125 = vpop.f32.mrf.mxu0
      %v6126 = vadd.f32 %v5957, %v6125
      %6127 = vmatmul.bf16.gmra.mxu0 %v3129
      %v6128 = vpop.f32.mrf.mxu0
      %v6129 = vadd.f32 %v5960, %v6128
      %v6130 = vpop.f32.mrf.mxu0
      %v6131 = vadd.f32 %v5962, %v6130
      %6132 = vmatmul.bf16.gmra.mxu0 %v3132
      %v6133 = vpop.f32.mrf.mxu0
      %v6134 = vadd.f32 %v5965, %v6133
      %v6135 = vpop.f32.mrf.mxu0
      %v6136 = vadd.f32 %v5967, %v6135
      %6137 = vmatmul.bf16.gmra.mxu0 %v3135
      %v6138 = vpop.f32.mrf.mxu0
      %v6139 = vadd.f32 %v5970, %v6138
      %v6140 = vpop.f32.mrf.mxu0
      %v6141 = vadd.f32 %v5972, %v6140
      %6142 = vmatmul.bf16.gmra.mxu0 %v3138
      %v6143 = vpop.f32.mrf.mxu0
      %v6144 = vadd.f32 %v5975, %v6143
      %v6145 = vpop.f32.mrf.mxu0
      %v6146 = vadd.f32 %v5977, %v6145
      %6147 = vmatmul.bf16.gmra.mxu0 %v3141
      %v6148 = vpop.f32.mrf.mxu0
      %v6149 = vadd.f32 %v5980, %v6148
      %v6150 = vpop.f32.mrf.mxu0
      %v6151 = vadd.f32 %v5982, %v6150
      %6152 = vmatmul.bf16.gmra.mxu0 %v3144
      %v6153 = vpop.f32.mrf.mxu0
      %v6154 = vadd.f32 %v5985, %v6153
      %v6155 = vpop.f32.mrf.mxu0
      %v6156 = vadd.f32 %v5987, %v6155
      %6157 = vmatmul.bf16.gmra.mxu0 %v3147
      %v6158 = vpop.f32.mrf.mxu0
      %v6159 = vadd.f32 %v5990, %v6158
      %v6160 = vpop.f32.mrf.mxu0
      %v6161 = vadd.f32 %v5992, %v6160
      %6162 = vmatmul.bf16.gmra.mxu0 %v3150
      %v6163 = vpop.f32.mrf.mxu0
      %v6164 = vadd.f32 %v5995, %v6163
      %v6165 = vpop.f32.mrf.mxu0
      %v6166 = vadd.f32 %v5997, %v6165
      %6167 = vmatmul.bf16.gmra.mxu0 %v3153
      %v6168 = vpop.f32.mrf.mxu0
      %v6169 = vadd.f32 %v6000, %v6168
      %v6170 = vpop.f32.mrf.mxu0
      %v6171 = vadd.f32 %v6002, %v6170
      %6172 = vmatmul.bf16.gmra.mxu0 %v3156
      %v6173 = vpop.f32.mrf.mxu0
      %v6174 = vadd.f32 %v6005, %v6173
      %v6175 = vpop.f32.mrf.mxu0
      %v6176 = vadd.f32 %v6007, %v6175
      %6177 = vmatmul.bf16.gmra.mxu0 %v3159
      %v6178 = vpop.f32.mrf.mxu0
      %v6179 = vadd.f32 %v6010, %v6178
      %v6180 = vpop.f32.mrf.mxu0
      %v6181 = vadd.f32 %v6012, %v6180
      %6182 = vmatmul.bf16.gmra.mxu0 %v3162
      %v6183 = vpop.f32.mrf.mxu0
      %v6184 = vadd.f32 %v6015, %v6183
      %v6185 = vpop.f32.mrf.mxu0
      %v6186 = vadd.f32 %v6017, %v6185
      %6187 = vmatmul.bf16.gmra.mxu0 %v3165
      %v6188 = vpop.f32.mrf.mxu0
      %v6189 = vadd.f32 %v6020, %v6188
      %v6190 = vpop.f32.mrf.mxu0
      %v6191 = vadd.f32 %v6022, %v6190
      %6192 = vmatmul.bf16.gmra.mxu0 %v3168
      %v6193 = vpop.f32.mrf.mxu0
      %v6194 = vadd.f32 %v6025, %v6193
      %v6195 = vpop.f32.mrf.mxu0
      %v6196 = vadd.f32 %v6027, %v6195
      %6197 = vmatmul.bf16.gmra.mxu0 %v3171
      %v6198 = vpop.f32.mrf.mxu0
      %v6199 = vadd.f32 %v6030, %v6198
      %v6200 = vpop.f32.mrf.mxu0
      %v6201 = vadd.f32 %v6032, %v6200
      %6202 = vmatmul.bf16.gmra.mxu0 %v3174
      %v6203 = vpop.f32.mrf.mxu0
      %v6204 = vadd.f32 %v6035, %v6203
      %v6205 = vpop.f32.mrf.mxu0
      %v6206 = vadd.f32 %v6037, %v6205
      %6207 = vmatmul.bf16.gmra.mxu0 %v3177
      %v6208 = vpop.f32.mrf.mxu0
      %v6209 = vadd.f32 %v6040, %v6208
      %v6210 = vpop.f32.mrf.mxu0
      %v6211 = vadd.f32 %v6042, %v6210
      %6212 = vmatmul.bf16.gmra.mxu0 %v3180
      %v6213 = vpop.f32.mrf.mxu0
      %v6214 = vadd.f32 %v6045, %v6213
      %v6215 = vpop.f32.mrf.mxu0
      %v6216 = vadd.f32 %v6047, %v6215
      %6217 = vmatmul.bf16.gmra.mxu0 %v3183
      %v6218 = vpop.f32.mrf.mxu0
      %v6219 = vadd.f32 %v6050, %v6218
      %v6220 = vpop.f32.mrf.mxu0
      %v6221 = vadd.f32 %v6052, %v6220
      %6222 = vmatmul.bf16.gmra.mxu0 %v3186
      %v6223 = vpop.f32.mrf.mxu0
      %v6224 = vadd.f32 %v6055, %v6223
      %v6225 = vpop.f32.mrf.mxu0
      %v6226 = vadd.f32 %v6057, %v6225
      %6227 = vmatmul.bf16.gmra.mxu0 %v3189
      %v6228 = vpop.f32.mrf.mxu0
      %v6229 = vadd.f32 %v6060, %v6228
      %v6230 = vpop.f32.mrf.mxu0
      %v6231 = vadd.f32 %v6062, %v6230
      %6232 = vdwg.mxu0
      %vm6233 = vcmp.gt.f32.partialorder %v4553, 0.0
      %vm6234 = vcmp.gt.f32.partialorder %v6074, 0.0
      %vm6235 = vcmp.gt.f32.partialorder %v4555, 0.0
      %vm6236 = vcmp.gt.f32.partialorder %v6076, 0.0
      %vm6237 = vcmp.gt.f32.partialorder %v4558, 0.0
      %vm6238 = vcmp.gt.f32.partialorder %v6079, 0.0
      %vm6239 = vcmp.gt.f32.partialorder %v4560, 0.0
      %vm6240 = vcmp.gt.f32.partialorder %v6081, 0.0
      %vm6241 = vcmp.gt.f32.partialorder %v4563, 0.0
      %vm6242 = vcmp.gt.f32.partialorder %v6084, 0.0
      %vm6243 = vcmp.gt.f32.partialorder %v4565, 0.0
      %vm6244 = vcmp.gt.f32.partialorder %v6086, 0.0
      %vm6245 = vcmp.gt.f32.partialorder %v4568, 0.0
      %vm6246 = vcmp.gt.f32.partialorder %v6089, 0.0
      %vm6247 = vcmp.gt.f32.partialorder %v4570, 0.0
      %vm6248 = vcmp.gt.f32.partialorder %v6091, 0.0
      %vm6249 = vcmp.gt.f32.partialorder %v4573, 0.0
      %vm6250 = vcmp.gt.f32.partialorder %v6094, 0.0
      %vm6251 = vcmp.gt.f32.partialorder %v4575, 0.0
      %vm6252 = vcmp.gt.f32.partialorder %v6096, 0.0
      %vm6253 = vcmp.gt.f32.partialorder %v4578, 0.0
      %vm6254 = vcmp.gt.f32.partialorder %v6099, 0.0
      %vm6255 = vcmp.gt.f32.partialorder %v4580, 0.0
      %vm6256 = vcmp.gt.f32.partialorder %v6101, 0.0
      %vm6257 = vcmp.gt.f32.partialorder %v4583, 0.0
      %vm6258 = vcmp.gt.f32.partialorder %v6104, 0.0
      %vm6259 = vcmp.gt.f32.partialorder %v4585, 0.0
      %vm6260 = vcmp.gt.f32.partialorder %v6106, 0.0
      %vm6261 = vcmp.gt.f32.partialorder %v4588, 0.0
      %vm6262 = vcmp.gt.f32.partialorder %v6109, 0.0
      %vm6263 = vcmp.gt.f32.partialorder %v4590, 0.0
      %vm6264 = vcmp.gt.f32.partialorder %v6111, 0.0
      %vm6265 = vcmp.gt.f32.partialorder %v4593, 0.0
      %vm6266 = vcmp.gt.f32.partialorder %v6114, 0.0
      %vm6267 = vcmp.gt.f32.partialorder %v4595, 0.0
      %vm6268 = vcmp.gt.f32.partialorder %v6116, 0.0
      %vm6269 = vcmp.gt.f32.partialorder %v4598, 0.0
      %vm6270 = vcmp.gt.f32.partialorder %v6119, 0.0
      %vm6271 = vcmp.gt.f32.partialorder %v4600, 0.0
      %vm6272 = vcmp.gt.f32.partialorder %v6121, 0.0
      %vm6273 = vcmp.gt.f32.partialorder %v4603, 0.0
      %vm6274 = vcmp.gt.f32.partialorder %v6124, 0.0
      %vm6275 = vcmp.gt.f32.partialorder %v4605, 0.0
      %vm6276 = vcmp.gt.f32.partialorder %v6126, 0.0
      %vm6277 = vcmp.gt.f32.partialorder %v4608, 0.0
      %vm6278 = vcmp.gt.f32.partialorder %v6129, 0.0
      %vm6279 = vcmp.gt.f32.partialorder %v4610, 0.0
      %vm6280 = vcmp.gt.f32.partialorder %v6131, 0.0
      %vm6281 = vcmp.gt.f32.partialorder %v4613, 0.0
      %vm6282 = vcmp.gt.f32.partialorder %v6134, 0.0
      %vm6283 = vcmp.gt.f32.partialorder %v4615, 0.0
      %vm6284 = vcmp.gt.f32.partialorder %v6136, 0.0
      %vm6285 = vcmp.gt.f32.partialorder %v4618, 0.0
      %vm6286 = vcmp.gt.f32.partialorder %v6139, 0.0
      %vm6287 = vcmp.gt.f32.partialorder %v4620, 0.0
      %vm6288 = vcmp.gt.f32.partialorder %v6141, 0.0
      %vm6289 = vcmp.gt.f32.partialorder %v4623, 0.0
      %vm6290 = vcmp.gt.f32.partialorder %v6144, 0.0
      %vm6291 = vcmp.gt.f32.partialorder %v4625, 0.0
      %vm6292 = vcmp.gt.f32.partialorder %v6146, 0.0
      %vm6293 = vcmp.gt.f32.partialorder %v4628, 0.0
      %vm6294 = vcmp.gt.f32.partialorder %v6149, 0.0
      %vm6295 = vcmp.gt.f32.partialorder %v4630, 0.0
      %vm6296 = vcmp.gt.f32.partialorder %v6151, 0.0
      %vm6297 = vcmp.gt.f32.partialorder %v4633, 0.0
      %vm6298 = vcmp.gt.f32.partialorder %v6154, 0.0
      %vm6299 = vcmp.gt.f32.partialorder %v4635, 0.0
      %vm6300 = vcmp.gt.f32.partialorder %v6156, 0.0
      %vm6301 = vcmp.gt.f32.partialorder %v4638, 0.0
      %vm6302 = vcmp.gt.f32.partialorder %v6159, 0.0
      %vm6303 = vcmp.gt.f32.partialorder %v4640, 0.0
      %vm6304 = vcmp.gt.f32.partialorder %v6161, 0.0
      %vm6305 = vcmp.gt.f32.partialorder %v4643, 0.0
      %vm6306 = vcmp.gt.f32.partialorder %v6164, 0.0
      %vm6307 = vcmp.gt.f32.partialorder %v4645, 0.0
      %vm6308 = vcmp.gt.f32.partialorder %v6166, 0.0
      %vm6309 = vcmp.gt.f32.partialorder %v4648, 0.0
      %vm6310 = vcmp.gt.f32.partialorder %v6169, 0.0
      %vm6311 = vcmp.gt.f32.partialorder %v4650, 0.0
      %vm6312 = vcmp.gt.f32.partialorder %v6171, 0.0
      %vm6313 = vcmp.gt.f32.partialorder %v4653, 0.0
      %vm6314 = vcmp.gt.f32.partialorder %v6174, 0.0
      %vm6315 = vcmp.gt.f32.partialorder %v4655, 0.0
      %vm6316 = vcmp.gt.f32.partialorder %v6176, 0.0
      %vm6317 = vcmp.gt.f32.partialorder %v4658, 0.0
      %vm6318 = vcmp.gt.f32.partialorder %v6179, 0.0
      %vm6319 = vcmp.gt.f32.partialorder %v4660, 0.0
      %vm6320 = vcmp.gt.f32.partialorder %v6181, 0.0
      %vm6321 = vcmp.gt.f32.partialorder %v4663, 0.0
      %vm6322 = vcmp.gt.f32.partialorder %v6184, 0.0
      %vm6323 = vcmp.gt.f32.partialorder %v4665, 0.0
      %vm6324 = vcmp.gt.f32.partialorder %v6186, 0.0
      %vm6325 = vcmp.gt.f32.partialorder %v4668, 0.0
      %vm6326 = vcmp.gt.f32.partialorder %v6189, 0.0
      %vm6327 = vcmp.gt.f32.partialorder %v4670, 0.0
      %vm6328 = vcmp.gt.f32.partialorder %v6191, 0.0
      %vm6329 = vcmp.gt.f32.partialorder %v4673, 0.0
      %vm6330 = vcmp.gt.f32.partialorder %v6194, 0.0
      %vm6331 = vcmp.gt.f32.partialorder %v4675, 0.0
      %vm6332 = vcmp.gt.f32.partialorder %v6196, 0.0
      %vm6333 = vcmp.gt.f32.partialorder %v4678, 0.0
      %vm6334 = vcmp.gt.f32.partialorder %v6199, 0.0
      %vm6335 = vcmp.gt.f32.partialorder %v4680, 0.0
      %vm6336 = vcmp.gt.f32.partialorder %v6201, 0.0
      %vm6337 = vcmp.gt.f32.partialorder %v4683, 0.0
      %vm6338 = vcmp.gt.f32.partialorder %v6204, 0.0
      %vm6339 = vcmp.gt.f32.partialorder %v4685, 0.0
      %vm6340 = vcmp.gt.f32.partialorder %v6206, 0.0
      %vm6341 = vcmp.gt.f32.partialorder %v4688, 0.0
      %vm6342 = vcmp.gt.f32.partialorder %v6209, 0.0
      %vm6343 = vcmp.gt.f32.partialorder %v4690, 0.0
      %vm6344 = vcmp.gt.f32.partialorder %v6211, 0.0
      %vm6345 = vcmp.gt.f32.partialorder %v4693, 0.0
      %vm6346 = vcmp.gt.f32.partialorder %v6214, 0.0
      %vm6347 = vcmp.gt.f32.partialorder %v4695, 0.0
      %vm6348 = vcmp.gt.f32.partialorder %v6216, 0.0
      %vm6349 = vcmp.gt.f32.partialorder %v4698, 0.0
      %vm6350 = vcmp.gt.f32.partialorder %v6219, 0.0
      %vm6351 = vcmp.gt.f32.partialorder %v4700, 0.0
      %vm6352 = vcmp.gt.f32.partialorder %v6221, 0.0
      %vm6353 = vcmp.gt.f32.partialorder %v4703, 0.0
      %vm6354 = vcmp.gt.f32.partialorder %v6224, 0.0
      %vm6355 = vcmp.gt.f32.partialorder %v4705, 0.0
      %vm6356 = vcmp.gt.f32.partialorder %v6226, 0.0
      %vm6357 = vcmp.gt.f32.partialorder %v4708, 0.0
      %vm6358 = vcmp.gt.f32.partialorder %v6229, 0.0
      %vm6359 = vcmp.gt.f32.partialorder %v4710, 0.0
      %vm6360 = vcmp.gt.f32.partialorder %v6231, 0.0
      %v6361 = vmul.f32 %v4553, 0.01
      %v6362 = vmul.f32 %v6074, 0.01
      %v6363 = vmul.f32 %v4555, 0.01
      %v6364 = vmul.f32 %v6076, 0.01
      %v6365 = vmul.f32 %v4558, 0.01
      %v6366 = vmul.f32 %v6079, 0.01
      %v6367 = vmul.f32 %v4560, 0.01
      %v6368 = vmul.f32 %v6081, 0.01
      %v6369 = vmul.f32 %v4563, 0.01
      %v6370 = vmul.f32 %v6084, 0.01
      %v6371 = vmul.f32 %v4565, 0.01
      %v6372 = vmul.f32 %v6086, 0.01
      %v6373 = vmul.f32 %v4568, 0.01
      %v6374 = vmul.f32 %v6089, 0.01
      %v6375 = vmul.f32 %v4570, 0.01
      %v6376 = vmul.f32 %v6091, 0.01
      %v6377 = vmul.f32 %v4573, 0.01
      %v6378 = vmul.f32 %v6094, 0.01
      %v6379 = vmul.f32 %v4575, 0.01
      %v6380 = vmul.f32 %v6096, 0.01
      %v6381 = vmul.f32 %v4578, 0.01
      %v6382 = vmul.f32 %v6099, 0.01
      %v6383 = vmul.f32 %v4580, 0.01
      %v6384 = vmul.f32 %v6101, 0.01
      %v6385 = vmul.f32 %v4583, 0.01
      %v6386 = vmul.f32 %v6104, 0.01
      %v6387 = vmul.f32 %v4585, 0.01
      %v6388 = vmul.f32 %v6106, 0.01
      %v6389 = vmul.f32 %v4588, 0.01
      %v6390 = vmul.f32 %v6109, 0.01
      %v6391 = vmul.f32 %v4590, 0.01
      %v6392 = vmul.f32 %v6111, 0.01
      %v6393 = vmul.f32 %v4593, 0.01
      %v6394 = vmul.f32 %v6114, 0.01
      %v6395 = vmul.f32 %v4595, 0.01
      %v6396 = vmul.f32 %v6116, 0.01
      %v6397 = vmul.f32 %v4598, 0.01
      %v6398 = vmul.f32 %v6119, 0.01
      %v6399 = vmul.f32 %v4600, 0.01
      %v6400 = vmul.f32 %v6121, 0.01
      %v6401 = vmul.f32 %v4603, 0.01
      %v6402 = vmul.f32 %v6124, 0.01
      %v6403 = vmul.f32 %v4605, 0.01
      %v6404 = vmul.f32 %v6126, 0.01
      %v6405 = vmul.f32 %v4608, 0.01
      %v6406 = vmul.f32 %v6129, 0.01
      %v6407 = vmul.f32 %v4610, 0.01
      %v6408 = vmul.f32 %v6131, 0.01
      %v6409 = vmul.f32 %v4613, 0.01
      %v6410 = vmul.f32 %v6134, 0.01
      %v6411 = vmul.f32 %v4615, 0.01
      %v6412 = vmul.f32 %v6136, 0.01
      %v6413 = vmul.f32 %v4618, 0.01
      %v6414 = vmul.f32 %v6139, 0.01
      %v6415 = vmul.f32 %v4620, 0.01
      %v6416 = vmul.f32 %v6141, 0.01
      %v6417 = vmul.f32 %v4623, 0.01
      %v6418 = vmul.f32 %v6144, 0.01
      %v6419 = vmul.f32 %v4625, 0.01
      %v6420 = vmul.f32 %v6146, 0.01
      %v6421 = vmul.f32 %v4628, 0.01
      %v6422 = vmul.f32 %v6149, 0.01
      %v6423 = vmul.f32 %v4630, 0.01
      %v6424 = vmul.f32 %v6151, 0.01
      %v6425 = vmul.f32 %v4633, 0.01
      %v6426 = vmul.f32 %v6154, 0.01
      %v6427 = vmul.f32 %v4635, 0.01
      %v6428 = vmul.f32 %v6156, 0.01
      %v6429 = vmul.f32 %v4638, 0.01
      %v6430 = vmul.f32 %v6159, 0.01
      %v6431 = vmul.f32 %v4640, 0.01
      %v6432 = vmul.f32 %v6161, 0.01
      %v6433 = vmul.f32 %v4643, 0.01
      %v6434 = vmul.f32 %v6164, 0.01
      %v6435 = vmul.f32 %v4645, 0.01
      %v6436 = vmul.f32 %v6166, 0.01
      %v6437 = vmul.f32 %v4648, 0.01
      %v6438 = vmul.f32 %v6169, 0.01
      %v6439 = vmul.f32 %v4650, 0.01
      %v6440 = vmul.f32 %v6171, 0.01
      %v6441 = vmul.f32 %v4653, 0.01
      %v6442 = vmul.f32 %v6174, 0.01
      %v6443 = vmul.f32 %v4655, 0.01
      %v6444 = vmul.f32 %v6176, 0.01
      %v6445 = vmul.f32 %v4658, 0.01
      %v6446 = vmul.f32 %v6179, 0.01
      %v6447 = vmul.f32 %v4660, 0.01
      %v6448 = vmul.f32 %v6181, 0.01
      %v6449 = vmul.f32 %v4663, 0.01
      %v6450 = vmul.f32 %v6184, 0.01
      %v6451 = vmul.f32 %v4665, 0.01
      %v6452 = vmul.f32 %v6186, 0.01
      %v6453 = vmul.f32 %v4668, 0.01
      %v6454 = vmul.f32 %v6189, 0.01
      %v6455 = vmul.f32 %v4670, 0.01
      %v6456 = vmul.f32 %v6191, 0.01
      %v6457 = vmul.f32 %v4673, 0.01
      %v6458 = vmul.f32 %v6194, 0.01
      %v6459 = vmul.f32 %v4675, 0.01
      %v6460 = vmul.f32 %v6196, 0.01
      %v6461 = vmul.f32 %v4678, 0.01
      %v6462 = vmul.f32 %v6199, 0.01
      %v6463 = vmul.f32 %v4680, 0.01
      %v6464 = vmul.f32 %v6201, 0.01
      %v6465 = vmul.f32 %v4683, 0.01
      %v6466 = vmul.f32 %v6204, 0.01
      %v6467 = vmul.f32 %v4685, 0.01
      %v6468 = vmul.f32 %v6206, 0.01
      %v6469 = vmul.f32 %v4688, 0.01
      %v6470 = vmul.f32 %v6209, 0.01
      %v6471 = vmul.f32 %v4690, 0.01
      %v6472 = vmul.f32 %v6211, 0.01
      %v6473 = vmul.f32 %v4693, 0.01
      %v6474 = vmul.f32 %v6214, 0.01
      %v6475 = vmul.f32 %v4695, 0.01
      %v6476 = vmul.f32 %v6216, 0.01
      %v6477 = vmul.f32 %v4698, 0.01
      %v6478 = vmul.f32 %v6219, 0.01
      %v6479 = vmul.f32 %v4700, 0.01
      %v6480 = vmul.f32 %v6221, 0.01
      %v6481 = vmul.f32 %v4703, 0.01
      %v6482 = vmul.f32 %v6224, 0.01
      %v6483 = vmul.f32 %v4705, 0.01
      %v6484 = vmul.f32 %v6226, 0.01
      %v6485 = vmul.f32 %v4708, 0.01
      %v6486 = vmul.f32 %v6229, 0.01
      %v6487 = vmul.f32 %v4710, 0.01
      %v6488 = vmul.f32 %v6231, 0.01
      %v6489 = vsel %vm6233, %v4553, %v6361
      %v6490 = vsel %vm6234, %v6074, %v6362
      %v6491 = vsel %vm6235, %v4555, %v6363
      %v6492 = vsel %vm6236, %v6076, %v6364
      %v6493 = vsel %vm6237, %v4558, %v6365
      %v6494 = vsel %vm6238, %v6079, %v6366
      %v6495 = vsel %vm6239, %v4560, %v6367
      %v6496 = vsel %vm6240, %v6081, %v6368
      %v6497 = vsel %vm6241, %v4563, %v6369
      %v6498 = vsel %vm6242, %v6084, %v6370
      %v6499 = vsel %vm6243, %v4565, %v6371
      %v6500 = vsel %vm6244, %v6086, %v6372
      %v6501 = vsel %vm6245, %v4568, %v6373
      %v6502 = vsel %vm6246, %v6089, %v6374
      %v6503 = vsel %vm6247, %v4570, %v6375
      %v6504 = vsel %vm6248, %v6091, %v6376
      %v6505 = vsel %vm6249, %v4573, %v6377
      %v6506 = vsel %vm6250, %v6094, %v6378
      %v6507 = vsel %vm6251, %v4575, %v6379
      %v6508 = vsel %vm6252, %v6096, %v6380
      %v6509 = vsel %vm6253, %v4578, %v6381
      %v6510 = vsel %vm6254, %v6099, %v6382
      %v6511 = vsel %vm6255, %v4580, %v6383
      %v6512 = vsel %vm6256, %v6101, %v6384
      %v6513 = vsel %vm6257, %v4583, %v6385
      %v6514 = vsel %vm6258, %v6104, %v6386
      %v6515 = vsel %vm6259, %v4585, %v6387
      %v6516 = vsel %vm6260, %v6106, %v6388
      %v6517 = vsel %vm6261, %v4588, %v6389
      %v6518 = vsel %vm6262, %v6109, %v6390
      %v6519 = vsel %vm6263, %v4590, %v6391
      %v6520 = vsel %vm6264, %v6111, %v6392
      %v6521 = vsel %vm6265, %v4593, %v6393
      %v6522 = vsel %vm6266, %v6114, %v6394
      %v6523 = vsel %vm6267, %v4595, %v6395
      %v6524 = vsel %vm6268, %v6116, %v6396
      %v6525 = vsel %vm6269, %v4598, %v6397
      %v6526 = vsel %vm6270, %v6119, %v6398
      %v6527 = vsel %vm6271, %v4600, %v6399
      %v6528 = vsel %vm6272, %v6121, %v6400
      %v6529 = vsel %vm6273, %v4603, %v6401
      %v6530 = vsel %vm6274, %v6124, %v6402
      %v6531 = vsel %vm6275, %v4605, %v6403
      %v6532 = vsel %vm6276, %v6126, %v6404
      %v6533 = vsel %vm6277, %v4608, %v6405
      %v6534 = vsel %vm6278, %v6129, %v6406
      %v6535 = vsel %vm6279, %v4610, %v6407
      %v6536 = vsel %vm6280, %v6131, %v6408
      %v6537 = vsel %vm6281, %v4613, %v6409
      %v6538 = vsel %vm6282, %v6134, %v6410
      %v6539 = vsel %vm6283, %v4615, %v6411
      %v6540 = vsel %vm6284, %v6136, %v6412
      %v6541 = vsel %vm6285, %v4618, %v6413
      %v6542 = vsel %vm6286, %v6139, %v6414
      %v6543 = vsel %vm6287, %v4620, %v6415
      %v6544 = vsel %vm6288, %v6141, %v6416
      %v6545 = vsel %vm6289, %v4623, %v6417
      %v6546 = vsel %vm6290, %v6144, %v6418
      %v6547 = vsel %vm6291, %v4625, %v6419
      %v6548 = vsel %vm6292, %v6146, %v6420
      %v6549 = vsel %vm6293, %v4628, %v6421
      %v6550 = vsel %vm6294, %v6149, %v6422
      %v6551 = vsel %vm6295, %v4630, %v6423
      %v6552 = vsel %vm6296, %v6151, %v6424
      %v6553 = vsel %vm6297, %v4633, %v6425
      %v6554 = vsel %vm6298, %v6154, %v6426
      %v6555 = vsel %vm6299, %v4635, %v6427
      %v6556 = vsel %vm6300, %v6156, %v6428
      %v6557 = vsel %vm6301, %v4638, %v6429
      %v6558 = vsel %vm6302, %v6159, %v6430
      %v6559 = vsel %vm6303, %v4640, %v6431
      %v6560 = vsel %vm6304, %v6161, %v6432
      %v6561 = vsel %vm6305, %v4643, %v6433
      %v6562 = vsel %vm6306, %v6164, %v6434
      %v6563 = vsel %vm6307, %v4645, %v6435
      %v6564 = vsel %vm6308, %v6166, %v6436
      %v6565 = vsel %vm6309, %v4648, %v6437
      %v6566 = vsel %vm6310, %v6169, %v6438
      %v6567 = vsel %vm6311, %v4650, %v6439
      %v6568 = vsel %vm6312, %v6171, %v6440
      %v6569 = vsel %vm6313, %v4653, %v6441
      %v6570 = vsel %vm6314, %v6174, %v6442
      %v6571 = vsel %vm6315, %v4655, %v6443
      %v6572 = vsel %vm6316, %v6176, %v6444
      %v6573 = vsel %vm6317, %v4658, %v6445
      %v6574 = vsel %vm6318, %v6179, %v6446
      %v6575 = vsel %vm6319, %v4660, %v6447
      %v6576 = vsel %vm6320, %v6181, %v6448
      %v6577 = vsel %vm6321, %v4663, %v6449
      %v6578 = vsel %vm6322, %v6184, %v6450
      %v6579 = vsel %vm6323, %v4665, %v6451
      %v6580 = vsel %vm6324, %v6186, %v6452
      %v6581 = vsel %vm6325, %v4668, %v6453
      %v6582 = vsel %vm6326, %v6189, %v6454
      %v6583 = vsel %vm6327, %v4670, %v6455
      %v6584 = vsel %vm6328, %v6191, %v6456
      %v6585 = vsel %vm6329, %v4673, %v6457
      %v6586 = vsel %vm6330, %v6194, %v6458
      %v6587 = vsel %vm6331, %v4675, %v6459
      %v6588 = vsel %vm6332, %v6196, %v6460
      %v6589 = vsel %vm6333, %v4678, %v6461
      %v6590 = vsel %vm6334, %v6199, %v6462
      %v6591 = vsel %vm6335, %v4680, %v6463
      %v6592 = vsel %vm6336, %v6201, %v6464
      %v6593 = vsel %vm6337, %v4683, %v6465
      %v6594 = vsel %vm6338, %v6204, %v6466
      %v6595 = vsel %vm6339, %v4685, %v6467
      %v6596 = vsel %vm6340, %v6206, %v6468
      %v6597 = vsel %vm6341, %v4688, %v6469
      %v6598 = vsel %vm6342, %v6209, %v6470
      %v6599 = vsel %vm6343, %v4690, %v6471
      %v6600 = vsel %vm6344, %v6211, %v6472
      %v6601 = vsel %vm6345, %v4693, %v6473
      %v6602 = vsel %vm6346, %v6214, %v6474
      %v6603 = vsel %vm6347, %v4695, %v6475
      %v6604 = vsel %vm6348, %v6216, %v6476
      %v6605 = vsel %vm6349, %v4698, %v6477
      %v6606 = vsel %vm6350, %v6219, %v6478
      %v6607 = vsel %vm6351, %v4700, %v6479
      %v6608 = vsel %vm6352, %v6221, %v6480
      %v6609 = vsel %vm6353, %v4703, %v6481
      %v6610 = vsel %vm6354, %v6224, %v6482
      %v6611 = vsel %vm6355, %v4705, %v6483
      %v6612 = vsel %vm6356, %v6226, %v6484
      %v6613 = vsel %vm6357, %v4708, %v6485
      %v6614 = vsel %vm6358, %v6229, %v6486
      %v6615 = vsel %vm6359, %v4710, %v6487
      %v6616 = vsel %vm6360, %v6231, %v6488
      %v6617 = vpack.c.bf16 %v6491, %v6489
      %v6618 = vpack.c.bf16 %v6492, %v6490
      %v6619 = vpack.c.bf16 %v6495, %v6493
      %v6620 = vpack.c.bf16 %v6496, %v6494
      %v6621 = vpack.c.bf16 %v6499, %v6497
      %v6622 = vpack.c.bf16 %v6500, %v6498
      %v6623 = vpack.c.bf16 %v6503, %v6501
      %v6624 = vpack.c.bf16 %v6504, %v6502
      %v6625 = vpack.c.bf16 %v6507, %v6505
      %v6626 = vpack.c.bf16 %v6508, %v6506
      %v6627 = vpack.c.bf16 %v6511, %v6509
      %v6628 = vpack.c.bf16 %v6512, %v6510
      %v6629 = vpack.c.bf16 %v6515, %v6513
      %v6630 = vpack.c.bf16 %v6516, %v6514
      %v6631 = vpack.c.bf16 %v6519, %v6517
      %v6632 = vpack.c.bf16 %v6520, %v6518
      %v6633 = vpack.c.bf16 %v6523, %v6521
      %v6634 = vpack.c.bf16 %v6524, %v6522
      %v6635 = vpack.c.bf16 %v6527, %v6525
      %v6636 = vpack.c.bf16 %v6528, %v6526
      %v6637 = vpack.c.bf16 %v6531, %v6529
      %v6638 = vpack.c.bf16 %v6532, %v6530
      %v6639 = vpack.c.bf16 %v6535, %v6533
      %v6640 = vpack.c.bf16 %v6536, %v6534
      %v6641 = vpack.c.bf16 %v6539, %v6537
      %v6642 = vpack.c.bf16 %v6540, %v6538
      %v6643 = vpack.c.bf16 %v6543, %v6541
      %v6644 = vpack.c.bf16 %v6544, %v6542
      %v6645 = vpack.c.bf16 %v6547, %v6545
      %v6646 = vpack.c.bf16 %v6548, %v6546
      %v6647 = vpack.c.bf16 %v6551, %v6549
      %v6648 = vpack.c.bf16 %v6552, %v6550
      %v6649 = vpack.c.bf16 %v6555, %v6553
      %v6650 = vpack.c.bf16 %v6556, %v6554
      %v6651 = vpack.c.bf16 %v6559, %v6557
      %v6652 = vpack.c.bf16 %v6560, %v6558
      %v6653 = vpack.c.bf16 %v6563, %v6561
      %v6654 = vpack.c.bf16 %v6564, %v6562
      %v6655 = vpack.c.bf16 %v6567, %v6565
      %v6656 = vpack.c.bf16 %v6568, %v6566
      %v6657 = vpack.c.bf16 %v6571, %v6569
      %v6658 = vpack.c.bf16 %v6572, %v6570
      %v6659 = vpack.c.bf16 %v6575, %v6573
      %v6660 = vpack.c.bf16 %v6576, %v6574
      %v6661 = vpack.c.bf16 %v6579, %v6577
      %v6662 = vpack.c.bf16 %v6580, %v6578
      %v6663 = vpack.c.bf16 %v6583, %v6581
      %v6664 = vpack.c.bf16 %v6584, %v6582
      %v6665 = vpack.c.bf16 %v6587, %v6585
      %v6666 = vpack.c.bf16 %v6588, %v6586
      %v6667 = vpack.c.bf16 %v6591, %v6589
      %v6668 = vpack.c.bf16 %v6592, %v6590
      %v6669 = vpack.c.bf16 %v6595, %v6593
      %v6670 = vpack.c.bf16 %v6596, %v6594
      %v6671 = vpack.c.bf16 %v6599, %v6597
      %v6672 = vpack.c.bf16 %v6600, %v6598
      %v6673 = vpack.c.bf16 %v6603, %v6601
      %v6674 = vpack.c.bf16 %v6604, %v6602
      %v6675 = vpack.c.bf16 %v6607, %v6605
      %v6676 = vpack.c.bf16 %v6608, %v6606
      %v6677 = vpack.c.bf16 %v6611, %v6609
      %v6678 = vpack.c.bf16 %v6612, %v6610
      %v6679 = vpack.c.bf16 %v6615, %v6613
      %v6680 = vpack.c.bf16 %v6616, %v6614
      %v6681 = vld [vmem:[%s482] sm:$0xff]
      %v6682 = vld [vmem:[%s482 + $0x8] sm:$0xff]
      %v6683 = vld [vmem:[%s482 + $0x10] sm:$0xff]
      %v6684 = vld [vmem:[%s482 + $0x18] sm:$0xff]
      %v6685 = vld [vmem:[%s482 + $0x20] sm:$0xff]
      %v6686 = vld [vmem:[%s482 + $0x28] sm:$0xff]
      %v6687 = vld [vmem:[%s482 + $0x30] sm:$0xff]
      %v6688 = vld [vmem:[%s482 + $0x38] sm:$0xff]
      %v6689 = vld [vmem:[%s482 + $0x40] sm:$0xff]
      %v6690 = vld [vmem:[%s482 + $0x48] sm:$0xff]
      %v6691 = vld [vmem:[%s482 + $0x50] sm:$0xff]
      %v6692 = vld [vmem:[%s482 + $0x58] sm:$0xff]
      %v6693 = vld [vmem:[%s482 + $0x60] sm:$0xff]
      %v6694 = vld [vmem:[%s482 + $0x68] sm:$0xff]
      %v6695 = vld [vmem:[%s482 + $0x70] sm:$0xff]
      %v6696 = vld [vmem:[%s482 + $0x78] sm:$0xff]
      %v6697 = vld [vmem:[%s482 + $0x80] sm:$0xff]
      %v6698 = vld [vmem:[%s482 + $0x88] sm:$0xff]
      %v6699 = vld [vmem:[%s482 + $0x90] sm:$0xff]
      %v6700 = vld [vmem:[%s482 + $0x98] sm:$0xff]
      %v6701 = vld [vmem:[%s482 + $0xa0] sm:$0xff]
      %v6702 = vld [vmem:[%s482 + $0xa8] sm:$0xff]
      %v6703 = vld [vmem:[%s482 + $0xb0] sm:$0xff]
      %v6704 = vld [vmem:[%s482 + $0xb8] sm:$0xff]
      %v6705 = vld [vmem:[%s482 + $0xc0] sm:$0xff]
      %v6706 = vld [vmem:[%s482 + $0xc8] sm:$0xff]
      %v6707 = vld [vmem:[%s482 + $0xd0] sm:$0xff]
      %v6708 = vld [vmem:[%s482 + $0xd8] sm:$0xff]
      %v6709 = vld [vmem:[%s482 + $0xe0] sm:$0xff]
      %v6710 = vld [vmem:[%s482 + $0xe8] sm:$0xff]
      %v6711 = vld [vmem:[%s482 + $0xf0] sm:$0xff]
      %v6712 = vld [vmem:[%s482 + $0xf8] sm:$0xff]
      %v6713 = vld [vmem:[%s486] sm:$0x3]
      %v6715 = vperm.slane %v6713, 0
      %v6716 = vperm.slane %v6713, 1
      %v6751 = vunpack.c.l.b16 %v6681
      %v6752 = vunpack.c.h.b16 %v6681
      %v6753 = vunpack.c.l.b16 %v6682
      %v6754 = vunpack.c.h.b16 %v6682
      %v6755 = vunpack.c.l.b16 %v6683
      %v6756 = vunpack.c.h.b16 %v6683
      %v6757 = vunpack.c.l.b16 %v6684
      %v6758 = vunpack.c.h.b16 %v6684
      %v6759 = vunpack.c.l.b16 %v6685
      %v6760 = vunpack.c.h.b16 %v6685
      %v6761 = vunpack.c.l.b16 %v6686
      %v6762 = vunpack.c.h.b16 %v6686
      %v6763 = vunpack.c.l.b16 %v6687
      %v6764 = vunpack.c.h.b16 %v6687
      %v6765 = vunpack.c.l.b16 %v6688
      %v6766 = vunpack.c.h.b16 %v6688
      %v6767 = vunpack.c.l.b16 %v6689
      %v6768 = vunpack.c.h.b16 %v6689
      %v6769 = vunpack.c.l.b16 %v6690
      %v6770 = vunpack.c.h.b16 %v6690
      %v6771 = vunpack.c.l.b16 %v6691
      %v6772 = vunpack.c.h.b16 %v6691
      %v6773 = vunpack.c.l.b16 %v6692
      %v6774 = vunpack.c.h.b16 %v6692
      %v6775 = vunpack.c.l.b16 %v6693
      %v6776 = vunpack.c.h.b16 %v6693
      %v6777 = vunpack.c.l.b16 %v6694
      %v6778 = vunpack.c.h.b16 %v6694
      %v6779 = vunpack.c.l.b16 %v6695
      %v6780 = vunpack.c.h.b16 %v6695
      %v6781 = vunpack.c.l.b16 %v6696
      %v6782 = vunpack.c.h.b16 %v6696
      %v6783 = vunpack.c.l.b16 %v6697
      %v6784 = vunpack.c.h.b16 %v6697
      %v6785 = vunpack.c.l.b16 %v6698
      %v6786 = vunpack.c.h.b16 %v6698
      %v6787 = vunpack.c.l.b16 %v6699
      %v6788 = vunpack.c.h.b16 %v6699
      %v6789 = vunpack.c.l.b16 %v6700
      %v6790 = vunpack.c.h.b16 %v6700
      %v6791 = vunpack.c.l.b16 %v6701
      %v6792 = vunpack.c.h.b16 %v6701
      %v6793 = vunpack.c.l.b16 %v6702
      %v6794 = vunpack.c.h.b16 %v6702
      %v6795 = vunpack.c.l.b16 %v6703
      %v6796 = vunpack.c.h.b16 %v6703
      %v6797 = vunpack.c.l.b16 %v6704
      %v6798 = vunpack.c.h.b16 %v6704
      %v6799 = vunpack.c.l.b16 %v6705
      %v6800 = vunpack.c.h.b16 %v6705
      %v6801 = vunpack.c.l.b16 %v6706
      %v6802 = vunpack.c.h.b16 %v6706
      %v6803 = vunpack.c.l.b16 %v6707
      %v6804 = vunpack.c.h.b16 %v6707
      %v6805 = vunpack.c.l.b16 %v6708
      %v6806 = vunpack.c.h.b16 %v6708
      %v6807 = vunpack.c.l.b16 %v6709
      %v6808 = vunpack.c.h.b16 %v6709
      %v6809 = vunpack.c.l.b16 %v6710
      %v6810 = vunpack.c.h.b16 %v6710
      %v6811 = vunpack.c.l.b16 %v6711
      %v6812 = vunpack.c.h.b16 %v6711
      %v6813 = vunpack.c.l.b16 %v6712
      %v6814 = vunpack.c.h.b16 %v6712
      %v6815 = vpack.c.b16 %v6753, %v6751
      %v6816 = vpack.c.b16 %v6754, %v6752
      %v6817 = vpack.c.b16 %v6757, %v6755
      %v6818 = vpack.c.b16 %v6758, %v6756
      %v6819 = vpack.c.b16 %v6761, %v6759
      %v6820 = vpack.c.b16 %v6762, %v6760
      %v6821 = vpack.c.b16 %v6765, %v6763
      %v6822 = vpack.c.b16 %v6766, %v6764
      %v6823 = vpack.c.b16 %v6769, %v6767
      %v6824 = vpack.c.b16 %v6770, %v6768
      %v6825 = vpack.c.b16 %v6773, %v6771
      %v6826 = vpack.c.b16 %v6774, %v6772
      %v6827 = vpack.c.b16 %v6777, %v6775
      %v6828 = vpack.c.b16 %v6778, %v6776
      %v6829 = vpack.c.b16 %v6781, %v6779
      %v6830 = vpack.c.b16 %v6782, %v6780
      %v6831 = vpack.c.b16 %v6785, %v6783
      %v6832 = vpack.c.b16 %v6786, %v6784
      %v6833 = vpack.c.b16 %v6789, %v6787
      %v6834 = vpack.c.b16 %v6790, %v6788
      %v6835 = vpack.c.b16 %v6793, %v6791
      %v6836 = vpack.c.b16 %v6794, %v6792
      %v6837 = vpack.c.b16 %v6797, %v6795
      %v6838 = vpack.c.b16 %v6798, %v6796
      %v6839 = vpack.c.b16 %v6801, %v6799
      %v6840 = vpack.c.b16 %v6802, %v6800
      %v6841 = vpack.c.b16 %v6805, %v6803
      %v6842 = vpack.c.b16 %v6806, %v6804
      %v6843 = vpack.c.b16 %v6809, %v6807
      %v6844 = vpack.c.b16 %v6810, %v6808
      %v6845 = vpack.c.b16 %v6813, %v6811
      %v6846 = vpack.c.b16 %v6814, %v6812
      %6879 = vmatpush.bf16.msra.mxu0 %v6829
      %6880 = vmatpush.bf16.msra.mxu0 %v6827
      %6881 = vmatpush.bf16.msra.mxu0 %v6825
      %6882 = vmatpush.bf16.msra.mxu0 %v6823
      %6883 = vmatpush.bf16.msra.mxu0 %v6821
      %6884 = vmatpush.bf16.msra.mxu0 %v6819
      %6885 = vmatpush.bf16.msra.mxu0 %v6817
      %6886 = vmatpush.bf16.msra.mxu0 %v6815
      %6887 = vmatmul.bf16.gmra.mxu0 %v6617
      %v6888 = vpop.f32.mrf.mxu0
      %v6889 = vadd.f32 %v6715, %v6888
      %v6890 = vpop.f32.mrf.mxu0
      %v6891 = vadd.f32 %v6715, %v6890
      %6892 = vmatmul.bf16.gmra.mxu0 %v6619
      %v6893 = vpop.f32.mrf.mxu0
      %v6894 = vadd.f32 %v6715, %v6893
      %v6895 = vpop.f32.mrf.mxu0
      %v6896 = vadd.f32 %v6715, %v6895
      %6897 = vmatmul.bf16.gmra.mxu0 %v6621
      %v6898 = vpop.f32.mrf.mxu0
      %v6899 = vadd.f32 %v6715, %v6898
      %v6900 = vpop.f32.mrf.mxu0
      %v6901 = vadd.f32 %v6715, %v6900
      %6902 = vmatmul.bf16.gmra.mxu0 %v6623
      %v6903 = vpop.f32.mrf.mxu0
      %v6904 = vadd.f32 %v6715, %v6903
      %v6905 = vpop.f32.mrf.mxu0
      %v6906 = vadd.f32 %v6715, %v6905
      %6907 = vmatmul.bf16.gmra.mxu0 %v6625
      %v6908 = vpop.f32.mrf.mxu0
      %v6909 = vadd.f32 %v6715, %v6908
      %v6910 = vpop.f32.mrf.mxu0
      %v6911 = vadd.f32 %v6715, %v6910
      %6912 = vmatmul.bf16.gmra.mxu0 %v6627
      %v6913 = vpop.f32.mrf.mxu0
      %v6914 = vadd.f32 %v6715, %v6913
      %v6915 = vpop.f32.mrf.mxu0
      %v6916 = vadd.f32 %v6715, %v6915
      %6917 = vmatmul.bf16.gmra.mxu0 %v6629
      %v6918 = vpop.f32.mrf.mxu0
      %v6919 = vadd.f32 %v6715, %v6918
      %v6920 = vpop.f32.mrf.mxu0
      %v6921 = vadd.f32 %v6715, %v6920
      %6922 = vmatmul.bf16.gmra.mxu0 %v6631
      %v6923 = vpop.f32.mrf.mxu0
      %v6924 = vadd.f32 %v6715, %v6923
      %v6925 = vpop.f32.mrf.mxu0
      %v6926 = vadd.f32 %v6715, %v6925
      %6927 = vmatmul.bf16.gmra.mxu0 %v6633
      %v6928 = vpop.f32.mrf.mxu0
      %v6929 = vadd.f32 %v6715, %v6928
      %v6930 = vpop.f32.mrf.mxu0
      %v6931 = vadd.f32 %v6715, %v6930
      %6932 = vmatmul.bf16.gmra.mxu0 %v6635
      %v6933 = vpop.f32.mrf.mxu0
      %v6934 = vadd.f32 %v6715, %v6933
      %v6935 = vpop.f32.mrf.mxu0
      %v6936 = vadd.f32 %v6715, %v6935
      %6937 = vmatmul.bf16.gmra.mxu0 %v6637
      %v6938 = vpop.f32.mrf.mxu0
      %v6939 = vadd.f32 %v6715, %v6938
      %v6940 = vpop.f32.mrf.mxu0
      %v6941 = vadd.f32 %v6715, %v6940
      %6942 = vmatmul.bf16.gmra.mxu0 %v6639
      %v6943 = vpop.f32.mrf.mxu0
      %v6944 = vadd.f32 %v6715, %v6943
      %v6945 = vpop.f32.mrf.mxu0
      %v6946 = vadd.f32 %v6715, %v6945
      %6947 = vmatmul.bf16.gmra.mxu0 %v6641
      %v6948 = vpop.f32.mrf.mxu0
      %v6949 = vadd.f32 %v6715, %v6948
      %v6950 = vpop.f32.mrf.mxu0
      %v6951 = vadd.f32 %v6715, %v6950
      %6952 = vmatmul.bf16.gmra.mxu0 %v6643
      %v6953 = vpop.f32.mrf.mxu0
      %v6954 = vadd.f32 %v6715, %v6953
      %v6955 = vpop.f32.mrf.mxu0
      %v6956 = vadd.f32 %v6715, %v6955
      %6957 = vmatmul.bf16.gmra.mxu0 %v6645
      %v6958 = vpop.f32.mrf.mxu0
      %v6959 = vadd.f32 %v6715, %v6958
      %v6960 = vpop.f32.mrf.mxu0
      %v6961 = vadd.f32 %v6715, %v6960
      %6962 = vmatmul.bf16.gmra.mxu0 %v6647
      %v6963 = vpop.f32.mrf.mxu0
      %v6964 = vadd.f32 %v6715, %v6963
      %v6965 = vpop.f32.mrf.mxu0
      %v6966 = vadd.f32 %v6715, %v6965
      %6967 = vmatmul.bf16.gmra.mxu0 %v6649
      %v6968 = vpop.f32.mrf.mxu0
      %v6969 = vadd.f32 %v6715, %v6968
      %v6970 = vpop.f32.mrf.mxu0
      %v6971 = vadd.f32 %v6715, %v6970
      %6972 = vmatmul.bf16.gmra.mxu0 %v6651
      %v6973 = vpop.f32.mrf.mxu0
      %v6974 = vadd.f32 %v6715, %v6973
      %v6975 = vpop.f32.mrf.mxu0
      %v6976 = vadd.f32 %v6715, %v6975
      %6977 = vmatmul.bf16.gmra.mxu0 %v6653
      %v6978 = vpop.f32.mrf.mxu0
      %v6979 = vadd.f32 %v6715, %v6978
      %v6980 = vpop.f32.mrf.mxu0
      %v6981 = vadd.f32 %v6715, %v6980
      %6982 = vmatmul.bf16.gmra.mxu0 %v6655
      %v6983 = vpop.f32.mrf.mxu0
      %v6984 = vadd.f32 %v6715, %v6983
      %v6985 = vpop.f32.mrf.mxu0
      %v6986 = vadd.f32 %v6715, %v6985
      %6987 = vmatmul.bf16.gmra.mxu0 %v6657
      %v6988 = vpop.f32.mrf.mxu0
      %v6989 = vadd.f32 %v6715, %v6988
      %v6990 = vpop.f32.mrf.mxu0
      %v6991 = vadd.f32 %v6715, %v6990
      %6992 = vmatmul.bf16.gmra.mxu0 %v6659
      %v6993 = vpop.f32.mrf.mxu0
      %v6994 = vadd.f32 %v6715, %v6993
      %v6995 = vpop.f32.mrf.mxu0
      %v6996 = vadd.f32 %v6715, %v6995
      %6997 = vmatmul.bf16.gmra.mxu0 %v6661
      %v6998 = vpop.f32.mrf.mxu0
      %v6999 = vadd.f32 %v6715, %v6998
      %v7000 = vpop.f32.mrf.mxu0
      %v7001 = vadd.f32 %v6715, %v7000
      %7002 = vmatmul.bf16.gmra.mxu0 %v6663
      %v7003 = vpop.f32.mrf.mxu0
      %v7004 = vadd.f32 %v6715, %v7003
      %v7005 = vpop.f32.mrf.mxu0
      %v7006 = vadd.f32 %v6715, %v7005
      %7007 = vmatmul.bf16.gmra.mxu0 %v6665
      %v7008 = vpop.f32.mrf.mxu0
      %v7009 = vadd.f32 %v6715, %v7008
      %v7010 = vpop.f32.mrf.mxu0
      %v7011 = vadd.f32 %v6715, %v7010
      %7012 = vmatmul.bf16.gmra.mxu0 %v6667
      %v7013 = vpop.f32.mrf.mxu0
      %v7014 = vadd.f32 %v6715, %v7013
      %v7015 = vpop.f32.mrf.mxu0
      %v7016 = vadd.f32 %v6715, %v7015
      %7017 = vmatmul.bf16.gmra.mxu0 %v6669
      %v7018 = vpop.f32.mrf.mxu0
      %v7019 = vadd.f32 %v6715, %v7018
      %v7020 = vpop.f32.mrf.mxu0
      %v7021 = vadd.f32 %v6715, %v7020
      %7022 = vmatmul.bf16.gmra.mxu0 %v6671
      %v7023 = vpop.f32.mrf.mxu0
      %v7024 = vadd.f32 %v6715, %v7023
      %v7025 = vpop.f32.mrf.mxu0
      %v7026 = vadd.f32 %v6715, %v7025
      %7027 = vmatmul.bf16.gmra.mxu0 %v6673
      %v7028 = vpop.f32.mrf.mxu0
      %v7029 = vadd.f32 %v6715, %v7028
      %v7030 = vpop.f32.mrf.mxu0
      %v7031 = vadd.f32 %v6715, %v7030
      %7032 = vmatmul.bf16.gmra.mxu0 %v6675
      %v7033 = vpop.f32.mrf.mxu0
      %v7034 = vadd.f32 %v6715, %v7033
      %v7035 = vpop.f32.mrf.mxu0
      %v7036 = vadd.f32 %v6715, %v7035
      %7037 = vmatmul.bf16.gmra.mxu0 %v6677
      %v7038 = vpop.f32.mrf.mxu0
      %v7039 = vadd.f32 %v6715, %v7038
      %v7040 = vpop.f32.mrf.mxu0
      %v7041 = vadd.f32 %v6715, %v7040
      %7042 = vmatmul.bf16.gmra.mxu0 %v6679
      %v7043 = vpop.f32.mrf.mxu0
      %v7044 = vadd.f32 %v6715, %v7043
      %v7045 = vpop.f32.mrf.mxu0
      %v7046 = vadd.f32 %v6715, %v7045
      %7047 = vdwg.mxu0
      %7048 = vmatpush.bf16.msra.mxu0 %v6845
      %7049 = vmatpush.bf16.msra.mxu0 %v6843
      %7050 = vmatpush.bf16.msra.mxu0 %v6841
      %7051 = vmatpush.bf16.msra.mxu0 %v6839
      %7052 = vmatpush.bf16.msra.mxu0 %v6837
      %7053 = vmatpush.bf16.msra.mxu0 %v6835
      %7054 = vmatpush.bf16.msra.mxu0 %v6833
      %7055 = vmatpush.bf16.msra.mxu0 %v6831
      %7056 = vmatmul.bf16.gmra.mxu0 %v6618
      %v7057 = vpop.f32.mrf.mxu0
      %v7058 = vadd.f32 %v6889, %v7057
      %v7059 = vpop.f32.mrf.mxu0
      %v7060 = vadd.f32 %v6891, %v7059
      %7061 = vmatmul.bf16.gmra.mxu0 %v6620
      %v7062 = vpop.f32.mrf.mxu0
      %v7063 = vadd.f32 %v6894, %v7062
      %v7064 = vpop.f32.mrf.mxu0
      %v7065 = vadd.f32 %v6896, %v7064
      %7066 = vmatmul.bf16.gmra.mxu0 %v6622
      %v7067 = vpop.f32.mrf.mxu0
      %v7068 = vadd.f32 %v6899, %v7067
      %v7069 = vpop.f32.mrf.mxu0
      %v7070 = vadd.f32 %v6901, %v7069
      %7071 = vmatmul.bf16.gmra.mxu0 %v6624
      %v7072 = vpop.f32.mrf.mxu0
      %v7073 = vadd.f32 %v6904, %v7072
      %v7074 = vpop.f32.mrf.mxu0
      %v7075 = vadd.f32 %v6906, %v7074
      %7076 = vmatmul.bf16.gmra.mxu0 %v6626
      %v7077 = vpop.f32.mrf.mxu0
      %v7078 = vadd.f32 %v6909, %v7077
      %v7079 = vpop.f32.mrf.mxu0
      %v7080 = vadd.f32 %v6911, %v7079
      %7081 = vmatmul.bf16.gmra.mxu0 %v6628
      %v7082 = vpop.f32.mrf.mxu0
      %v7083 = vadd.f32 %v6914, %v7082
      %v7084 = vpop.f32.mrf.mxu0
      %v7085 = vadd.f32 %v6916, %v7084
      %7086 = vmatmul.bf16.gmra.mxu0 %v6630
      %v7087 = vpop.f32.mrf.mxu0
      %v7088 = vadd.f32 %v6919, %v7087
      %v7089 = vpop.f32.mrf.mxu0
      %v7090 = vadd.f32 %v6921, %v7089
      %7091 = vmatmul.bf16.gmra.mxu0 %v6632
      %v7092 = vpop.f32.mrf.mxu0
      %v7093 = vadd.f32 %v6924, %v7092
      %v7094 = vpop.f32.mrf.mxu0
      %v7095 = vadd.f32 %v6926, %v7094
      %7096 = vmatmul.bf16.gmra.mxu0 %v6634
      %v7097 = vpop.f32.mrf.mxu0
      %v7098 = vadd.f32 %v6929, %v7097
      %v7099 = vpop.f32.mrf.mxu0
      %v7100 = vadd.f32 %v6931, %v7099
      %7101 = vmatmul.bf16.gmra.mxu0 %v6636
      %v7102 = vpop.f32.mrf.mxu0
      %v7103 = vadd.f32 %v6934, %v7102
      %v7104 = vpop.f32.mrf.mxu0
      %v7105 = vadd.f32 %v6936, %v7104
      %7106 = vmatmul.bf16.gmra.mxu0 %v6638
      %v7107 = vpop.f32.mrf.mxu0
      %v7108 = vadd.f32 %v6939, %v7107
      %v7109 = vpop.f32.mrf.mxu0
      %v7110 = vadd.f32 %v6941, %v7109
      %7111 = vmatmul.bf16.gmra.mxu0 %v6640
      %v7112 = vpop.f32.mrf.mxu0
      %v7113 = vadd.f32 %v6944, %v7112
      %v7114 = vpop.f32.mrf.mxu0
      %v7115 = vadd.f32 %v6946, %v7114
      %7116 = vmatmul.bf16.gmra.mxu0 %v6642
      %v7117 = vpop.f32.mrf.mxu0
      %v7118 = vadd.f32 %v6949, %v7117
      %v7119 = vpop.f32.mrf.mxu0
      %v7120 = vadd.f32 %v6951, %v7119
      %7121 = vmatmul.bf16.gmra.mxu0 %v6644
      %v7122 = vpop.f32.mrf.mxu0
      %v7123 = vadd.f32 %v6954, %v7122
      %v7124 = vpop.f32.mrf.mxu0
      %v7125 = vadd.f32 %v6956, %v7124
      %7126 = vmatmul.bf16.gmra.mxu0 %v6646
      %v7127 = vpop.f32.mrf.mxu0
      %v7128 = vadd.f32 %v6959, %v7127
      %v7129 = vpop.f32.mrf.mxu0
      %v7130 = vadd.f32 %v6961, %v7129
      %7131 = vmatmul.bf16.gmra.mxu0 %v6648
      %v7132 = vpop.f32.mrf.mxu0
      %v7133 = vadd.f32 %v6964, %v7132
      %v7134 = vpop.f32.mrf.mxu0
      %v7135 = vadd.f32 %v6966, %v7134
      %7136 = vmatmul.bf16.gmra.mxu0 %v6650
      %v7137 = vpop.f32.mrf.mxu0
      %v7138 = vadd.f32 %v6969, %v7137
      %v7139 = vpop.f32.mrf.mxu0
      %v7140 = vadd.f32 %v6971, %v7139
      %7141 = vmatmul.bf16.gmra.mxu0 %v6652
      %v7142 = vpop.f32.mrf.mxu0
      %v7143 = vadd.f32 %v6974, %v7142
      %v7144 = vpop.f32.mrf.mxu0
      %v7145 = vadd.f32 %v6976, %v7144
      %7146 = vmatmul.bf16.gmra.mxu0 %v6654
      %v7147 = vpop.f32.mrf.mxu0
      %v7148 = vadd.f32 %v6979, %v7147
      %v7149 = vpop.f32.mrf.mxu0
      %v7150 = vadd.f32 %v6981, %v7149
      %7151 = vmatmul.bf16.gmra.mxu0 %v6656
      %v7152 = vpop.f32.mrf.mxu0
      %v7153 = vadd.f32 %v6984, %v7152
      %v7154 = vpop.f32.mrf.mxu0
      %v7155 = vadd.f32 %v6986, %v7154
      %7156 = vmatmul.bf16.gmra.mxu0 %v6658
      %v7157 = vpop.f32.mrf.mxu0
      %v7158 = vadd.f32 %v6989, %v7157
      %v7159 = vpop.f32.mrf.mxu0
      %v7160 = vadd.f32 %v6991, %v7159
      %7161 = vmatmul.bf16.gmra.mxu0 %v6660
      %v7162 = vpop.f32.mrf.mxu0
      %v7163 = vadd.f32 %v6994, %v7162
      %v7164 = vpop.f32.mrf.mxu0
      %v7165 = vadd.f32 %v6996, %v7164
      %7166 = vmatmul.bf16.gmra.mxu0 %v6662
      %v7167 = vpop.f32.mrf.mxu0
      %v7168 = vadd.f32 %v6999, %v7167
      %v7169 = vpop.f32.mrf.mxu0
      %v7170 = vadd.f32 %v7001, %v7169
      %7171 = vmatmul.bf16.gmra.mxu0 %v6664
      %v7172 = vpop.f32.mrf.mxu0
      %v7173 = vadd.f32 %v7004, %v7172
      %v7174 = vpop.f32.mrf.mxu0
      %v7175 = vadd.f32 %v7006, %v7174
      %7176 = vmatmul.bf16.gmra.mxu0 %v6666
      %v7177 = vpop.f32.mrf.mxu0
      %v7178 = vadd.f32 %v7009, %v7177
      %v7179 = vpop.f32.mrf.mxu0
      %v7180 = vadd.f32 %v7011, %v7179
      %7181 = vmatmul.bf16.gmra.mxu0 %v6668
      %v7182 = vpop.f32.mrf.mxu0
      %v7183 = vadd.f32 %v7014, %v7182
      %v7184 = vpop.f32.mrf.mxu0
      %v7185 = vadd.f32 %v7016, %v7184
      %7186 = vmatmul.bf16.gmra.mxu0 %v6670
      %v7187 = vpop.f32.mrf.mxu0
      %v7188 = vadd.f32 %v7019, %v7187
      %v7189 = vpop.f32.mrf.mxu0
      %v7190 = vadd.f32 %v7021, %v7189
      %7191 = vmatmul.bf16.gmra.mxu0 %v6672
      %v7192 = vpop.f32.mrf.mxu0
      %v7193 = vadd.f32 %v7024, %v7192
      %v7194 = vpop.f32.mrf.mxu0
      %v7195 = vadd.f32 %v7026, %v7194
      %7196 = vmatmul.bf16.gmra.mxu0 %v6674
      %v7197 = vpop.f32.mrf.mxu0
      %v7198 = vadd.f32 %v7029, %v7197
      %v7199 = vpop.f32.mrf.mxu0
      %v7200 = vadd.f32 %v7031, %v7199
      %7201 = vmatmul.bf16.gmra.mxu0 %v6676
      %v7202 = vpop.f32.mrf.mxu0
      %v7203 = vadd.f32 %v7034, %v7202
      %v7204 = vpop.f32.mrf.mxu0
      %v7205 = vadd.f32 %v7036, %v7204
      %7206 = vmatmul.bf16.gmra.mxu0 %v6678
      %v7207 = vpop.f32.mrf.mxu0
      %v7208 = vadd.f32 %v7039, %v7207
      %v7209 = vpop.f32.mrf.mxu0
      %v7210 = vadd.f32 %v7041, %v7209
      %7211 = vmatmul.bf16.gmra.mxu0 %v6680
      %v7212 = vpop.f32.mrf.mxu0
      %v7213 = vadd.f32 %v7044, %v7212
      %v7214 = vpop.f32.mrf.mxu0
      %v7215 = vadd.f32 %v7046, %v7214
      %7216 = vdwg.mxu0
      %7217 = vmatpush.bf16.msra.mxu0 %v6830
      %7218 = vmatpush.bf16.msra.mxu0 %v6828
      %7219 = vmatpush.bf16.msra.mxu0 %v6826
      %7220 = vmatpush.bf16.msra.mxu0 %v6824
      %7221 = vmatpush.bf16.msra.mxu0 %v6822
      %7222 = vmatpush.bf16.msra.mxu0 %v6820
      %7223 = vmatpush.bf16.msra.mxu0 %v6818
      %7224 = vmatpush.bf16.msra.mxu0 %v6816
      %7225 = vmatmul.bf16.gmra.mxu0 %v6617
      %v7226 = vpop.f32.mrf.mxu0
      %v7227 = vadd.f32 %v6716, %v7226
      %v7228 = vpop.f32.mrf.mxu0
      %v7229 = vadd.f32 %v6716, %v7228
      %7230 = vmatmul.bf16.gmra.mxu0 %v6619
      %v7231 = vpop.f32.mrf.mxu0
      %v7232 = vadd.f32 %v6716, %v7231
      %v7233 = vpop.f32.mrf.mxu0
      %v7234 = vadd.f32 %v6716, %v7233
      %7235 = vmatmul.bf16.gmra.mxu0 %v6621
      %v7236 = vpop.f32.mrf.mxu0
      %v7237 = vadd.f32 %v6716, %v7236
      %v7238 = vpop.f32.mrf.mxu0
      %v7239 = vadd.f32 %v6716, %v7238
      %7240 = vmatmul.bf16.gmra.mxu0 %v6623
      %v7241 = vpop.f32.mrf.mxu0
      %v7242 = vadd.f32 %v6716, %v7241
      %v7243 = vpop.f32.mrf.mxu0
      %v7244 = vadd.f32 %v6716, %v7243
      %7245 = vmatmul.bf16.gmra.mxu0 %v6625
      %v7246 = vpop.f32.mrf.mxu0
      %v7247 = vadd.f32 %v6716, %v7246
      %v7248 = vpop.f32.mrf.mxu0
      %v7249 = vadd.f32 %v6716, %v7248
      %7250 = vmatmul.bf16.gmra.mxu0 %v6627
      %v7251 = vpop.f32.mrf.mxu0
      %v7252 = vadd.f32 %v6716, %v7251
      %v7253 = vpop.f32.mrf.mxu0
      %v7254 = vadd.f32 %v6716, %v7253
      %7255 = vmatmul.bf16.gmra.mxu0 %v6629
      %v7256 = vpop.f32.mrf.mxu0
      %v7257 = vadd.f32 %v6716, %v7256
      %v7258 = vpop.f32.mrf.mxu0
      %v7259 = vadd.f32 %v6716, %v7258
      %7260 = vmatmul.bf16.gmra.mxu0 %v6631
      %v7261 = vpop.f32.mrf.mxu0
      %v7262 = vadd.f32 %v6716, %v7261
      %v7263 = vpop.f32.mrf.mxu0
      %v7264 = vadd.f32 %v6716, %v7263
      %7265 = vmatmul.bf16.gmra.mxu0 %v6633
      %v7266 = vpop.f32.mrf.mxu0
      %v7267 = vadd.f32 %v6716, %v7266
      %v7268 = vpop.f32.mrf.mxu0
      %v7269 = vadd.f32 %v6716, %v7268
      %7270 = vmatmul.bf16.gmra.mxu0 %v6635
      %v7271 = vpop.f32.mrf.mxu0
      %v7272 = vadd.f32 %v6716, %v7271
      %v7273 = vpop.f32.mrf.mxu0
      %v7274 = vadd.f32 %v6716, %v7273
      %7275 = vmatmul.bf16.gmra.mxu0 %v6637
      %v7276 = vpop.f32.mrf.mxu0
      %v7277 = vadd.f32 %v6716, %v7276
      %v7278 = vpop.f32.mrf.mxu0
      %v7279 = vadd.f32 %v6716, %v7278
      %7280 = vmatmul.bf16.gmra.mxu0 %v6639
      %v7281 = vpop.f32.mrf.mxu0
      %v7282 = vadd.f32 %v6716, %v7281
      %v7283 = vpop.f32.mrf.mxu0
      %v7284 = vadd.f32 %v6716, %v7283
      %7285 = vmatmul.bf16.gmra.mxu0 %v6641
      %v7286 = vpop.f32.mrf.mxu0
      %v7287 = vadd.f32 %v6716, %v7286
      %v7288 = vpop.f32.mrf.mxu0
      %v7289 = vadd.f32 %v6716, %v7288
      %7290 = vmatmul.bf16.gmra.mxu0 %v6643
      %v7291 = vpop.f32.mrf.mxu0
      %v7292 = vadd.f32 %v6716, %v7291
      %v7293 = vpop.f32.mrf.mxu0
      %v7294 = vadd.f32 %v6716, %v7293
      %7295 = vmatmul.bf16.gmra.mxu0 %v6645
      %v7296 = vpop.f32.mrf.mxu0
      %v7297 = vadd.f32 %v6716, %v7296
      %v7298 = vpop.f32.mrf.mxu0
      %v7299 = vadd.f32 %v6716, %v7298
      %7300 = vmatmul.bf16.gmra.mxu0 %v6647
      %v7301 = vpop.f32.mrf.mxu0
      %v7302 = vadd.f32 %v6716, %v7301
      %v7303 = vpop.f32.mrf.mxu0
      %v7304 = vadd.f32 %v6716, %v7303
      %7305 = vmatmul.bf16.gmra.mxu0 %v6649
      %v7306 = vpop.f32.mrf.mxu0
      %v7307 = vadd.f32 %v6716, %v7306
      %v7308 = vpop.f32.mrf.mxu0
      %v7309 = vadd.f32 %v6716, %v7308
      %7310 = vmatmul.bf16.gmra.mxu0 %v6651
      %v7311 = vpop.f32.mrf.mxu0
      %v7312 = vadd.f32 %v6716, %v7311
      %v7313 = vpop.f32.mrf.mxu0
      %v7314 = vadd.f32 %v6716, %v7313
      %7315 = vmatmul.bf16.gmra.mxu0 %v6653
      %v7316 = vpop.f32.mrf.mxu0
      %v7317 = vadd.f32 %v6716, %v7316
      %v7318 = vpop.f32.mrf.mxu0
      %v7319 = vadd.f32 %v6716, %v7318
      %7320 = vmatmul.bf16.gmra.mxu0 %v6655
      %v7321 = vpop.f32.mrf.mxu0
      %v7322 = vadd.f32 %v6716, %v7321
      %v7323 = vpop.f32.mrf.mxu0
      %v7324 = vadd.f32 %v6716, %v7323
      %7325 = vmatmul.bf16.gmra.mxu0 %v6657
      %v7326 = vpop.f32.mrf.mxu0
      %v7327 = vadd.f32 %v6716, %v7326
      %v7328 = vpop.f32.mrf.mxu0
      %v7329 = vadd.f32 %v6716, %v7328
      %7330 = vmatmul.bf16.gmra.mxu0 %v6659
      %v7331 = vpop.f32.mrf.mxu0
      %v7332 = vadd.f32 %v6716, %v7331
      %v7333 = vpop.f32.mrf.mxu0
      %v7334 = vadd.f32 %v6716, %v7333
      %7335 = vmatmul.bf16.gmra.mxu0 %v6661
      %v7336 = vpop.f32.mrf.mxu0
      %v7337 = vadd.f32 %v6716, %v7336
      %v7338 = vpop.f32.mrf.mxu0
      %v7339 = vadd.f32 %v6716, %v7338
      %7340 = vmatmul.bf16.gmra.mxu0 %v6663
      %v7341 = vpop.f32.mrf.mxu0
      %v7342 = vadd.f32 %v6716, %v7341
      %v7343 = vpop.f32.mrf.mxu0
      %v7344 = vadd.f32 %v6716, %v7343
      %7345 = vmatmul.bf16.gmra.mxu0 %v6665
      %v7346 = vpop.f32.mrf.mxu0
      %v7347 = vadd.f32 %v6716, %v7346
      %v7348 = vpop.f32.mrf.mxu0
      %v7349 = vadd.f32 %v6716, %v7348
      %7350 = vmatmul.bf16.gmra.mxu0 %v6667
      %v7351 = vpop.f32.mrf.mxu0
      %v7352 = vadd.f32 %v6716, %v7351
      %v7353 = vpop.f32.mrf.mxu0
      %v7354 = vadd.f32 %v6716, %v7353
      %7355 = vmatmul.bf16.gmra.mxu0 %v6669
      %v7356 = vpop.f32.mrf.mxu0
      %v7357 = vadd.f32 %v6716, %v7356
      %v7358 = vpop.f32.mrf.mxu0
      %v7359 = vadd.f32 %v6716, %v7358
      %7360 = vmatmul.bf16.gmra.mxu0 %v6671
      %v7361 = vpop.f32.mrf.mxu0
      %v7362 = vadd.f32 %v6716, %v7361
      %v7363 = vpop.f32.mrf.mxu0
      %v7364 = vadd.f32 %v6716, %v7363
      %7365 = vmatmul.bf16.gmra.mxu0 %v6673
      %v7366 = vpop.f32.mrf.mxu0
      %v7367 = vadd.f32 %v6716, %v7366
      %v7368 = vpop.f32.mrf.mxu0
      %v7369 = vadd.f32 %v6716, %v7368
      %7370 = vmatmul.bf16.gmra.mxu0 %v6675
      %v7371 = vpop.f32.mrf.mxu0
      %v7372 = vadd.f32 %v6716, %v7371
      %v7373 = vpop.f32.mrf.mxu0
      %v7374 = vadd.f32 %v6716, %v7373
      %7375 = vmatmul.bf16.gmra.mxu0 %v6677
      %v7376 = vpop.f32.mrf.mxu0
      %v7377 = vadd.f32 %v6716, %v7376
      %v7378 = vpop.f32.mrf.mxu0
      %v7379 = vadd.f32 %v6716, %v7378
      %7380 = vmatmul.bf16.gmra.mxu0 %v6679
      %v7381 = vpop.f32.mrf.mxu0
      %v7382 = vadd.f32 %v6716, %v7381
      %v7383 = vpop.f32.mrf.mxu0
      %v7384 = vadd.f32 %v6716, %v7383
      %7385 = vdwg.mxu0
      %7386 = vmatpush.bf16.msra.mxu0 %v6846
      %7387 = vmatpush.bf16.msra.mxu0 %v6844
      %7388 = vmatpush.bf16.msra.mxu0 %v6842
      %7389 = vmatpush.bf16.msra.mxu0 %v6840
      %7390 = vmatpush.bf16.msra.mxu0 %v6838
      %7391 = vmatpush.bf16.msra.mxu0 %v6836
      %7392 = vmatpush.bf16.msra.mxu0 %v6834
      %7393 = vmatpush.bf16.msra.mxu0 %v6832
      %7394 = vmatmul.bf16.gmra.mxu0 %v6618
      %v7395 = vpop.f32.mrf.mxu0
      %v7396 = vadd.f32 %v7227, %v7395
      %v7397 = vpop.f32.mrf.mxu0
      %v7398 = vadd.f32 %v7229, %v7397
      %7399 = vmatmul.bf16.gmra.mxu0 %v6620
      %v7400 = vpop.f32.mrf.mxu0
      %v7401 = vadd.f32 %v7232, %v7400
      %v7402 = vpop.f32.mrf.mxu0
      %v7403 = vadd.f32 %v7234, %v7402
      %7404 = vmatmul.bf16.gmra.mxu0 %v6622
      %v7405 = vpop.f32.mrf.mxu0
      %v7406 = vadd.f32 %v7237, %v7405
      %v7407 = vpop.f32.mrf.mxu0
      %v7408 = vadd.f32 %v7239, %v7407
      %7409 = vmatmul.bf16.gmra.mxu0 %v6624
      %v7410 = vpop.f32.mrf.mxu0
      %v7411 = vadd.f32 %v7242, %v7410
      %v7412 = vpop.f32.mrf.mxu0
      %v7413 = vadd.f32 %v7244, %v7412
      %7414 = vmatmul.bf16.gmra.mxu0 %v6626
      %v7415 = vpop.f32.mrf.mxu0
      %v7416 = vadd.f32 %v7247, %v7415
      %v7417 = vpop.f32.mrf.mxu0
      %v7418 = vadd.f32 %v7249, %v7417
      %7419 = vmatmul.bf16.gmra.mxu0 %v6628
      %v7420 = vpop.f32.mrf.mxu0
      %v7421 = vadd.f32 %v7252, %v7420
      %v7422 = vpop.f32.mrf.mxu0
      %v7423 = vadd.f32 %v7254, %v7422
      %7424 = vmatmul.bf16.gmra.mxu0 %v6630
      %v7425 = vpop.f32.mrf.mxu0
      %v7426 = vadd.f32 %v7257, %v7425
      %v7427 = vpop.f32.mrf.mxu0
      %v7428 = vadd.f32 %v7259, %v7427
      %7429 = vmatmul.bf16.gmra.mxu0 %v6632
      %v7430 = vpop.f32.mrf.mxu0
      %v7431 = vadd.f32 %v7262, %v7430
      %v7432 = vpop.f32.mrf.mxu0
      %v7433 = vadd.f32 %v7264, %v7432
      %7434 = vmatmul.bf16.gmra.mxu0 %v6634
      %v7435 = vpop.f32.mrf.mxu0
      %v7436 = vadd.f32 %v7267, %v7435
      %v7437 = vpop.f32.mrf.mxu0
      %v7438 = vadd.f32 %v7269, %v7437
      %7439 = vmatmul.bf16.gmra.mxu0 %v6636
      %v7440 = vpop.f32.mrf.mxu0
      %v7441 = vadd.f32 %v7272, %v7440
      %v7442 = vpop.f32.mrf.mxu0
      %v7443 = vadd.f32 %v7274, %v7442
      %7444 = vmatmul.bf16.gmra.mxu0 %v6638
      %v7445 = vpop.f32.mrf.mxu0
      %v7446 = vadd.f32 %v7277, %v7445
      %v7447 = vpop.f32.mrf.mxu0
      %v7448 = vadd.f32 %v7279, %v7447
      %7449 = vmatmul.bf16.gmra.mxu0 %v6640
      %v7450 = vpop.f32.mrf.mxu0
      %v7451 = vadd.f32 %v7282, %v7450
      %v7452 = vpop.f32.mrf.mxu0
      %v7453 = vadd.f32 %v7284, %v7452
      %7454 = vmatmul.bf16.gmra.mxu0 %v6642
      %v7455 = vpop.f32.mrf.mxu0
      %v7456 = vadd.f32 %v7287, %v7455
      %v7457 = vpop.f32.mrf.mxu0
      %v7458 = vadd.f32 %v7289, %v7457
      %7459 = vmatmul.bf16.gmra.mxu0 %v6644
      %v7460 = vpop.f32.mrf.mxu0
      %v7461 = vadd.f32 %v7292, %v7460
      %v7462 = vpop.f32.mrf.mxu0
      %v7463 = vadd.f32 %v7294, %v7462
      %7464 = vmatmul.bf16.gmra.mxu0 %v6646
      %v7465 = vpop.f32.mrf.mxu0
      %v7466 = vadd.f32 %v7297, %v7465
      %v7467 = vpop.f32.mrf.mxu0
      %v7468 = vadd.f32 %v7299, %v7467
      %7469 = vmatmul.bf16.gmra.mxu0 %v6648
      %v7470 = vpop.f32.mrf.mxu0
      %v7471 = vadd.f32 %v7302, %v7470
      %v7472 = vpop.f32.mrf.mxu0
      %v7473 = vadd.f32 %v7304, %v7472
      %7474 = vmatmul.bf16.gmra.mxu0 %v6650
      %v7475 = vpop.f32.mrf.mxu0
      %v7476 = vadd.f32 %v7307, %v7475
      %v7477 = vpop.f32.mrf.mxu0
      %v7478 = vadd.f32 %v7309, %v7477
      %7479 = vmatmul.bf16.gmra.mxu0 %v6652
      %v7480 = vpop.f32.mrf.mxu0
      %v7481 = vadd.f32 %v7312, %v7480
      %v7482 = vpop.f32.mrf.mxu0
      %v7483 = vadd.f32 %v7314, %v7482
      %7484 = vmatmul.bf16.gmra.mxu0 %v6654
      %v7485 = vpop.f32.mrf.mxu0
      %v7486 = vadd.f32 %v7317, %v7485
      %v7487 = vpop.f32.mrf.mxu0
      %v7488 = vadd.f32 %v7319, %v7487
      %7489 = vmatmul.bf16.gmra.mxu0 %v6656
      %v7490 = vpop.f32.mrf.mxu0
      %v7491 = vadd.f32 %v7322, %v7490
      %v7492 = vpop.f32.mrf.mxu0
      %v7493 = vadd.f32 %v7324, %v7492
      %7494 = vmatmul.bf16.gmra.mxu0 %v6658
      %v7495 = vpop.f32.mrf.mxu0
      %v7496 = vadd.f32 %v7327, %v7495
      %v7497 = vpop.f32.mrf.mxu0
      %v7498 = vadd.f32 %v7329, %v7497
      %7499 = vmatmul.bf16.gmra.mxu0 %v6660
      %v7500 = vpop.f32.mrf.mxu0
      %v7501 = vadd.f32 %v7332, %v7500
      %v7502 = vpop.f32.mrf.mxu0
      %v7503 = vadd.f32 %v7334, %v7502
      %7504 = vmatmul.bf16.gmra.mxu0 %v6662
      %v7505 = vpop.f32.mrf.mxu0
      %v7506 = vadd.f32 %v7337, %v7505
      %v7507 = vpop.f32.mrf.mxu0
      %v7508 = vadd.f32 %v7339, %v7507
      %7509 = vmatmul.bf16.gmra.mxu0 %v6664
      %v7510 = vpop.f32.mrf.mxu0
      %v7511 = vadd.f32 %v7342, %v7510
      %v7512 = vpop.f32.mrf.mxu0
      %v7513 = vadd.f32 %v7344, %v7512
      %7514 = vmatmul.bf16.gmra.mxu0 %v6666
      %v7515 = vpop.f32.mrf.mxu0
      %v7516 = vadd.f32 %v7347, %v7515
      %v7517 = vpop.f32.mrf.mxu0
      %v7518 = vadd.f32 %v7349, %v7517
      %7519 = vmatmul.bf16.gmra.mxu0 %v6668
      %v7520 = vpop.f32.mrf.mxu0
      %v7521 = vadd.f32 %v7352, %v7520
      %v7522 = vpop.f32.mrf.mxu0
      %v7523 = vadd.f32 %v7354, %v7522
      %7524 = vmatmul.bf16.gmra.mxu0 %v6670
      %v7525 = vpop.f32.mrf.mxu0
      %v7526 = vadd.f32 %v7357, %v7525
      %v7527 = vpop.f32.mrf.mxu0
      %v7528 = vadd.f32 %v7359, %v7527
      %7529 = vmatmul.bf16.gmra.mxu0 %v6672
      %v7530 = vpop.f32.mrf.mxu0
      %v7531 = vadd.f32 %v7362, %v7530
      %v7532 = vpop.f32.mrf.mxu0
      %v7533 = vadd.f32 %v7364, %v7532
      %7534 = vmatmul.bf16.gmra.mxu0 %v6674
      %v7535 = vpop.f32.mrf.mxu0
      %v7536 = vadd.f32 %v7367, %v7535
      %v7537 = vpop.f32.mrf.mxu0
      %v7538 = vadd.f32 %v7369, %v7537
      %7539 = vmatmul.bf16.gmra.mxu0 %v6676
      %v7540 = vpop.f32.mrf.mxu0
      %v7541 = vadd.f32 %v7372, %v7540
      %v7542 = vpop.f32.mrf.mxu0
      %v7543 = vadd.f32 %v7374, %v7542
      %7544 = vmatmul.bf16.gmra.mxu0 %v6678
      %v7545 = vpop.f32.mrf.mxu0
      %v7546 = vadd.f32 %v7377, %v7545
      %v7547 = vpop.f32.mrf.mxu0
      %v7548 = vadd.f32 %v7379, %v7547
      %7549 = vmatmul.bf16.gmra.mxu0 %v6680
      %v7550 = vpop.f32.mrf.mxu0
      %v7551 = vadd.f32 %v7382, %v7550
      %v7552 = vpop.f32.mrf.mxu0
      %v7553 = vadd.f32 %v7384, %v7552
      %7554 = vdwg.mxu0
      %vm7555 = vcmp.gt.f32.partialorder %v7058, 0.0
      %vm7556 = vcmp.gt.f32.partialorder %v7396, 0.0
      %vm7557 = vcmp.gt.f32.partialorder %v7060, 0.0
      %vm7558 = vcmp.gt.f32.partialorder %v7398, 0.0
      %vm7559 = vcmp.gt.f32.partialorder %v7063, 0.0
      %vm7560 = vcmp.gt.f32.partialorder %v7401, 0.0
      %vm7561 = vcmp.gt.f32.partialorder %v7065, 0.0
      %vm7562 = vcmp.gt.f32.partialorder %v7403, 0.0
      %vm7563 = vcmp.gt.f32.partialorder %v7068, 0.0
      %vm7564 = vcmp.gt.f32.partialorder %v7406, 0.0
      %vm7565 = vcmp.gt.f32.partialorder %v7070, 0.0
      %vm7566 = vcmp.gt.f32.partialorder %v7408, 0.0
      %vm7567 = vcmp.gt.f32.partialorder %v7073, 0.0
      %vm7568 = vcmp.gt.f32.partialorder %v7411, 0.0
      %vm7569 = vcmp.gt.f32.partialorder %v7075, 0.0
      %vm7570 = vcmp.gt.f32.partialorder %v7413, 0.0
      %vm7571 = vcmp.gt.f32.partialorder %v7078, 0.0
      %vm7572 = vcmp.gt.f32.partialorder %v7416, 0.0
      %vm7573 = vcmp.gt.f32.partialorder %v7080, 0.0
      %vm7574 = vcmp.gt.f32.partialorder %v7418, 0.0
      %vm7575 = vcmp.gt.f32.partialorder %v7083, 0.0
      %vm7576 = vcmp.gt.f32.partialorder %v7421, 0.0
      %vm7577 = vcmp.gt.f32.partialorder %v7085, 0.0
      %vm7578 = vcmp.gt.f32.partialorder %v7423, 0.0
      %vm7579 = vcmp.gt.f32.partialorder %v7088, 0.0
      %vm7580 = vcmp.gt.f32.partialorder %v7426, 0.0
      %vm7581 = vcmp.gt.f32.partialorder %v7090, 0.0
      %vm7582 = vcmp.gt.f32.partialorder %v7428, 0.0
      %vm7583 = vcmp.gt.f32.partialorder %v7093, 0.0
      %vm7584 = vcmp.gt.f32.partialorder %v7431, 0.0
      %vm7585 = vcmp.gt.f32.partialorder %v7095, 0.0
      %vm7586 = vcmp.gt.f32.partialorder %v7433, 0.0
      %vm7587 = vcmp.gt.f32.partialorder %v7098, 0.0
      %vm7588 = vcmp.gt.f32.partialorder %v7436, 0.0
      %vm7589 = vcmp.gt.f32.partialorder %v7100, 0.0
      %vm7590 = vcmp.gt.f32.partialorder %v7438, 0.0
      %vm7591 = vcmp.gt.f32.partialorder %v7103, 0.0
      %vm7592 = vcmp.gt.f32.partialorder %v7441, 0.0
      %vm7593 = vcmp.gt.f32.partialorder %v7105, 0.0
      %vm7594 = vcmp.gt.f32.partialorder %v7443, 0.0
      %vm7595 = vcmp.gt.f32.partialorder %v7108, 0.0
      %vm7596 = vcmp.gt.f32.partialorder %v7446, 0.0
      %vm7597 = vcmp.gt.f32.partialorder %v7110, 0.0
      %vm7598 = vcmp.gt.f32.partialorder %v7448, 0.0
      %vm7599 = vcmp.gt.f32.partialorder %v7113, 0.0
      %vm7600 = vcmp.gt.f32.partialorder %v7451, 0.0
      %vm7601 = vcmp.gt.f32.partialorder %v7115, 0.0
      %vm7602 = vcmp.gt.f32.partialorder %v7453, 0.0
      %vm7603 = vcmp.gt.f32.partialorder %v7118, 0.0
      %vm7604 = vcmp.gt.f32.partialorder %v7456, 0.0
      %vm7605 = vcmp.gt.f32.partialorder %v7120, 0.0
      %vm7606 = vcmp.gt.f32.partialorder %v7458, 0.0
      %vm7607 = vcmp.gt.f32.partialorder %v7123, 0.0
      %vm7608 = vcmp.gt.f32.partialorder %v7461, 0.0
      %vm7609 = vcmp.gt.f32.partialorder %v7125, 0.0
      %vm7610 = vcmp.gt.f32.partialorder %v7463, 0.0
      %vm7611 = vcmp.gt.f32.partialorder %v7128, 0.0
      %vm7612 = vcmp.gt.f32.partialorder %v7466, 0.0
      %vm7613 = vcmp.gt.f32.partialorder %v7130, 0.0
      %vm7614 = vcmp.gt.f32.partialorder %v7468, 0.0
      %vm7615 = vcmp.gt.f32.partialorder %v7133, 0.0
      %vm7616 = vcmp.gt.f32.partialorder %v7471, 0.0
      %vm7617 = vcmp.gt.f32.partialorder %v7135, 0.0
      %vm7618 = vcmp.gt.f32.partialorder %v7473, 0.0
      %vm7619 = vcmp.gt.f32.partialorder %v7138, 0.0
      %vm7620 = vcmp.gt.f32.partialorder %v7476, 0.0
      %vm7621 = vcmp.gt.f32.partialorder %v7140, 0.0
      %vm7622 = vcmp.gt.f32.partialorder %v7478, 0.0
      %vm7623 = vcmp.gt.f32.partialorder %v7143, 0.0
      %vm7624 = vcmp.gt.f32.partialorder %v7481, 0.0
      %vm7625 = vcmp.gt.f32.partialorder %v7145, 0.0
      %vm7626 = vcmp.gt.f32.partialorder %v7483, 0.0
      %vm7627 = vcmp.gt.f32.partialorder %v7148, 0.0
      %vm7628 = vcmp.gt.f32.partialorder %v7486, 0.0
      %vm7629 = vcmp.gt.f32.partialorder %v7150, 0.0
      %vm7630 = vcmp.gt.f32.partialorder %v7488, 0.0
      %vm7631 = vcmp.gt.f32.partialorder %v7153, 0.0
      %vm7632 = vcmp.gt.f32.partialorder %v7491, 0.0
      %vm7633 = vcmp.gt.f32.partialorder %v7155, 0.0
      %vm7634 = vcmp.gt.f32.partialorder %v7493, 0.0
      %vm7635 = vcmp.gt.f32.partialorder %v7158, 0.0
      %vm7636 = vcmp.gt.f32.partialorder %v7496, 0.0
      %vm7637 = vcmp.gt.f32.partialorder %v7160, 0.0
      %vm7638 = vcmp.gt.f32.partialorder %v7498, 0.0
      %vm7639 = vcmp.gt.f32.partialorder %v7163, 0.0
      %vm7640 = vcmp.gt.f32.partialorder %v7501, 0.0
      %vm7641 = vcmp.gt.f32.partialorder %v7165, 0.0
      %vm7642 = vcmp.gt.f32.partialorder %v7503, 0.0
      %vm7643 = vcmp.gt.f32.partialorder %v7168, 0.0
      %vm7644 = vcmp.gt.f32.partialorder %v7506, 0.0
      %vm7645 = vcmp.gt.f32.partialorder %v7170, 0.0
      %vm7646 = vcmp.gt.f32.partialorder %v7508, 0.0
      %vm7647 = vcmp.gt.f32.partialorder %v7173, 0.0
      %vm7648 = vcmp.gt.f32.partialorder %v7511, 0.0
      %vm7649 = vcmp.gt.f32.partialorder %v7175, 0.0
      %vm7650 = vcmp.gt.f32.partialorder %v7513, 0.0
      %vm7651 = vcmp.gt.f32.partialorder %v7178, 0.0
      %vm7652 = vcmp.gt.f32.partialorder %v7516, 0.0
      %vm7653 = vcmp.gt.f32.partialorder %v7180, 0.0
      %vm7654 = vcmp.gt.f32.partialorder %v7518, 0.0
      %vm7655 = vcmp.gt.f32.partialorder %v7183, 0.0
      %vm7656 = vcmp.gt.f32.partialorder %v7521, 0.0
      %vm7657 = vcmp.gt.f32.partialorder %v7185, 0.0
      %vm7658 = vcmp.gt.f32.partialorder %v7523, 0.0
      %vm7659 = vcmp.gt.f32.partialorder %v7188, 0.0
      %vm7660 = vcmp.gt.f32.partialorder %v7526, 0.0
      %vm7661 = vcmp.gt.f32.partialorder %v7190, 0.0
      %vm7662 = vcmp.gt.f32.partialorder %v7528, 0.0
      %vm7663 = vcmp.gt.f32.partialorder %v7193, 0.0
      %vm7664 = vcmp.gt.f32.partialorder %v7531, 0.0
      %vm7665 = vcmp.gt.f32.partialorder %v7195, 0.0
      %vm7666 = vcmp.gt.f32.partialorder %v7533, 0.0
      %vm7667 = vcmp.gt.f32.partialorder %v7198, 0.0
      %vm7668 = vcmp.gt.f32.partialorder %v7536, 0.0
      %vm7669 = vcmp.gt.f32.partialorder %v7200, 0.0
      %vm7670 = vcmp.gt.f32.partialorder %v7538, 0.0
      %vm7671 = vcmp.gt.f32.partialorder %v7203, 0.0
      %vm7672 = vcmp.gt.f32.partialorder %v7541, 0.0
      %vm7673 = vcmp.gt.f32.partialorder %v7205, 0.0
      %vm7674 = vcmp.gt.f32.partialorder %v7543, 0.0
      %vm7675 = vcmp.gt.f32.partialorder %v7208, 0.0
      %vm7676 = vcmp.gt.f32.partialorder %v7546, 0.0
      %vm7677 = vcmp.gt.f32.partialorder %v7210, 0.0
      %vm7678 = vcmp.gt.f32.partialorder %v7548, 0.0
      %vm7679 = vcmp.gt.f32.partialorder %v7213, 0.0
      %vm7680 = vcmp.gt.f32.partialorder %v7551, 0.0
      %vm7681 = vcmp.gt.f32.partialorder %v7215, 0.0
      %vm7682 = vcmp.gt.f32.partialorder %v7553, 0.0
      %v7683 = vmul.f32 %v7058, 0.01
      %v7684 = vmul.f32 %v7396, 0.01
      %v7685 = vmul.f32 %v7060, 0.01
      %v7686 = vmul.f32 %v7398, 0.01
      %v7687 = vmul.f32 %v7063, 0.01
      %v7688 = vmul.f32 %v7401, 0.01
      %v7689 = vmul.f32 %v7065, 0.01
      %v7690 = vmul.f32 %v7403, 0.01
      %v7691 = vmul.f32 %v7068, 0.01
      %v7692 = vmul.f32 %v7406, 0.01
      %v7693 = vmul.f32 %v7070, 0.01
      %v7694 = vmul.f32 %v7408, 0.01
      %v7695 = vmul.f32 %v7073, 0.01
      %v7696 = vmul.f32 %v7411, 0.01
      %v7697 = vmul.f32 %v7075, 0.01
      %v7698 = vmul.f32 %v7413, 0.01
      %v7699 = vmul.f32 %v7078, 0.01
      %v7700 = vmul.f32 %v7416, 0.01
      %v7701 = vmul.f32 %v7080, 0.01
      %v7702 = vmul.f32 %v7418, 0.01
      %v7703 = vmul.f32 %v7083, 0.01
      %v7704 = vmul.f32 %v7421, 0.01
      %v7705 = vmul.f32 %v7085, 0.01
      %v7706 = vmul.f32 %v7423, 0.01
      %v7707 = vmul.f32 %v7088, 0.01
      %v7708 = vmul.f32 %v7426, 0.01
      %v7709 = vmul.f32 %v7090, 0.01
      %v7710 = vmul.f32 %v7428, 0.01
      %v7711 = vmul.f32 %v7093, 0.01
      %v7712 = vmul.f32 %v7431, 0.01
      %v7713 = vmul.f32 %v7095, 0.01
      %v7714 = vmul.f32 %v7433, 0.01
      %v7715 = vmul.f32 %v7098, 0.01
      %v7716 = vmul.f32 %v7436, 0.01
      %v7717 = vmul.f32 %v7100, 0.01
      %v7718 = vmul.f32 %v7438, 0.01
      %v7719 = vmul.f32 %v7103, 0.01
      %v7720 = vmul.f32 %v7441, 0.01
      %v7721 = vmul.f32 %v7105, 0.01
      %v7722 = vmul.f32 %v7443, 0.01
      %v7723 = vmul.f32 %v7108, 0.01
      %v7724 = vmul.f32 %v7446, 0.01
      %v7725 = vmul.f32 %v7110, 0.01
      %v7726 = vmul.f32 %v7448, 0.01
      %v7727 = vmul.f32 %v7113, 0.01
      %v7728 = vmul.f32 %v7451, 0.01
      %v7729 = vmul.f32 %v7115, 0.01
      %v7730 = vmul.f32 %v7453, 0.01
      %v7731 = vmul.f32 %v7118, 0.01
      %v7732 = vmul.f32 %v7456, 0.01
      %v7733 = vmul.f32 %v7120, 0.01
      %v7734 = vmul.f32 %v7458, 0.01
      %v7735 = vmul.f32 %v7123, 0.01
      %v7736 = vmul.f32 %v7461, 0.01
      %v7737 = vmul.f32 %v7125, 0.01
      %v7738 = vmul.f32 %v7463, 0.01
      %v7739 = vmul.f32 %v7128, 0.01
      %v7740 = vmul.f32 %v7466, 0.01
      %v7741 = vmul.f32 %v7130, 0.01
      %v7742 = vmul.f32 %v7468, 0.01
      %v7743 = vmul.f32 %v7133, 0.01
      %v7744 = vmul.f32 %v7471, 0.01
      %v7745 = vmul.f32 %v7135, 0.01
      %v7746 = vmul.f32 %v7473, 0.01
      %v7747 = vmul.f32 %v7138, 0.01
      %v7748 = vmul.f32 %v7476, 0.01
      %v7749 = vmul.f32 %v7140, 0.01
      %v7750 = vmul.f32 %v7478, 0.01
      %v7751 = vmul.f32 %v7143, 0.01
      %v7752 = vmul.f32 %v7481, 0.01
      %v7753 = vmul.f32 %v7145, 0.01
      %v7754 = vmul.f32 %v7483, 0.01
      %v7755 = vmul.f32 %v7148, 0.01
      %v7756 = vmul.f32 %v7486, 0.01
      %v7757 = vmul.f32 %v7150, 0.01
      %v7758 = vmul.f32 %v7488, 0.01
      %v7759 = vmul.f32 %v7153, 0.01
      %v7760 = vmul.f32 %v7491, 0.01
      %v7761 = vmul.f32 %v7155, 0.01
      %v7762 = vmul.f32 %v7493, 0.01
      %v7763 = vmul.f32 %v7158, 0.01
      %v7764 = vmul.f32 %v7496, 0.01
      %v7765 = vmul.f32 %v7160, 0.01
      %v7766 = vmul.f32 %v7498, 0.01
      %v7767 = vmul.f32 %v7163, 0.01
      %v7768 = vmul.f32 %v7501, 0.01
      %v7769 = vmul.f32 %v7165, 0.01
      %v7770 = vmul.f32 %v7503, 0.01
      %v7771 = vmul.f32 %v7168, 0.01
      %v7772 = vmul.f32 %v7506, 0.01
      %v7773 = vmul.f32 %v7170, 0.01
      %v7774 = vmul.f32 %v7508, 0.01
      %v7775 = vmul.f32 %v7173, 0.01
      %v7776 = vmul.f32 %v7511, 0.01
      %v7777 = vmul.f32 %v7175, 0.01
      %v7778 = vmul.f32 %v7513, 0.01
      %v7779 = vmul.f32 %v7178, 0.01
      %v7780 = vmul.f32 %v7516, 0.01
      %v7781 = vmul.f32 %v7180, 0.01
      %v7782 = vmul.f32 %v7518, 0.01
      %v7783 = vmul.f32 %v7183, 0.01
      %v7784 = vmul.f32 %v7521, 0.01
      %v7785 = vmul.f32 %v7185, 0.01
      %v7786 = vmul.f32 %v7523, 0.01
      %v7787 = vmul.f32 %v7188, 0.01
      %v7788 = vmul.f32 %v7526, 0.01
      %v7789 = vmul.f32 %v7190, 0.01
      %v7790 = vmul.f32 %v7528, 0.01
      %v7791 = vmul.f32 %v7193, 0.01
      %v7792 = vmul.f32 %v7531, 0.01
      %v7793 = vmul.f32 %v7195, 0.01
      %v7794 = vmul.f32 %v7533, 0.01
      %v7795 = vmul.f32 %v7198, 0.01
      %v7796 = vmul.f32 %v7536, 0.01
      %v7797 = vmul.f32 %v7200, 0.01
      %v7798 = vmul.f32 %v7538, 0.01
      %v7799 = vmul.f32 %v7203, 0.01
      %v7800 = vmul.f32 %v7541, 0.01
      %v7801 = vmul.f32 %v7205, 0.01
      %v7802 = vmul.f32 %v7543, 0.01
      %v7803 = vmul.f32 %v7208, 0.01
      %v7804 = vmul.f32 %v7546, 0.01
      %v7805 = vmul.f32 %v7210, 0.01
      %v7806 = vmul.f32 %v7548, 0.01
      %v7807 = vmul.f32 %v7213, 0.01
      %v7808 = vmul.f32 %v7551, 0.01
      %v7809 = vmul.f32 %v7215, 0.01
      %v7810 = vmul.f32 %v7553, 0.01
      %v7811 = vsel %vm7555, %v7058, %v7683
      %v7812 = vsel %vm7556, %v7396, %v7684
      %v7813 = vsel %vm7557, %v7060, %v7685
      %v7814 = vsel %vm7558, %v7398, %v7686
      %v7815 = vsel %vm7559, %v7063, %v7687
      %v7816 = vsel %vm7560, %v7401, %v7688
      %v7817 = vsel %vm7561, %v7065, %v7689
      %v7818 = vsel %vm7562, %v7403, %v7690
      %v7819 = vsel %vm7563, %v7068, %v7691
      %v7820 = vsel %vm7564, %v7406, %v7692
      %v7821 = vsel %vm7565, %v7070, %v7693
      %v7822 = vsel %vm7566, %v7408, %v7694
      %v7823 = vsel %vm7567, %v7073, %v7695
      %v7824 = vsel %vm7568, %v7411, %v7696
      %v7825 = vsel %vm7569, %v7075, %v7697
      %v7826 = vsel %vm7570, %v7413, %v7698
      %v7827 = vsel %vm7571, %v7078, %v7699
      %v7828 = vsel %vm7572, %v7416, %v7700
      %v7829 = vsel %vm7573, %v7080, %v7701
      %v7830 = vsel %vm7574, %v7418, %v7702
      %v7831 = vsel %vm7575, %v7083, %v7703
      %v7832 = vsel %vm7576, %v7421, %v7704
      %v7833 = vsel %vm7577, %v7085, %v7705
      %v7834 = vsel %vm7578, %v7423, %v7706
      %v7835 = vsel %vm7579, %v7088, %v7707
      %v7836 = vsel %vm7580, %v7426, %v7708
      %v7837 = vsel %vm7581, %v7090, %v7709
      %v7838 = vsel %vm7582, %v7428, %v7710
      %v7839 = vsel %vm7583, %v7093, %v7711
      %v7840 = vsel %vm7584, %v7431, %v7712
      %v7841 = vsel %vm7585, %v7095, %v7713
      %v7842 = vsel %vm7586, %v7433, %v7714
      %v7843 = vsel %vm7587, %v7098, %v7715
      %v7844 = vsel %vm7588, %v7436, %v7716
      %v7845 = vsel %vm7589, %v7100, %v7717
      %v7846 = vsel %vm7590, %v7438, %v7718
      %v7847 = vsel %vm7591, %v7103, %v7719
      %v7848 = vsel %vm7592, %v7441, %v7720
      %v7849 = vsel %vm7593, %v7105, %v7721
      %v7850 = vsel %vm7594, %v7443, %v7722
      %v7851 = vsel %vm7595, %v7108, %v7723
      %v7852 = vsel %vm7596, %v7446, %v7724
      %v7853 = vsel %vm7597, %v7110, %v7725
      %v7854 = vsel %vm7598, %v7448, %v7726
      %v7855 = vsel %vm7599, %v7113, %v7727
      %v7856 = vsel %vm7600, %v7451, %v7728
      %v7857 = vsel %vm7601, %v7115, %v7729
      %v7858 = vsel %vm7602, %v7453, %v7730
      %v7859 = vsel %vm7603, %v7118, %v7731
      %v7860 = vsel %vm7604, %v7456, %v7732
      %v7861 = vsel %vm7605, %v7120, %v7733
      %v7862 = vsel %vm7606, %v7458, %v7734
      %v7863 = vsel %vm7607, %v7123, %v7735
      %v7864 = vsel %vm7608, %v7461, %v7736
      %v7865 = vsel %vm7609, %v7125, %v7737
      %v7866 = vsel %vm7610, %v7463, %v7738
      %v7867 = vsel %vm7611, %v7128, %v7739
      %v7868 = vsel %vm7612, %v7466, %v7740
      %v7869 = vsel %vm7613, %v7130, %v7741
      %v7870 = vsel %vm7614, %v7468, %v7742
      %v7871 = vsel %vm7615, %v7133, %v7743
      %v7872 = vsel %vm7616, %v7471, %v7744
      %v7873 = vsel %vm7617, %v7135, %v7745
      %v7874 = vsel %vm7618, %v7473, %v7746
      %v7875 = vsel %vm7619, %v7138, %v7747
      %v7876 = vsel %vm7620, %v7476, %v7748
      %v7877 = vsel %vm7621, %v7140, %v7749
      %v7878 = vsel %vm7622, %v7478, %v7750
      %v7879 = vsel %vm7623, %v7143, %v7751
      %v7880 = vsel %vm7624, %v7481, %v7752
      %v7881 = vsel %vm7625, %v7145, %v7753
      %v7882 = vsel %vm7626, %v7483, %v7754
      %v7883 = vsel %vm7627, %v7148, %v7755
      %v7884 = vsel %vm7628, %v7486, %v7756
      %v7885 = vsel %vm7629, %v7150, %v7757
      %v7886 = vsel %vm7630, %v7488, %v7758
      %v7887 = vsel %vm7631, %v7153, %v7759
      %v7888 = vsel %vm7632, %v7491, %v7760
      %v7889 = vsel %vm7633, %v7155, %v7761
      %v7890 = vsel %vm7634, %v7493, %v7762
      %v7891 = vsel %vm7635, %v7158, %v7763
      %v7892 = vsel %vm7636, %v7496, %v7764
      %v7893 = vsel %vm7637, %v7160, %v7765
      %v7894 = vsel %vm7638, %v7498, %v7766
      %v7895 = vsel %vm7639, %v7163, %v7767
      %v7896 = vsel %vm7640, %v7501, %v7768
      %v7897 = vsel %vm7641, %v7165, %v7769
      %v7898 = vsel %vm7642, %v7503, %v7770
      %v7899 = vsel %vm7643, %v7168, %v7771
      %v7900 = vsel %vm7644, %v7506, %v7772
      %v7901 = vsel %vm7645, %v7170, %v7773
      %v7902 = vsel %vm7646, %v7508, %v7774
      %v7903 = vsel %vm7647, %v7173, %v7775
      %v7904 = vsel %vm7648, %v7511, %v7776
      %v7905 = vsel %vm7649, %v7175, %v7777
      %v7906 = vsel %vm7650, %v7513, %v7778
      %v7907 = vsel %vm7651, %v7178, %v7779
      %v7908 = vsel %vm7652, %v7516, %v7780
      %v7909 = vsel %vm7653, %v7180, %v7781
      %v7910 = vsel %vm7654, %v7518, %v7782
      %v7911 = vsel %vm7655, %v7183, %v7783
      %v7912 = vsel %vm7656, %v7521, %v7784
      %v7913 = vsel %vm7657, %v7185, %v7785
      %v7914 = vsel %vm7658, %v7523, %v7786
      %v7915 = vsel %vm7659, %v7188, %v7787
      %v7916 = vsel %vm7660, %v7526, %v7788
      %v7917 = vsel %vm7661, %v7190, %v7789
      %v7918 = vsel %vm7662, %v7528, %v7790
      %v7919 = vsel %vm7663, %v7193, %v7791
      %v7920 = vsel %vm7664, %v7531, %v7792
      %v7921 = vsel %vm7665, %v7195, %v7793
      %v7922 = vsel %vm7666, %v7533, %v7794
      %v7923 = vsel %vm7667, %v7198, %v7795
      %v7924 = vsel %vm7668, %v7536, %v7796
      %v7925 = vsel %vm7669, %v7200, %v7797
      %v7926 = vsel %vm7670, %v7538, %v7798
      %v7927 = vsel %vm7671, %v7203, %v7799
      %v7928 = vsel %vm7672, %v7541, %v7800
      %v7929 = vsel %vm7673, %v7205, %v7801
      %v7930 = vsel %vm7674, %v7543, %v7802
      %v7931 = vsel %vm7675, %v7208, %v7803
      %v7932 = vsel %vm7676, %v7546, %v7804
      %v7933 = vsel %vm7677, %v7210, %v7805
      %v7934 = vsel %vm7678, %v7548, %v7806
      %v7935 = vsel %vm7679, %v7213, %v7807
      %v7936 = vsel %vm7680, %v7551, %v7808
      %v7937 = vsel %vm7681, %v7215, %v7809
      %v7938 = vsel %vm7682, %v7553, %v7810
      %v7939 = vpack.c.bf16 %v7813, %v7811
      %v7940 = vpack.c.bf16 %v7814, %v7812
      %v7941 = vpack.c.bf16 %v7817, %v7815
      %v7942 = vpack.c.bf16 %v7818, %v7816
      %v7943 = vpack.c.bf16 %v7821, %v7819
      %v7944 = vpack.c.bf16 %v7822, %v7820
      %v7945 = vpack.c.bf16 %v7825, %v7823
      %v7946 = vpack.c.bf16 %v7826, %v7824
      %v7947 = vpack.c.bf16 %v7829, %v7827
      %v7948 = vpack.c.bf16 %v7830, %v7828
      %v7949 = vpack.c.bf16 %v7833, %v7831
      %v7950 = vpack.c.bf16 %v7834, %v7832
      %v7951 = vpack.c.bf16 %v7837, %v7835
      %v7952 = vpack.c.bf16 %v7838, %v7836
      %v7953 = vpack.c.bf16 %v7841, %v7839
      %v7954 = vpack.c.bf16 %v7842, %v7840
      %v7955 = vpack.c.bf16 %v7845, %v7843
      %v7956 = vpack.c.bf16 %v7846, %v7844
      %v7957 = vpack.c.bf16 %v7849, %v7847
      %v7958 = vpack.c.bf16 %v7850, %v7848
      %v7959 = vpack.c.bf16 %v7853, %v7851
      %v7960 = vpack.c.bf16 %v7854, %v7852
      %v7961 = vpack.c.bf16 %v7857, %v7855
      %v7962 = vpack.c.bf16 %v7858, %v7856
      %v7963 = vpack.c.bf16 %v7861, %v7859
      %v7964 = vpack.c.bf16 %v7862, %v7860
      %v7965 = vpack.c.bf16 %v7865, %v7863
      %v7966 = vpack.c.bf16 %v7866, %v7864
      %v7967 = vpack.c.bf16 %v7869, %v7867
      %v7968 = vpack.c.bf16 %v7870, %v7868
      %v7969 = vpack.c.bf16 %v7873, %v7871
      %v7970 = vpack.c.bf16 %v7874, %v7872
      %v7971 = vpack.c.bf16 %v7877, %v7875
      %v7972 = vpack.c.bf16 %v7878, %v7876
      %v7973 = vpack.c.bf16 %v7881, %v7879
      %v7974 = vpack.c.bf16 %v7882, %v7880
      %v7975 = vpack.c.bf16 %v7885, %v7883
      %v7976 = vpack.c.bf16 %v7886, %v7884
      %v7977 = vpack.c.bf16 %v7889, %v7887
      %v7978 = vpack.c.bf16 %v7890, %v7888
      %v7979 = vpack.c.bf16 %v7893, %v7891
      %v7980 = vpack.c.bf16 %v7894, %v7892
      %v7981 = vpack.c.bf16 %v7897, %v7895
      %v7982 = vpack.c.bf16 %v7898, %v7896
      %v7983 = vpack.c.bf16 %v7901, %v7899
      %v7984 = vpack.c.bf16 %v7902, %v7900
      %v7985 = vpack.c.bf16 %v7905, %v7903
      %v7986 = vpack.c.bf16 %v7906, %v7904
      %v7987 = vpack.c.bf16 %v7909, %v7907
      %v7988 = vpack.c.bf16 %v7910, %v7908
      %v7989 = vpack.c.bf16 %v7913, %v7911
      %v7990 = vpack.c.bf16 %v7914, %v7912
      %v7991 = vpack.c.bf16 %v7917, %v7915
      %v7992 = vpack.c.bf16 %v7918, %v7916
      %v7993 = vpack.c.bf16 %v7921, %v7919
      %v7994 = vpack.c.bf16 %v7922, %v7920
      %v7995 = vpack.c.bf16 %v7925, %v7923
      %v7996 = vpack.c.bf16 %v7926, %v7924
      %v7997 = vpack.c.bf16 %v7929, %v7927
      %v7998 = vpack.c.bf16 %v7930, %v7928
      %v7999 = vpack.c.bf16 %v7933, %v7931
      %v8000 = vpack.c.bf16 %v7934, %v7932
      %v8001 = vpack.c.bf16 %v7937, %v7935
      %v8002 = vpack.c.bf16 %v7938, %v7936
      %v8003 = vld [vmem:[%s491] sm:$0xf]
      %v8004 = vld [vmem:[%s491 + $0x4] sm:$0xf]
      %v8005 = vld [vmem:[%s491 + $0x8] sm:$0xf]
      %v8006 = vld [vmem:[%s491 + $0xc] sm:$0xf]
      %v8007 = vld [vmem:[%s491 + $0x10] sm:$0xf]
      %v8008 = vld [vmem:[%s491 + $0x14] sm:$0xf]
      %v8009 = vld [vmem:[%s491 + $0x18] sm:$0xf]
      %v8010 = vld [vmem:[%s491 + $0x1c] sm:$0xf]
      %v8011 = vld [vmem:[%s491 + $0x20] sm:$0xf]
      %v8012 = vld [vmem:[%s491 + $0x24] sm:$0xf]
      %v8013 = vld [vmem:[%s491 + $0x28] sm:$0xf]
      %v8014 = vld [vmem:[%s491 + $0x2c] sm:$0xf]
      %v8015 = vld [vmem:[%s491 + $0x30] sm:$0xf]
      %v8016 = vld [vmem:[%s491 + $0x34] sm:$0xf]
      %v8017 = vld [vmem:[%s491 + $0x38] sm:$0xf]
      %v8018 = vld [vmem:[%s491 + $0x3c] sm:$0xf]
      %v8019 = vld [vmem:[%s491 + $0x40] sm:$0xf]
      %v8020 = vld [vmem:[%s491 + $0x44] sm:$0xf]
      %v8021 = vld [vmem:[%s491 + $0x48] sm:$0xf]
      %v8022 = vld [vmem:[%s491 + $0x4c] sm:$0xf]
      %v8023 = vld [vmem:[%s491 + $0x50] sm:$0xf]
      %v8024 = vld [vmem:[%s491 + $0x54] sm:$0xf]
      %v8025 = vld [vmem:[%s491 + $0x58] sm:$0xf]
      %v8026 = vld [vmem:[%s491 + $0x5c] sm:$0xf]
      %v8027 = vld [vmem:[%s491 + $0x60] sm:$0xf]
      %v8028 = vld [vmem:[%s491 + $0x64] sm:$0xf]
      %v8029 = vld [vmem:[%s491 + $0x68] sm:$0xf]
      %v8030 = vld [vmem:[%s491 + $0x6c] sm:$0xf]
      %v8031 = vld [vmem:[%s491 + $0x70] sm:$0xf]
      %v8032 = vld [vmem:[%s491 + $0x74] sm:$0xf]
      %v8033 = vld [vmem:[%s491 + $0x78] sm:$0xf]
      %v8034 = vld [vmem:[%s491 + $0x7c] sm:$0xf]
      %v8035 = vld [vmem:[%s494] sm:$0x1]
      %v8037 = vperm.slane %v8035, 0
      %v8071 = vunpack.c.l.b16 %v8003
      %v8072 = vunpack.c.l.b16 %v8004
      %v8073 = vunpack.c.l.b16 %v8005
      %v8074 = vunpack.c.l.b16 %v8006
      %v8075 = vunpack.c.l.b16 %v8007
      %v8076 = vunpack.c.l.b16 %v8008
      %v8077 = vunpack.c.l.b16 %v8009
      %v8078 = vunpack.c.l.b16 %v8010
      %v8079 = vunpack.c.l.b16 %v8011
      %v8080 = vunpack.c.l.b16 %v8012
      %v8081 = vunpack.c.l.b16 %v8013
      %v8082 = vunpack.c.l.b16 %v8014
      %v8083 = vunpack.c.l.b16 %v8015
      %v8084 = vunpack.c.l.b16 %v8016
      %v8085 = vunpack.c.l.b16 %v8017
      %v8086 = vunpack.c.l.b16 %v8018
      %v8087 = vunpack.c.l.b16 %v8019
      %v8088 = vunpack.c.l.b16 %v8020
      %v8089 = vunpack.c.l.b16 %v8021
      %v8090 = vunpack.c.l.b16 %v8022
      %v8091 = vunpack.c.l.b16 %v8023
      %v8092 = vunpack.c.l.b16 %v8024
      %v8093 = vunpack.c.l.b16 %v8025
      %v8094 = vunpack.c.l.b16 %v8026
      %v8095 = vunpack.c.l.b16 %v8027
      %v8096 = vunpack.c.l.b16 %v8028
      %v8097 = vunpack.c.l.b16 %v8029
      %v8098 = vunpack.c.l.b16 %v8030
      %v8099 = vunpack.c.l.b16 %v8031
      %v8100 = vunpack.c.l.b16 %v8032
      %v8101 = vunpack.c.l.b16 %v8033
      %v8102 = vunpack.c.l.b16 %v8034
      %v8103 = vpack.c.b16 %v8072, %v8071
      %v8104 = vpack.c.b16 %v8074, %v8073
      %v8105 = vpack.c.b16 %v8076, %v8075
      %v8106 = vpack.c.b16 %v8078, %v8077
      %v8107 = vpack.c.b16 %v8080, %v8079
      %v8108 = vpack.c.b16 %v8082, %v8081
      %v8109 = vpack.c.b16 %v8084, %v8083
      %v8110 = vpack.c.b16 %v8086, %v8085
      %v8111 = vpack.c.b16 %v8088, %v8087
      %v8112 = vpack.c.b16 %v8090, %v8089
      %v8113 = vpack.c.b16 %v8092, %v8091
      %v8114 = vpack.c.b16 %v8094, %v8093
      %v8115 = vpack.c.b16 %v8096, %v8095
      %v8116 = vpack.c.b16 %v8098, %v8097
      %v8117 = vpack.c.b16 %v8100, %v8099
      %v8118 = vpack.c.b16 %v8102, %v8101
      %8135 = vmatpush.bf16.msra.mxu0 %v8110
      %8136 = vmatpush.bf16.msra.mxu0 %v8109
      %8137 = vmatpush.bf16.msra.mxu0 %v8108
      %8138 = vmatpush.bf16.msra.mxu0 %v8107
      %8139 = vmatpush.bf16.msra.mxu0 %v8106
      %8140 = vmatpush.bf16.msra.mxu0 %v8105
      %8141 = vmatpush.bf16.msra.mxu0 %v8104
      %8142 = vmatpush.bf16.msra.mxu0 %v8103
      %8143 = vmatmul.bf16.gmra.mxu0 %v7939
      %v8144 = vpop.f32.mrf.mxu0
      %v8145 = vadd.f32 %v8037, %v8144
      %v8146 = vpop.f32.mrf.mxu0
      %v8147 = vadd.f32 %v8037, %v8146
      %8148 = vmatmul.bf16.gmra.mxu0 %v7941
      %v8149 = vpop.f32.mrf.mxu0
      %v8150 = vadd.f32 %v8037, %v8149
      %v8151 = vpop.f32.mrf.mxu0
      %v8152 = vadd.f32 %v8037, %v8151
      %8153 = vmatmul.bf16.gmra.mxu0 %v7943
      %v8154 = vpop.f32.mrf.mxu0
      %v8155 = vadd.f32 %v8037, %v8154
      %v8156 = vpop.f32.mrf.mxu0
      %v8157 = vadd.f32 %v8037, %v8156
      %8158 = vmatmul.bf16.gmra.mxu0 %v7945
      %v8159 = vpop.f32.mrf.mxu0
      %v8160 = vadd.f32 %v8037, %v8159
      %v8161 = vpop.f32.mrf.mxu0
      %v8162 = vadd.f32 %v8037, %v8161
      %8163 = vmatmul.bf16.gmra.mxu0 %v7947
      %v8164 = vpop.f32.mrf.mxu0
      %v8165 = vadd.f32 %v8037, %v8164
      %v8166 = vpop.f32.mrf.mxu0
      %v8167 = vadd.f32 %v8037, %v8166
      %8168 = vmatmul.bf16.gmra.mxu0 %v7949
      %v8169 = vpop.f32.mrf.mxu0
      %v8170 = vadd.f32 %v8037, %v8169
      %v8171 = vpop.f32.mrf.mxu0
      %v8172 = vadd.f32 %v8037, %v8171
      %8173 = vmatmul.bf16.gmra.mxu0 %v7951
      %v8174 = vpop.f32.mrf.mxu0
      %v8175 = vadd.f32 %v8037, %v8174
      %v8176 = vpop.f32.mrf.mxu0
      %v8177 = vadd.f32 %v8037, %v8176
      %8178 = vmatmul.bf16.gmra.mxu0 %v7953
      %v8179 = vpop.f32.mrf.mxu0
      %v8180 = vadd.f32 %v8037, %v8179
      %v8181 = vpop.f32.mrf.mxu0
      %v8182 = vadd.f32 %v8037, %v8181
      %8183 = vmatmul.bf16.gmra.mxu0 %v7955
      %v8184 = vpop.f32.mrf.mxu0
      %v8185 = vadd.f32 %v8037, %v8184
      %v8186 = vpop.f32.mrf.mxu0
      %v8187 = vadd.f32 %v8037, %v8186
      %8188 = vmatmul.bf16.gmra.mxu0 %v7957
      %v8189 = vpop.f32.mrf.mxu0
      %v8190 = vadd.f32 %v8037, %v8189
      %v8191 = vpop.f32.mrf.mxu0
      %v8192 = vadd.f32 %v8037, %v8191
      %8193 = vmatmul.bf16.gmra.mxu0 %v7959
      %v8194 = vpop.f32.mrf.mxu0
      %v8195 = vadd.f32 %v8037, %v8194
      %v8196 = vpop.f32.mrf.mxu0
      %v8197 = vadd.f32 %v8037, %v8196
      %8198 = vmatmul.bf16.gmra.mxu0 %v7961
      %v8199 = vpop.f32.mrf.mxu0
      %v8200 = vadd.f32 %v8037, %v8199
      %v8201 = vpop.f32.mrf.mxu0
      %v8202 = vadd.f32 %v8037, %v8201
      %8203 = vmatmul.bf16.gmra.mxu0 %v7963
      %v8204 = vpop.f32.mrf.mxu0
      %v8205 = vadd.f32 %v8037, %v8204
      %v8206 = vpop.f32.mrf.mxu0
      %v8207 = vadd.f32 %v8037, %v8206
      %8208 = vmatmul.bf16.gmra.mxu0 %v7965
      %v8209 = vpop.f32.mrf.mxu0
      %v8210 = vadd.f32 %v8037, %v8209
      %v8211 = vpop.f32.mrf.mxu0
      %v8212 = vadd.f32 %v8037, %v8211
      %8213 = vmatmul.bf16.gmra.mxu0 %v7967
      %v8214 = vpop.f32.mrf.mxu0
      %v8215 = vadd.f32 %v8037, %v8214
      %v8216 = vpop.f32.mrf.mxu0
      %v8217 = vadd.f32 %v8037, %v8216
      %8218 = vmatmul.bf16.gmra.mxu0 %v7969
      %v8219 = vpop.f32.mrf.mxu0
      %v8220 = vadd.f32 %v8037, %v8219
      %v8221 = vpop.f32.mrf.mxu0
      %v8222 = vadd.f32 %v8037, %v8221
      %8223 = vmatmul.bf16.gmra.mxu0 %v7971
      %v8224 = vpop.f32.mrf.mxu0
      %v8225 = vadd.f32 %v8037, %v8224
      %v8226 = vpop.f32.mrf.mxu0
      %v8227 = vadd.f32 %v8037, %v8226
      %8228 = vmatmul.bf16.gmra.mxu0 %v7973
      %v8229 = vpop.f32.mrf.mxu0
      %v8230 = vadd.f32 %v8037, %v8229
      %v8231 = vpop.f32.mrf.mxu0
      %v8232 = vadd.f32 %v8037, %v8231
      %8233 = vmatmul.bf16.gmra.mxu0 %v7975
      %v8234 = vpop.f32.mrf.mxu0
      %v8235 = vadd.f32 %v8037, %v8234
      %v8236 = vpop.f32.mrf.mxu0
      %v8237 = vadd.f32 %v8037, %v8236
      %8238 = vmatmul.bf16.gmra.mxu0 %v7977
      %v8239 = vpop.f32.mrf.mxu0
      %v8240 = vadd.f32 %v8037, %v8239
      %v8241 = vpop.f32.mrf.mxu0
      %v8242 = vadd.f32 %v8037, %v8241
      %8243 = vmatmul.bf16.gmra.mxu0 %v7979
      %v8244 = vpop.f32.mrf.mxu0
      %v8245 = vadd.f32 %v8037, %v8244
      %v8246 = vpop.f32.mrf.mxu0
      %v8247 = vadd.f32 %v8037, %v8246
      %8248 = vmatmul.bf16.gmra.mxu0 %v7981
      %v8249 = vpop.f32.mrf.mxu0
      %v8250 = vadd.f32 %v8037, %v8249
      %v8251 = vpop.f32.mrf.mxu0
      %v8252 = vadd.f32 %v8037, %v8251
      %8253 = vmatmul.bf16.gmra.mxu0 %v7983
      %v8254 = vpop.f32.mrf.mxu0
      %v8255 = vadd.f32 %v8037, %v8254
      %v8256 = vpop.f32.mrf.mxu0
      %v8257 = vadd.f32 %v8037, %v8256
      %8258 = vmatmul.bf16.gmra.mxu0 %v7985
      %v8259 = vpop.f32.mrf.mxu0
      %v8260 = vadd.f32 %v8037, %v8259
      %v8261 = vpop.f32.mrf.mxu0
      %v8262 = vadd.f32 %v8037, %v8261
      %8263 = vmatmul.bf16.gmra.mxu0 %v7987
      %v8264 = vpop.f32.mrf.mxu0
      %v8265 = vadd.f32 %v8037, %v8264
      %v8266 = vpop.f32.mrf.mxu0
      %v8267 = vadd.f32 %v8037, %v8266
      %8268 = vmatmul.bf16.gmra.mxu0 %v7989
      %v8269 = vpop.f32.mrf.mxu0
      %v8270 = vadd.f32 %v8037, %v8269
      %v8271 = vpop.f32.mrf.mxu0
      %v8272 = vadd.f32 %v8037, %v8271
      %8273 = vmatmul.bf16.gmra.mxu0 %v7991
      %v8274 = vpop.f32.mrf.mxu0
      %v8275 = vadd.f32 %v8037, %v8274
      %v8276 = vpop.f32.mrf.mxu0
      %v8277 = vadd.f32 %v8037, %v8276
      %8278 = vmatmul.bf16.gmra.mxu0 %v7993
      %v8279 = vpop.f32.mrf.mxu0
      %v8280 = vadd.f32 %v8037, %v8279
      %v8281 = vpop.f32.mrf.mxu0
      %v8282 = vadd.f32 %v8037, %v8281
      %8283 = vmatmul.bf16.gmra.mxu0 %v7995
      %v8284 = vpop.f32.mrf.mxu0
      %v8285 = vadd.f32 %v8037, %v8284
      %v8286 = vpop.f32.mrf.mxu0
      %v8287 = vadd.f32 %v8037, %v8286
      %8288 = vmatmul.bf16.gmra.mxu0 %v7997
      %v8289 = vpop.f32.mrf.mxu0
      %v8290 = vadd.f32 %v8037, %v8289
      %v8291 = vpop.f32.mrf.mxu0
      %v8292 = vadd.f32 %v8037, %v8291
      %8293 = vmatmul.bf16.gmra.mxu0 %v7999
      %v8294 = vpop.f32.mrf.mxu0
      %v8295 = vadd.f32 %v8037, %v8294
      %v8296 = vpop.f32.mrf.mxu0
      %v8297 = vadd.f32 %v8037, %v8296
      %8298 = vmatmul.bf16.gmra.mxu0 %v8001
      %v8299 = vpop.f32.mrf.mxu0
      %v8300 = vadd.f32 %v8037, %v8299
      %v8301 = vpop.f32.mrf.mxu0
      %v8302 = vadd.f32 %v8037, %v8301
      %8303 = vdwg.mxu0
      %8304 = vmatpush.bf16.msra.mxu0 %v8118
      %8305 = vmatpush.bf16.msra.mxu0 %v8117
      %8306 = vmatpush.bf16.msra.mxu0 %v8116
      %8307 = vmatpush.bf16.msra.mxu0 %v8115
      %8308 = vmatpush.bf16.msra.mxu0 %v8114
      %8309 = vmatpush.bf16.msra.mxu0 %v8113
      %8310 = vmatpush.bf16.msra.mxu0 %v8112
      %8311 = vmatpush.bf16.msra.mxu0 %v8111
      %8312 = vmatmul.bf16.gmra.mxu0 %v7940
      %v8313 = vpop.f32.mrf.mxu0
      %v8314 = vadd.f32 %v8145, %v8313
      %v8315 = vpop.f32.mrf.mxu0
      %v8316 = vadd.f32 %v8147, %v8315
      %8317 = vmatmul.bf16.gmra.mxu0 %v7942
      %v8318 = vpop.f32.mrf.mxu0
      %v8319 = vadd.f32 %v8150, %v8318
      %v8320 = vpop.f32.mrf.mxu0
      %v8321 = vadd.f32 %v8152, %v8320
      %8322 = vmatmul.bf16.gmra.mxu0 %v7944
      %v8323 = vpop.f32.mrf.mxu0
      %v8324 = vadd.f32 %v8155, %v8323
      %v8325 = vpop.f32.mrf.mxu0
      %v8326 = vadd.f32 %v8157, %v8325
      %8327 = vmatmul.bf16.gmra.mxu0 %v7946
      %v8328 = vpop.f32.mrf.mxu0
      %v8329 = vadd.f32 %v8160, %v8328
      %v8330 = vpop.f32.mrf.mxu0
      %v8331 = vadd.f32 %v8162, %v8330
      %8332 = vmatmul.bf16.gmra.mxu0 %v7948
      %v8333 = vpop.f32.mrf.mxu0
      %v8334 = vadd.f32 %v8165, %v8333
      %v8335 = vpop.f32.mrf.mxu0
      %v8336 = vadd.f32 %v8167, %v8335
      %8337 = vmatmul.bf16.gmra.mxu0 %v7950
      %v8338 = vpop.f32.mrf.mxu0
      %v8339 = vadd.f32 %v8170, %v8338
      %v8340 = vpop.f32.mrf.mxu0
      %v8341 = vadd.f32 %v8172, %v8340
      %8342 = vmatmul.bf16.gmra.mxu0 %v7952
      %v8343 = vpop.f32.mrf.mxu0
      %v8344 = vadd.f32 %v8175, %v8343
      %v8345 = vpop.f32.mrf.mxu0
      %v8346 = vadd.f32 %v8177, %v8345
      %8347 = vmatmul.bf16.gmra.mxu0 %v7954
      %v8348 = vpop.f32.mrf.mxu0
      %v8349 = vadd.f32 %v8180, %v8348
      %v8350 = vpop.f32.mrf.mxu0
      %v8351 = vadd.f32 %v8182, %v8350
      %8352 = vmatmul.bf16.gmra.mxu0 %v7956
      %v8353 = vpop.f32.mrf.mxu0
      %v8354 = vadd.f32 %v8185, %v8353
      %v8355 = vpop.f32.mrf.mxu0
      %v8356 = vadd.f32 %v8187, %v8355
      %8357 = vmatmul.bf16.gmra.mxu0 %v7958
      %v8358 = vpop.f32.mrf.mxu0
      %v8359 = vadd.f32 %v8190, %v8358
      %v8360 = vpop.f32.mrf.mxu0
      %v8361 = vadd.f32 %v8192, %v8360
      %8362 = vmatmul.bf16.gmra.mxu0 %v7960
      %v8363 = vpop.f32.mrf.mxu0
      %v8364 = vadd.f32 %v8195, %v8363
      %v8365 = vpop.f32.mrf.mxu0
      %v8366 = vadd.f32 %v8197, %v8365
      %8367 = vmatmul.bf16.gmra.mxu0 %v7962
      %v8368 = vpop.f32.mrf.mxu0
      %v8369 = vadd.f32 %v8200, %v8368
      %v8370 = vpop.f32.mrf.mxu0
      %v8371 = vadd.f32 %v8202, %v8370
      %8372 = vmatmul.bf16.gmra.mxu0 %v7964
      %v8373 = vpop.f32.mrf.mxu0
      %v8374 = vadd.f32 %v8205, %v8373
      %v8375 = vpop.f32.mrf.mxu0
      %v8376 = vadd.f32 %v8207, %v8375
      %8377 = vmatmul.bf16.gmra.mxu0 %v7966
      %v8378 = vpop.f32.mrf.mxu0
      %v8379 = vadd.f32 %v8210, %v8378
      %v8380 = vpop.f32.mrf.mxu0
      %v8381 = vadd.f32 %v8212, %v8380
      %8382 = vmatmul.bf16.gmra.mxu0 %v7968
      %v8383 = vpop.f32.mrf.mxu0
      %v8384 = vadd.f32 %v8215, %v8383
      %v8385 = vpop.f32.mrf.mxu0
      %v8386 = vadd.f32 %v8217, %v8385
      %8387 = vmatmul.bf16.gmra.mxu0 %v7970
      %v8388 = vpop.f32.mrf.mxu0
      %v8389 = vadd.f32 %v8220, %v8388
      %v8390 = vpop.f32.mrf.mxu0
      %v8391 = vadd.f32 %v8222, %v8390
      %8392 = vmatmul.bf16.gmra.mxu0 %v7972
      %v8393 = vpop.f32.mrf.mxu0
      %v8394 = vadd.f32 %v8225, %v8393
      %v8395 = vpop.f32.mrf.mxu0
      %v8396 = vadd.f32 %v8227, %v8395
      %8397 = vmatmul.bf16.gmra.mxu0 %v7974
      %v8398 = vpop.f32.mrf.mxu0
      %v8399 = vadd.f32 %v8230, %v8398
      %v8400 = vpop.f32.mrf.mxu0
      %v8401 = vadd.f32 %v8232, %v8400
      %8402 = vmatmul.bf16.gmra.mxu0 %v7976
      %v8403 = vpop.f32.mrf.mxu0
      %v8404 = vadd.f32 %v8235, %v8403
      %v8405 = vpop.f32.mrf.mxu0
      %v8406 = vadd.f32 %v8237, %v8405
      %8407 = vmatmul.bf16.gmra.mxu0 %v7978
      %v8408 = vpop.f32.mrf.mxu0
      %v8409 = vadd.f32 %v8240, %v8408
      %v8410 = vpop.f32.mrf.mxu0
      %v8411 = vadd.f32 %v8242, %v8410
      %8412 = vmatmul.bf16.gmra.mxu0 %v7980
      %v8413 = vpop.f32.mrf.mxu0
      %v8414 = vadd.f32 %v8245, %v8413
      %v8415 = vpop.f32.mrf.mxu0
      %v8416 = vadd.f32 %v8247, %v8415
      %8417 = vmatmul.bf16.gmra.mxu0 %v7982
      %v8418 = vpop.f32.mrf.mxu0
      %v8419 = vadd.f32 %v8250, %v8418
      %v8420 = vpop.f32.mrf.mxu0
      %v8421 = vadd.f32 %v8252, %v8420
      %8422 = vmatmul.bf16.gmra.mxu0 %v7984
      %v8423 = vpop.f32.mrf.mxu0
      %v8424 = vadd.f32 %v8255, %v8423
      %v8425 = vpop.f32.mrf.mxu0
      %v8426 = vadd.f32 %v8257, %v8425
      %8427 = vmatmul.bf16.gmra.mxu0 %v7986
      %v8428 = vpop.f32.mrf.mxu0
      %v8429 = vadd.f32 %v8260, %v8428
      %v8430 = vpop.f32.mrf.mxu0
      %v8431 = vadd.f32 %v8262, %v8430
      %8432 = vmatmul.bf16.gmra.mxu0 %v7988
      %v8433 = vpop.f32.mrf.mxu0
      %v8434 = vadd.f32 %v8265, %v8433
      %v8435 = vpop.f32.mrf.mxu0
      %v8436 = vadd.f32 %v8267, %v8435
      %8437 = vmatmul.bf16.gmra.mxu0 %v7990
      %v8438 = vpop.f32.mrf.mxu0
      %v8439 = vadd.f32 %v8270, %v8438
      %v8440 = vpop.f32.mrf.mxu0
      %v8441 = vadd.f32 %v8272, %v8440
      %8442 = vmatmul.bf16.gmra.mxu0 %v7992
      %v8443 = vpop.f32.mrf.mxu0
      %v8444 = vadd.f32 %v8275, %v8443
      %v8445 = vpop.f32.mrf.mxu0
      %v8446 = vadd.f32 %v8277, %v8445
      %8447 = vmatmul.bf16.gmra.mxu0 %v7994
      %v8448 = vpop.f32.mrf.mxu0
      %v8449 = vadd.f32 %v8280, %v8448
      %v8450 = vpop.f32.mrf.mxu0
      %v8451 = vadd.f32 %v8282, %v8450
      %8452 = vmatmul.bf16.gmra.mxu0 %v7996
      %v8453 = vpop.f32.mrf.mxu0
      %v8454 = vadd.f32 %v8285, %v8453
      %v8455 = vpop.f32.mrf.mxu0
      %v8456 = vadd.f32 %v8287, %v8455
      %8457 = vmatmul.bf16.gmra.mxu0 %v7998
      %v8458 = vpop.f32.mrf.mxu0
      %v8459 = vadd.f32 %v8290, %v8458
      %v8460 = vpop.f32.mrf.mxu0
      %v8461 = vadd.f32 %v8292, %v8460
      %8462 = vmatmul.bf16.gmra.mxu0 %v8000
      %v8463 = vpop.f32.mrf.mxu0
      %v8464 = vadd.f32 %v8295, %v8463
      %v8465 = vpop.f32.mrf.mxu0
      %v8466 = vadd.f32 %v8297, %v8465
      %8467 = vmatmul.bf16.gmra.mxu0 %v8002
      %v8468 = vpop.f32.mrf.mxu0
      %v8469 = vadd.f32 %v8300, %v8468
      %v8470 = vpop.f32.mrf.mxu0
      %v8471 = vadd.f32 %v8302, %v8470
      %8472 = vdwg.mxu0
      %vm8473 = vcmp.gt.f32.partialorder %v8314, 0.0
      %vm8474 = vcmp.gt.f32.partialorder %v8316, 0.0
      %vm8475 = vcmp.gt.f32.partialorder %v8319, 0.0
      %vm8476 = vcmp.gt.f32.partialorder %v8321, 0.0
      %vm8477 = vcmp.gt.f32.partialorder %v8324, 0.0
      %vm8478 = vcmp.gt.f32.partialorder %v8326, 0.0
      %vm8479 = vcmp.gt.f32.partialorder %v8329, 0.0
      %vm8480 = vcmp.gt.f32.partialorder %v8331, 0.0
      %vm8481 = vcmp.gt.f32.partialorder %v8334, 0.0
      %vm8482 = vcmp.gt.f32.partialorder %v8336, 0.0
      %vm8483 = vcmp.gt.f32.partialorder %v8339, 0.0
      %vm8484 = vcmp.gt.f32.partialorder %v8341, 0.0
      %vm8485 = vcmp.gt.f32.partialorder %v8344, 0.0
      %vm8486 = vcmp.gt.f32.partialorder %v8346, 0.0
      %vm8487 = vcmp.gt.f32.partialorder %v8349, 0.0
      %vm8488 = vcmp.gt.f32.partialorder %v8351, 0.0
      %vm8489 = vcmp.gt.f32.partialorder %v8354, 0.0
      %vm8490 = vcmp.gt.f32.partialorder %v8356, 0.0
      %vm8491 = vcmp.gt.f32.partialorder %v8359, 0.0
      %vm8492 = vcmp.gt.f32.partialorder %v8361, 0.0
      %vm8493 = vcmp.gt.f32.partialorder %v8364, 0.0
      %vm8494 = vcmp.gt.f32.partialorder %v8366, 0.0
      %vm8495 = vcmp.gt.f32.partialorder %v8369, 0.0
      %vm8496 = vcmp.gt.f32.partialorder %v8371, 0.0
      %vm8497 = vcmp.gt.f32.partialorder %v8374, 0.0
      %vm8498 = vcmp.gt.f32.partialorder %v8376, 0.0
      %vm8499 = vcmp.gt.f32.partialorder %v8379, 0.0
      %vm8500 = vcmp.gt.f32.partialorder %v8381, 0.0
      %vm8501 = vcmp.gt.f32.partialorder %v8384, 0.0
      %vm8502 = vcmp.gt.f32.partialorder %v8386, 0.0
      %vm8503 = vcmp.gt.f32.partialorder %v8389, 0.0
      %vm8504 = vcmp.gt.f32.partialorder %v8391, 0.0
      %vm8505 = vcmp.gt.f32.partialorder %v8394, 0.0
      %vm8506 = vcmp.gt.f32.partialorder %v8396, 0.0
      %vm8507 = vcmp.gt.f32.partialorder %v8399, 0.0
      %vm8508 = vcmp.gt.f32.partialorder %v8401, 0.0
      %vm8509 = vcmp.gt.f32.partialorder %v8404, 0.0
      %vm8510 = vcmp.gt.f32.partialorder %v8406, 0.0
      %vm8511 = vcmp.gt.f32.partialorder %v8409, 0.0
      %vm8512 = vcmp.gt.f32.partialorder %v8411, 0.0
      %vm8513 = vcmp.gt.f32.partialorder %v8414, 0.0
      %vm8514 = vcmp.gt.f32.partialorder %v8416, 0.0
      %vm8515 = vcmp.gt.f32.partialorder %v8419, 0.0
      %vm8516 = vcmp.gt.f32.partialorder %v8421, 0.0
      %vm8517 = vcmp.gt.f32.partialorder %v8424, 0.0
      %vm8518 = vcmp.gt.f32.partialorder %v8426, 0.0
      %vm8519 = vcmp.gt.f32.partialorder %v8429, 0.0
      %vm8520 = vcmp.gt.f32.partialorder %v8431, 0.0
      %vm8521 = vcmp.gt.f32.partialorder %v8434, 0.0
      %vm8522 = vcmp.gt.f32.partialorder %v8436, 0.0
      %vm8523 = vcmp.gt.f32.partialorder %v8439, 0.0
      %vm8524 = vcmp.gt.f32.partialorder %v8441, 0.0
      %vm8525 = vcmp.gt.f32.partialorder %v8444, 0.0
      %vm8526 = vcmp.gt.f32.partialorder %v8446, 0.0
      %vm8527 = vcmp.gt.f32.partialorder %v8449, 0.0
      %vm8528 = vcmp.gt.f32.partialorder %v8451, 0.0
      %vm8529 = vcmp.gt.f32.partialorder %v8454, 0.0
      %vm8530 = vcmp.gt.f32.partialorder %v8456, 0.0
      %vm8531 = vcmp.gt.f32.partialorder %v8459, 0.0
      %vm8532 = vcmp.gt.f32.partialorder %v8461, 0.0
      %vm8533 = vcmp.gt.f32.partialorder %v8464, 0.0
      %vm8534 = vcmp.gt.f32.partialorder %v8466, 0.0
      %vm8535 = vcmp.gt.f32.partialorder %v8469, 0.0
      %vm8536 = vcmp.gt.f32.partialorder %v8471, 0.0
      %v8537 = vmul.f32 %v8314, 0.01
      %v8538 = vmul.f32 %v8316, 0.01
      %v8539 = vmul.f32 %v8319, 0.01
      %v8540 = vmul.f32 %v8321, 0.01
      %v8541 = vmul.f32 %v8324, 0.01
      %v8542 = vmul.f32 %v8326, 0.01
      %v8543 = vmul.f32 %v8329, 0.01
      %v8544 = vmul.f32 %v8331, 0.01
      %v8545 = vmul.f32 %v8334, 0.01
      %v8546 = vmul.f32 %v8336, 0.01
      %v8547 = vmul.f32 %v8339, 0.01
      %v8548 = vmul.f32 %v8341, 0.01
      %v8549 = vmul.f32 %v8344, 0.01
      %v8550 = vmul.f32 %v8346, 0.01
      %v8551 = vmul.f32 %v8349, 0.01
      %v8552 = vmul.f32 %v8351, 0.01
      %v8553 = vmul.f32 %v8354, 0.01
      %v8554 = vmul.f32 %v8356, 0.01
      %v8555 = vmul.f32 %v8359, 0.01
      %v8556 = vmul.f32 %v8361, 0.01
      %v8557 = vmul.f32 %v8364, 0.01
      %v8558 = vmul.f32 %v8366, 0.01
      %v8559 = vmul.f32 %v8369, 0.01
      %v8560 = vmul.f32 %v8371, 0.01
      %v8561 = vmul.f32 %v8374, 0.01
      %v8562 = vmul.f32 %v8376, 0.01
      %v8563 = vmul.f32 %v8379, 0.01
      %v8564 = vmul.f32 %v8381, 0.01
      %v8565 = vmul.f32 %v8384, 0.01
      %v8566 = vmul.f32 %v8386, 0.01
      %v8567 = vmul.f32 %v8389, 0.01
      %v8568 = vmul.f32 %v8391, 0.01
      %v8569 = vmul.f32 %v8394, 0.01
      %v8570 = vmul.f32 %v8396, 0.01
      %v8571 = vmul.f32 %v8399, 0.01
      %v8572 = vmul.f32 %v8401, 0.01
      %v8573 = vmul.f32 %v8404, 0.01
      %v8574 = vmul.f32 %v8406, 0.01
      %v8575 = vmul.f32 %v8409, 0.01
      %v8576 = vmul.f32 %v8411, 0.01
      %v8577 = vmul.f32 %v8414, 0.01
      %v8578 = vmul.f32 %v8416, 0.01
      %v8579 = vmul.f32 %v8419, 0.01
      %v8580 = vmul.f32 %v8421, 0.01
      %v8581 = vmul.f32 %v8424, 0.01
      %v8582 = vmul.f32 %v8426, 0.01
      %v8583 = vmul.f32 %v8429, 0.01
      %v8584 = vmul.f32 %v8431, 0.01
      %v8585 = vmul.f32 %v8434, 0.01
      %v8586 = vmul.f32 %v8436, 0.01
      %v8587 = vmul.f32 %v8439, 0.01
      %v8588 = vmul.f32 %v8441, 0.01
      %v8589 = vmul.f32 %v8444, 0.01
      %v8590 = vmul.f32 %v8446, 0.01
      %v8591 = vmul.f32 %v8449, 0.01
      %v8592 = vmul.f32 %v8451, 0.01
      %v8593 = vmul.f32 %v8454, 0.01
      %v8594 = vmul.f32 %v8456, 0.01
      %v8595 = vmul.f32 %v8459, 0.01
      %v8596 = vmul.f32 %v8461, 0.01
      %v8597 = vmul.f32 %v8464, 0.01
      %v8598 = vmul.f32 %v8466, 0.01
      %v8599 = vmul.f32 %v8469, 0.01
      %v8600 = vmul.f32 %v8471, 0.01
      %v8601 = vsel %vm8473, %v8314, %v8537
      %v8602 = vsel %vm8474, %v8316, %v8538
      %v8603 = vsel %vm8475, %v8319, %v8539
      %v8604 = vsel %vm8476, %v8321, %v8540
      %v8605 = vsel %vm8477, %v8324, %v8541
      %v8606 = vsel %vm8478, %v8326, %v8542
      %v8607 = vsel %vm8479, %v8329, %v8543
      %v8608 = vsel %vm8480, %v8331, %v8544
      %v8609 = vsel %vm8481, %v8334, %v8545
      %v8610 = vsel %vm8482, %v8336, %v8546
      %v8611 = vsel %vm8483, %v8339, %v8547
      %v8612 = vsel %vm8484, %v8341, %v8548
      %v8613 = vsel %vm8485, %v8344, %v8549
      %v8614 = vsel %vm8486, %v8346, %v8550
      %v8615 = vsel %vm8487, %v8349, %v8551
      %v8616 = vsel %vm8488, %v8351, %v8552
      %v8617 = vsel %vm8489, %v8354, %v8553
      %v8618 = vsel %vm8490, %v8356, %v8554
      %v8619 = vsel %vm8491, %v8359, %v8555
      %v8620 = vsel %vm8492, %v8361, %v8556
      %v8621 = vsel %vm8493, %v8364, %v8557
      %v8622 = vsel %vm8494, %v8366, %v8558
      %v8623 = vsel %vm8495, %v8369, %v8559
      %v8624 = vsel %vm8496, %v8371, %v8560
      %v8625 = vsel %vm8497, %v8374, %v8561
      %v8626 = vsel %vm8498, %v8376, %v8562
      %v8627 = vsel %vm8499, %v8379, %v8563
      %v8628 = vsel %vm8500, %v8381, %v8564
      %v8629 = vsel %vm8501, %v8384, %v8565
      %v8630 = vsel %vm8502, %v8386, %v8566
      %v8631 = vsel %vm8503, %v8389, %v8567
      %v8632 = vsel %vm8504, %v8391, %v8568
      %v8633 = vsel %vm8505, %v8394, %v8569
      %v8634 = vsel %vm8506, %v8396, %v8570
      %v8635 = vsel %vm8507, %v8399, %v8571
      %v8636 = vsel %vm8508, %v8401, %v8572
      %v8637 = vsel %vm8509, %v8404, %v8573
      %v8638 = vsel %vm8510, %v8406, %v8574
      %v8639 = vsel %vm8511, %v8409, %v8575
      %v8640 = vsel %vm8512, %v8411, %v8576
      %v8641 = vsel %vm8513, %v8414, %v8577
      %v8642 = vsel %vm8514, %v8416, %v8578
      %v8643 = vsel %vm8515, %v8419, %v8579
      %v8644 = vsel %vm8516, %v8421, %v8580
      %v8645 = vsel %vm8517, %v8424, %v8581
      %v8646 = vsel %vm8518, %v8426, %v8582
      %v8647 = vsel %vm8519, %v8429, %v8583
      %v8648 = vsel %vm8520, %v8431, %v8584
      %v8649 = vsel %vm8521, %v8434, %v8585
      %v8650 = vsel %vm8522, %v8436, %v8586
      %v8651 = vsel %vm8523, %v8439, %v8587
      %v8652 = vsel %vm8524, %v8441, %v8588
      %v8653 = vsel %vm8525, %v8444, %v8589
      %v8654 = vsel %vm8526, %v8446, %v8590
      %v8655 = vsel %vm8527, %v8449, %v8591
      %v8656 = vsel %vm8528, %v8451, %v8592
      %v8657 = vsel %vm8529, %v8454, %v8593
      %v8658 = vsel %vm8530, %v8456, %v8594
      %v8659 = vsel %vm8531, %v8459, %v8595
      %v8660 = vsel %vm8532, %v8461, %v8596
      %v8661 = vsel %vm8533, %v8464, %v8597
      %v8662 = vsel %vm8534, %v8466, %v8598
      %v8663 = vsel %vm8535, %v8469, %v8599
      %v8664 = vsel %vm8536, %v8471, %v8600
      %v8665 = vld [vmem:[%s497] sm:$0x1]
      %v8667 = vperm.slane %v8665, 0
      %v8669 = vmul.f32 %v8601, %v8667
      %v8670 = vmul.f32 %v8602, %v8667
      %v8671 = vmul.f32 %v8603, %v8667
      %v8672 = vmul.f32 %v8604, %v8667
      %v8673 = vmul.f32 %v8605, %v8667
      %v8674 = vmul.f32 %v8606, %v8667
      %v8675 = vmul.f32 %v8607, %v8667
      %v8676 = vmul.f32 %v8608, %v8667
      %v8677 = vmul.f32 %v8609, %v8667
      %v8678 = vmul.f32 %v8610, %v8667
      %v8679 = vmul.f32 %v8611, %v8667
      %v8680 = vmul.f32 %v8612, %v8667
      %v8681 = vmul.f32 %v8613, %v8667
      %v8682 = vmul.f32 %v8614, %v8667
      %v8683 = vmul.f32 %v8615, %v8667
      %v8684 = vmul.f32 %v8616, %v8667
      %v8685 = vmul.f32 %v8617, %v8667
      %v8686 = vmul.f32 %v8618, %v8667
      %v8687 = vmul.f32 %v8619, %v8667
      %v8688 = vmul.f32 %v8620, %v8667
      %v8689 = vmul.f32 %v8621, %v8667
      %v8690 = vmul.f32 %v8622, %v8667
      %v8691 = vmul.f32 %v8623, %v8667
      %v8692 = vmul.f32 %v8624, %v8667
      %v8693 = vmul.f32 %v8625, %v8667
      %v8694 = vmul.f32 %v8626, %v8667
      %v8695 = vmul.f32 %v8627, %v8667
      %v8696 = vmul.f32 %v8628, %v8667
      %v8697 = vmul.f32 %v8629, %v8667
      %v8698 = vmul.f32 %v8630, %v8667
      %v8699 = vmul.f32 %v8631, %v8667
      %v8700 = vmul.f32 %v8632, %v8667
      %v8701 = vmul.f32 %v8633, %v8667
      %v8702 = vmul.f32 %v8634, %v8667
      %v8703 = vmul.f32 %v8635, %v8667
      %v8704 = vmul.f32 %v8636, %v8667
      %v8705 = vmul.f32 %v8637, %v8667
      %v8706 = vmul.f32 %v8638, %v8667
      %v8707 = vmul.f32 %v8639, %v8667
      %v8708 = vmul.f32 %v8640, %v8667
      %v8709 = vmul.f32 %v8641, %v8667
      %v8710 = vmul.f32 %v8642, %v8667
      %v8711 = vmul.f32 %v8643, %v8667
      %v8712 = vmul.f32 %v8644, %v8667
      %v8713 = vmul.f32 %v8645, %v8667
      %v8714 = vmul.f32 %v8646, %v8667
      %v8715 = vmul.f32 %v8647, %v8667
      %v8716 = vmul.f32 %v8648, %v8667
      %v8717 = vmul.f32 %v8649, %v8667
      %v8718 = vmul.f32 %v8650, %v8667
      %v8719 = vmul.f32 %v8651, %v8667
      %v8720 = vmul.f32 %v8652, %v8667
      %v8721 = vmul.f32 %v8653, %v8667
      %v8722 = vmul.f32 %v8654, %v8667
      %v8723 = vmul.f32 %v8655, %v8667
      %v8724 = vmul.f32 %v8656, %v8667
      %v8725 = vmul.f32 %v8657, %v8667
      %v8726 = vmul.f32 %v8658, %v8667
      %v8727 = vmul.f32 %v8659, %v8667
      %v8728 = vmul.f32 %v8660, %v8667
      %v8729 = vmul.f32 %v8661, %v8667
      %v8730 = vmul.f32 %v8662, %v8667
      %v8731 = vmul.f32 %v8663, %v8667
      %v8732 = vmul.f32 %v8664, %v8667
      %8733 = vadd.xlane.f32.xlu0 %v8669
      %v8734 = vpop.xlane.xlu0 %8733
      %8735 = vadd.xlane.f32.xlu0 %v8670
      %v8736 = vpop.xlane.xlu0 %8735
      %8737 = vadd.xlane.f32.xlu0 %v8671
      %v8738 = vpop.xlane.xlu0 %8737
      %8739 = vadd.xlane.f32.xlu0 %v8672
      %v8740 = vpop.xlane.xlu0 %8739
      %8741 = vadd.xlane.f32.xlu0 %v8673
      %v8742 = vpop.xlane.xlu0 %8741
      %8743 = vadd.xlane.f32.xlu0 %v8674
      %v8744 = vpop.xlane.xlu0 %8743
      %8745 = vadd.xlane.f32.xlu0 %v8675
      %v8746 = vpop.xlane.xlu0 %8745
      %8747 = vadd.xlane.f32.xlu0 %v8676
      %v8748 = vpop.xlane.xlu0 %8747
      %8749 = vadd.xlane.f32.xlu0 %v8677
      %v8750 = vpop.xlane.xlu0 %8749
      %8751 = vadd.xlane.f32.xlu0 %v8678
      %v8752 = vpop.xlane.xlu0 %8751
      %8753 = vadd.xlane.f32.xlu0 %v8679
      %v8754 = vpop.xlane.xlu0 %8753
      %8755 = vadd.xlane.f32.xlu0 %v8680
      %v8756 = vpop.xlane.xlu0 %8755
      %8757 = vadd.xlane.f32.xlu0 %v8681
      %v8758 = vpop.xlane.xlu0 %8757
      %8759 = vadd.xlane.f32.xlu0 %v8682
      %v8760 = vpop.xlane.xlu0 %8759
      %8761 = vadd.xlane.f32.xlu0 %v8683
      %v8762 = vpop.xlane.xlu0 %8761
      %8763 = vadd.xlane.f32.xlu0 %v8684
      %v8764 = vpop.xlane.xlu0 %8763
      %8765 = vadd.xlane.f32.xlu0 %v8685
      %v8766 = vpop.xlane.xlu0 %8765
      %8767 = vadd.xlane.f32.xlu0 %v8686
      %v8768 = vpop.xlane.xlu0 %8767
      %8769 = vadd.xlane.f32.xlu0 %v8687
      %v8770 = vpop.xlane.xlu0 %8769
      %8771 = vadd.xlane.f32.xlu0 %v8688
      %v8772 = vpop.xlane.xlu0 %8771
      %8773 = vadd.xlane.f32.xlu0 %v8689
      %v8774 = vpop.xlane.xlu0 %8773
      %8775 = vadd.xlane.f32.xlu0 %v8690
      %v8776 = vpop.xlane.xlu0 %8775
      %8777 = vadd.xlane.f32.xlu0 %v8691
      %v8778 = vpop.xlane.xlu0 %8777
      %8779 = vadd.xlane.f32.xlu0 %v8692
      %v8780 = vpop.xlane.xlu0 %8779
      %8781 = vadd.xlane.f32.xlu0 %v8693
      %v8782 = vpop.xlane.xlu0 %8781
      %8783 = vadd.xlane.f32.xlu0 %v8694
      %v8784 = vpop.xlane.xlu0 %8783
      %8785 = vadd.xlane.f32.xlu0 %v8695
      %v8786 = vpop.xlane.xlu0 %8785
      %8787 = vadd.xlane.f32.xlu0 %v8696
      %v8788 = vpop.xlane.xlu0 %8787
      %8789 = vadd.xlane.f32.xlu0 %v8697
      %v8790 = vpop.xlane.xlu0 %8789
      %8791 = vadd.xlane.f32.xlu0 %v8698
      %v8792 = vpop.xlane.xlu0 %8791
      %8793 = vadd.xlane.f32.xlu0 %v8699
      %v8794 = vpop.xlane.xlu0 %8793
      %8795 = vadd.xlane.f32.xlu0 %v8700
      %v8796 = vpop.xlane.xlu0 %8795
      %8797 = vadd.xlane.f32.xlu0 %v8701
      %v8798 = vpop.xlane.xlu0 %8797
      %8799 = vadd.xlane.f32.xlu0 %v8702
      %v8800 = vpop.xlane.xlu0 %8799
      %8801 = vadd.xlane.f32.xlu0 %v8703
      %v8802 = vpop.xlane.xlu0 %8801
      %8803 = vadd.xlane.f32.xlu0 %v8704
      %v8804 = vpop.xlane.xlu0 %8803
      %8805 = vadd.xlane.f32.xlu0 %v8705
      %v8806 = vpop.xlane.xlu0 %8805
      %8807 = vadd.xlane.f32.xlu0 %v8706
      %v8808 = vpop.xlane.xlu0 %8807
      %8809 = vadd.xlane.f32.xlu0 %v8707
      %v8810 = vpop.xlane.xlu0 %8809
      %8811 = vadd.xlane.f32.xlu0 %v8708
      %v8812 = vpop.xlane.xlu0 %8811
      %8813 = vadd.xlane.f32.xlu0 %v8709
      %v8814 = vpop.xlane.xlu0 %8813
      %8815 = vadd.xlane.f32.xlu0 %v8710
      %v8816 = vpop.xlane.xlu0 %8815
      %8817 = vadd.xlane.f32.xlu0 %v8711
      %v8818 = vpop.xlane.xlu0 %8817
      %8819 = vadd.xlane.f32.xlu0 %v8712
      %v8820 = vpop.xlane.xlu0 %8819
      %8821 = vadd.xlane.f32.xlu0 %v8713
      %v8822 = vpop.xlane.xlu0 %8821
      %8823 = vadd.xlane.f32.xlu0 %v8714
      %v8824 = vpop.xlane.xlu0 %8823
      %8825 = vadd.xlane.f32.xlu0 %v8715
      %v8826 = vpop.xlane.xlu0 %8825
      %8827 = vadd.xlane.f32.xlu0 %v8716
      %v8828 = vpop.xlane.xlu0 %8827
      %8829 = vadd.xlane.f32.xlu0 %v8717
      %v8830 = vpop.xlane.xlu0 %8829
      %8831 = vadd.xlane.f32.xlu0 %v8718
      %v8832 = vpop.xlane.xlu0 %8831
      %8833 = vadd.xlane.f32.xlu0 %v8719
      %v8834 = vpop.xlane.xlu0 %8833
      %8835 = vadd.xlane.f32.xlu0 %v8720
      %v8836 = vpop.xlane.xlu0 %8835
      %8837 = vadd.xlane.f32.xlu0 %v8721
      %v8838 = vpop.xlane.xlu0 %8837
      %8839 = vadd.xlane.f32.xlu0 %v8722
      %v8840 = vpop.xlane.xlu0 %8839
      %8841 = vadd.xlane.f32.xlu0 %v8723
      %v8842 = vpop.xlane.xlu0 %8841
      %8843 = vadd.xlane.f32.xlu0 %v8724
      %v8844 = vpop.xlane.xlu0 %8843
      %8845 = vadd.xlane.f32.xlu0 %v8725
      %v8846 = vpop.xlane.xlu0 %8845
      %8847 = vadd.xlane.f32.xlu0 %v8726
      %v8848 = vpop.xlane.xlu0 %8847
      %8849 = vadd.xlane.f32.xlu0 %v8727
      %v8850 = vpop.xlane.xlu0 %8849
      %8851 = vadd.xlane.f32.xlu0 %v8728
      %v8852 = vpop.xlane.xlu0 %8851
      %8853 = vadd.xlane.f32.xlu0 %v8729
      %v8854 = vpop.xlane.xlu0 %8853
      %8855 = vadd.xlane.f32.xlu0 %v8730
      %v8856 = vpop.xlane.xlu0 %8855
      %8857 = vadd.xlane.f32.xlu0 %v8731
      %v8858 = vpop.xlane.xlu0 %8857
      %8859 = vadd.xlane.f32.xlu0 %v8732
      %v8860 = vpop.xlane.xlu0 %8859
      %v8861 = vld [vmem:[%s500] sm:$0x1]
      %v8863 = vperm.slane %v8861, 0
      %v8865 = vadd.f32 %v8734, %v8863
      %v8866 = vadd.f32 %v8736, %v8863
      %v8867 = vadd.f32 %v8738, %v8863
      %v8868 = vadd.f32 %v8740, %v8863
      %v8869 = vadd.f32 %v8742, %v8863
      %v8870 = vadd.f32 %v8744, %v8863
      %v8871 = vadd.f32 %v8746, %v8863
      %v8872 = vadd.f32 %v8748, %v8863
      %v8873 = vadd.f32 %v8750, %v8863
      %v8874 = vadd.f32 %v8752, %v8863
      %v8875 = vadd.f32 %v8754, %v8863
      %v8876 = vadd.f32 %v8756, %v8863
      %v8877 = vadd.f32 %v8758, %v8863
      %v8878 = vadd.f32 %v8760, %v8863
      %v8879 = vadd.f32 %v8762, %v8863
      %v8880 = vadd.f32 %v8764, %v8863
      %v8881 = vadd.f32 %v8766, %v8863
      %v8882 = vadd.f32 %v8768, %v8863
      %v8883 = vadd.f32 %v8770, %v8863
      %v8884 = vadd.f32 %v8772, %v8863
      %v8885 = vadd.f32 %v8774, %v8863
      %v8886 = vadd.f32 %v8776, %v8863
      %v8887 = vadd.f32 %v8778, %v8863
      %v8888 = vadd.f32 %v8780, %v8863
      %v8889 = vadd.f32 %v8782, %v8863
      %v8890 = vadd.f32 %v8784, %v8863
      %v8891 = vadd.f32 %v8786, %v8863
      %v8892 = vadd.f32 %v8788, %v8863
      %v8893 = vadd.f32 %v8790, %v8863
      %v8894 = vadd.f32 %v8792, %v8863
      %v8895 = vadd.f32 %v8794, %v8863
      %v8896 = vadd.f32 %v8796, %v8863
      %v8897 = vadd.f32 %v8798, %v8863
      %v8898 = vadd.f32 %v8800, %v8863
      %v8899 = vadd.f32 %v8802, %v8863
      %v8900 = vadd.f32 %v8804, %v8863
      %v8901 = vadd.f32 %v8806, %v8863
      %v8902 = vadd.f32 %v8808, %v8863
      %v8903 = vadd.f32 %v8810, %v8863
      %v8904 = vadd.f32 %v8812, %v8863
      %v8905 = vadd.f32 %v8814, %v8863
      %v8906 = vadd.f32 %v8816, %v8863
      %v8907 = vadd.f32 %v8818, %v8863
      %v8908 = vadd.f32 %v8820, %v8863
      %v8909 = vadd.f32 %v8822, %v8863
      %v8910 = vadd.f32 %v8824, %v8863
      %v8911 = vadd.f32 %v8826, %v8863
      %v8912 = vadd.f32 %v8828, %v8863
      %v8913 = vadd.f32 %v8830, %v8863
      %v8914 = vadd.f32 %v8832, %v8863
      %v8915 = vadd.f32 %v8834, %v8863
      %v8916 = vadd.f32 %v8836, %v8863
      %v8917 = vadd.f32 %v8838, %v8863
      %v8918 = vadd.f32 %v8840, %v8863
      %v8919 = vadd.f32 %v8842, %v8863
      %v8920 = vadd.f32 %v8844, %v8863
      %v8921 = vadd.f32 %v8846, %v8863
      %v8922 = vadd.f32 %v8848, %v8863
      %v8923 = vadd.f32 %v8850, %v8863
      %v8924 = vadd.f32 %v8852, %v8863
      %v8925 = vadd.f32 %v8854, %v8863
      %v8926 = vadd.f32 %v8856, %v8863
      %v8927 = vadd.f32 %v8858, %v8863
      %v8928 = vadd.f32 %v8860, %v8863
      %vm8929 = vcmask 7168
      %8930 = vst.msk [vmem:[%s509] sm:$0xff] %vm8929, %v8865
      %8931 = vst.msk [vmem:[%s509 + $0x8] sm:$0xff] %vm8929, %v8866
      %8932 = vst.msk [vmem:[%s509 + $0x10] sm:$0xff] %vm8929, %v8867
      %8933 = vst.msk [vmem:[%s509 + $0x18] sm:$0xff] %vm8929, %v8868
      %8934 = vst.msk [vmem:[%s509 + $0x20] sm:$0xff] %vm8929, %v8869
      %8935 = vst.msk [vmem:[%s509 + $0x28] sm:$0xff] %vm8929, %v8870
      %8936 = vst.msk [vmem:[%s509 + $0x30] sm:$0xff] %vm8929, %v8871
      %8937 = vst.msk [vmem:[%s509 + $0x38] sm:$0xff] %vm8929, %v8872
      %8938 = vst.msk [vmem:[%s509 + $0x40] sm:$0xff] %vm8929, %v8873
      %8939 = vst.msk [vmem:[%s509 + $0x48] sm:$0xff] %vm8929, %v8874
      %8940 = vst.msk [vmem:[%s509 + $0x50] sm:$0xff] %vm8929, %v8875
      %8941 = vst.msk [vmem:[%s509 + $0x58] sm:$0xff] %vm8929, %v8876
      %8942 = vst.msk [vmem:[%s509 + $0x60] sm:$0xff] %vm8929, %v8877
      %8943 = vst.msk [vmem:[%s509 + $0x68] sm:$0xff] %vm8929, %v8878
      %8944 = vst.msk [vmem:[%s509 + $0x70] sm:$0xff] %vm8929, %v8879
      %8945 = vst.msk [vmem:[%s509 + $0x78] sm:$0xff] %vm8929, %v8880
      %8946 = vst.msk [vmem:[%s509 + $0x80] sm:$0xff] %vm8929, %v8881
      %8947 = vst.msk [vmem:[%s509 + $0x88] sm:$0xff] %vm8929, %v8882
      %8948 = vst.msk [vmem:[%s509 + $0x90] sm:$0xff] %vm8929, %v8883
      %8949 = vst.msk [vmem:[%s509 + $0x98] sm:$0xff] %vm8929, %v8884
      %8950 = vst.msk [vmem:[%s509 + $0xa0] sm:$0xff] %vm8929, %v8885
      %8951 = vst.msk [vmem:[%s509 + $0xa8] sm:$0xff] %vm8929, %v8886
      %8952 = vst.msk [vmem:[%s509 + $0xb0] sm:$0xff] %vm8929, %v8887
      %8953 = vst.msk [vmem:[%s509 + $0xb8] sm:$0xff] %vm8929, %v8888
      %8954 = vst.msk [vmem:[%s509 + $0xc0] sm:$0xff] %vm8929, %v8889
      %8955 = vst.msk [vmem:[%s509 + $0xc8] sm:$0xff] %vm8929, %v8890
      %8956 = vst.msk [vmem:[%s509 + $0xd0] sm:$0xff] %vm8929, %v8891
      %8957 = vst.msk [vmem:[%s509 + $0xd8] sm:$0xff] %vm8929, %v8892
      %8958 = vst.msk [vmem:[%s509 + $0xe0] sm:$0xff] %vm8929, %v8893
      %8959 = vst.msk [vmem:[%s509 + $0xe8] sm:$0xff] %vm8929, %v8894
      %8960 = vst.msk [vmem:[%s509 + $0xf0] sm:$0xff] %vm8929, %v8895
      %8961 = vst.msk [vmem:[%s509 + $0xf8] sm:$0xff] %vm8929, %v8896
      %8962 = vst.msk [vmem:[%s509 + $0x100] sm:$0xff] %vm8929, %v8897
      %8963 = vst.msk [vmem:[%s509 + $0x108] sm:$0xff] %vm8929, %v8898
      %8964 = vst.msk [vmem:[%s509 + $0x110] sm:$0xff] %vm8929, %v8899
      %8965 = vst.msk [vmem:[%s509 + $0x118] sm:$0xff] %vm8929, %v8900
      %8966 = vst.msk [vmem:[%s509 + $0x120] sm:$0xff] %vm8929, %v8901
      %8967 = vst.msk [vmem:[%s509 + $0x128] sm:$0xff] %vm8929, %v8902
      %8968 = vst.msk [vmem:[%s509 + $0x130] sm:$0xff] %vm8929, %v8903
      %8969 = vst.msk [vmem:[%s509 + $0x138] sm:$0xff] %vm8929, %v8904
      %8970 = vst.msk [vmem:[%s509 + $0x140] sm:$0xff] %vm8929, %v8905
      %8971 = vst.msk [vmem:[%s509 + $0x148] sm:$0xff] %vm8929, %v8906
      %8972 = vst.msk [vmem:[%s509 + $0x150] sm:$0xff] %vm8929, %v8907
      %8973 = vst.msk [vmem:[%s509 + $0x158] sm:$0xff] %vm8929, %v8908
      %8974 = vst.msk [vmem:[%s509 + $0x160] sm:$0xff] %vm8929, %v8909
      %8975 = vst.msk [vmem:[%s509 + $0x168] sm:$0xff] %vm8929, %v8910
      %8976 = vst.msk [vmem:[%s509 + $0x170] sm:$0xff] %vm8929, %v8911
      %8977 = vst.msk [vmem:[%s509 + $0x178] sm:$0xff] %vm8929, %v8912
      %8978 = vst.msk [vmem:[%s509 + $0x180] sm:$0xff] %vm8929, %v8913
      %8979 = vst.msk [vmem:[%s509 + $0x188] sm:$0xff] %vm8929, %v8914
      %8980 = vst.msk [vmem:[%s509 + $0x190] sm:$0xff] %vm8929, %v8915
      %8981 = vst.msk [vmem:[%s509 + $0x198] sm:$0xff] %vm8929, %v8916
      %8982 = vst.msk [vmem:[%s509 + $0x1a0] sm:$0xff] %vm8929, %v8917
      %8983 = vst.msk [vmem:[%s509 + $0x1a8] sm:$0xff] %vm8929, %v8918
      %8984 = vst.msk [vmem:[%s509 + $0x1b0] sm:$0xff] %vm8929, %v8919
      %8985 = vst.msk [vmem:[%s509 + $0x1b8] sm:$0xff] %vm8929, %v8920
      %8986 = vst.msk [vmem:[%s509 + $0x1c0] sm:$0xff] %vm8929, %v8921
      %8987 = vst.msk [vmem:[%s509 + $0x1c8] sm:$0xff] %vm8929, %v8922
      %8988 = vst.msk [vmem:[%s509 + $0x1d0] sm:$0xff] %vm8929, %v8923
      %8989 = vst.msk [vmem:[%s509 + $0x1d8] sm:$0xff] %vm8929, %v8924
      %8990 = vst.msk [vmem:[%s509 + $0x1e0] sm:$0xff] %vm8929, %v8925
      %8991 = vst.msk [vmem:[%s509 + $0x1e8] sm:$0xff] %vm8929, %v8926
      %8992 = vst.msk [vmem:[%s509 + $0x1f0] sm:$0xff] %vm8929, %v8927
      %8993 = vst.msk [vmem:[%s509 + $0x1f8] sm:$0xff] %vm8929, %v8928
      %s8994 = smul.u32 64, %s25
      %p8995 = scmp.lt.s32.totalorder %s24, 1
      %s8996 = scalar_select %p8995, %s24, 1
      %p8997 = scmp.lt.s32.totalorder %s8994, 63
      %s8998 = scalar_select %p8997, %s8994, 63
      %s8999 = smul.addr %s8996, 64
      %s9000 = sadd.s32 %s8998, %s8999
      %s9001 = smul.addr %s9000, 8
      %s9002 = scalar_lea.vmem %s9, %s9001
      // Predicated region
      $region57: #{dfm_forward.1} parent=55 // pred_check
        %p9003 = pneg %p288
      $region58: #{dfm_forward.1} parent=55 // pred_check_branch
        %9005 = sbr.rel (%p9003) target = $region60
      $region59: #{dfm_forward.1} parent=55 // pred_region
        %s9006 = smul.u32 64, %s25
      $region60: #{dfm_forward.1} parent=55 // pred_fallthru
        _
    $region56: #{dfm_forward.1} parent=5 // pred_fallthru
      _
    %p9007 = scmp.le.s32.totalorder 2, %s15
    // Predicated region
    $region61: #{dfm_forward.1} parent=5 // pred_check
      %p9008 = pneg %p9007
    $region62: #{dfm_forward.1} parent=5 // pred_check_branch
      %9010 = sbr.rel (%p9008) target = $region64
    $region63: #{dfm_forward.1} parent=5 // pred_region
      %s9011 = ssub.s32 %s15, 2
      // Predicated region
      $region65: #{dfm_forward.1} parent=63 // pred_check
        %p9012 = pneg %p294
      $region66: #{dfm_forward.1} parent=63 // pred_check_branch
        %9014 = sbr.rel (%p9012) target = $region68
      $region67: #{dfm_forward.1} parent=63 // pred_region
        %s9015 = smul.u32 64, %s27
        %p9016 = scmp.lt.s32.totalorder %s26, 1
        %s9017 = scalar_select %p9016, %s26, 1
        %p9018 = scmp.lt.s32.totalorder %s9015, 63
        %s9019 = scalar_select %p9018, %s9015, 63
        %s9020 = smul.addr %s9017, 64
        %s9021 = sadd.s32 %s9019, %s9020
        %s9022 = smul.addr %s9021, 8
        %s9023 = scalar_lea.vmem %s9, %s9022
      $region68: #{dfm_forward.1} parent=63 // pred_fallthru
        _
    $region64: #{dfm_forward.1} parent=5 // pred_fallthru
      _
  $region6: #{dfm_forward.1} parent=0 // loop_footer
    %s19 = sadd.s32 1, %s15
  $region7: #{dfm_forward.1} parent=0 // loop_footer_branch
    %14 = sbr.rel target = $region3
  $region8: #{dfm_forward.1} parent=0 // loop_exit
    _

</llo_original>
